<compile_context>
chip_gen: v7x
topology: tpu7x:2x2x1
jax: 0.10.0
libtpu: 0.0.40
codegen_flags: <defaults>
</compile_context>

<pallas_src>
import functools

import jax
import jax.numpy as jnp
from jax import lax
from jax.experimental import pallas as pl
from jax.experimental.pallas import tpu as pltpu


_C_PAD = 16    # pad the 5 input channels up to one bf16 sublane tile
_PAD = 128     # lane-aligned zero margin on each side of the flat activation


# ----------------------------------------------------------------------------
# Fused Pallas kernel: the full forward pass for one batch element
# ----------------------------------------------------------------------------
def _topo_cnn_kernel(x_ref,
                     w1, b1, w2, b2, w3, b3, w4, b4, w5, b5, w6, b6,
                     o_ref, pad_ref, im2col_ref, *, H, W, PAD):
    HW = H * W

    # Zero the margined flat-activation scratch once per batch element.
    # The margins supply the vertical zero padding for all 3x3 taps.
    pad_ref[...] = jnp.zeros(pad_ref.shape, pad_ref.dtype)

    # Per-column masks (hoisted): kill values that horizontally wrap to the
    # adjacent image row when the flat index is shifted by dx = +-1.
    col = lax.broadcasted_iota(jnp.int32, (1, HW), 1) % W
    masks = {
        -1: (col >= 1).astype(jnp.bfloat16),       # tap dx = -1
        0: None,
        1: (col <= W - 2).astype(jnp.bfloat16),    # tap dx = +1
    }

    def conv3x3(act, w_ref, b_ref, relu=True):
        # act: (Cin, HW) value.  w_ref: (Cout, 9*Cin) bf16.  b_ref: (Cout, 1) f32.
        cin = act.shape[0]
        # Write the activation into the zero-margined flat buffer (bf16).
        pad_ref[0:cin, PAD:PAD + HW] = act.astype(jnp.bfloat16)

        # Assemble im2col: 9 statically shifted (Cin, HW) views.
        t = 0
        for dy in (-1, 0, 1):
            for dx in (-1, 0, 1):
                d = dy * W + dx
                shifted = pad_ref[0:cin, PAD + d:PAD + d + HW]   # (Cin, HW) bf16
                m = masks[dx]
                if m is not None:
                    shifted = shifted * m
                im2col_ref[t * cin:(t + 1) * cin, :] = shifted
                t += 1

        # Single lane-dense MXU matmul: (Cout, 9*Cin) @ (9*Cin, HW) -> (Cout, HW).
        acc = jnp.dot(w_ref[...], im2col_ref[0:9 * cin, :],
                      preferred_element_type=jnp.float32)
        acc = acc + b_ref[...]                                    # (Cout, 1) bias
        return jnp.maximum(acc, 0.0) if relu else acc

    # Encoder: ConvBlock(5->32), ConvBlock(32->64), ConvBlock(64->128)
    a = conv3x3(x_ref[0], w1, b1)          # (32, HW)
    a = conv3x3(a, w2, b2)                 # (64, HW)
    a = conv3x3(a, w3, b3)                 # (128, HW)
    # Decoder: ConvBlock(128->64), ConvBlock(64->32)
    a = conv3x3(a, w4, b4)                 # (64, HW)
    a = conv3x3(a, w5, b5)                 # (32, HW)

    # Final fused 1x1 conv (32 -> 2), no activation.
    out = jnp.dot(w6[...], a.astype(jnp.bfloat16),
                  preferred_element_type=jnp.float32) + b6[...]
    o_ref[0] = out.astype(o_ref.dtype)


# ----------------------------------------------------------------------------
# Wrapper: NCHW in / NCHW out, single pallas_call for the whole network
# ----------------------------------------------------------------------------
def topology_cnn_forward(x_nchw, params):
    N, C, H, W = x_nchw.shape
    HW = H * W
    assert HW % 128 == 0, "flattened spatial size must be lane-aligned"
    # TODO(synk): for large images (e.g. the module default 180x60) add row-strip
    # spatial tiling with a 1-row halo instead of whole-image-in-VMEM blocks.

    # NCHW -> (N, C, H*W): channels on sublanes, spatial on lanes (free reshape).
    x_flat = x_nchw.reshape(N, C, HW)
    x_flat = jnp.pad(x_flat, ((0, 0), (0, _C_PAD - C), (0, 0)))   # one-time tiny pad
    x_flat = x_flat.astype(jnp.bfloat16)

    args = [x_flat]
    in_specs = [pl.BlockSpec((1, _C_PAD, HW), lambda n: (n, 0, 0))]
    c_max = _C_PAD
    k_max = 16 * 9
    for li, (w, b) in enumerate(params):
        kh, kw, cin, cout = w.shape
        if li == 0:
            w = jnp.pad(w, ((0, 0), (0, 0), (0, _C_PAD - cin), (0, 0)))
            cin = _C_PAD
        # (KH, KW, Cin, Cout) -> (Cout, KH*KW*Cin), tap-major / channel-minor,
        # matching the im2col row order built in the kernel.
        w_mat = jnp.transpose(w, (3, 0, 1, 2)).reshape(cout, kh * kw * cin)
        w_mat = w_mat.astype(jnp.bfloat16)
        b_col = b.reshape(cout, 1).astype(jnp.float32)
        args += [w_mat, b_col]
        in_specs += [pl.BlockSpec(w_mat.shape, lambda n: (0, 0)),
                     pl.BlockSpec(b_col.shape, lambda n: (0, 0))]
        c_max = max(c_max, cin, cout)
        if kh == 3:
            k_max = max(k_max, kh * kw * cin)

    cout_final = params[-1][0].shape[-1]
    kernel = functools.partial(_topo_cnn_kernel, H=H, W=W, PAD=_PAD)

    out_flat = pl.pallas_call(
        kernel,
        out_shape=jax.ShapeDtypeStruct((N, cout_final, HW), jnp.float32),
        grid=(N,),
        in_specs=in_specs,
        out_specs=pl.BlockSpec((1, cout_final, HW), lambda n: (n, 0, 0)),
        scratch_shapes=[
            pltpu.VMEM((c_max, HW + 2 * _PAD), jnp.bfloat16),   # margined flat act
            pltpu.VMEM((k_max, HW), jnp.bfloat16),              # im2col slab
        ],
        compiler_params=pltpu.CompilerParams(
            dimension_semantics=("parallel",)),
    )(*args)

    return out_flat.reshape(N, cout_final, H, W)


# ----------------------------------------------------------------------------
# Deterministic parameter construction (He-normal keeps activations O(1))
# ----------------------------------------------------------------------------
def init_params(key):
    layer_defs = [
        (5, 32, 3), (32, 64, 3), (64, 128, 3),      # encoder ConvBlocks
        (128, 64, 3), (64, 32, 3),                  # decoder ConvBlocks
        (32, 2, 1),                                 # final 1x1 Conv2d
    ]
    params = []
    for cin, cout, k in layer_defs:
        key, k_w, k_b = jax.random.split(key, 3)
        fan_in = cin * k * k
        w = jax.random.normal(k_w, (k, k, cin, cout), jnp.float32)
        w = w * jnp.sqrt(2.0 / fan_in)
        b = 0.05 * jax.random.normal(k_b, (cout,), jnp.float32)
        params.append((w, b))                       # HWIO weights, vector bias
    return params


# ----------------------------------------------------------------------------
# Pure-JAX reference (f32, lax.conv) for a correctness check
# ----------------------------------------------------------------------------
def _reference_forward(x_nchw, params):
    x = jnp.transpose(x_nchw, (0, 2, 3, 1))        # NCHW -> NHWC
    for i, (w, b) in enumerate(params):
        k = w.shape[0]
        pad = (k - 1) // 2
        dn = lax.conv_dimension_numbers(x.shape, w.shape, ("NHWC", "HWIO", "NHWC"))
        x = lax.conv_general_dilated(
            x, w, window_strides=(1, 1),
            padding=[(pad, pad), (pad, pad)], dimension_numbers=dn)
        x = x + b[None, None, None, :]
        if i < len(params) - 1:
            x = jnp.maximum(x, 0.0)
    return jnp.transpose(x, (0, 3, 1, 2))          # NHWC -> NCHW


if __name__ == "__main__":
    key = jax.random.PRNGKey(0)
    k_in, k_params = jax.random.split(key)

    # NCHW input, 5 channels as the module requires; small spatial size.
    N, C, H, W = 2, 5, 16, 16
    x = jax.random.normal(k_in, (N, C, H, W), dtype=jnp.float32)
    params = init_params(k_params)

    fwd = jax.jit(topology_cnn_forward)
    out = jax.block_until_ready(fwd(x, params))
    assert out.shape == (N, 2, H, W), out.shape

    ref = jax.block_until_ready(_reference_forward(x, params))
    max_err = float(jnp.max(jnp.abs(out - ref)))
    # bf16 matmul inputs with f32 accumulation: a few-percent worst-case deviation;
    # a genuine indexing/tap bug would show errors of O(1).
    assert jnp.allclose(out, ref, rtol=5e-2, atol=1e-1), max_err

    print("KERNEL_OK")
</pallas_src>

<mosaic_0001>
module attributes {stable_mosaic.version = 11 : i64} {
  func.func @_topo_cnn_kernel(%arg0: i32, %arg1: memref<1x16x256xbf16, #tpu.memory_space<vmem>>, %arg2: memref<32x144xbf16, #tpu.memory_space<vmem>>, %arg3: memref<32x1xf32, #tpu.memory_space<vmem>>, %arg4: memref<64x288xbf16, #tpu.memory_space<vmem>>, %arg5: memref<64x1xf32, #tpu.memory_space<vmem>>, %arg6: memref<128x576xbf16, #tpu.memory_space<vmem>>, %arg7: memref<128x1xf32, #tpu.memory_space<vmem>>, %arg8: memref<64x1152xbf16, #tpu.memory_space<vmem>>, %arg9: memref<64x1xf32, #tpu.memory_space<vmem>>, %arg10: memref<32x576xbf16, #tpu.memory_space<vmem>>, %arg11: memref<32x1xf32, #tpu.memory_space<vmem>>, %arg12: memref<2x32xbf16, #tpu.memory_space<vmem>>, %arg13: memref<2x1xf32, #tpu.memory_space<vmem>>, %arg14: memref<1x2x256xf32, #tpu.memory_space<vmem>>, %arg15: memref<128x512xbf16, #tpu.memory_space<vmem>>, %arg16: memref<1152x256xbf16, #tpu.memory_space<vmem>>) attributes {dimension_semantics = [#tpu.dimension_semantics<parallel>], iteration_bounds = array<i64: 2>, scalar_prefetch = 0 : i64, scratch_operands = 2 : i64, tpu.core_type = #tpu.core_type<tc>, window_params = [{transform_indices = @transform_0, window_bounds = array<i64: 1, 16, 256>}, {pipeline_mode = #tpu.pipeline_mode<synchronous>, transform_indices = @transform_1, window_bounds = array<i64: 32, 144>}, {pipeline_mode = #tpu.pipeline_mode<synchronous>, transform_indices = @transform_2, window_bounds = array<i64: 32, 1>}, {pipeline_mode = #tpu.pipeline_mode<synchronous>, transform_indices = @transform_3, window_bounds = array<i64: 64, 288>}, {pipeline_mode = #tpu.pipeline_mode<synchronous>, transform_indices = @transform_4, window_bounds = array<i64: 64, 1>}, {pipeline_mode = #tpu.pipeline_mode<synchronous>, transform_indices = @transform_5, window_bounds = array<i64: 128, 576>}, {pipeline_mode = #tpu.pipeline_mode<synchronous>, transform_indices = @transform_6, window_bounds = array<i64: 128, 1>}, {pipeline_mode = #tpu.pipeline_mode<synchronous>, transform_indices = @transform_7, window_bounds = array<i64: 64, 1152>}, {pipeline_mode = #tpu.pipeline_mode<synchronous>, transform_indices = @transform_8, window_bounds = array<i64: 64, 1>}, {pipeline_mode = #tpu.pipeline_mode<synchronous>, transform_indices = @transform_9, window_bounds = array<i64: 32, 576>}, {pipeline_mode = #tpu.pipeline_mode<synchronous>, transform_indices = @transform_10, window_bounds = array<i64: 32, 1>}, {pipeline_mode = #tpu.pipeline_mode<synchronous>, transform_indices = @transform_11, window_bounds = array<i64: 2, 32>}, {pipeline_mode = #tpu.pipeline_mode<synchronous>, transform_indices = @transform_12, window_bounds = array<i64: 2, 1>}, {transform_indices = @transform_13, window_bounds = array<i64: 1, 2, 256>}]} {
    %cst = arith.constant 0.000000e+00 : bf16
    %0 = vector.broadcast %cst : bf16 to vector<128x512xbf16>
    %c0 = arith.constant 0 : index
    %c0_0 = arith.constant 0 : index
    %1 = vector.load %arg15[%c0, %c0_0] : memref<128x512xbf16, #tpu.memory_space<vmem>>, vector<128x512xbf16>
    tpu.vector_store %arg15[%c0, %c0_0], %0 {strides = array<i32>} : memref<128x512xbf16, #tpu.memory_space<vmem>>, vector<128x512xbf16>,
    %2 = tpu.iota {dimensions = array<i32: 1>} : vector<1x256xi32>
    %c16_i32 = arith.constant 16 : i32
    %c0_i32 = arith.constant 0 : i32
    %3 = arith.cmpi eq, %c16_i32, %c0_i32 : i32
    %c1_i32 = arith.constant 1 : i32
    %4 = arith.select %3, %c1_i32, %c16_i32 : i32
    %5 = vector.broadcast %4 : i32 to vector<1x256xi32>
    %6 = arith.remsi %2, %5 : vector<1x256xi32>
    %c0_i32_1 = arith.constant 0 : i32
    %7 = vector.broadcast %c0_i32_1 : i32 to vector<1x256xi32>
    %8 = arith.cmpi ne, %6, %7 : vector<1x256xi32>
    %c0_i32_2 = arith.constant 0 : i32
    %9 = vector.broadcast %c0_i32_2 : i32 to vector<1x256xi32>
    %10 = arith.cmpi slt, %6, %9 : vector<1x256xi32>
    %c0_i32_3 = arith.constant 0 : i32
    %11 = arith.cmpi slt, %4, %c0_i32_3 : i32
    %12 = vector.broadcast %11 : i1 to vector<1x256xi1>
    %13 = vector.broadcast %12 : vector<1x256xi1> to vector<1x256xi1>
    %14 = arith.xori %10, %13 : vector<1x256xi1>
    %15 = arith.andi %14, %8 : vector<1x256xi1>
    %16 = vector.broadcast %4 : i32 to vector<1x256xi32>
    %17 = arith.addi %6, %16 : vector<1x256xi32>
    %18 = arith.select %15, %17, %6 : vector<1x256xi1>, vector<1x256xi32>
    %c1_i32_4 = arith.constant 1 : i32
    %19 = vector.broadcast %c1_i32_4 : i32 to vector<1x256xi32>
    %20 = arith.cmpi sge, %18, %19 : vector<1x256xi32>
    %21 = arith.extui %20 : vector<1x256xi1> to vector<1x256xi32>
    %22 = arith.sitofp %21 : vector<1x256xi32> to vector<1x256xf32>
    %23 = arith.truncf %22 : vector<1x256xf32> to vector<1x256xbf16>
    %c14_i32 = arith.constant 14 : i32
    %24 = vector.broadcast %c14_i32 : i32 to vector<1x256xi32>
    %25 = arith.cmpi sle, %18, %24 : vector<1x256xi32>
    %26 = arith.extui %25 : vector<1x256xi1> to vector<1x256xi32>
    %27 = arith.sitofp %26 : vector<1x256xi32> to vector<1x256xf32>
    %28 = arith.truncf %27 : vector<1x256xf32> to vector<1x256xbf16>
    %c0_5 = arith.constant 0 : index
    %c0_6 = arith.constant 0 : index
    %c0_7 = arith.constant 0 : index
    %29 = vector.load %arg1[%c0_5, %c0_6, %c0_7] : memref<1x16x256xbf16, #tpu.memory_space<vmem>>, vector<1x16x256xbf16>
    %30 = vector.shape_cast %29 : vector<1x16x256xbf16> to vector<16x256xbf16>
    %c0_8 = arith.constant 0 : index
    %c128 = arith.constant 128 : index
    %31 = vector.load %arg15[%c0_8, %c128] : memref<128x512xbf16, #tpu.memory_space<vmem>>, vector<16x256xbf16>
    tpu.vector_store %arg15[%c0_8, %c128], %30 {strides = array<i32>} : memref<128x512xbf16, #tpu.memory_space<vmem>>, vector<16x256xbf16>,
    %c0_9 = arith.constant 0 : index
    %c111 = arith.constant 111 : index
    %32 = vector.load %arg15[%c0_9, %c111] : memref<128x512xbf16, #tpu.memory_space<vmem>>, vector<16x256xbf16>
    %33 = vector.broadcast %23 : vector<1x256xbf16> to vector<16x256xbf16>
    %34 = arith.mulf %32, %33 : vector<16x256xbf16>
    %c0_10 = arith.constant 0 : index
    %c0_11 = arith.constant 0 : index
    %35 = vector.load %arg16[%c0_10, %c0_11] : memref<1152x256xbf16, #tpu.memory_space<vmem>>, vector<16x256xbf16>
    tpu.vector_store %arg16[%c0_10, %c0_11], %34 {strides = array<i32>} : memref<1152x256xbf16, #tpu.memory_space<vmem>>, vector<16x256xbf16>,
    %c0_12 = arith.constant 0 : index
    %c112 = arith.constant 112 : index
    %36 = vector.load %arg15[%c0_12, %c112] : memref<128x512xbf16, #tpu.memory_space<vmem>>, vector<16x256xbf16>
    %c16 = arith.constant 16 : index
    %c0_13 = arith.constant 0 : index
    %37 = vector.load %arg16[%c16, %c0_13] : memref<1152x256xbf16, #tpu.memory_space<vmem>>, vector<16x256xbf16>
    tpu.vector_store %arg16[%c16, %c0_13], %36 {strides = array<i32>} : memref<1152x256xbf16, #tpu.memory_space<vmem>>, vector<16x256xbf16>,
    %c0_14 = arith.constant 0 : index
    %c113 = arith.constant 113 : index
    %38 = vector.load %arg15[%c0_14, %c113] : memref<128x512xbf16, #tpu.memory_space<vmem>>, vector<16x256xbf16>
    %39 = vector.broadcast %28 : vector<1x256xbf16> to vector<16x256xbf16>
    %40 = arith.mulf %38, %39 : vector<16x256xbf16>
    %c32 = arith.constant 32 : index
    %c0_15 = arith.constant 0 : index
    %41 = vector.load %arg16[%c32, %c0_15] : memref<1152x256xbf16, #tpu.memory_space<vmem>>, vector<16x256xbf16>
    tpu.vector_store %arg16[%c32, %c0_15], %40 {strides = array<i32>} : memref<1152x256xbf16, #tpu.memory_space<vmem>>, vector<16x256xbf16>,
    %c0_16 = arith.constant 0 : index
    %c127 = arith.constant 127 : index
    %42 = vector.load %arg15[%c0_16, %c127] : memref<128x512xbf16, #tpu.memory_space<vmem>>, vector<16x256xbf16>
    %43 = vector.broadcast %23 : vector<1x256xbf16> to vector<16x256xbf16>
    %44 = arith.mulf %42, %43 : vector<16x256xbf16>
    %c48 = arith.constant 48 : index
    %c0_17 = arith.constant 0 : index
    %45 = vector.load %arg16[%c48, %c0_17] : memref<1152x256xbf16, #tpu.memory_space<vmem>>, vector<16x256xbf16>
    tpu.vector_store %arg16[%c48, %c0_17], %44 {strides = array<i32>} : memref<1152x256xbf16, #tpu.memory_space<vmem>>, vector<16x256xbf16>,
    %c0_18 = arith.constant 0 : index
    %c128_19 = arith.constant 128 : index
    %46 = vector.load %arg15[%c0_18, %c128_19] : memref<128x512xbf16, #tpu.memory_space<vmem>>, vector<16x256xbf16>
    %c64 = arith.constant 64 : index
    %c0_20 = arith.constant 0 : index
    %47 = vector.load %arg16[%c64, %c0_20] : memref<1152x256xbf16, #tpu.memory_space<vmem>>, vector<16x256xbf16>
    tpu.vector_store %arg16[%c64, %c0_20], %46 {strides = array<i32>} : memref<1152x256xbf16, #tpu.memory_space<vmem>>, vector<16x256xbf16>,
    %c0_21 = arith.constant 0 : index
    %c129 = arith.constant 129 : index
    %48 = vector.load %arg15[%c0_21, %c129] : memref<128x512xbf16, #tpu.memory_space<vmem>>, vector<16x256xbf16>
    %49 = vector.broadcast %28 : vector<1x256xbf16> to vector<16x256xbf16>
    %50 = arith.mulf %48, %49 : vector<16x256xbf16>
    %c80 = arith.constant 80 : index
    %c0_22 = arith.constant 0 : index
    %51 = vector.load %arg16[%c80, %c0_22] : memref<1152x256xbf16, #tpu.memory_space<vmem>>, vector<16x256xbf16>
    tpu.vector_store %arg16[%c80, %c0_22], %50 {strides = array<i32>} : memref<1152x256xbf16, #tpu.memory_space<vmem>>, vector<16x256xbf16>,
    %c0_23 = arith.constant 0 : index
    %c143 = arith.constant 143 : index
    %52 = vector.load %arg15[%c0_23, %c143] : memref<128x512xbf16, #tpu.memory_space<vmem>>, vector<16x256xbf16>
    %53 = vector.broadcast %23 : vector<1x256xbf16> to vector<16x256xbf16>
    %54 = arith.mulf %52, %53 : vector<16x256xbf16>
    %c96 = arith.constant 96 : index
    %c0_24 = arith.constant 0 : index
    %55 = vector.load %arg16[%c96, %c0_24] : memref<1152x256xbf16, #tpu.memory_space<vmem>>, vector<16x256xbf16>
    tpu.vector_store %arg16[%c96, %c0_24], %54 {strides = array<i32>} : memref<1152x256xbf16, #tpu.memory_space<vmem>>, vector<16x256xbf16>,
    %c0_25 = arith.constant 0 : index
    %c144 = arith.constant 144 : index
    %56 = vector.load %arg15[%c0_25, %c144] : memref<128x512xbf16, #tpu.memory_space<vmem>>, vector<16x256xbf16>
    %c112_26 = arith.constant 112 : index
    %c0_27 = arith.constant 0 : index
    %57 = vector.load %arg16[%c112_26, %c0_27] : memref<1152x256xbf16, #tpu.memory_space<vmem>>, vector<16x256xbf16>
    tpu.vector_store %arg16[%c112_26, %c0_27], %56 {strides = array<i32>} : memref<1152x256xbf16, #tpu.memory_space<vmem>>, vector<16x256xbf16>,
    %c0_28 = arith.constant 0 : index
    %c145 = arith.constant 145 : index
    %58 = vector.load %arg15[%c0_28, %c145] : memref<128x512xbf16, #tpu.memory_space<vmem>>, vector<16x256xbf16>
    %59 = vector.broadcast %28 : vector<1x256xbf16> to vector<16x256xbf16>
    %60 = arith.mulf %58, %59 : vector<16x256xbf16>
    %c128_29 = arith.constant 128 : index
    %c0_30 = arith.constant 0 : index
    %61 = vector.load %arg16[%c128_29, %c0_30] : memref<1152x256xbf16, #tpu.memory_space<vmem>>, vector<16x256xbf16>
    tpu.vector_store %arg16[%c128_29, %c0_30], %60 {strides = array<i32>} : memref<1152x256xbf16, #tpu.memory_space<vmem>>, vector<16x256xbf16>,
    %c0_31 = arith.constant 0 : index
    %c0_32 = arith.constant 0 : index
    %62 = vector.load %arg2[%c0_31, %c0_32] : memref<32x144xbf16, #tpu.memory_space<vmem>>, vector<32x144xbf16>
    %c0_33 = arith.constant 0 : index
    %c0_34 = arith.constant 0 : index
    %63 = vector.load %arg16[%c0_33, %c0_34] : memref<1152x256xbf16, #tpu.memory_space<vmem>>, vector<144x256xbf16>
    %cst_35 = arith.constant dense<0.000000e+00> : vector<32x256xf32>
    %64 = tpu.matmul %62, %63, %cst_35 {dimension_numbers = #tpu.dot_dimension_numbers<[1], [0], [0], [1], [0, 0, 1, 1], [], []>} : vector<32x144xbf16>, vector<144x256xbf16>, vector<32x256xf32> -> vector<32x256xf32>
    %c0_36 = arith.constant 0 : index
    %c0_37 = arith.constant 0 : index
    %65 = vector.load %arg3[%c0_36, %c0_37] : memref<32x1xf32, #tpu.memory_space<vmem>>, vector<32x1xf32>
    %66 = vector.broadcast %65 : vector<32x1xf32> to vector<32x256xf32>
    %67 = arith.addf %64, %66 : vector<32x256xf32>
    %cst_38 = arith.constant 0.000000e+00 : f32
    %68 = vector.broadcast %cst_38 : f32 to vector<32x256xf32>
    %69 = arith.maximumf %67, %68 : vector<32x256xf32>
    %70 = arith.truncf %69 : vector<32x256xf32> to vector<32x256xbf16>
    %c0_39 = arith.constant 0 : index
    %c128_40 = arith.constant 128 : index
    %71 = vector.load %arg15[%c0_39, %c128_40] : memref<128x512xbf16, #tpu.memory_space<vmem>>, vector<32x256xbf16>
    tpu.vector_store %arg15[%c0_39, %c128_40], %70 {strides = array<i32>} : memref<128x512xbf16, #tpu.memory_space<vmem>>, vector<32x256xbf16>,
    %c0_41 = arith.constant 0 : index
    %c111_42 = arith.constant 111 : index
    %72 = vector.load %arg15[%c0_41, %c111_42] : memref<128x512xbf16, #tpu.memory_space<vmem>>, vector<32x256xbf16>
    %73 = vector.broadcast %23 : vector<1x256xbf16> to vector<32x256xbf16>
    %74 = arith.mulf %72, %73 : vector<32x256xbf16>
    %c0_43 = arith.constant 0 : index
    %c0_44 = arith.constant 0 : index
    %75 = vector.load %arg16[%c0_43, %c0_44] : memref<1152x256xbf16, #tpu.memory_space<vmem>>, vector<32x256xbf16>
    tpu.vector_store %arg16[%c0_43, %c0_44], %74 {strides = array<i32>} : memref<1152x256xbf16, #tpu.memory_space<vmem>>, vector<32x256xbf16>,
    %c0_45 = arith.constant 0 : index
    %c112_46 = arith.constant 112 : index
    %76 = vector.load %arg15[%c0_45, %c112_46] : memref<128x512xbf16, #tpu.memory_space<vmem>>, vector<32x256xbf16>
    %c32_47 = arith.constant 32 : index
    %c0_48 = arith.constant 0 : index
    %77 = vector.load %arg16[%c32_47, %c0_48] : memref<1152x256xbf16, #tpu.memory_space<vmem>>, vector<32x256xbf16>
    tpu.vector_store %arg16[%c32_47, %c0_48], %76 {strides = array<i32>} : memref<1152x256xbf16, #tpu.memory_space<vmem>>, vector<32x256xbf16>,
    %c0_49 = arith.constant 0 : index
    %c113_50 = arith.constant 113 : index
    %78 = vector.load %arg15[%c0_49, %c113_50] : memref<128x512xbf16, #tpu.memory_space<vmem>>, vector<32x256xbf16>
    %79 = vector.broadcast %28 : vector<1x256xbf16> to vector<32x256xbf16>
    %80 = arith.mulf %78, %79 : vector<32x256xbf16>
    %c64_51 = arith.constant 64 : index
    %c0_52 = arith.constant 0 : index
    %81 = vector.load %arg16[%c64_51, %c0_52] : memref<1152x256xbf16, #tpu.memory_space<vmem>>, vector<32x256xbf16>
    tpu.vector_store %arg16[%c64_51, %c0_52], %80 {strides = array<i32>} : memref<1152x256xbf16, #tpu.memory_space<vmem>>, vector<32x256xbf16>,
    %c0_53 = arith.constant 0 : index
    %c127_54 = arith.constant 127 : index
    %82 = vector.load %arg15[%c0_53, %c127_54] : memref<128x512xbf16, #tpu.memory_space<vmem>>, vector<32x256xbf16>
    %83 = vector.broadcast %23 : vector<1x256xbf16> to vector<32x256xbf16>
    %84 = arith.mulf %82, %83 : vector<32x256xbf16>
    %c96_55 = arith.constant 96 : index
    %c0_56 = arith.constant 0 : index
    %85 = vector.load %arg16[%c96_55, %c0_56] : memref<1152x256xbf16, #tpu.memory_space<vmem>>, vector<32x256xbf16>
    tpu.vector_store %arg16[%c96_55, %c0_56], %84 {strides = array<i32>} : memref<1152x256xbf16, #tpu.memory_space<vmem>>, vector<32x256xbf16>,
    %c0_57 = arith.constant 0 : index
    %c128_58 = arith.constant 128 : index
    %86 = vector.load %arg15[%c0_57, %c128_58] : memref<128x512xbf16, #tpu.memory_space<vmem>>, vector<32x256xbf16>
    %c128_59 = arith.constant 128 : index
    %c0_60 = arith.constant 0 : index
    %87 = vector.load %arg16[%c128_59, %c0_60] : memref<1152x256xbf16, #tpu.memory_space<vmem>>, vector<32x256xbf16>
    tpu.vector_store %arg16[%c128_59, %c0_60], %86 {strides = array<i32>} : memref<1152x256xbf16, #tpu.memory_space<vmem>>, vector<32x256xbf16>,
    %c0_61 = arith.constant 0 : index
    %c129_62 = arith.constant 129 : index
    %88 = vector.load %arg15[%c0_61, %c129_62] : memref<128x512xbf16, #tpu.memory_space<vmem>>, vector<32x256xbf16>
    %89 = vector.broadcast %28 : vector<1x256xbf16> to vector<32x256xbf16>
    %90 = arith.mulf %88, %89 : vector<32x256xbf16>
    %c160 = arith.constant 160 : index
    %c0_63 = arith.constant 0 : index
    %91 = vector.load %arg16[%c160, %c0_63] : memref<1152x256xbf16, #tpu.memory_space<vmem>>, vector<32x256xbf16>
    tpu.vector_store %arg16[%c160, %c0_63], %90 {strides = array<i32>} : memref<1152x256xbf16, #tpu.memory_space<vmem>>, vector<32x256xbf16>,
    %c0_64 = arith.constant 0 : index
    %c143_65 = arith.constant 143 : index
    %92 = vector.load %arg15[%c0_64, %c143_65] : memref<128x512xbf16, #tpu.memory_space<vmem>>, vector<32x256xbf16>
    %93 = vector.broadcast %23 : vector<1x256xbf16> to vector<32x256xbf16>
    %94 = arith.mulf %92, %93 : vector<32x256xbf16>
    %c192 = arith.constant 192 : index
    %c0_66 = arith.constant 0 : index
    %95 = vector.load %arg16[%c192, %c0_66] : memref<1152x256xbf16, #tpu.memory_space<vmem>>, vector<32x256xbf16>
    tpu.vector_store %arg16[%c192, %c0_66], %94 {strides = array<i32>} : memref<1152x256xbf16, #tpu.memory_space<vmem>>, vector<32x256xbf16>,
    %c0_67 = arith.constant 0 : index
    %c144_68 = arith.constant 144 : index
    %96 = vector.load %arg15[%c0_67, %c144_68] : memref<128x512xbf16, #tpu.memory_space<vmem>>, vector<32x256xbf16>
    %c224 = arith.constant 224 : index
    %c0_69 = arith.constant 0 : index
    %97 = vector.load %arg16[%c224, %c0_69] : memref<1152x256xbf16, #tpu.memory_space<vmem>>, vector<32x256xbf16>
    tpu.vector_store %arg16[%c224, %c0_69], %96 {strides = array<i32>} : memref<1152x256xbf16, #tpu.memory_space<vmem>>, vector<32x256xbf16>,
    %c0_70 = arith.constant 0 : index
    %c145_71 = arith.constant 145 : index
    %98 = vector.load %arg15[%c0_70, %c145_71] : memref<128x512xbf16, #tpu.memory_space<vmem>>, vector<32x256xbf16>
    %99 = vector.broadcast %28 : vector<1x256xbf16> to vector<32x256xbf16>
    %100 = arith.mulf %98, %99 : vector<32x256xbf16>
    %c256 = arith.constant 256 : index
    %c0_72 = arith.constant 0 : index
    %101 = vector.load %arg16[%c256, %c0_72] : memref<1152x256xbf16, #tpu.memory_space<vmem>>, vector<32x256xbf16>
    tpu.vector_store %arg16[%c256, %c0_72], %100 {strides = array<i32>} : memref<1152x256xbf16, #tpu.memory_space<vmem>>, vector<32x256xbf16>,
    %c0_73 = arith.constant 0 : index
    %c0_74 = arith.constant 0 : index
    %102 = vector.load %arg4[%c0_73, %c0_74] : memref<64x288xbf16, #tpu.memory_space<vmem>>, vector<64x288xbf16>
    %c0_75 = arith.constant 0 : index
    %c0_76 = arith.constant 0 : index
    %103 = vector.load %arg16[%c0_75, %c0_76] : memref<1152x256xbf16, #tpu.memory_space<vmem>>, vector<288x256xbf16>
    %cst_77 = arith.constant dense<0.000000e+00> : vector<64x256xf32>
    %104 = tpu.matmul %102, %103, %cst_77 {dimension_numbers = #tpu.dot_dimension_numbers<[1], [0], [0], [1], [0, 0, 1, 1], [], []>} : vector<64x288xbf16>, vector<288x256xbf16>, vector<64x256xf32> -> vector<64x256xf32>
    %c0_78 = arith.constant 0 : index
    %c0_79 = arith.constant 0 : index
    %105 = vector.load %arg5[%c0_78, %c0_79] : memref<64x1xf32, #tpu.memory_space<vmem>>, vector<64x1xf32>
    %106 = vector.broadcast %105 : vector<64x1xf32> to vector<64x256xf32>
    %107 = arith.addf %104, %106 : vector<64x256xf32>
    %cst_80 = arith.constant 0.000000e+00 : f32
    %108 = vector.broadcast %cst_80 : f32 to vector<64x256xf32>
    %109 = arith.maximumf %107, %108 : vector<64x256xf32>
    %110 = arith.truncf %109 : vector<64x256xf32> to vector<64x256xbf16>
    %c0_81 = arith.constant 0 : index
    %c128_82 = arith.constant 128 : index
    %111 = vector.load %arg15[%c0_81, %c128_82] : memref<128x512xbf16, #tpu.memory_space<vmem>>, vector<64x256xbf16>
    tpu.vector_store %arg15[%c0_81, %c128_82], %110 {strides = array<i32>} : memref<128x512xbf16, #tpu.memory_space<vmem>>, vector<64x256xbf16>,
    %c0_83 = arith.constant 0 : index
    %c111_84 = arith.constant 111 : index
    %112 = vector.load %arg15[%c0_83, %c111_84] : memref<128x512xbf16, #tpu.memory_space<vmem>>, vector<64x256xbf16>
    %113 = vector.broadcast %23 : vector<1x256xbf16> to vector<64x256xbf16>
    %114 = arith.mulf %112, %113 : vector<64x256xbf16>
    %c0_85 = arith.constant 0 : index
    %c0_86 = arith.constant 0 : index
    %115 = vector.load %arg16[%c0_85, %c0_86] : memref<1152x256xbf16, #tpu.memory_space<vmem>>, vector<64x256xbf16>
    tpu.vector_store %arg16[%c0_85, %c0_86], %114 {strides = array<i32>} : memref<1152x256xbf16, #tpu.memory_space<vmem>>, vector<64x256xbf16>,
    %c0_87 = arith.constant 0 : index
    %c112_88 = arith.constant 112 : index
    %116 = vector.load %arg15[%c0_87, %c112_88] : memref<128x512xbf16, #tpu.memory_space<vmem>>, vector<64x256xbf16>
    %c64_89 = arith.constant 64 : index
    %c0_90 = arith.constant 0 : index
    %117 = vector.load %arg16[%c64_89, %c0_90] : memref<1152x256xbf16, #tpu.memory_space<vmem>>, vector<64x256xbf16>
    tpu.vector_store %arg16[%c64_89, %c0_90], %116 {strides = array<i32>} : memref<1152x256xbf16, #tpu.memory_space<vmem>>, vector<64x256xbf16>,
    %c0_91 = arith.constant 0 : index
    %c113_92 = arith.constant 113 : index
    %118 = vector.load %arg15[%c0_91, %c113_92] : memref<128x512xbf16, #tpu.memory_space<vmem>>, vector<64x256xbf16>
    %119 = vector.broadcast %28 : vector<1x256xbf16> to vector<64x256xbf16>
    %120 = arith.mulf %118, %119 : vector<64x256xbf16>
    %c128_93 = arith.constant 128 : index
    %c0_94 = arith.constant 0 : index
    %121 = vector.load %arg16[%c128_93, %c0_94] : memref<1152x256xbf16, #tpu.memory_space<vmem>>, vector<64x256xbf16>
    tpu.vector_store %arg16[%c128_93, %c0_94], %120 {strides = array<i32>} : memref<1152x256xbf16, #tpu.memory_space<vmem>>, vector<64x256xbf16>,
    %c0_95 = arith.constant 0 : index
    %c127_96 = arith.constant 127 : index
    %122 = vector.load %arg15[%c0_95, %c127_96] : memref<128x512xbf16, #tpu.memory_space<vmem>>, vector<64x256xbf16>
    %123 = vector.broadcast %23 : vector<1x256xbf16> to vector<64x256xbf16>
    %124 = arith.mulf %122, %123 : vector<64x256xbf16>
    %c192_97 = arith.constant 192 : index
    %c0_98 = arith.constant 0 : index
    %125 = vector.load %arg16[%c192_97, %c0_98] : memref<1152x256xbf16, #tpu.memory_space<vmem>>, vector<64x256xbf16>
    tpu.vector_store %arg16[%c192_97, %c0_98], %124 {strides = array<i32>} : memref<1152x256xbf16, #tpu.memory_space<vmem>>, vector<64x256xbf16>,
    %c0_99 = arith.constant 0 : index
    %c128_100 = arith.constant 128 : index
    %126 = vector.load %arg15[%c0_99, %c128_100] : memref<128x512xbf16, #tpu.memory_space<vmem>>, vector<64x256xbf16>
    %c256_101 = arith.constant 256 : index
    %c0_102 = arith.constant 0 : index
    %127 = vector.load %arg16[%c256_101, %c0_102] : memref<1152x256xbf16, #tpu.memory_space<vmem>>, vector<64x256xbf16>
    tpu.vector_store %arg16[%c256_101, %c0_102], %126 {strides = array<i32>} : memref<1152x256xbf16, #tpu.memory_space<vmem>>, vector<64x256xbf16>,
    %c0_103 = arith.constant 0 : index
    %c129_104 = arith.constant 129 : index
    %128 = vector.load %arg15[%c0_103, %c129_104] : memref<128x512xbf16, #tpu.memory_space<vmem>>, vector<64x256xbf16>
    %129 = vector.broadcast %28 : vector<1x256xbf16> to vector<64x256xbf16>
    %130 = arith.mulf %128, %129 : vector<64x256xbf16>
    %c320 = arith.constant 320 : index
    %c0_105 = arith.constant 0 : index
    %131 = vector.load %arg16[%c320, %c0_105] : memref<1152x256xbf16, #tpu.memory_space<vmem>>, vector<64x256xbf16>
    tpu.vector_store %arg16[%c320, %c0_105], %130 {strides = array<i32>} : memref<1152x256xbf16, #tpu.memory_space<vmem>>, vector<64x256xbf16>,
    %c0_106 = arith.constant 0 : index
    %c143_107 = arith.constant 143 : index
    %132 = vector.load %arg15[%c0_106, %c143_107] : memref<128x512xbf16, #tpu.memory_space<vmem>>, vector<64x256xbf16>
    %133 = vector.broadcast %23 : vector<1x256xbf16> to vector<64x256xbf16>
    %134 = arith.mulf %132, %133 : vector<64x256xbf16>
    %c384 = arith.constant 384 : index
    %c0_108 = arith.constant 0 : index
    %135 = vector.load %arg16[%c384, %c0_108] : memref<1152x256xbf16, #tpu.memory_space<vmem>>, vector<64x256xbf16>
    tpu.vector_store %arg16[%c384, %c0_108], %134 {strides = array<i32>} : memref<1152x256xbf16, #tpu.memory_space<vmem>>, vector<64x256xbf16>,
    %c0_109 = arith.constant 0 : index
    %c144_110 = arith.constant 144 : index
    %136 = vector.load %arg15[%c0_109, %c144_110] : memref<128x512xbf16, #tpu.memory_space<vmem>>, vector<64x256xbf16>
    %c448 = arith.constant 448 : index
    %c0_111 = arith.constant 0 : index
    %137 = vector.load %arg16[%c448, %c0_111] : memref<1152x256xbf16, #tpu.memory_space<vmem>>, vector<64x256xbf16>
    tpu.vector_store %arg16[%c448, %c0_111], %136 {strides = array<i32>} : memref<1152x256xbf16, #tpu.memory_space<vmem>>, vector<64x256xbf16>,
    %c0_112 = arith.constant 0 : index
    %c145_113 = arith.constant 145 : index
    %138 = vector.load %arg15[%c0_112, %c145_113] : memref<128x512xbf16, #tpu.memory_space<vmem>>, vector<64x256xbf16>
    %139 = vector.broadcast %28 : vector<1x256xbf16> to vector<64x256xbf16>
    %140 = arith.mulf %138, %139 : vector<64x256xbf16>
    %c512 = arith.constant 512 : index
    %c0_114 = arith.constant 0 : index
    %141 = vector.load %arg16[%c512, %c0_114] : memref<1152x256xbf16, #tpu.memory_space<vmem>>, vector<64x256xbf16>
    tpu.vector_store %arg16[%c512, %c0_114], %140 {strides = array<i32>} : memref<1152x256xbf16, #tpu.memory_space<vmem>>, vector<64x256xbf16>,
    %c0_115 = arith.constant 0 : index
    %c0_116 = arith.constant 0 : index
    %142 = vector.load %arg6[%c0_115, %c0_116] : memref<128x576xbf16, #tpu.memory_space<vmem>>, vector<128x576xbf16>
    %c0_117 = arith.constant 0 : index
    %c0_118 = arith.constant 0 : index
    %143 = vector.load %arg16[%c0_117, %c0_118] : memref<1152x256xbf16, #tpu.memory_space<vmem>>, vector<576x256xbf16>
    %cst_119 = arith.constant dense<0.000000e+00> : vector<128x256xf32>
    %144 = tpu.matmul %142, %143, %cst_119 {dimension_numbers = #tpu.dot_dimension_numbers<[1], [0], [0], [1], [0, 0, 1, 1], [], []>} : vector<128x576xbf16>, vector<576x256xbf16>, vector<128x256xf32> -> vector<128x256xf32>
    %c0_120 = arith.constant 0 : index
    %c0_121 = arith.constant 0 : index
    %145 = vector.load %arg7[%c0_120, %c0_121] : memref<128x1xf32, #tpu.memory_space<vmem>>, vector<128x1xf32>
    %146 = vector.broadcast %145 : vector<128x1xf32> to vector<128x256xf32>
    %147 = arith.addf %144, %146 : vector<128x256xf32>
    %cst_122 = arith.constant 0.000000e+00 : f32
    %148 = vector.broadcast %cst_122 : f32 to vector<128x256xf32>
    %149 = arith.maximumf %147, %148 : vector<128x256xf32>
    %150 = arith.truncf %149 : vector<128x256xf32> to vector<128x256xbf16>
    %c0_123 = arith.constant 0 : index
    %c128_124 = arith.constant 128 : index
    %151 = vector.load %arg15[%c0_123, %c128_124] : memref<128x512xbf16, #tpu.memory_space<vmem>>, vector<128x256xbf16>
    tpu.vector_store %arg15[%c0_123, %c128_124], %150 {strides = array<i32>} : memref<128x512xbf16, #tpu.memory_space<vmem>>, vector<128x256xbf16>,
    %c0_125 = arith.constant 0 : index
    %c111_126 = arith.constant 111 : index
    %152 = vector.load %arg15[%c0_125, %c111_126] : memref<128x512xbf16, #tpu.memory_space<vmem>>, vector<128x256xbf16>
    %153 = vector.broadcast %23 : vector<1x256xbf16> to vector<128x256xbf16>
    %154 = arith.mulf %152, %153 : vector<128x256xbf16>
    %c0_127 = arith.constant 0 : index
    %c0_128 = arith.constant 0 : index
    %155 = vector.load %arg16[%c0_127, %c0_128] : memref<1152x256xbf16, #tpu.memory_space<vmem>>, vector<128x256xbf16>
    tpu.vector_store %arg16[%c0_127, %c0_128], %154 {strides = array<i32>} : memref<1152x256xbf16, #tpu.memory_space<vmem>>, vector<128x256xbf16>,
    %c0_129 = arith.constant 0 : index
    %c112_130 = arith.constant 112 : index
    %156 = vector.load %arg15[%c0_129, %c112_130] : memref<128x512xbf16, #tpu.memory_space<vmem>>, vector<128x256xbf16>
    %c128_131 = arith.constant 128 : index
    %c0_132 = arith.constant 0 : index
    %157 = vector.load %arg16[%c128_131, %c0_132] : memref<1152x256xbf16, #tpu.memory_space<vmem>>, vector<128x256xbf16>
    tpu.vector_store %arg16[%c128_131, %c0_132], %156 {strides = array<i32>} : memref<1152x256xbf16, #tpu.memory_space<vmem>>, vector<128x256xbf16>,
    %c0_133 = arith.constant 0 : index
    %c113_134 = arith.constant 113 : index
    %158 = vector.load %arg15[%c0_133, %c113_134] : memref<128x512xbf16, #tpu.memory_space<vmem>>, vector<128x256xbf16>
    %159 = vector.broadcast %28 : vector<1x256xbf16> to vector<128x256xbf16>
    %160 = arith.mulf %158, %159 : vector<128x256xbf16>
    %c256_135 = arith.constant 256 : index
    %c0_136 = arith.constant 0 : index
    %161 = vector.load %arg16[%c256_135, %c0_136] : memref<1152x256xbf16, #tpu.memory_space<vmem>>, vector<128x256xbf16>
    tpu.vector_store %arg16[%c256_135, %c0_136], %160 {strides = array<i32>} : memref<1152x256xbf16, #tpu.memory_space<vmem>>, vector<128x256xbf16>,
    %c0_137 = arith.constant 0 : index
    %c127_138 = arith.constant 127 : index
    %162 = vector.load %arg15[%c0_137, %c127_138] : memref<128x512xbf16, #tpu.memory_space<vmem>>, vector<128x256xbf16>
    %163 = vector.broadcast %23 : vector<1x256xbf16> to vector<128x256xbf16>
    %164 = arith.mulf %162, %163 : vector<128x256xbf16>
    %c384_139 = arith.constant 384 : index
    %c0_140 = arith.constant 0 : index
    %165 = vector.load %arg16[%c384_139, %c0_140] : memref<1152x256xbf16, #tpu.memory_space<vmem>>, vector<128x256xbf16>
    tpu.vector_store %arg16[%c384_139, %c0_140], %164 {strides = array<i32>} : memref<1152x256xbf16, #tpu.memory_space<vmem>>, vector<128x256xbf16>,
    %c0_141 = arith.constant 0 : index
    %c128_142 = arith.constant 128 : index
    %166 = vector.load %arg15[%c0_141, %c128_142] : memref<128x512xbf16, #tpu.memory_space<vmem>>, vector<128x256xbf16>
    %c512_143 = arith.constant 512 : index
    %c0_144 = arith.constant 0 : index
    %167 = vector.load %arg16[%c512_143, %c0_144] : memref<1152x256xbf16, #tpu.memory_space<vmem>>, vector<128x256xbf16>
    tpu.vector_store %arg16[%c512_143, %c0_144], %166 {strides = array<i32>} : memref<1152x256xbf16, #tpu.memory_space<vmem>>, vector<128x256xbf16>,
    %c0_145 = arith.constant 0 : index
    %c129_146 = arith.constant 129 : index
    %168 = vector.load %arg15[%c0_145, %c129_146] : memref<128x512xbf16, #tpu.memory_space<vmem>>, vector<128x256xbf16>
    %169 = vector.broadcast %28 : vector<1x256xbf16> to vector<128x256xbf16>
    %170 = arith.mulf %168, %169 : vector<128x256xbf16>
    %c640 = arith.constant 640 : index
    %c0_147 = arith.constant 0 : index
    %171 = vector.load %arg16[%c640, %c0_147] : memref<1152x256xbf16, #tpu.memory_space<vmem>>, vector<128x256xbf16>
    tpu.vector_store %arg16[%c640, %c0_147], %170 {strides = array<i32>} : memref<1152x256xbf16, #tpu.memory_space<vmem>>, vector<128x256xbf16>,
    %c0_148 = arith.constant 0 : index
    %c143_149 = arith.constant 143 : index
    %172 = vector.load %arg15[%c0_148, %c143_149] : memref<128x512xbf16, #tpu.memory_space<vmem>>, vector<128x256xbf16>
    %173 = vector.broadcast %23 : vector<1x256xbf16> to vector<128x256xbf16>
    %174 = arith.mulf %172, %173 : vector<128x256xbf16>
    %c768 = arith.constant 768 : index
    %c0_150 = arith.constant 0 : index
    %175 = vector.load %arg16[%c768, %c0_150] : memref<1152x256xbf16, #tpu.memory_space<vmem>>, vector<128x256xbf16>
    tpu.vector_store %arg16[%c768, %c0_150], %174 {strides = array<i32>} : memref<1152x256xbf16, #tpu.memory_space<vmem>>, vector<128x256xbf16>,
    %c0_151 = arith.constant 0 : index
    %c144_152 = arith.constant 144 : index
    %176 = vector.load %arg15[%c0_151, %c144_152] : memref<128x512xbf16, #tpu.memory_space<vmem>>, vector<128x256xbf16>
    %c896 = arith.constant 896 : index
    %c0_153 = arith.constant 0 : index
    %177 = vector.load %arg16[%c896, %c0_153] : memref<1152x256xbf16, #tpu.memory_space<vmem>>, vector<128x256xbf16>
    tpu.vector_store %arg16[%c896, %c0_153], %176 {strides = array<i32>} : memref<1152x256xbf16, #tpu.memory_space<vmem>>, vector<128x256xbf16>,
    %c0_154 = arith.constant 0 : index
    %c145_155 = arith.constant 145 : index
    %178 = vector.load %arg15[%c0_154, %c145_155] : memref<128x512xbf16, #tpu.memory_space<vmem>>, vector<128x256xbf16>
    %179 = vector.broadcast %28 : vector<1x256xbf16> to vector<128x256xbf16>
    %180 = arith.mulf %178, %179 : vector<128x256xbf16>
    %c1024 = arith.constant 1024 : index
    %c0_156 = arith.constant 0 : index
    %181 = vector.load %arg16[%c1024, %c0_156] : memref<1152x256xbf16, #tpu.memory_space<vmem>>, vector<128x256xbf16>
    tpu.vector_store %arg16[%c1024, %c0_156], %180 {strides = array<i32>} : memref<1152x256xbf16, #tpu.memory_space<vmem>>, vector<128x256xbf16>,
    %c0_157 = arith.constant 0 : index
    %c0_158 = arith.constant 0 : index
    %182 = vector.load %arg8[%c0_157, %c0_158] : memref<64x1152xbf16, #tpu.memory_space<vmem>>, vector<64x1152xbf16>
    %c0_159 = arith.constant 0 : index
    %c0_160 = arith.constant 0 : index
    %183 = vector.load %arg16[%c0_159, %c0_160] : memref<1152x256xbf16, #tpu.memory_space<vmem>>, vector<1152x256xbf16>
    %cst_161 = arith.constant dense<0.000000e+00> : vector<64x256xf32>
    %184 = tpu.matmul %182, %183, %cst_161 {dimension_numbers = #tpu.dot_dimension_numbers<[1], [0], [0], [1], [0, 0, 1, 1], [], []>} : vector<64x1152xbf16>, vector<1152x256xbf16>, vector<64x256xf32> -> vector<64x256xf32>
    %c0_162 = arith.constant 0 : index
    %c0_163 = arith.constant 0 : index
    %185 = vector.load %arg9[%c0_162, %c0_163] : memref<64x1xf32, #tpu.memory_space<vmem>>, vector<64x1xf32>
    %186 = vector.broadcast %185 : vector<64x1xf32> to vector<64x256xf32>
    %187 = arith.addf %184, %186 : vector<64x256xf32>
    %cst_164 = arith.constant 0.000000e+00 : f32
    %188 = vector.broadcast %cst_164 : f32 to vector<64x256xf32>
    %189 = arith.maximumf %187, %188 : vector<64x256xf32>
    %190 = arith.truncf %189 : vector<64x256xf32> to vector<64x256xbf16>
    %c0_165 = arith.constant 0 : index
    %c128_166 = arith.constant 128 : index
    %191 = vector.load %arg15[%c0_165, %c128_166] : memref<128x512xbf16, #tpu.memory_space<vmem>>, vector<64x256xbf16>
    tpu.vector_store %arg15[%c0_165, %c128_166], %190 {strides = array<i32>} : memref<128x512xbf16, #tpu.memory_space<vmem>>, vector<64x256xbf16>,
    %c0_167 = arith.constant 0 : index
    %c111_168 = arith.constant 111 : index
    %192 = vector.load %arg15[%c0_167, %c111_168] : memref<128x512xbf16, #tpu.memory_space<vmem>>, vector<64x256xbf16>
    %193 = vector.broadcast %23 : vector<1x256xbf16> to vector<64x256xbf16>
    %194 = arith.mulf %192, %193 : vector<64x256xbf16>
    %c0_169 = arith.constant 0 : index
    %c0_170 = arith.constant 0 : index
    %195 = vector.load %arg16[%c0_169, %c0_170] : memref<1152x256xbf16, #tpu.memory_space<vmem>>, vector<64x256xbf16>
    tpu.vector_store %arg16[%c0_169, %c0_170], %194 {strides = array<i32>} : memref<1152x256xbf16, #tpu.memory_space<vmem>>, vector<64x256xbf16>,
    %c0_171 = arith.constant 0 : index
    %c112_172 = arith.constant 112 : index
    %196 = vector.load %arg15[%c0_171, %c112_172] : memref<128x512xbf16, #tpu.memory_space<vmem>>, vector<64x256xbf16>
    %c64_173 = arith.constant 64 : index
    %c0_174 = arith.constant 0 : index
    %197 = vector.load %arg16[%c64_173, %c0_174] : memref<1152x256xbf16, #tpu.memory_space<vmem>>, vector<64x256xbf16>
    tpu.vector_store %arg16[%c64_173, %c0_174], %196 {strides = array<i32>} : memref<1152x256xbf16, #tpu.memory_space<vmem>>, vector<64x256xbf16>,
    %c0_175 = arith.constant 0 : index
    %c113_176 = arith.constant 113 : index
    %198 = vector.load %arg15[%c0_175, %c113_176] : memref<128x512xbf16, #tpu.memory_space<vmem>>, vector<64x256xbf16>
    %199 = vector.broadcast %28 : vector<1x256xbf16> to vector<64x256xbf16>
    %200 = arith.mulf %198, %199 : vector<64x256xbf16>
    %c128_177 = arith.constant 128 : index
    %c0_178 = arith.constant 0 : index
    %201 = vector.load %arg16[%c128_177, %c0_178] : memref<1152x256xbf16, #tpu.memory_space<vmem>>, vector<64x256xbf16>
    tpu.vector_store %arg16[%c128_177, %c0_178], %200 {strides = array<i32>} : memref<1152x256xbf16, #tpu.memory_space<vmem>>, vector<64x256xbf16>,
    %c0_179 = arith.constant 0 : index
    %c127_180 = arith.constant 127 : index
    %202 = vector.load %arg15[%c0_179, %c127_180] : memref<128x512xbf16, #tpu.memory_space<vmem>>, vector<64x256xbf16>
    %203 = vector.broadcast %23 : vector<1x256xbf16> to vector<64x256xbf16>
    %204 = arith.mulf %202, %203 : vector<64x256xbf16>
    %c192_181 = arith.constant 192 : index
    %c0_182 = arith.constant 0 : index
    %205 = vector.load %arg16[%c192_181, %c0_182] : memref<1152x256xbf16, #tpu.memory_space<vmem>>, vector<64x256xbf16>
    tpu.vector_store %arg16[%c192_181, %c0_182], %204 {strides = array<i32>} : memref<1152x256xbf16, #tpu.memory_space<vmem>>, vector<64x256xbf16>,
    %c0_183 = arith.constant 0 : index
    %c128_184 = arith.constant 128 : index
    %206 = vector.load %arg15[%c0_183, %c128_184] : memref<128x512xbf16, #tpu.memory_space<vmem>>, vector<64x256xbf16>
    %c256_185 = arith.constant 256 : index
    %c0_186 = arith.constant 0 : index
    %207 = vector.load %arg16[%c256_185, %c0_186] : memref<1152x256xbf16, #tpu.memory_space<vmem>>, vector<64x256xbf16>
    tpu.vector_store %arg16[%c256_185, %c0_186], %206 {strides = array<i32>} : memref<1152x256xbf16, #tpu.memory_space<vmem>>, vector<64x256xbf16>,
    %c0_187 = arith.constant 0 : index
    %c129_188 = arith.constant 129 : index
    %208 = vector.load %arg15[%c0_187, %c129_188] : memref<128x512xbf16, #tpu.memory_space<vmem>>, vector<64x256xbf16>
    %209 = vector.broadcast %28 : vector<1x256xbf16> to vector<64x256xbf16>
    %210 = arith.mulf %208, %209 : vector<64x256xbf16>
    %c320_189 = arith.constant 320 : index
    %c0_190 = arith.constant 0 : index
    %211 = vector.load %arg16[%c320_189, %c0_190] : memref<1152x256xbf16, #tpu.memory_space<vmem>>, vector<64x256xbf16>
    tpu.vector_store %arg16[%c320_189, %c0_190], %210 {strides = array<i32>} : memref<1152x256xbf16, #tpu.memory_space<vmem>>, vector<64x256xbf16>,
    %c0_191 = arith.constant 0 : index
    %c143_192 = arith.constant 143 : index
    %212 = vector.load %arg15[%c0_191, %c143_192] : memref<128x512xbf16, #tpu.memory_space<vmem>>, vector<64x256xbf16>
    %213 = vector.broadcast %23 : vector<1x256xbf16> to vector<64x256xbf16>
    %214 = arith.mulf %212, %213 : vector<64x256xbf16>
    %c384_193 = arith.constant 384 : index
    %c0_194 = arith.constant 0 : index
    %215 = vector.load %arg16[%c384_193, %c0_194] : memref<1152x256xbf16, #tpu.memory_space<vmem>>, vector<64x256xbf16>
    tpu.vector_store %arg16[%c384_193, %c0_194], %214 {strides = array<i32>} : memref<1152x256xbf16, #tpu.memory_space<vmem>>, vector<64x256xbf16>,
    %c0_195 = arith.constant 0 : index
    %c144_196 = arith.constant 144 : index
    %216 = vector.load %arg15[%c0_195, %c144_196] : memref<128x512xbf16, #tpu.memory_space<vmem>>, vector<64x256xbf16>
    %c448_197 = arith.constant 448 : index
    %c0_198 = arith.constant 0 : index
    %217 = vector.load %arg16[%c448_197, %c0_198] : memref<1152x256xbf16, #tpu.memory_space<vmem>>, vector<64x256xbf16>
    tpu.vector_store %arg16[%c448_197, %c0_198], %216 {strides = array<i32>} : memref<1152x256xbf16, #tpu.memory_space<vmem>>, vector<64x256xbf16>,
    %c0_199 = arith.constant 0 : index
    %c145_200 = arith.constant 145 : index
    %218 = vector.load %arg15[%c0_199, %c145_200] : memref<128x512xbf16, #tpu.memory_space<vmem>>, vector<64x256xbf16>
    %219 = vector.broadcast %28 : vector<1x256xbf16> to vector<64x256xbf16>
    %220 = arith.mulf %218, %219 : vector<64x256xbf16>
    %c512_201 = arith.constant 512 : index
    %c0_202 = arith.constant 0 : index
    %221 = vector.load %arg16[%c512_201, %c0_202] : memref<1152x256xbf16, #tpu.memory_space<vmem>>, vector<64x256xbf16>
    tpu.vector_store %arg16[%c512_201, %c0_202], %220 {strides = array<i32>} : memref<1152x256xbf16, #tpu.memory_space<vmem>>, vector<64x256xbf16>,
    %c0_203 = arith.constant 0 : index
    %c0_204 = arith.constant 0 : index
    %222 = vector.load %arg10[%c0_203, %c0_204] : memref<32x576xbf16, #tpu.memory_space<vmem>>, vector<32x576xbf16>
    %c0_205 = arith.constant 0 : index
    %c0_206 = arith.constant 0 : index
    %223 = vector.load %arg16[%c0_205, %c0_206] : memref<1152x256xbf16, #tpu.memory_space<vmem>>, vector<576x256xbf16>
    %cst_207 = arith.constant dense<0.000000e+00> : vector<32x256xf32>
    %224 = tpu.matmul %222, %223, %cst_207 {dimension_numbers = #tpu.dot_dimension_numbers<[1], [0], [0], [1], [0, 0, 1, 1], [], []>} : vector<32x576xbf16>, vector<576x256xbf16>, vector<32x256xf32> -> vector<32x256xf32>
    %c0_208 = arith.constant 0 : index
    %c0_209 = arith.constant 0 : index
    %225 = vector.load %arg11[%c0_208, %c0_209] : memref<32x1xf32, #tpu.memory_space<vmem>>, vector<32x1xf32>
    %226 = vector.broadcast %225 : vector<32x1xf32> to vector<32x256xf32>
    %227 = arith.addf %224, %226 : vector<32x256xf32>
    %cst_210 = arith.constant 0.000000e+00 : f32
    %228 = vector.broadcast %cst_210 : f32 to vector<32x256xf32>
    %229 = arith.maximumf %227, %228 : vector<32x256xf32>
    %c0_211 = arith.constant 0 : index
    %c0_212 = arith.constant 0 : index
    %230 = vector.load %arg12[%c0_211, %c0_212] : memref<2x32xbf16, #tpu.memory_space<vmem>>, vector<2x32xbf16>
    %231 = arith.truncf %229 : vector<32x256xf32> to vector<32x256xbf16>
    %cst_213 = arith.constant dense<0.000000e+00> : vector<2x256xf32>
    %232 = tpu.matmul %230, %231, %cst_213 {dimension_numbers = #tpu.dot_dimension_numbers<[1], [0], [0], [1], [0, 0, 1, 1], [], []>} : vector<2x32xbf16>, vector<32x256xbf16>, vector<2x256xf32> -> vector<2x256xf32>
    %c0_214 = arith.constant 0 : index
    %c0_215 = arith.constant 0 : index
    %233 = vector.load %arg13[%c0_214, %c0_215] : memref<2x1xf32, #tpu.memory_space<vmem>>, vector<2x1xf32>
    %234 = vector.broadcast %233 : vector<2x1xf32> to vector<2x256xf32>
    %235 = arith.addf %232, %234 : vector<2x256xf32>
    %c0_216 = arith.constant 0 : index
    %c0_217 = arith.constant 0 : index
    %c0_218 = arith.constant 0 : index
    %236 = vector.load %arg14[%c0_216, %c0_217, %c0_218] : memref<1x2x256xf32, #tpu.memory_space<vmem>>, vector<1x2x256xf32>
    %237 = vector.shape_cast %236 : vector<1x2x256xf32> to vector<2x256xf32>
    %238 = vector.shape_cast %235 : vector<2x256xf32> to vector<1x2x256xf32>
    tpu.vector_store %arg14[%c0_216, %c0_217, %c0_218], %238 {strides = array<i32>} : memref<1x2x256xf32, #tpu.memory_space<vmem>>, vector<1x2x256xf32>,
    return
  }
  func.func @transform_0(%arg0: i32) -> (i32, i32, i32) {
    %c0_i32 = arith.constant 0 : i32
    %c0_i32_0 = arith.constant 0 : i32
    %c0_i32_1 = arith.constant 0 : i32
    return %arg0, %c0_i32, %c0_i32_0 : i32, i32, i32
  }
  func.func @transform_1(%arg0: i32) -> (i32, i32) {
    %c0_i32 = arith.constant 0 : i32
    %c0_i32_0 = arith.constant 0 : i32
    %c0_i32_1 = arith.constant 0 : i32
    return %c0_i32, %c0_i32_0 : i32, i32
  }
  func.func @transform_2(%arg0: i32) -> (i32, i32) {
    %c0_i32 = arith.constant 0 : i32
    %c0_i32_0 = arith.constant 0 : i32
    %c0_i32_1 = arith.constant 0 : i32
    return %c0_i32, %c0_i32_0 : i32, i32
  }
  func.func @transform_3(%arg0: i32) -> (i32, i32) {
    %c0_i32 = arith.constant 0 : i32
    %c0_i32_0 = arith.constant 0 : i32
    %c0_i32_1 = arith.constant 0 : i32
    return %c0_i32, %c0_i32_0 : i32, i32
  }
  func.func @transform_4(%arg0: i32) -> (i32, i32) {
    %c0_i32 = arith.constant 0 : i32
    %c0_i32_0 = arith.constant 0 : i32
    %c0_i32_1 = arith.constant 0 : i32
    return %c0_i32, %c0_i32_0 : i32, i32
  }
  func.func @transform_5(%arg0: i32) -> (i32, i32) {
    %c0_i32 = arith.constant 0 : i32
    %c0_i32_0 = arith.constant 0 : i32
    %c0_i32_1 = arith.constant 0 : i32
    return %c0_i32, %c0_i32_0 : i32, i32
  }
  func.func @transform_6(%arg0: i32) -> (i32, i32) {
    %c0_i32 = arith.constant 0 : i32
    %c0_i32_0 = arith.constant 0 : i32
    %c0_i32_1 = arith.constant 0 : i32
    return %c0_i32, %c0_i32_0 : i32, i32
  }
  func.func @transform_7(%arg0: i32) -> (i32, i32) {
    %c0_i32 = arith.constant 0 : i32
    %c0_i32_0 = arith.constant 0 : i32
    %c0_i32_1 = arith.constant 0 : i32
    return %c0_i32, %c0_i32_0 : i32, i32
  }
  func.func @transform_8(%arg0: i32) -> (i32, i32) {
    %c0_i32 = arith.constant 0 : i32
    %c0_i32_0 = arith.constant 0 : i32
    %c0_i32_1 = arith.constant 0 : i32
    return %c0_i32, %c0_i32_0 : i32, i32
  }
  func.func @transform_9(%arg0: i32) -> (i32, i32) {
    %c0_i32 = arith.constant 0 : i32
    %c0_i32_0 = arith.constant 0 : i32
    %c0_i32_1 = arith.constant 0 : i32
    return %c0_i32, %c0_i32_0 : i32, i32
  }
  func.func @transform_10(%arg0: i32) -> (i32, i32) {
    %c0_i32 = arith.constant 0 : i32
    %c0_i32_0 = arith.constant 0 : i32
    %c0_i32_1 = arith.constant 0 : i32
    return %c0_i32, %c0_i32_0 : i32, i32
  }
  func.func @transform_11(%arg0: i32) -> (i32, i32) {
    %c0_i32 = arith.constant 0 : i32
    %c0_i32_0 = arith.constant 0 : i32
    %c0_i32_1 = arith.constant 0 : i32
    return %c0_i32, %c0_i32_0 : i32, i32
  }
  func.func @transform_12(%arg0: i32) -> (i32, i32) {
    %c0_i32 = arith.constant 0 : i32
    %c0_i32_0 = arith.constant 0 : i32
    %c0_i32_1 = arith.constant 0 : i32
    return %c0_i32, %c0_i32_0 : i32, i32
  }
  func.func @transform_13(%arg0: i32) -> (i32, i32, i32) {
    %c0_i32 = arith.constant 0 : i32
    %c0_i32_0 = arith.constant 0 : i32
    %c0_i32_1 = arith.constant 0 : i32
    return %arg0, %c0_i32, %c0_i32_0 : i32, i32, i32
  }
}

</mosaic_0001>

<llo_original>
// kernel: topology_cnn_forward.1
$region0: #{topology_cnn_forward.1}
  #allocation0 [shape = 'u32[]', space=smem, size = 0x4, offset = 0x4, fixed_abs, tag = 'smem constant byte address 0x4 - core index']
  #allocation1 [shape = 'u32[144,128]{1,0:T(1,128)}', space=vmem, size = 0x12000, scoped, tag = 'internal scratch']
  #allocation2 [shape = 'bf16[128,512]{1,0:T(16,128)(2,1)}', space=vmem, size = 0x20000, scoped, tag = 'scratch operand']
  #allocation3 [shape = 'bf16[1152,256]{1,0:T(16,128)(2,1)}', space=vmem, size = 0x90000, scoped, tag = 'scratch operand']
  %s0 = inlined_call_operand.vmem [shape: bf16[2,16,256], index: 0, kind: input, shape index: {}]
  %s1 = inlined_call_operand.vmem [shape: bf16[32,144], index: 1, kind: input, shape index: {}]
  %s2 = inlined_call_operand.vmem [shape: f32[32,1], index: 2, kind: input, shape index: {}]
  %s3 = inlined_call_operand.vmem [shape: bf16[64,288], index: 3, kind: input, shape index: {}]
  %s4 = inlined_call_operand.vmem [shape: f32[64,1], index: 4, kind: input, shape index: {}]
  %s5 = inlined_call_operand.vmem [shape: bf16[128,576], index: 5, kind: input, shape index: {}]
  %s6 = inlined_call_operand.vmem [shape: f32[128,1], index: 6, kind: input, shape index: {}]
  %s7 = inlined_call_operand.vmem [shape: bf16[64,1152], index: 7, kind: input, shape index: {}]
  %s8 = inlined_call_operand.vmem [shape: f32[64,1], index: 8, kind: input, shape index: {}]
  %s9 = inlined_call_operand.vmem [shape: bf16[32,576], index: 9, kind: input, shape index: {}]
  %s10 = inlined_call_operand.vmem [shape: f32[32,1], index: 10, kind: input, shape index: {}]
  %s11 = inlined_call_operand.vmem [shape: bf16[2,32], index: 11, kind: input, shape index: {}]
  %s12 = inlined_call_operand.vmem [shape: f32[2,1], index: 12, kind: input, shape index: {}]
  %s13 = inlined_call_operand.vmem [shape: f32[2,2,256], index: 13, kind: output, shape index: {}]
  %s14 = sld [smem:[#allocation0]]
  $region85: #{topology_cnn_forward.1} parent=0
    _
  %s16 = ssub.s32 1, %s14
  %s17 = scalar_select 0, %s16, %s14
  loop: start=0, step=1, limit=4
  $region2: #{topology_cnn_forward.1} parent=0 // loop_pre_header
    _
  $region3: #{topology_cnn_forward.1} parent=0 // loop_header
    %s19 = sphi 0, %s23
    %p20 = scmp.ge.s32.totalorder %s19, 4
    %s29 = sphi 0, %s31
    %s32 = sphi 0, %s29
    %s33 = sphi 0, %s32
    %s49 = sphi 0, %s33
    %s53 = sphi 0, %s53
    %s55 = sphi 0, %s53
    %s56 = sphi 0, %s55
    %s70 = sphi 0, %s56
    %s74 = sphi 0, %s74
    %s76 = sphi 0, %s74
    %s77 = sphi 0, %s76
    %s91 = sphi 0, %s77
    %s95 = sphi 0, %s95
    %s97 = sphi 0, %s95
    %s98 = sphi 0, %s97
    %s112 = sphi 0, %s98
    %s116 = sphi 0, %s116
    %s118 = sphi 0, %s116
    %s119 = sphi 0, %s118
    %s133 = sphi 0, %s119
    %s137 = sphi 0, %s137
    %s139 = sphi 0, %s137
    %s140 = sphi 0, %s139
    %s154 = sphi 0, %s140
    %s158 = sphi 0, %s158
    %s160 = sphi 0, %s158
    %s161 = sphi 0, %s160
    %s175 = sphi 0, %s161
    %s179 = sphi 0, %s179
    %s181 = sphi 0, %s179
    %s182 = sphi 0, %s181
    %s196 = sphi 0, %s182
    %s200 = sphi 0, %s200
    %s202 = sphi 0, %s200
    %s203 = sphi 0, %s202
    %s217 = sphi 0, %s203
    %s221 = sphi 0, %s221
    %s223 = sphi 0, %s221
    %s224 = sphi 0, %s223
    %s238 = sphi 0, %s224
    %s242 = sphi 0, %s242
    %s244 = sphi 0, %s242
    %s245 = sphi 0, %s244
    %s259 = sphi 0, %s245
    %s263 = sphi 0, %s263
    %s265 = sphi 0, %s263
    %s266 = sphi 0, %s265
    %s280 = sphi 0, %s266
    %s284 = sphi 0, %s284
    %s286 = sphi 0, %s284
    %s287 = sphi 0, %s286
    %s301 = sphi 0, %s287
    %s307 = sphi 0, %s309
    %s310 = sphi 0, %s307
    %s311 = sphi 0, %s310
    %s327 = sphi 0, %s311
  $region4: #{topology_cnn_forward.1} parent=0 // loop_header_branch
    %22 = sbr.rel (%p20) target = $region8
  $region5: #{topology_cnn_forward.1} parent=0 // loop_body
    %s24 = ssub.s32 %s19, 1
    %s25 = ssub.s32 %s19, 2
    %s26 = sadd.s32 %s19, 1
    %s27 = ssub.s32 %s19, %s26
    %p28 = scmp.eq.s32.totalorder %s27, 0
    %s30 = sadd.s32 %s29, 1
    %s31 = scalar_select %p28, %s29, %s30
    %p34 = pneg %p28
    %p35 = scmp.eq.s32.totalorder %s19, 1
    %p36 = por %p34, %p35
    %p37 = scmp.ne.s32.totalorder %s29, %s32
    %p38 = scmp.eq.s32.totalorder %s19, 0
    %p39 = por %p37, %p38
    %p40 = scmp.ne.s32.totalorder %s29, %s32
    %p41 = scmp.eq.s32.totalorder %s24, 1
    %p42 = por %p40, %p41
    %p43 = scmp.ne.s32.totalorder %s32, %s33
    %p44 = scmp.eq.s32.totalorder %s24, 0
    %p45 = por %p43, %p44
    %p46 = scmp.ne.s32.totalorder %s32, %s33
    %p47 = scmp.eq.s32.totalorder %s25, 1
    %p48 = por %p46, %p47
    %p50 = scmp.ne.s32.totalorder %s33, %s49
    %p51 = scmp.eq.s32.totalorder %s25, 0
    %p52 = por %p50, %p51
    %s54 = sadd.s32 %s53, 1
    %p57 = scmp.eq.s32.totalorder %s19, 1
    %p58 = scmp.ne.s32.totalorder %s53, %s55
    %p59 = scmp.eq.s32.totalorder %s19, 0
    %p60 = por %p58, %p59
    %p61 = scmp.ne.s32.totalorder %s53, %s55
    %p62 = scmp.eq.s32.totalorder %s24, 1
    %p63 = por %p61, %p62
    %p64 = scmp.ne.s32.totalorder %s55, %s56
    %p65 = scmp.eq.s32.totalorder %s24, 0
    %p66 = por %p64, %p65
    %p67 = scmp.ne.s32.totalorder %s55, %s56
    %p68 = scmp.eq.s32.totalorder %s25, 1
    %p69 = por %p67, %p68
    %p71 = scmp.ne.s32.totalorder %s56, %s70
    %p72 = scmp.eq.s32.totalorder %s25, 0
    %p73 = por %p71, %p72
    %s75 = sadd.s32 %s74, 1
    %p78 = scmp.eq.s32.totalorder %s19, 1
    %p79 = scmp.ne.s32.totalorder %s74, %s76
    %p80 = scmp.eq.s32.totalorder %s19, 0
    %p81 = por %p79, %p80
    %p82 = scmp.ne.s32.totalorder %s74, %s76
    %p83 = scmp.eq.s32.totalorder %s24, 1
    %p84 = por %p82, %p83
    %p85 = scmp.ne.s32.totalorder %s76, %s77
    %p86 = scmp.eq.s32.totalorder %s24, 0
    %p87 = por %p85, %p86
    %p88 = scmp.ne.s32.totalorder %s76, %s77
    %p89 = scmp.eq.s32.totalorder %s25, 1
    %p90 = por %p88, %p89
    %p92 = scmp.ne.s32.totalorder %s77, %s91
    %p93 = scmp.eq.s32.totalorder %s25, 0
    %p94 = por %p92, %p93
    %s96 = sadd.s32 %s95, 1
    %p99 = scmp.eq.s32.totalorder %s19, 1
    %p100 = scmp.ne.s32.totalorder %s95, %s97
    %p101 = scmp.eq.s32.totalorder %s19, 0
    %p102 = por %p100, %p101
    %p103 = scmp.ne.s32.totalorder %s95, %s97
    %p104 = scmp.eq.s32.totalorder %s24, 1
    %p105 = por %p103, %p104
    %p106 = scmp.ne.s32.totalorder %s97, %s98
    %p107 = scmp.eq.s32.totalorder %s24, 0
    %p108 = por %p106, %p107
    %p109 = scmp.ne.s32.totalorder %s97, %s98
    %p110 = scmp.eq.s32.totalorder %s25, 1
    %p111 = por %p109, %p110
    %p113 = scmp.ne.s32.totalorder %s98, %s112
    %p114 = scmp.eq.s32.totalorder %s25, 0
    %p115 = por %p113, %p114
    %s117 = sadd.s32 %s116, 1
    %p120 = scmp.eq.s32.totalorder %s19, 1
    %p121 = scmp.ne.s32.totalorder %s116, %s118
    %p122 = scmp.eq.s32.totalorder %s19, 0
    %p123 = por %p121, %p122
    %p124 = scmp.ne.s32.totalorder %s116, %s118
    %p125 = scmp.eq.s32.totalorder %s24, 1
    %p126 = por %p124, %p125
    %p127 = scmp.ne.s32.totalorder %s118, %s119
    %p128 = scmp.eq.s32.totalorder %s24, 0
    %p129 = por %p127, %p128
    %p130 = scmp.ne.s32.totalorder %s118, %s119
    %p131 = scmp.eq.s32.totalorder %s25, 1
    %p132 = por %p130, %p131
    %p134 = scmp.ne.s32.totalorder %s119, %s133
    %p135 = scmp.eq.s32.totalorder %s25, 0
    %p136 = por %p134, %p135
    %s138 = sadd.s32 %s137, 1
    %p141 = scmp.eq.s32.totalorder %s19, 1
    %p142 = scmp.ne.s32.totalorder %s137, %s139
    %p143 = scmp.eq.s32.totalorder %s19, 0
    %p144 = por %p142, %p143
    %p145 = scmp.ne.s32.totalorder %s137, %s139
    %p146 = scmp.eq.s32.totalorder %s24, 1
    %p147 = por %p145, %p146
    %p148 = scmp.ne.s32.totalorder %s139, %s140
    %p149 = scmp.eq.s32.totalorder %s24, 0
    %p150 = por %p148, %p149
    %p151 = scmp.ne.s32.totalorder %s139, %s140
    %p152 = scmp.eq.s32.totalorder %s25, 1
    %p153 = por %p151, %p152
    %p155 = scmp.ne.s32.totalorder %s140, %s154
    %p156 = scmp.eq.s32.totalorder %s25, 0
    %p157 = por %p155, %p156
    %s159 = sadd.s32 %s158, 1
    %p162 = scmp.eq.s32.totalorder %s19, 1
    %p163 = scmp.ne.s32.totalorder %s158, %s160
    %p164 = scmp.eq.s32.totalorder %s19, 0
    %p165 = por %p163, %p164
    %p166 = scmp.ne.s32.totalorder %s158, %s160
    %p167 = scmp.eq.s32.totalorder %s24, 1
    %p168 = por %p166, %p167
    %p169 = scmp.ne.s32.totalorder %s160, %s161
    %p170 = scmp.eq.s32.totalorder %s24, 0
    %p171 = por %p169, %p170
    %p172 = scmp.ne.s32.totalorder %s160, %s161
    %p173 = scmp.eq.s32.totalorder %s25, 1
    %p174 = por %p172, %p173
    %p176 = scmp.ne.s32.totalorder %s161, %s175
    %p177 = scmp.eq.s32.totalorder %s25, 0
    %p178 = por %p176, %p177
    %s180 = sadd.s32 %s179, 1
    %p183 = scmp.eq.s32.totalorder %s19, 1
    %p184 = scmp.ne.s32.totalorder %s179, %s181
    %p185 = scmp.eq.s32.totalorder %s19, 0
    %p186 = por %p184, %p185
    %p187 = scmp.ne.s32.totalorder %s179, %s181
    %p188 = scmp.eq.s32.totalorder %s24, 1
    %p189 = por %p187, %p188
    %p190 = scmp.ne.s32.totalorder %s181, %s182
    %p191 = scmp.eq.s32.totalorder %s24, 0
    %p192 = por %p190, %p191
    %p193 = scmp.ne.s32.totalorder %s181, %s182
    %p194 = scmp.eq.s32.totalorder %s25, 1
    %p195 = por %p193, %p194
    %p197 = scmp.ne.s32.totalorder %s182, %s196
    %p198 = scmp.eq.s32.totalorder %s25, 0
    %p199 = por %p197, %p198
    %s201 = sadd.s32 %s200, 1
    %p204 = scmp.eq.s32.totalorder %s19, 1
    %p205 = scmp.ne.s32.totalorder %s200, %s202
    %p206 = scmp.eq.s32.totalorder %s19, 0
    %p207 = por %p205, %p206
    %p208 = scmp.ne.s32.totalorder %s200, %s202
    %p209 = scmp.eq.s32.totalorder %s24, 1
    %p210 = por %p208, %p209
    %p211 = scmp.ne.s32.totalorder %s202, %s203
    %p212 = scmp.eq.s32.totalorder %s24, 0
    %p213 = por %p211, %p212
    %p214 = scmp.ne.s32.totalorder %s202, %s203
    %p215 = scmp.eq.s32.totalorder %s25, 1
    %p216 = por %p214, %p215
    %p218 = scmp.ne.s32.totalorder %s203, %s217
    %p219 = scmp.eq.s32.totalorder %s25, 0
    %p220 = por %p218, %p219
    %s222 = sadd.s32 %s221, 1
    %p225 = scmp.eq.s32.totalorder %s19, 1
    %p226 = scmp.ne.s32.totalorder %s221, %s223
    %p227 = scmp.eq.s32.totalorder %s19, 0
    %p228 = por %p226, %p227
    %p229 = scmp.ne.s32.totalorder %s221, %s223
    %p230 = scmp.eq.s32.totalorder %s24, 1
    %p231 = por %p229, %p230
    %p232 = scmp.ne.s32.totalorder %s223, %s224
    %p233 = scmp.eq.s32.totalorder %s24, 0
    %p234 = por %p232, %p233
    %p235 = scmp.ne.s32.totalorder %s223, %s224
    %p236 = scmp.eq.s32.totalorder %s25, 1
    %p237 = por %p235, %p236
    %p239 = scmp.ne.s32.totalorder %s224, %s238
    %p240 = scmp.eq.s32.totalorder %s25, 0
    %p241 = por %p239, %p240
    %s243 = sadd.s32 %s242, 1
    %p246 = scmp.eq.s32.totalorder %s19, 1
    %p247 = scmp.ne.s32.totalorder %s242, %s244
    %p248 = scmp.eq.s32.totalorder %s19, 0
    %p249 = por %p247, %p248
    %p250 = scmp.ne.s32.totalorder %s242, %s244
    %p251 = scmp.eq.s32.totalorder %s24, 1
    %p252 = por %p250, %p251
    %p253 = scmp.ne.s32.totalorder %s244, %s245
    %p254 = scmp.eq.s32.totalorder %s24, 0
    %p255 = por %p253, %p254
    %p256 = scmp.ne.s32.totalorder %s244, %s245
    %p257 = scmp.eq.s32.totalorder %s25, 1
    %p258 = por %p256, %p257
    %p260 = scmp.ne.s32.totalorder %s245, %s259
    %p261 = scmp.eq.s32.totalorder %s25, 0
    %p262 = por %p260, %p261
    %s264 = sadd.s32 %s263, 1
    %p267 = scmp.eq.s32.totalorder %s19, 1
    %p268 = scmp.ne.s32.totalorder %s263, %s265
    %p269 = scmp.eq.s32.totalorder %s19, 0
    %p270 = por %p268, %p269
    %p271 = scmp.ne.s32.totalorder %s263, %s265
    %p272 = scmp.eq.s32.totalorder %s24, 1
    %p273 = por %p271, %p272
    %p274 = scmp.ne.s32.totalorder %s265, %s266
    %p275 = scmp.eq.s32.totalorder %s24, 0
    %p276 = por %p274, %p275
    %p277 = scmp.ne.s32.totalorder %s265, %s266
    %p278 = scmp.eq.s32.totalorder %s25, 1
    %p279 = por %p277, %p278
    %p281 = scmp.ne.s32.totalorder %s266, %s280
    %p282 = scmp.eq.s32.totalorder %s25, 0
    %p283 = por %p281, %p282
    %s285 = sadd.s32 %s284, 1
    %p288 = scmp.eq.s32.totalorder %s19, 1
    %p289 = scmp.ne.s32.totalorder %s284, %s286
    %p290 = scmp.eq.s32.totalorder %s19, 0
    %p291 = por %p289, %p290
    %p292 = scmp.ne.s32.totalorder %s284, %s286
    %p293 = scmp.eq.s32.totalorder %s24, 1
    %p294 = por %p292, %p293
    %p295 = scmp.ne.s32.totalorder %s286, %s287
    %p296 = scmp.eq.s32.totalorder %s24, 0
    %p297 = por %p295, %p296
    %p298 = scmp.ne.s32.totalorder %s286, %s287
    %p299 = scmp.eq.s32.totalorder %s25, 1
    %p300 = por %p298, %p299
    %p302 = scmp.ne.s32.totalorder %s287, %s301
    %p303 = scmp.eq.s32.totalorder %s25, 0
    %p304 = por %p302, %p303
    %s305 = ssub.s32 %s19, %s26
    %p306 = scmp.eq.s32.totalorder %s305, 0
    %s308 = sadd.s32 %s307, 1
    %s309 = scalar_select %p306, %s307, %s308
    %p312 = pneg %p306
    %p313 = scmp.eq.s32.totalorder %s19, 1
    %p314 = por %p312, %p313
    %p315 = scmp.ne.s32.totalorder %s307, %s310
    %p316 = scmp.eq.s32.totalorder %s19, 0
    %p317 = por %p315, %p316
    %p318 = scmp.ne.s32.totalorder %s307, %s310
    %p319 = scmp.eq.s32.totalorder %s24, 1
    %p320 = por %p318, %p319
    %p321 = scmp.ne.s32.totalorder %s310, %s311
    %p322 = scmp.eq.s32.totalorder %s24, 0
    %p323 = por %p321, %p322
    %p324 = scmp.ne.s32.totalorder %s310, %s311
    %p325 = scmp.eq.s32.totalorder %s25, 1
    %p326 = por %p324, %p325
    %p328 = scmp.ne.s32.totalorder %s311, %s327
    %p329 = scmp.eq.s32.totalorder %s25, 0
    %p330 = por %p328, %p329
    %p331 = scmp.le.s32.totalorder 1, %s19
    %p332 = scmp.lt.s32.totalorder %s19, 3
    %p333 = pnand %p331, %p332
    %p334 = pneg %p333
    // Predicated region
    $region9: #{topology_cnn_forward.1} parent=5 // pred_check
      _
    $region10: #{topology_cnn_forward.1} parent=5 // pred_check_branch
      %336 = sbr.rel (%p333) target = $region12
    $region11: #{topology_cnn_forward.1} parent=5 // pred_region
      %s337 = ssub.s32 %s19, 1
      // Predicated region
      $region13: #{topology_cnn_forward.1} parent=11 // pred_check
        %p338 = pneg %p66
      $region14: #{topology_cnn_forward.1} parent=11 // pred_check_branch
        %340 = sbr.rel (%p338) target = $region16
      $region15: #{topology_cnn_forward.1} parent=11 // pred_region
        _
      $region16: #{topology_cnn_forward.1} parent=11 // pred_fallthru
        _
      // Predicated region
      $region17: #{topology_cnn_forward.1} parent=11 // pred_check
        %p341 = pneg %p87
      $region18: #{topology_cnn_forward.1} parent=11 // pred_check_branch
        %343 = sbr.rel (%p341) target = $region20
      $region19: #{topology_cnn_forward.1} parent=11 // pred_region
        _
      $region20: #{topology_cnn_forward.1} parent=11 // pred_fallthru
        _
      // Predicated region
      $region21: #{topology_cnn_forward.1} parent=11 // pred_check
        %p344 = pneg %p108
      $region22: #{topology_cnn_forward.1} parent=11 // pred_check_branch
        %346 = sbr.rel (%p344) target = $region24
      $region23: #{topology_cnn_forward.1} parent=11 // pred_region
        _
      $region24: #{topology_cnn_forward.1} parent=11 // pred_fallthru
        _
      // Predicated region
      $region25: #{topology_cnn_forward.1} parent=11 // pred_check
        %p347 = pneg %p129
      $region26: #{topology_cnn_forward.1} parent=11 // pred_check_branch
        %349 = sbr.rel (%p347) target = $region28
      $region27: #{topology_cnn_forward.1} parent=11 // pred_region
        _
      $region28: #{topology_cnn_forward.1} parent=11 // pred_fallthru
        _
      // Predicated region
      $region29: #{topology_cnn_forward.1} parent=11 // pred_check
        %p350 = pneg %p150
      $region30: #{topology_cnn_forward.1} parent=11 // pred_check_branch
        %352 = sbr.rel (%p350) target = $region32
      $region31: #{topology_cnn_forward.1} parent=11 // pred_region
        _
      $region32: #{topology_cnn_forward.1} parent=11 // pred_fallthru
        _
      // Predicated region
      $region33: #{topology_cnn_forward.1} parent=11 // pred_check
        %p353 = pneg %p171
      $region34: #{topology_cnn_forward.1} parent=11 // pred_check_branch
        %355 = sbr.rel (%p353) target = $region36
      $region35: #{topology_cnn_forward.1} parent=11 // pred_region
        _
      $region36: #{topology_cnn_forward.1} parent=11 // pred_fallthru
        _
      // Predicated region
      $region37: #{topology_cnn_forward.1} parent=11 // pred_check
        %p356 = pneg %p192
      $region38: #{topology_cnn_forward.1} parent=11 // pred_check_branch
        %358 = sbr.rel (%p356) target = $region40
      $region39: #{topology_cnn_forward.1} parent=11 // pred_region
        _
      $region40: #{topology_cnn_forward.1} parent=11 // pred_fallthru
        _
      // Predicated region
      $region41: #{topology_cnn_forward.1} parent=11 // pred_check
        %p359 = pneg %p213
      $region42: #{topology_cnn_forward.1} parent=11 // pred_check_branch
        %361 = sbr.rel (%p359) target = $region44
      $region43: #{topology_cnn_forward.1} parent=11 // pred_region
        _
      $region44: #{topology_cnn_forward.1} parent=11 // pred_fallthru
        _
      // Predicated region
      $region45: #{topology_cnn_forward.1} parent=11 // pred_check
        %p362 = pneg %p234
      $region46: #{topology_cnn_forward.1} parent=11 // pred_check_branch
        %364 = sbr.rel (%p362) target = $region48
      $region47: #{topology_cnn_forward.1} parent=11 // pred_region
        _
      $region48: #{topology_cnn_forward.1} parent=11 // pred_fallthru
        _
      // Predicated region
      $region49: #{topology_cnn_forward.1} parent=11 // pred_check
        %p365 = pneg %p255
      $region50: #{topology_cnn_forward.1} parent=11 // pred_check_branch
        %367 = sbr.rel (%p365) target = $region52
      $region51: #{topology_cnn_forward.1} parent=11 // pred_region
        _
      $region52: #{topology_cnn_forward.1} parent=11 // pred_fallthru
        _
      // Predicated region
      $region53: #{topology_cnn_forward.1} parent=11 // pred_check
        %p368 = pneg %p276
      $region54: #{topology_cnn_forward.1} parent=11 // pred_check_branch
        %370 = sbr.rel (%p368) target = $region56
      $region55: #{topology_cnn_forward.1} parent=11 // pred_region
        _
      $region56: #{topology_cnn_forward.1} parent=11 // pred_fallthru
        _
      // Predicated region
      $region57: #{topology_cnn_forward.1} parent=11 // pred_check
        %p371 = pneg %p297
      $region58: #{topology_cnn_forward.1} parent=11 // pred_check_branch
        %373 = sbr.rel (%p371) target = $region60
      $region59: #{topology_cnn_forward.1} parent=11 // pred_region
        _
      $region60: #{topology_cnn_forward.1} parent=11 // pred_fallthru
        _
    $region12: #{topology_cnn_forward.1} parent=5 // pred_fallthru
      _
    %p374 = scmp.lt.s32.totalorder %s19, 2
    // Predicated region
    $region61: #{topology_cnn_forward.1} parent=5 // pred_check
      %p375 = pneg %p374
    $region62: #{topology_cnn_forward.1} parent=5 // pred_check_branch
      %377 = sbr.rel (%p375) target = $region64
    $region63: #{topology_cnn_forward.1} parent=5 // pred_region
      // Predicated region
      $region65: #{topology_cnn_forward.1} parent=63 // pred_check
        %p378 = pneg %p39
      $region66: #{topology_cnn_forward.1} parent=63 // pred_check_branch
        %380 = sbr.rel (%p378) target = $region68
      $region67: #{topology_cnn_forward.1} parent=63 // pred_region
        %p381 = scmp.lt.s32.totalorder %s19, 1
        %s382 = scalar_select %p381, %s19, 1
        %s383 = smul.addr %s382, 4
        %s384 = smul.addr %s383, 4
        %s385 = scalar_lea.vmem %s0, %s384
      $region68: #{topology_cnn_forward.1} parent=63 // pred_fallthru
        _
    $region64: #{topology_cnn_forward.1} parent=5 // pred_fallthru
      _
    %p386 = scmp.le.s32.totalorder 1, %s19
    %p387 = scmp.lt.s32.totalorder %s19, 3
    %p388 = pnand %p386, %p387
    %p389 = pneg %p388
    // Predicated region
    $region69: #{topology_cnn_forward.1} parent=5 // pred_check
      _
    $region70: #{topology_cnn_forward.1} parent=5 // pred_check_branch
      %391 = sbr.rel (%p388) target = $region72
    $region71: #{topology_cnn_forward.1} parent=5 // pred_region
      %s392 = ssub.s32 %s19, 1
      %p393 = scmp.lt.s32.totalorder %s24, 1
      %s394 = scalar_select %p393, %s24, 1
      %s395 = smul.addr %s394, 4
      %s396 = smul.addr %s395, 4
      %s397 = scalar_lea.vmem %s0, %s396
      %p398 = pneg %p45
      %p399 = pneg %p42
      %p400 = pneg %p66
      %p401 = pneg %p63
      %p402 = pneg %p87
      %p403 = pneg %p84
      %p404 = pneg %p108
      %p405 = pneg %p105
      %p406 = pneg %p129
      %p407 = pneg %p126
      %p408 = pneg %p150
      %p409 = pneg %p147
      %p410 = pneg %p171
      %p411 = pneg %p168
      %p412 = pneg %p192
      %p413 = pneg %p189
      %p414 = pneg %p213
      %p415 = pneg %p210
      %p416 = pneg %p234
      %p417 = pneg %p231
      %p418 = pneg %p255
      %p419 = pneg %p252
      %p420 = pneg %p276
      %p421 = pneg %p273
      %p422 = pneg %p297
      %p423 = pneg %p294
      %p424 = pneg %p323
      %p425 = pneg %p320
      %p426 = scmp.lt.s32.totalorder %s24, 1
      %s427 = scalar_select %p426, %s24, 1
      %s428 = smul.addr %s427, 2
      %s429 = smul.addr %s428, 2
      %s430 = scalar_lea.vmem %s13, %s429
      %p431 = scmp.lt.s32.totalorder %s24, 1
      %s432 = scalar_select %p431, %s24, 1
      %s433 = smul.addr %s432, 4
      %s434 = smul.addr %s433, 4
      %s435 = scalar_lea.vmem %s0, %s434
      %p436 = scmp.lt.s32.totalorder %s24, 1
      %s437 = scalar_select %p436, %s24, 1
      %s438 = smul.addr %s437, 2
      %s439 = smul.addr %s438, 2
      %s440 = scalar_lea.vmem %s13, %s439
      %442 = vst [vmem:[#allocation2] sm:$0xff] 0
      %443 = vst [vmem:[#allocation2 + $0x8] sm:$0xff] 0
      %444 = vst [vmem:[#allocation2 + $0x10] sm:$0xff] 0
      %445 = vst [vmem:[#allocation2 + $0x18] sm:$0xff] 0
      %446 = vst [vmem:[#allocation2 + $0x20] sm:$0xff] 0
      %447 = vst [vmem:[#allocation2 + $0x28] sm:$0xff] 0
      %448 = vst [vmem:[#allocation2 + $0x30] sm:$0xff] 0
      %449 = vst [vmem:[#allocation2 + $0x38] sm:$0xff] 0
      %450 = vst [vmem:[#allocation2 + $0x40] sm:$0xff] 0
      %451 = vst [vmem:[#allocation2 + $0x48] sm:$0xff] 0
      %452 = vst [vmem:[#allocation2 + $0x50] sm:$0xff] 0
      %453 = vst [vmem:[#allocation2 + $0x58] sm:$0xff] 0
      %454 = vst [vmem:[#allocation2 + $0x60] sm:$0xff] 0
      %455 = vst [vmem:[#allocation2 + $0x68] sm:$0xff] 0
      %456 = vst [vmem:[#allocation2 + $0x70] sm:$0xff] 0
      %457 = vst [vmem:[#allocation2 + $0x78] sm:$0xff] 0
      %458 = vst [vmem:[#allocation2 + $0x80] sm:$0xff] 0
      %459 = vst [vmem:[#allocation2 + $0x88] sm:$0xff] 0
      %460 = vst [vmem:[#allocation2 + $0x90] sm:$0xff] 0
      %461 = vst [vmem:[#allocation2 + $0x98] sm:$0xff] 0
      %462 = vst [vmem:[#allocation2 + $0xa0] sm:$0xff] 0
      %463 = vst [vmem:[#allocation2 + $0xa8] sm:$0xff] 0
      %464 = vst [vmem:[#allocation2 + $0xb0] sm:$0xff] 0
      %465 = vst [vmem:[#allocation2 + $0xb8] sm:$0xff] 0
      %466 = vst [vmem:[#allocation2 + $0xc0] sm:$0xff] 0
      %467 = vst [vmem:[#allocation2 + $0xc8] sm:$0xff] 0
      %468 = vst [vmem:[#allocation2 + $0xd0] sm:$0xff] 0
      %469 = vst [vmem:[#allocation2 + $0xd8] sm:$0xff] 0
      %470 = vst [vmem:[#allocation2 + $0xe0] sm:$0xff] 0
      %471 = vst [vmem:[#allocation2 + $0xe8] sm:$0xff] 0
      %472 = vst [vmem:[#allocation2 + $0xf0] sm:$0xff] 0
      %473 = vst [vmem:[#allocation2 + $0xf8] sm:$0xff] 0
      %v474 = vlaneseq
      %v475 = vand.u32 %v474, 127
      %v476 = vadd.s32 %v475, 128
      %vm477 = vcmp.lt.s32.totalorder %v475, 0
      %v478 = vsub.s32 0, %v475
      %v479 = vsel %vm477, %v478, %v475
      %v480 = vshrl.u32 %v479, 4
      %v481 = vand.u32 %v479, 15
      %v482 = vsub.s32 0, %v481
      %v483 = vsel %vm477, %v482, %v481
      %vm484 = vcmp.lt.s32.totalorder %v476, 0
      %v485 = vsub.s32 0, %v476
      %v486 = vsel %vm484, %v485, %v476
      %v487 = vshrl.u32 %v486, 4
      %v488 = vand.u32 %v486, 15
      %v489 = vsub.s32 0, %v488
      %v490 = vsel %vm484, %v489, %v488
      %vm491 = vcmp.ne.s32.totalorder %v483, 0
      %vm492 = vcmp.ne.s32.totalorder %v490, 0
      %vm493 = vcmp.lt.s32.totalorder %v483, 0
      %vm494 = vcmp.lt.s32.totalorder %v490, 0
      %vm495 = vmand %vm493, %vm491
      %vm496 = vmand %vm494, %vm492
      %v497 = vadd.s32 %v483, 16
      %v498 = vadd.s32 %v490, 16
      %v499 = vsel %vm495, %v497, %v483
      %v500 = vsel %vm496, %v498, %v490
      %vm501 = vcmp.ge.s32.totalorder %v499, 1
      %vm502 = vcmp.ge.s32.totalorder %v500, 1
      %v503 = vsel %vm501, 1, 0
      %v504 = vsel %vm502, 1, 0
      %v505 = vcvt.s32.f32 %v503
      %v506 = vcvt.s32.f32 %v504
      %v507 = vpack.c.bf16 %v505, %v505
      %v508 = vpack.c.bf16 %v506, %v506
      %vm509 = vcmp.le.s32.totalorder %v499, 14
      %vm510 = vcmp.le.s32.totalorder %v500, 14
      %v511 = vsel %vm509, 1, 0
      %v512 = vsel %vm510, 1, 0
      %v513 = vcvt.s32.f32 %v511
      %v514 = vcvt.s32.f32 %v512
      %v515 = vpack.c.bf16 %v513, %v513
      %v516 = vpack.c.bf16 %v514, %v514
      %v517 = vld [vmem:[%s435] sm:$0xff]
      %v518 = vld [vmem:[%s435 + $0x8] sm:$0xff]
      %v521 = vunpack.c.l.b16 %v517
      %v522 = vunpack.c.h.b16 %v517
      %v523 = vunpack.c.l.b16 %v518
      %v524 = vunpack.c.h.b16 %v518
      %v525 = vpack.c.b16 %v523, %v521
      %v526 = vpack.c.b16 %v524, %v522
      %529 = vst [vmem:[#allocation2 + $0x8] sm:$0xff] %v525
      %530 = vst [vmem:[#allocation2 + $0x10] sm:$0xff] %v526
      %v531 = vld [vmem:[#allocation2] sm:$0xff]
      %v532 = vld [vmem:[#allocation2 + $0x8] sm:$0xff]
      %v533 = vld [vmem:[#allocation2 + $0x10] sm:$0xff]
      %536 = vrot.lane.b32.xlu0 %v507, 111
      %v537 = vpop.permute.xlu0 %536
      %538 = vrot.lane.b32.xlu0 %v508, 111
      %v539 = vpop.permute.xlu0 %538
      %vm540 = vcmask 908288
      %v541 = vsel %vm540, %v537, %v539
      %v545 = vmul.bf16 %v531, %v537
      %v546 = vmul.bf16 %v532, %v541
      %v547 = vmul.bf16 %v533, %v539
      %551 = vrot.lane.b32.xlu0 %v545, 17
      %v552 = vpop.permute.xlu0 %551
      %553 = vrot.lane.b32.xlu0 %v546, 17
      %v554 = vpop.permute.xlu0 %553
      %555 = vrot.lane.b32.xlu0 %v547, 17
      %v556 = vpop.permute.xlu0 %555
      %vm557 = vcmask 138240
      %v558 = vsel %vm557, %v552, %v554
      %v559 = vsel %vm557, %v554, %v556
      %562 = vst [vmem:[#allocation3] sm:$0xff] %v558
      %563 = vst [vmem:[#allocation3 + $0x8] sm:$0xff] %v559
      %v564 = vld [vmem:[#allocation2] sm:$0xff]
      %v565 = vld [vmem:[#allocation2 + $0x8] sm:$0xff]
      %v566 = vld [vmem:[#allocation2 + $0x10] sm:$0xff]
      %570 = vrot.lane.b32.xlu0 %v564, 16
      %v571 = vpop.permute.xlu0 %570
      %572 = vrot.lane.b32.xlu0 %v565, 16
      %v573 = vpop.permute.xlu0 %572
      %574 = vrot.lane.b32.xlu0 %v566, 16
      %v575 = vpop.permute.xlu0 %574
      %vm576 = vcmask 130048
      %v577 = vsel %vm576, %v571, %v573
      %v578 = vsel %vm576, %v573, %v575
      %581 = vst [vmem:[#allocation3 + $0x10] sm:$0xff] %v577
      %582 = vst [vmem:[#allocation3 + $0x18] sm:$0xff] %v578
      %v583 = vld [vmem:[#allocation2] sm:$0xff]
      %v584 = vld [vmem:[#allocation2 + $0x8] sm:$0xff]
      %v585 = vld [vmem:[#allocation2 + $0x10] sm:$0xff]
      %588 = vrot.lane.b32.xlu0 %v515, 113
      %v589 = vpop.permute.xlu0 %588
      %590 = vrot.lane.b32.xlu0 %v516, 113
      %v591 = vpop.permute.xlu0 %590
      %vm592 = vcmask 924672
      %v593 = vsel %vm592, %v589, %v591
      %v597 = vmul.bf16 %v583, %v589
      %v598 = vmul.bf16 %v584, %v593
      %v599 = vmul.bf16 %v585, %v591
      %603 = vrot.lane.b32.xlu0 %v597, 15
      %v604 = vpop.permute.xlu0 %603
      %605 = vrot.lane.b32.xlu0 %v598, 15
      %v606 = vpop.permute.xlu0 %605
      %607 = vrot.lane.b32.xlu0 %v599, 15
      %v608 = vpop.permute.xlu0 %607
      %vm609 = vcmask 121856
      %v610 = vsel %vm609, %v604, %v606
      %v611 = vsel %vm609, %v606, %v608
      %614 = vst [vmem:[#allocation3 + $0x20] sm:$0xff] %v610
      %615 = vst [vmem:[#allocation3 + $0x28] sm:$0xff] %v611
      %v616 = vld [vmem:[#allocation2] sm:$0xff]
      %v617 = vld [vmem:[#allocation2 + $0x8] sm:$0xff]
      %v618 = vld [vmem:[#allocation2 + $0x10] sm:$0xff]
      %619 = vrot.lane.b32.xlu0 %v507, 127
      %v620 = vpop.permute.xlu0 %619
      %621 = vrot.lane.b32.xlu0 %v508, 127
      %v622 = vpop.permute.xlu0 %621
      %vm623 = vcmask 1039360
      %v624 = vsel %vm623, %v620, %v622
      %v628 = vmul.bf16 %v616, %v620
      %v629 = vmul.bf16 %v617, %v624
      %v630 = vmul.bf16 %v618, %v622
      %634 = vrot.lane.b32.xlu0 %v628, 1
      %v635 = vpop.permute.xlu0 %634
      %636 = vrot.lane.b32.xlu0 %v629, 1
      %v637 = vpop.permute.xlu0 %636
      %638 = vrot.lane.b32.xlu0 %v630, 1
      %v639 = vpop.permute.xlu0 %638
      %vm640 = vcmask 7168
      %v641 = vsel %vm640, %v635, %v637
      %v642 = vsel %vm640, %v637, %v639
      %645 = vst [vmem:[#allocation3 + $0x30] sm:$0xff] %v641
      %646 = vst [vmem:[#allocation3 + $0x38] sm:$0xff] %v642
      %v647 = vld [vmem:[#allocation2 + $0x8] sm:$0xff]
      %v648 = vld [vmem:[#allocation2 + $0x10] sm:$0xff]
      %649 = vst [vmem:[#allocation3 + $0x40] sm:$0xff] %v647
      %650 = vst [vmem:[#allocation3 + $0x48] sm:$0xff] %v648
      %v651 = vld [vmem:[#allocation2 + $0x8] sm:$0xff]
      %v652 = vld [vmem:[#allocation2 + $0x10] sm:$0xff]
      %v653 = vld [vmem:[#allocation2 + $0x18] sm:$0xff]
      %654 = vrot.lane.b32.xlu0 %v515, 1
      %v655 = vpop.permute.xlu0 %654
      %656 = vrot.lane.b32.xlu0 %v516, 1
      %v657 = vpop.permute.xlu0 %656
      %v658 = vsel %vm640, %v655, %v657
      %v662 = vmul.bf16 %v651, %v655
      %v663 = vmul.bf16 %v652, %v658
      %v664 = vmul.bf16 %v653, %v657
      %668 = vrot.lane.b32.xlu0 %v662, 127
      %v669 = vpop.permute.xlu0 %668
      %670 = vrot.lane.b32.xlu0 %v663, 127
      %v671 = vpop.permute.xlu0 %670
      %672 = vrot.lane.b32.xlu0 %v664, 127
      %v673 = vpop.permute.xlu0 %672
      %v674 = vsel %vm623, %v669, %v671
      %v675 = vsel %vm623, %v671, %v673
      %678 = vst [vmem:[#allocation3 + $0x50] sm:$0xff] %v674
      %679 = vst [vmem:[#allocation3 + $0x58] sm:$0xff] %v675
      %v680 = vld [vmem:[#allocation2 + $0x8] sm:$0xff]
      %v681 = vld [vmem:[#allocation2 + $0x10] sm:$0xff]
      %v682 = vld [vmem:[#allocation2 + $0x18] sm:$0xff]
      %683 = vrot.lane.b32.xlu0 %v507, 15
      %v684 = vpop.permute.xlu0 %683
      %685 = vrot.lane.b32.xlu0 %v508, 15
      %v686 = vpop.permute.xlu0 %685
      %v687 = vsel %vm609, %v684, %v686
      %v691 = vmul.bf16 %v680, %v684
      %v692 = vmul.bf16 %v681, %v687
      %v693 = vmul.bf16 %v682, %v686
      %697 = vrot.lane.b32.xlu0 %v691, 113
      %v698 = vpop.permute.xlu0 %697
      %699 = vrot.lane.b32.xlu0 %v692, 113
      %v700 = vpop.permute.xlu0 %699
      %701 = vrot.lane.b32.xlu0 %v693, 113
      %v702 = vpop.permute.xlu0 %701
      %v703 = vsel %vm592, %v698, %v700
      %v704 = vsel %vm592, %v700, %v702
      %707 = vst [vmem:[#allocation3 + $0x60] sm:$0xff] %v703
      %708 = vst [vmem:[#allocation3 + $0x68] sm:$0xff] %v704
      %v709 = vld [vmem:[#allocation2 + $0x8] sm:$0xff]
      %v710 = vld [vmem:[#allocation2 + $0x10] sm:$0xff]
      %v711 = vld [vmem:[#allocation2 + $0x18] sm:$0xff]
      %715 = vrot.lane.b32.xlu0 %v709, 112
      %v716 = vpop.permute.xlu0 %715
      %717 = vrot.lane.b32.xlu0 %v710, 112
      %v718 = vpop.permute.xlu0 %717
      %719 = vrot.lane.b32.xlu0 %v711, 112
      %v720 = vpop.permute.xlu0 %719
      %vm721 = vcmask 916480
      %v722 = vsel %vm721, %v716, %v718
      %v723 = vsel %vm721, %v718, %v720
      %726 = vst [vmem:[#allocation3 + $0x70] sm:$0xff] %v722
      %727 = vst [vmem:[#allocation3 + $0x78] sm:$0xff] %v723
      %v728 = vld [vmem:[#allocation2 + $0x8] sm:$0xff]
      %v729 = vld [vmem:[#allocation2 + $0x10] sm:$0xff]
      %v730 = vld [vmem:[#allocation2 + $0x18] sm:$0xff]
      %731 = vrot.lane.b32.xlu0 %v515, 17
      %v732 = vpop.permute.xlu0 %731
      %733 = vrot.lane.b32.xlu0 %v516, 17
      %v734 = vpop.permute.xlu0 %733
      %v735 = vsel %vm557, %v732, %v734
      %v739 = vmul.bf16 %v728, %v732
      %v740 = vmul.bf16 %v729, %v735
      %v741 = vmul.bf16 %v730, %v734
      %745 = vrot.lane.b32.xlu0 %v739, 111
      %v746 = vpop.permute.xlu0 %745
      %747 = vrot.lane.b32.xlu0 %v740, 111
      %v748 = vpop.permute.xlu0 %747
      %749 = vrot.lane.b32.xlu0 %v741, 111
      %v750 = vpop.permute.xlu0 %749
      %v751 = vsel %vm540, %v746, %v748
      %v752 = vsel %vm540, %v748, %v750
      %755 = vst [vmem:[#allocation3 + $0x80] sm:$0xff] %v751
      %756 = vst [vmem:[#allocation3 + $0x88] sm:$0xff] %v752
      %v757 = vld [vmem:[%s1] sm:$0xff]
      %v758 = vld [vmem:[%s1 + $0x8] sm:$0xff]
      %v759 = vld [vmem:[%s1 + $0x10] sm:$0xff]
      %v760 = vld [vmem:[%s1 + $0x18] sm:$0xff]
      %v761 = vld [vmem:[#allocation3] sm:$0xff]
      %v762 = vld [vmem:[#allocation3 + $0x8] sm:$0xff]
      %v763 = vld [vmem:[#allocation3 + $0x10] sm:$0xff]
      %v764 = vld [vmem:[#allocation3 + $0x18] sm:$0xff]
      %v765 = vld [vmem:[#allocation3 + $0x20] sm:$0xff]
      %v766 = vld [vmem:[#allocation3 + $0x28] sm:$0xff]
      %v767 = vld [vmem:[#allocation3 + $0x30] sm:$0xff]
      %v768 = vld [vmem:[#allocation3 + $0x38] sm:$0xff]
      %v769 = vld [vmem:[#allocation3 + $0x40] sm:$0xff]
      %v770 = vld [vmem:[#allocation3 + $0x48] sm:$0xff]
      %v771 = vld [vmem:[#allocation3 + $0x50] sm:$0xff]
      %v772 = vld [vmem:[#allocation3 + $0x58] sm:$0xff]
      %v773 = vld [vmem:[#allocation3 + $0x60] sm:$0xff]
      %v774 = vld [vmem:[#allocation3 + $0x68] sm:$0xff]
      %v775 = vld [vmem:[#allocation3 + $0x70] sm:$0xff]
      %v776 = vld [vmem:[#allocation3 + $0x78] sm:$0xff]
      %v777 = vld [vmem:[#allocation3 + $0x80] sm:$0xff]
      %v778 = vld [vmem:[#allocation3 + $0x88] sm:$0xff]
      %v779 = vld [vmem:[%s2] sm:$0xff]
      %v780 = vld [vmem:[%s2 + $0x8] sm:$0xff]
      %v781 = vld [vmem:[%s2 + $0x10] sm:$0xff]
      %v782 = vld [vmem:[%s2 + $0x18] sm:$0xff]
      %784 = vset.pattern.permute.xlu0 0
      %785 = vperm.xlu0 %784, %v779
      %v786 = vpop.permute.xlu0 %785
      %789 = vset.pattern.permute.xlu0 0
      %790 = vperm.xlu0 %789, %v780
      %v791 = vpop.permute.xlu0 %790
      %794 = vset.pattern.permute.xlu0 0
      %795 = vperm.xlu0 %794, %v781
      %v796 = vpop.permute.xlu0 %795
      %799 = vset.pattern.permute.xlu0 0
      %800 = vperm.xlu0 %799, %v782
      %v801 = vpop.permute.xlu0 %800
      %v807 = vunpack.c.l.b16 %v757
      %v808 = vunpack.c.h.b16 %v757
      %v809 = vunpack.c.l.b16 %v758
      %v810 = vunpack.c.h.b16 %v758
      %v811 = vunpack.c.l.b16 %v759
      %v812 = vunpack.c.h.b16 %v759
      %v813 = vunpack.c.l.b16 %v760
      %v814 = vunpack.c.h.b16 %v760
      %v815 = vpack.c.b16 %v809, %v807
      %v816 = vpack.c.b16 %v810, %v808
      %v817 = vpack.c.b16 %v813, %v811
      %v818 = vpack.c.b16 %v814, %v812
      %vm821 = vcmask 130048
      %v823 = vsel %vm821, %v816, 0
      %v826 = vsel %vm821, %v818, 0
      %828 = vmatprep.subr.bf16.mxu0 %v762
      %829 = vmatpush1.bf16.msra.mxu0 %v761
      %830 = vmatprep.subr.bf16.mxu0 %v764
      %831 = vmatpush1.bf16.msra.mxu0 %v763
      %832 = vmatprep.subr.bf16.mxu0 %v766
      %833 = vmatpush1.bf16.msra.mxu0 %v765
      %834 = vmatprep.subr.bf16.mxu0 %v768
      %835 = vmatpush1.bf16.msra.mxu0 %v767
      %836 = vmatprep.subr.bf16.mxu0 %v770
      %837 = vmatpush1.bf16.msra.mxu0 %v769
      %838 = vmatprep.subr.bf16.mxu0 %v772
      %839 = vmatpush1.bf16.msra.mxu0 %v771
      %840 = vmatprep.subr.bf16.mxu0 %v774
      %841 = vmatpush1.bf16.msra.mxu0 %v773
      %842 = vmatprep.subr.bf16.mxu0 %v776
      %843 = vmatpush1.bf16.msra.mxu0 %v775
      %844 = vmatprep.subr.bf16.mxu0 %v778
      %845 = vmatpush1.bf16.msra.mxu0 %v777
      %846 = vmatprep.subr.bf16.mxu0 0
      %847 = vmatpush1.bf16.msra.mxu0 0
      %848 = vmatprep.subr.bf16.mxu0 0
      %849 = vmatpush1.bf16.msra.mxu0 0
      %850 = vmatprep.subr.bf16.mxu0 0
      %851 = vmatpush1.bf16.msra.mxu0 0
      %852 = vmatprep.subr.bf16.mxu0 0
      %853 = vmatpush1.bf16.msra.mxu0 0
      %854 = vmatprep.subr.bf16.mxu0 0
      %855 = vmatpush1.bf16.msra.mxu0 0
      %856 = vmatprep.subr.bf16.mxu0 0
      %857 = vmatpush1.bf16.msra.mxu0 0
      %858 = vmatprep.subr.bf16.mxu0 0
      %859 = vmatpush1.bf16.msra.mxu0 0
      %860 = vmatprep.mubr.bf16.mxu0 %v823
      %861 = vmatmul.mubr.bf16.gmra.mrb[0].mxu0 %v815
      %v862 = vpop.f32.mrb[0].mxu0
      %v863 = vadd.f32 %v786, %v862
      %v864 = vpop.f32.mrb[0].mxu0
      %v865 = vadd.f32 %v786, %v864
      %v866 = vpop.f32.mrb[0].mxu0
      %v867 = vadd.f32 %v791, %v866
      %v868 = vpop.f32.mrb[0].mxu0
      %v869 = vadd.f32 %v791, %v868
      %870 = vmatprep.mubr.bf16.mxu0 %v826
      %871 = vmatmul.mubr.bf16.gmra.mrb[0].mxu0 %v817
      %v872 = vpop.f32.mrb[0].mxu0
      %v873 = vadd.f32 %v796, %v872
      %v874 = vpop.f32.mrb[0].mxu0
      %v875 = vadd.f32 %v796, %v874
      %v876 = vpop.f32.mrb[0].mxu0
      %v877 = vadd.f32 %v801, %v876
      %v878 = vpop.f32.mrb[0].mxu0
      %v879 = vadd.f32 %v801, %v878
      %880 = vdwg.mxu0
      %v881 = vmax.f32 %v863, 0.0
      %v882 = vmax.f32 %v865, 0.0
      %v883 = vmax.f32 %v867, 0.0
      %v884 = vmax.f32 %v869, 0.0
      %v885 = vmax.f32 %v873, 0.0
      %v886 = vmax.f32 %v875, 0.0
      %v887 = vmax.f32 %v877, 0.0
      %v888 = vmax.f32 %v879, 0.0
      %v889 = vpack.c.bf16 %v883, %v881
      %v890 = vpack.c.bf16 %v884, %v882
      %v891 = vpack.c.bf16 %v887, %v885
      %v892 = vpack.c.bf16 %v888, %v886
      %893 = vst [vmem:[#allocation2 + $0x8] sm:$0xff] %v889
      %894 = vst [vmem:[#allocation2 + $0x10] sm:$0xff] %v890
      %895 = vst [vmem:[#allocation2 + $0x28] sm:$0xff] %v891
      %896 = vst [vmem:[#allocation2 + $0x30] sm:$0xff] %v892
      %v897 = vld [vmem:[#allocation2] sm:$0xff]
      %v898 = vld [vmem:[#allocation2 + $0x8] sm:$0xff]
      %v899 = vld [vmem:[#allocation2 + $0x10] sm:$0xff]
      %v900 = vld [vmem:[#allocation2 + $0x20] sm:$0xff]
      %v901 = vld [vmem:[#allocation2 + $0x28] sm:$0xff]
      %v902 = vld [vmem:[#allocation2 + $0x30] sm:$0xff]
      %v903 = vmul.bf16 %v897, %v537
      %v904 = vmul.bf16 %v898, %v541
      %v905 = vmul.bf16 %v899, %v539
      %v906 = vmul.bf16 %v900, %v537
      %v907 = vmul.bf16 %v901, %v541
      %v908 = vmul.bf16 %v902, %v539
      %915 = vrot.lane.b32.xlu0 %v903, 17
      %v916 = vpop.permute.xlu0 %915
      %917 = vrot.lane.b32.xlu0 %v904, 17
      %v918 = vpop.permute.xlu0 %917
      %919 = vrot.lane.b32.xlu0 %v905, 17
      %v920 = vpop.permute.xlu0 %919
      %921 = vrot.lane.b32.xlu0 %v906, 17
      %v922 = vpop.permute.xlu0 %921
      %923 = vrot.lane.b32.xlu0 %v907, 17
      %v924 = vpop.permute.xlu0 %923
      %925 = vrot.lane.b32.xlu0 %v908, 17
      %v926 = vpop.permute.xlu0 %925
      %v927 = vsel %vm557, %v916, %v918
      %v928 = vsel %vm557, %v918, %v920
      %v929 = vsel %vm557, %v922, %v924
      %v930 = vsel %vm557, %v924, %v926
      %935 = vst [vmem:[#allocation3] sm:$0xff] %v927
      %936 = vst [vmem:[#allocation3 + $0x8] sm:$0xff] %v928
      %937 = vst [vmem:[#allocation3 + $0x10] sm:$0xff] %v929
      %938 = vst [vmem:[#allocation3 + $0x18] sm:$0xff] %v930
      %v939 = vld [vmem:[#allocation2] sm:$0xff]
      %v940 = vld [vmem:[#allocation2 + $0x8] sm:$0xff]
      %v941 = vld [vmem:[#allocation2 + $0x10] sm:$0xff]
      %v942 = vld [vmem:[#allocation2 + $0x20] sm:$0xff]
      %v943 = vld [vmem:[#allocation2 + $0x28] sm:$0xff]
      %v944 = vld [vmem:[#allocation2 + $0x30] sm:$0xff]
      %951 = vrot.lane.b32.xlu0 %v939, 16
      %v952 = vpop.permute.xlu0 %951
      %953 = vrot.lane.b32.xlu0 %v940, 16
      %v954 = vpop.permute.xlu0 %953
      %955 = vrot.lane.b32.xlu0 %v941, 16
      %v956 = vpop.permute.xlu0 %955
      %957 = vrot.lane.b32.xlu0 %v942, 16
      %v958 = vpop.permute.xlu0 %957
      %959 = vrot.lane.b32.xlu0 %v943, 16
      %v960 = vpop.permute.xlu0 %959
      %961 = vrot.lane.b32.xlu0 %v944, 16
      %v962 = vpop.permute.xlu0 %961
      %v963 = vsel %vm576, %v952, %v954
      %v964 = vsel %vm576, %v954, %v956
      %v965 = vsel %vm576, %v958, %v960
      %v966 = vsel %vm576, %v960, %v962
      %971 = vst [vmem:[#allocation3 + $0x20] sm:$0xff] %v963
      %972 = vst [vmem:[#allocation3 + $0x28] sm:$0xff] %v964
      %973 = vst [vmem:[#allocation3 + $0x30] sm:$0xff] %v965
      %974 = vst [vmem:[#allocation3 + $0x38] sm:$0xff] %v966
      %v975 = vld [vmem:[#allocation2] sm:$0xff]
      %v976 = vld [vmem:[#allocation2 + $0x8] sm:$0xff]
      %v977 = vld [vmem:[#allocation2 + $0x10] sm:$0xff]
      %v978 = vld [vmem:[#allocation2 + $0x20] sm:$0xff]
      %v979 = vld [vmem:[#allocation2 + $0x28] sm:$0xff]
      %v980 = vld [vmem:[#allocation2 + $0x30] sm:$0xff]
      %v981 = vmul.bf16 %v975, %v589
      %v982 = vmul.bf16 %v976, %v593
      %v983 = vmul.bf16 %v977, %v591
      %v984 = vmul.bf16 %v978, %v589
      %v985 = vmul.bf16 %v979, %v593
      %v986 = vmul.bf16 %v980, %v591
      %993 = vrot.lane.b32.xlu0 %v981, 15
      %v994 = vpop.permute.xlu0 %993
      %995 = vrot.lane.b32.xlu0 %v982, 15
      %v996 = vpop.permute.xlu0 %995
      %997 = vrot.lane.b32.xlu0 %v983, 15
      %v998 = vpop.permute.xlu0 %997
      %999 = vrot.lane.b32.xlu0 %v984, 15
      %v1000 = vpop.permute.xlu0 %999
      %1001 = vrot.lane.b32.xlu0 %v985, 15
      %v1002 = vpop.permute.xlu0 %1001
      %1003 = vrot.lane.b32.xlu0 %v986, 15
      %v1004 = vpop.permute.xlu0 %1003
      %v1005 = vsel %vm609, %v994, %v996
      %v1006 = vsel %vm609, %v996, %v998
      %v1007 = vsel %vm609, %v1000, %v1002
      %v1008 = vsel %vm609, %v1002, %v1004
      %1013 = vst [vmem:[#allocation3 + $0x40] sm:$0xff] %v1005
      %1014 = vst [vmem:[#allocation3 + $0x48] sm:$0xff] %v1006
      %1015 = vst [vmem:[#allocation3 + $0x50] sm:$0xff] %v1007
      %1016 = vst [vmem:[#allocation3 + $0x58] sm:$0xff] %v1008
      %v1017 = vld [vmem:[#allocation2] sm:$0xff]
      %v1018 = vld [vmem:[#allocation2 + $0x8] sm:$0xff]
      %v1019 = vld [vmem:[#allocation2 + $0x10] sm:$0xff]
      %v1020 = vld [vmem:[#allocation2 + $0x20] sm:$0xff]
      %v1021 = vld [vmem:[#allocation2 + $0x28] sm:$0xff]
      %v1022 = vld [vmem:[#allocation2 + $0x30] sm:$0xff]
      %v1023 = vmul.bf16 %v1017, %v620
      %v1024 = vmul.bf16 %v1018, %v624
      %v1025 = vmul.bf16 %v1019, %v622
      %v1026 = vmul.bf16 %v1020, %v620
      %v1027 = vmul.bf16 %v1021, %v624
      %v1028 = vmul.bf16 %v1022, %v622
      %1035 = vrot.lane.b32.xlu0 %v1023, 1
      %v1036 = vpop.permute.xlu0 %1035
      %1037 = vrot.lane.b32.xlu0 %v1024, 1
      %v1038 = vpop.permute.xlu0 %1037
      %1039 = vrot.lane.b32.xlu0 %v1025, 1
      %v1040 = vpop.permute.xlu0 %1039
      %1041 = vrot.lane.b32.xlu0 %v1026, 1
      %v1042 = vpop.permute.xlu0 %1041
      %1043 = vrot.lane.b32.xlu0 %v1027, 1
      %v1044 = vpop.permute.xlu0 %1043
      %1045 = vrot.lane.b32.xlu0 %v1028, 1
      %v1046 = vpop.permute.xlu0 %1045
      %v1047 = vsel %vm640, %v1036, %v1038
      %v1048 = vsel %vm640, %v1038, %v1040
      %v1049 = vsel %vm640, %v1042, %v1044
      %v1050 = vsel %vm640, %v1044, %v1046
      %1055 = vst [vmem:[#allocation3 + $0x60] sm:$0xff] %v1047
      %1056 = vst [vmem:[#allocation3 + $0x68] sm:$0xff] %v1048
      %1057 = vst [vmem:[#allocation3 + $0x70] sm:$0xff] %v1049
      %1058 = vst [vmem:[#allocation3 + $0x78] sm:$0xff] %v1050
      %v1059 = vld [vmem:[#allocation2 + $0x8] sm:$0xff]
      %v1060 = vld [vmem:[#allocation2 + $0x10] sm:$0xff]
      %v1061 = vld [vmem:[#allocation2 + $0x28] sm:$0xff]
      %v1062 = vld [vmem:[#allocation2 + $0x30] sm:$0xff]
      %1063 = vst [vmem:[#allocation3 + $0x80] sm:$0xff] %v1059
      %1064 = vst [vmem:[#allocation3 + $0x88] sm:$0xff] %v1060
      %1065 = vst [vmem:[#allocation3 + $0x90] sm:$0xff] %v1061
      %1066 = vst [vmem:[#allocation3 + $0x98] sm:$0xff] %v1062
      %v1067 = vld [vmem:[#allocation2 + $0x8] sm:$0xff]
      %v1068 = vld [vmem:[#allocation2 + $0x10] sm:$0xff]
      %v1069 = vld [vmem:[#allocation2 + $0x18] sm:$0xff]
      %v1070 = vld [vmem:[#allocation2 + $0x28] sm:$0xff]
      %v1071 = vld [vmem:[#allocation2 + $0x30] sm:$0xff]
      %v1072 = vld [vmem:[#allocation2 + $0x38] sm:$0xff]
      %v1073 = vmul.bf16 %v1067, %v655
      %v1074 = vmul.bf16 %v1068, %v658
      %v1075 = vmul.bf16 %v1069, %v657
      %v1076 = vmul.bf16 %v1070, %v655
      %v1077 = vmul.bf16 %v1071, %v658
      %v1078 = vmul.bf16 %v1072, %v657
      %1085 = vrot.lane.b32.xlu0 %v1073, 127
      %v1086 = vpop.permute.xlu0 %1085
      %1087 = vrot.lane.b32.xlu0 %v1074, 127
      %v1088 = vpop.permute.xlu0 %1087
      %1089 = vrot.lane.b32.xlu0 %v1075, 127
      %v1090 = vpop.permute.xlu0 %1089
      %1091 = vrot.lane.b32.xlu0 %v1076, 127
      %v1092 = vpop.permute.xlu0 %1091
      %1093 = vrot.lane.b32.xlu0 %v1077, 127
      %v1094 = vpop.permute.xlu0 %1093
      %1095 = vrot.lane.b32.xlu0 %v1078, 127
      %v1096 = vpop.permute.xlu0 %1095
      %v1097 = vsel %vm623, %v1086, %v1088
      %v1098 = vsel %vm623, %v1088, %v1090
      %v1099 = vsel %vm623, %v1092, %v1094
      %v1100 = vsel %vm623, %v1094, %v1096
      %1105 = vst [vmem:[#allocation3 + $0xa0] sm:$0xff] %v1097
      %1106 = vst [vmem:[#allocation3 + $0xa8] sm:$0xff] %v1098
      %1107 = vst [vmem:[#allocation3 + $0xb0] sm:$0xff] %v1099
      %1108 = vst [vmem:[#allocation3 + $0xb8] sm:$0xff] %v1100
      %v1109 = vld [vmem:[#allocation2 + $0x8] sm:$0xff]
      %v1110 = vld [vmem:[#allocation2 + $0x10] sm:$0xff]
      %v1111 = vld [vmem:[#allocation2 + $0x18] sm:$0xff]
      %v1112 = vld [vmem:[#allocation2 + $0x28] sm:$0xff]
      %v1113 = vld [vmem:[#allocation2 + $0x30] sm:$0xff]
      %v1114 = vld [vmem:[#allocation2 + $0x38] sm:$0xff]
      %v1115 = vmul.bf16 %v1109, %v684
      %v1116 = vmul.bf16 %v1110, %v687
      %v1117 = vmul.bf16 %v1111, %v686
      %v1118 = vmul.bf16 %v1112, %v684
      %v1119 = vmul.bf16 %v1113, %v687
      %v1120 = vmul.bf16 %v1114, %v686
      %1127 = vrot.lane.b32.xlu0 %v1115, 113
      %v1128 = vpop.permute.xlu0 %1127
      %1129 = vrot.lane.b32.xlu0 %v1116, 113
      %v1130 = vpop.permute.xlu0 %1129
      %1131 = vrot.lane.b32.xlu0 %v1117, 113
      %v1132 = vpop.permute.xlu0 %1131
      %1133 = vrot.lane.b32.xlu0 %v1118, 113
      %v1134 = vpop.permute.xlu0 %1133
      %1135 = vrot.lane.b32.xlu0 %v1119, 113
      %v1136 = vpop.permute.xlu0 %1135
      %1137 = vrot.lane.b32.xlu0 %v1120, 113
      %v1138 = vpop.permute.xlu0 %1137
      %v1139 = vsel %vm592, %v1128, %v1130
      %v1140 = vsel %vm592, %v1130, %v1132
      %v1141 = vsel %vm592, %v1134, %v1136
      %v1142 = vsel %vm592, %v1136, %v1138
      %1147 = vst [vmem:[#allocation3 + $0xc0] sm:$0xff] %v1139
      %1148 = vst [vmem:[#allocation3 + $0xc8] sm:$0xff] %v1140
      %1149 = vst [vmem:[#allocation3 + $0xd0] sm:$0xff] %v1141
      %1150 = vst [vmem:[#allocation3 + $0xd8] sm:$0xff] %v1142
      %v1151 = vld [vmem:[#allocation2 + $0x8] sm:$0xff]
      %v1152 = vld [vmem:[#allocation2 + $0x10] sm:$0xff]
      %v1153 = vld [vmem:[#allocation2 + $0x18] sm:$0xff]
      %v1154 = vld [vmem:[#allocation2 + $0x28] sm:$0xff]
      %v1155 = vld [vmem:[#allocation2 + $0x30] sm:$0xff]
      %v1156 = vld [vmem:[#allocation2 + $0x38] sm:$0xff]
      %1163 = vrot.lane.b32.xlu0 %v1151, 112
      %v1164 = vpop.permute.xlu0 %1163
      %1165 = vrot.lane.b32.xlu0 %v1152, 112
      %v1166 = vpop.permute.xlu0 %1165
      %1167 = vrot.lane.b32.xlu0 %v1153, 112
      %v1168 = vpop.permute.xlu0 %1167
      %1169 = vrot.lane.b32.xlu0 %v1154, 112
      %v1170 = vpop.permute.xlu0 %1169
      %1171 = vrot.lane.b32.xlu0 %v1155, 112
      %v1172 = vpop.permute.xlu0 %1171
      %1173 = vrot.lane.b32.xlu0 %v1156, 112
      %v1174 = vpop.permute.xlu0 %1173
      %v1175 = vsel %vm721, %v1164, %v1166
      %v1176 = vsel %vm721, %v1166, %v1168
      %v1177 = vsel %vm721, %v1170, %v1172
      %v1178 = vsel %vm721, %v1172, %v1174
      %1183 = vst [vmem:[#allocation3 + $0xe0] sm:$0xff] %v1175
      %1184 = vst [vmem:[#allocation3 + $0xe8] sm:$0xff] %v1176
      %1185 = vst [vmem:[#allocation3 + $0xf0] sm:$0xff] %v1177
      %1186 = vst [vmem:[#allocation3 + $0xf8] sm:$0xff] %v1178
      %v1187 = vld [vmem:[#allocation2 + $0x8] sm:$0xff]
      %v1188 = vld [vmem:[#allocation2 + $0x10] sm:$0xff]
      %v1189 = vld [vmem:[#allocation2 + $0x18] sm:$0xff]
      %v1190 = vld [vmem:[#allocation2 + $0x28] sm:$0xff]
      %v1191 = vld [vmem:[#allocation2 + $0x30] sm:$0xff]
      %v1192 = vld [vmem:[#allocation2 + $0x38] sm:$0xff]
      %v1193 = vmul.bf16 %v1187, %v732
      %v1194 = vmul.bf16 %v1188, %v735
      %v1195 = vmul.bf16 %v1189, %v734
      %v1196 = vmul.bf16 %v1190, %v732
      %v1197 = vmul.bf16 %v1191, %v735
      %v1198 = vmul.bf16 %v1192, %v734
      %1205 = vrot.lane.b32.xlu0 %v1193, 111
      %v1206 = vpop.permute.xlu0 %1205
      %1207 = vrot.lane.b32.xlu0 %v1194, 111
      %v1208 = vpop.permute.xlu0 %1207
      %1209 = vrot.lane.b32.xlu0 %v1195, 111
      %v1210 = vpop.permute.xlu0 %1209
      %1211 = vrot.lane.b32.xlu0 %v1196, 111
      %v1212 = vpop.permute.xlu0 %1211
      %1213 = vrot.lane.b32.xlu0 %v1197, 111
      %v1214 = vpop.permute.xlu0 %1213
      %1215 = vrot.lane.b32.xlu0 %v1198, 111
      %v1216 = vpop.permute.xlu0 %1215
      %v1217 = vsel %vm540, %v1206, %v1208
      %v1218 = vsel %vm540, %v1208, %v1210
      %v1219 = vsel %vm540, %v1212, %v1214
      %v1220 = vsel %vm540, %v1214, %v1216
      %1225 = vst [vmem:[#allocation3 + $0x100] sm:$0xff] %v1217
      %1226 = vst [vmem:[#allocation3 + $0x108] sm:$0xff] %v1218
      %1227 = vst [vmem:[#allocation3 + $0x110] sm:$0xff] %v1219
      %1228 = vst [vmem:[#allocation3 + $0x118] sm:$0xff] %v1220
      %v1229 = vld [vmem:[%s3] sm:$0xff]
      %v1230 = vld [vmem:[%s3 + $0x8] sm:$0xf]
      %v1231 = vld [vmem:[%s3 + $0xc] sm:$0xff]
      %v1232 = vld [vmem:[%s3 + $0x14] sm:$0xf]
      %v1233 = vld [vmem:[%s3 + $0x18] sm:$0xff]
      %v1234 = vld [vmem:[%s3 + $0x20] sm:$0xf]
      %v1235 = vld [vmem:[%s3 + $0x24] sm:$0xff]
      %v1236 = vld [vmem:[%s3 + $0x2c] sm:$0xf]
      %v1237 = vld [vmem:[%s3 + $0x30] sm:$0xff]
      %v1238 = vld [vmem:[%s3 + $0x38] sm:$0xf]
      %v1239 = vld [vmem:[%s3 + $0x3c] sm:$0xff]
      %v1240 = vld [vmem:[%s3 + $0x44] sm:$0xf]
      %v1241 = vld [vmem:[%s3 + $0x48] sm:$0xff]
      %v1242 = vld [vmem:[%s3 + $0x50] sm:$0xf]
      %v1243 = vld [vmem:[%s3 + $0x54] sm:$0xff]
      %v1244 = vld [vmem:[%s3 + $0x5c] sm:$0xf]
      %v1245 = vld [vmem:[#allocation3] sm:$0xff]
      %v1246 = vld [vmem:[#allocation3 + $0x8] sm:$0xff]
      %v1247 = vld [vmem:[#allocation3 + $0x10] sm:$0xff]
      %v1248 = vld [vmem:[#allocation3 + $0x18] sm:$0xff]
      %v1249 = vld [vmem:[#allocation3 + $0x20] sm:$0xff]
      %v1250 = vld [vmem:[#allocation3 + $0x28] sm:$0xff]
      %v1251 = vld [vmem:[#allocation3 + $0x30] sm:$0xff]
      %v1252 = vld [vmem:[#allocation3 + $0x38] sm:$0xff]
      %v1253 = vld [vmem:[#allocation3 + $0x40] sm:$0xff]
      %v1254 = vld [vmem:[#allocation3 + $0x48] sm:$0xff]
      %v1255 = vld [vmem:[#allocation3 + $0x50] sm:$0xff]
      %v1256 = vld [vmem:[#allocation3 + $0x58] sm:$0xff]
      %v1257 = vld [vmem:[#allocation3 + $0x60] sm:$0xff]
      %v1258 = vld [vmem:[#allocation3 + $0x68] sm:$0xff]
      %v1259 = vld [vmem:[#allocation3 + $0x70] sm:$0xff]
      %v1260 = vld [vmem:[#allocation3 + $0x78] sm:$0xff]
      %v1261 = vld [vmem:[#allocation3 + $0x80] sm:$0xff]
      %v1262 = vld [vmem:[#allocation3 + $0x88] sm:$0xff]
      %v1263 = vld [vmem:[#allocation3 + $0x90] sm:$0xff]
      %v1264 = vld [vmem:[#allocation3 + $0x98] sm:$0xff]
      %v1265 = vld [vmem:[#allocation3 + $0xa0] sm:$0xff]
      %v1266 = vld [vmem:[#allocation3 + $0xa8] sm:$0xff]
      %v1267 = vld [vmem:[#allocation3 + $0xb0] sm:$0xff]
      %v1268 = vld [vmem:[#allocation3 + $0xb8] sm:$0xff]
      %v1269 = vld [vmem:[#allocation3 + $0xc0] sm:$0xff]
      %v1270 = vld [vmem:[#allocation3 + $0xc8] sm:$0xff]
      %v1271 = vld [vmem:[#allocation3 + $0xd0] sm:$0xff]
      %v1272 = vld [vmem:[#allocation3 + $0xd8] sm:$0xff]
      %v1273 = vld [vmem:[#allocation3 + $0xe0] sm:$0xff]
      %v1274 = vld [vmem:[#allocation3 + $0xe8] sm:$0xff]
      %v1275 = vld [vmem:[#allocation3 + $0xf0] sm:$0xff]
      %v1276 = vld [vmem:[#allocation3 + $0xf8] sm:$0xff]
      %v1277 = vld [vmem:[#allocation3 + $0x100] sm:$0xff]
      %v1278 = vld [vmem:[#allocation3 + $0x108] sm:$0xff]
      %v1279 = vld [vmem:[#allocation3 + $0x110] sm:$0xff]
      %v1280 = vld [vmem:[#allocation3 + $0x118] sm:$0xff]
      %v1281 = vld [vmem:[%s4] sm:$0xff]
      %v1282 = vld [vmem:[%s4 + $0x8] sm:$0xff]
      %v1283 = vld [vmem:[%s4 + $0x10] sm:$0xff]
      %v1284 = vld [vmem:[%s4 + $0x18] sm:$0xff]
      %v1285 = vld [vmem:[%s4 + $0x20] sm:$0xff]
      %v1286 = vld [vmem:[%s4 + $0x28] sm:$0xff]
      %v1287 = vld [vmem:[%s4 + $0x30] sm:$0xff]
      %v1288 = vld [vmem:[%s4 + $0x38] sm:$0xff]
      %1290 = vset.pattern.permute.xlu0 0
      %1291 = vperm.xlu0 %1290, %v1281
      %v1292 = vpop.permute.xlu0 %1291
      %1295 = vset.pattern.permute.xlu0 0
      %1296 = vperm.xlu0 %1295, %v1282
      %v1297 = vpop.permute.xlu0 %1296
      %1300 = vset.pattern.permute.xlu0 0
      %1301 = vperm.xlu0 %1300, %v1283
      %v1302 = vpop.permute.xlu0 %1301
      %1305 = vset.pattern.permute.xlu0 0
      %1306 = vperm.xlu0 %1305, %v1284
      %v1307 = vpop.permute.xlu0 %1306
      %1310 = vset.pattern.permute.xlu0 0
      %1311 = vperm.xlu0 %1310, %v1285
      %v1312 = vpop.permute.xlu0 %1311
      %1315 = vset.pattern.permute.xlu0 0
      %1316 = vperm.xlu0 %1315, %v1286
      %v1317 = vpop.permute.xlu0 %1316
      %1320 = vset.pattern.permute.xlu0 0
      %1321 = vperm.xlu0 %1320, %v1287
      %v1322 = vpop.permute.xlu0 %1321
      %1325 = vset.pattern.permute.xlu0 0
      %1326 = vperm.xlu0 %1325, %v1288
      %v1327 = vpop.permute.xlu0 %1326
      %v1345 = vunpack.c.l.b16 %v1229
      %v1346 = vunpack.c.h.b16 %v1229
      %v1347 = vunpack.c.l.b16 %v1230
      %v1348 = vunpack.c.l.b16 %v1231
      %v1349 = vunpack.c.h.b16 %v1231
      %v1350 = vunpack.c.l.b16 %v1232
      %v1351 = vunpack.c.l.b16 %v1233
      %v1352 = vunpack.c.h.b16 %v1233
      %v1353 = vunpack.c.l.b16 %v1234
      %v1354 = vunpack.c.l.b16 %v1235
      %v1355 = vunpack.c.h.b16 %v1235
      %v1356 = vunpack.c.l.b16 %v1236
      %v1357 = vunpack.c.l.b16 %v1237
      %v1358 = vunpack.c.h.b16 %v1237
      %v1359 = vunpack.c.l.b16 %v1238
      %v1360 = vunpack.c.l.b16 %v1239
      %v1361 = vunpack.c.h.b16 %v1239
      %v1362 = vunpack.c.l.b16 %v1240
      %v1363 = vunpack.c.l.b16 %v1241
      %v1364 = vunpack.c.h.b16 %v1241
      %v1365 = vunpack.c.l.b16 %v1242
      %v1366 = vunpack.c.l.b16 %v1243
      %v1367 = vunpack.c.h.b16 %v1243
      %v1368 = vunpack.c.l.b16 %v1244
      %v1369 = vpack.c.b16 %v1348, %v1345
      %v1370 = vpack.c.b16 %v1349, %v1346
      %v1371 = vpack.c.b16 %v1350, %v1347
      %v1372 = vpack.c.b16 %v1354, %v1351
      %v1373 = vpack.c.b16 %v1355, %v1352
      %v1374 = vpack.c.b16 %v1356, %v1353
      %v1375 = vpack.c.b16 %v1360, %v1357
      %v1376 = vpack.c.b16 %v1361, %v1358
      %v1377 = vpack.c.b16 %v1362, %v1359
      %v1378 = vpack.c.b16 %v1366, %v1363
      %v1379 = vpack.c.b16 %v1367, %v1364
      %v1380 = vpack.c.b16 %v1368, %v1365
      %vm1389 = vcmask 261120
      %v1391 = vsel %vm1389, %v1371, 0
      %v1394 = vsel %vm1389, %v1374, 0
      %v1397 = vsel %vm1389, %v1377, 0
      %v1400 = vsel %vm1389, %v1380, 0
      %1402 = vmatprep.subr.bf16.mxu0 %v1246
      %1403 = vmatpush1.bf16.msra.mxu0 %v1245
      %1404 = vmatprep.subr.bf16.mxu0 %v1248
      %1405 = vmatpush1.bf16.msra.mxu0 %v1247
      %1406 = vmatprep.subr.bf16.mxu0 %v1250
      %1407 = vmatpush1.bf16.msra.mxu0 %v1249
      %1408 = vmatprep.subr.bf16.mxu0 %v1252
      %1409 = vmatpush1.bf16.msra.mxu0 %v1251
      %1410 = vmatprep.subr.bf16.mxu0 %v1254
      %1411 = vmatpush1.bf16.msra.mxu0 %v1253
      %1412 = vmatprep.subr.bf16.mxu0 %v1256
      %1413 = vmatpush1.bf16.msra.mxu0 %v1255
      %1414 = vmatprep.subr.bf16.mxu0 %v1258
      %1415 = vmatpush1.bf16.msra.mxu0 %v1257
      %1416 = vmatprep.subr.bf16.mxu0 %v1260
      %1417 = vmatpush1.bf16.msra.mxu0 %v1259
      %1418 = vmatprep.subr.bf16.mxu0 %v1262
      %1419 = vmatpush1.bf16.msra.mxu0 %v1261
      %1420 = vmatprep.subr.bf16.mxu0 %v1264
      %1421 = vmatpush1.bf16.msra.mxu0 %v1263
      %1422 = vmatprep.subr.bf16.mxu0 %v1266
      %1423 = vmatpush1.bf16.msra.mxu0 %v1265
      %1424 = vmatprep.subr.bf16.mxu0 %v1268
      %1425 = vmatpush1.bf16.msra.mxu0 %v1267
      %1426 = vmatprep.subr.bf16.mxu0 %v1270
      %1427 = vmatpush1.bf16.msra.mxu0 %v1269
      %1428 = vmatprep.subr.bf16.mxu0 %v1272
      %1429 = vmatpush1.bf16.msra.mxu0 %v1271
      %1430 = vmatprep.subr.bf16.mxu0 %v1274
      %1431 = vmatpush1.bf16.msra.mxu0 %v1273
      %1432 = vmatprep.subr.bf16.mxu0 %v1276
      %1433 = vmatpush1.bf16.msra.mxu0 %v1275
      %1434 = vmatprep.mubr.bf16.mxu0 %v1370
      %1435 = vmatmul.mubr.bf16.gmra.mrb[0].mxu0 %v1369
      %v1436 = vpop.f32.mrb[0].mxu0
      %v1437 = vadd.f32 %v1292, %v1436
      %v1438 = vpop.f32.mrb[0].mxu0
      %v1439 = vadd.f32 %v1292, %v1438
      %v1440 = vpop.f32.mrb[0].mxu0
      %v1441 = vadd.f32 %v1297, %v1440
      %v1442 = vpop.f32.mrb[0].mxu0
      %v1443 = vadd.f32 %v1297, %v1442
      %1444 = vmatprep.mubr.bf16.mxu0 %v1373
      %1445 = vmatmul.mubr.bf16.gmra.mrb[0].mxu0 %v1372
      %v1446 = vpop.f32.mrb[0].mxu0
      %v1447 = vadd.f32 %v1302, %v1446
      %v1448 = vpop.f32.mrb[0].mxu0
      %v1449 = vadd.f32 %v1302, %v1448
      %v1450 = vpop.f32.mrb[0].mxu0
      %v1451 = vadd.f32 %v1307, %v1450
      %v1452 = vpop.f32.mrb[0].mxu0
      %v1453 = vadd.f32 %v1307, %v1452
      %1454 = vmatprep.mubr.bf16.mxu0 %v1376
      %1455 = vmatmul.mubr.bf16.gmra.mrb[0].mxu0 %v1375
      %v1456 = vpop.f32.mrb[0].mxu0
      %v1457 = vadd.f32 %v1312, %v1456
      %v1458 = vpop.f32.mrb[0].mxu0
      %v1459 = vadd.f32 %v1312, %v1458
      %v1460 = vpop.f32.mrb[0].mxu0
      %v1461 = vadd.f32 %v1317, %v1460
      %v1462 = vpop.f32.mrb[0].mxu0
      %v1463 = vadd.f32 %v1317, %v1462
      %1464 = vmatprep.mubr.bf16.mxu0 %v1379
      %1465 = vmatmul.mubr.bf16.gmra.mrb[0].mxu0 %v1378
      %v1466 = vpop.f32.mrb[0].mxu0
      %v1467 = vadd.f32 %v1322, %v1466
      %v1468 = vpop.f32.mrb[0].mxu0
      %v1469 = vadd.f32 %v1322, %v1468
      %v1470 = vpop.f32.mrb[0].mxu0
      %v1471 = vadd.f32 %v1327, %v1470
      %v1472 = vpop.f32.mrb[0].mxu0
      %v1473 = vadd.f32 %v1327, %v1472
      %1474 = vdwg.mxu0
      %1475 = vmatprep.subr.bf16.mxu0 %v1278
      %1476 = vmatpush1.bf16.msra.mxu0 %v1277
      %1477 = vmatprep.subr.bf16.mxu0 %v1280
      %1478 = vmatpush1.bf16.msra.mxu0 %v1279
      %1479 = vmatprep.subr.bf16.mxu0 0
      %1480 = vmatpush1.bf16.msra.mxu0 0
      %1481 = vmatprep.subr.bf16.mxu0 0
      %1482 = vmatpush1.bf16.msra.mxu0 0
      %1483 = vmatprep.subr.bf16.mxu0 0
      %1484 = vmatpush1.bf16.msra.mxu0 0
      %1485 = vmatprep.subr.bf16.mxu0 0
      %1486 = vmatpush1.bf16.msra.mxu0 0
      %1487 = vmatprep.subr.bf16.mxu0 0
      %1488 = vmatpush1.bf16.msra.mxu0 0
      %1489 = vmatprep.subr.bf16.mxu0 0
      %1490 = vmatpush1.bf16.msra.mxu0 0
      %1491 = vmatprep.subr.bf16.mxu0 0
      %1492 = vmatpush1.bf16.msra.mxu0 0
      %1493 = vmatprep.subr.bf16.mxu0 0
      %1494 = vmatpush1.bf16.msra.mxu0 0
      %1495 = vmatprep.subr.bf16.mxu0 0
      %1496 = vmatpush1.bf16.msra.mxu0 0
      %1497 = vmatprep.subr.bf16.mxu0 0
      %1498 = vmatpush1.bf16.msra.mxu0 0
      %1499 = vmatprep.subr.bf16.mxu0 0
      %1500 = vmatpush1.bf16.msra.mxu0 0
      %1501 = vmatprep.subr.bf16.mxu0 0
      %1502 = vmatpush1.bf16.msra.mxu0 0
      %1503 = vmatprep.subr.bf16.mxu0 0
      %1504 = vmatpush1.bf16.msra.mxu0 0
      %1505 = vmatprep.subr.bf16.mxu0 0
      %1506 = vmatpush1.bf16.msra.mxu0 0
      %1507 = vmatprep.mubr.bf16.mxu0 0
      %1508 = vmatmul.mubr.bf16.gmra.mrb[0].mxu0 %v1391
      %v1509 = vpop.f32.mrb[0].mxu0
      %v1510 = vadd.f32 %v1437, %v1509
      %v1511 = vpop.f32.mrb[0].mxu0
      %v1512 = vadd.f32 %v1439, %v1511
      %v1513 = vpop.f32.mrb[0].mxu0
      %v1514 = vadd.f32 %v1441, %v1513
      %v1515 = vpop.f32.mrb[0].mxu0
      %v1516 = vadd.f32 %v1443, %v1515
      %1517 = vmatprep.mubr.bf16.mxu0 0
      %1518 = vmatmul.mubr.bf16.gmra.mrb[0].mxu0 %v1394
      %v1519 = vpop.f32.mrb[0].mxu0
      %v1520 = vadd.f32 %v1447, %v1519
      %v1521 = vpop.f32.mrb[0].mxu0
      %v1522 = vadd.f32 %v1449, %v1521
      %v1523 = vpop.f32.mrb[0].mxu0
      %v1524 = vadd.f32 %v1451, %v1523
      %v1525 = vpop.f32.mrb[0].mxu0
      %v1526 = vadd.f32 %v1453, %v1525
      %1527 = vmatprep.mubr.bf16.mxu0 0
      %1528 = vmatmul.mubr.bf16.gmra.mrb[0].mxu0 %v1397
      %v1529 = vpop.f32.mrb[0].mxu0
      %v1530 = vadd.f32 %v1457, %v1529
      %v1531 = vpop.f32.mrb[0].mxu0
      %v1532 = vadd.f32 %v1459, %v1531
      %v1533 = vpop.f32.mrb[0].mxu0
      %v1534 = vadd.f32 %v1461, %v1533
      %v1535 = vpop.f32.mrb[0].mxu0
      %v1536 = vadd.f32 %v1463, %v1535
      %1537 = vmatprep.mubr.bf16.mxu0 0
      %1538 = vmatmul.mubr.bf16.gmra.mrb[0].mxu0 %v1400
      %v1539 = vpop.f32.mrb[0].mxu0
      %v1540 = vadd.f32 %v1467, %v1539
      %v1541 = vpop.f32.mrb[0].mxu0
      %v1542 = vadd.f32 %v1469, %v1541
      %v1543 = vpop.f32.mrb[0].mxu0
      %v1544 = vadd.f32 %v1471, %v1543
      %v1545 = vpop.f32.mrb[0].mxu0
      %v1546 = vadd.f32 %v1473, %v1545
      %1547 = vdwg.mxu0
      %v1548 = vmax.f32 %v1510, 0.0
      %v1549 = vmax.f32 %v1512, 0.0
      %v1550 = vmax.f32 %v1514, 0.0
      %v1551 = vmax.f32 %v1516, 0.0
      %v1552 = vmax.f32 %v1520, 0.0
      %v1553 = vmax.f32 %v1522, 0.0
      %v1554 = vmax.f32 %v1524, 0.0
      %v1555 = vmax.f32 %v1526, 0.0
      %v1556 = vmax.f32 %v1530, 0.0
      %v1557 = vmax.f32 %v1532, 0.0
      %v1558 = vmax.f32 %v1534, 0.0
      %v1559 = vmax.f32 %v1536, 0.0
      %v1560 = vmax.f32 %v1540, 0.0
      %v1561 = vmax.f32 %v1542, 0.0
      %v1562 = vmax.f32 %v1544, 0.0
      %v1563 = vmax.f32 %v1546, 0.0
      %v1564 = vpack.c.bf16 %v1550, %v1548
      %v1565 = vpack.c.bf16 %v1551, %v1549
      %v1566 = vpack.c.bf16 %v1554, %v1552
      %v1567 = vpack.c.bf16 %v1555, %v1553
      %v1568 = vpack.c.bf16 %v1558, %v1556
      %v1569 = vpack.c.bf16 %v1559, %v1557
      %v1570 = vpack.c.bf16 %v1562, %v1560
      %v1571 = vpack.c.bf16 %v1563, %v1561
      %1572 = vst [vmem:[#allocation2 + $0x8] sm:$0xff] %v1564
      %1573 = vst [vmem:[#allocation2 + $0x10] sm:$0xff] %v1565
      %1574 = vst [vmem:[#allocation2 + $0x28] sm:$0xff] %v1566
      %1575 = vst [vmem:[#allocation2 + $0x30] sm:$0xff] %v1567
      %1576 = vst [vmem:[#allocation2 + $0x48] sm:$0xff] %v1568
      %1577 = vst [vmem:[#allocation2 + $0x50] sm:$0xff] %v1569
      %1578 = vst [vmem:[#allocation2 + $0x68] sm:$0xff] %v1570
      %1579 = vst [vmem:[#allocation2 + $0x70] sm:$0xff] %v1571
      %v1580 = vld [vmem:[#allocation2] sm:$0xff]
      %v1581 = vld [vmem:[#allocation2 + $0x8] sm:$0xff]
      %v1582 = vld [vmem:[#allocation2 + $0x10] sm:$0xff]
      %v1583 = vld [vmem:[#allocation2 + $0x20] sm:$0xff]
      %v1584 = vld [vmem:[#allocation2 + $0x28] sm:$0xff]
      %v1585 = vld [vmem:[#allocation2 + $0x30] sm:$0xff]
      %v1586 = vld [vmem:[#allocation2 + $0x40] sm:$0xff]
      %v1587 = vld [vmem:[#allocation2 + $0x48] sm:$0xff]
      %v1588 = vld [vmem:[#allocation2 + $0x50] sm:$0xff]
      %v1589 = vld [vmem:[#allocation2 + $0x60] sm:$0xff]
      %v1590 = vld [vmem:[#allocation2 + $0x68] sm:$0xff]
      %v1591 = vld [vmem:[#allocation2 + $0x70] sm:$0xff]
      %v1592 = vmul.bf16 %v1580, %v537
      %v1593 = vmul.bf16 %v1581, %v541
      %v1594 = vmul.bf16 %v1582, %v539
      %v1595 = vmul.bf16 %v1583, %v537
      %v1596 = vmul.bf16 %v1584, %v541
      %v1597 = vmul.bf16 %v1585, %v539
      %v1598 = vmul.bf16 %v1586, %v537
      %v1599 = vmul.bf16 %v1587, %v541
      %v1600 = vmul.bf16 %v1588, %v539
      %v1601 = vmul.bf16 %v1589, %v537
      %v1602 = vmul.bf16 %v1590, %v541
      %v1603 = vmul.bf16 %v1591, %v539
      %1616 = vrot.lane.b32.xlu0 %v1592, 17
      %v1617 = vpop.permute.xlu0 %1616
      %1618 = vrot.lane.b32.xlu0 %v1593, 17
      %v1619 = vpop.permute.xlu0 %1618
      %1620 = vrot.lane.b32.xlu0 %v1594, 17
      %v1621 = vpop.permute.xlu0 %1620
      %1622 = vrot.lane.b32.xlu0 %v1595, 17
      %v1623 = vpop.permute.xlu0 %1622
      %1624 = vrot.lane.b32.xlu0 %v1596, 17
      %v1625 = vpop.permute.xlu0 %1624
      %1626 = vrot.lane.b32.xlu0 %v1597, 17
      %v1627 = vpop.permute.xlu0 %1626
      %1628 = vrot.lane.b32.xlu0 %v1598, 17
      %v1629 = vpop.permute.xlu0 %1628
      %1630 = vrot.lane.b32.xlu0 %v1599, 17
      %v1631 = vpop.permute.xlu0 %1630
      %1632 = vrot.lane.b32.xlu0 %v1600, 17
      %v1633 = vpop.permute.xlu0 %1632
      %1634 = vrot.lane.b32.xlu0 %v1601, 17
      %v1635 = vpop.permute.xlu0 %1634
      %1636 = vrot.lane.b32.xlu0 %v1602, 17
      %v1637 = vpop.permute.xlu0 %1636
      %1638 = vrot.lane.b32.xlu0 %v1603, 17
      %v1639 = vpop.permute.xlu0 %1638
      %v1640 = vsel %vm557, %v1617, %v1619
      %v1641 = vsel %vm557, %v1619, %v1621
      %v1642 = vsel %vm557, %v1623, %v1625
      %v1643 = vsel %vm557, %v1625, %v1627
      %v1644 = vsel %vm557, %v1629, %v1631
      %v1645 = vsel %vm557, %v1631, %v1633
      %v1646 = vsel %vm557, %v1635, %v1637
      %v1647 = vsel %vm557, %v1637, %v1639
      %1656 = vst [vmem:[#allocation3] sm:$0xff] %v1640
      %1657 = vst [vmem:[#allocation3 + $0x8] sm:$0xff] %v1641
      %1658 = vst [vmem:[#allocation3 + $0x10] sm:$0xff] %v1642
      %1659 = vst [vmem:[#allocation3 + $0x18] sm:$0xff] %v1643
      %1660 = vst [vmem:[#allocation3 + $0x20] sm:$0xff] %v1644
      %1661 = vst [vmem:[#allocation3 + $0x28] sm:$0xff] %v1645
      %1662 = vst [vmem:[#allocation3 + $0x30] sm:$0xff] %v1646
      %1663 = vst [vmem:[#allocation3 + $0x38] sm:$0xff] %v1647
      %v1664 = vld [vmem:[#allocation2] sm:$0xff]
      %v1665 = vld [vmem:[#allocation2 + $0x8] sm:$0xff]
      %v1666 = vld [vmem:[#allocation2 + $0x10] sm:$0xff]
      %v1667 = vld [vmem:[#allocation2 + $0x20] sm:$0xff]
      %v1668 = vld [vmem:[#allocation2 + $0x28] sm:$0xff]
      %v1669 = vld [vmem:[#allocation2 + $0x30] sm:$0xff]
      %v1670 = vld [vmem:[#allocation2 + $0x40] sm:$0xff]
      %v1671 = vld [vmem:[#allocation2 + $0x48] sm:$0xff]
      %v1672 = vld [vmem:[#allocation2 + $0x50] sm:$0xff]
      %v1673 = vld [vmem:[#allocation2 + $0x60] sm:$0xff]
      %v1674 = vld [vmem:[#allocation2 + $0x68] sm:$0xff]
      %v1675 = vld [vmem:[#allocation2 + $0x70] sm:$0xff]
      %1688 = vrot.lane.b32.xlu0 %v1664, 16
      %v1689 = vpop.permute.xlu0 %1688
      %1690 = vrot.lane.b32.xlu0 %v1665, 16
      %v1691 = vpop.permute.xlu0 %1690
      %1692 = vrot.lane.b32.xlu0 %v1666, 16
      %v1693 = vpop.permute.xlu0 %1692
      %1694 = vrot.lane.b32.xlu0 %v1667, 16
      %v1695 = vpop.permute.xlu0 %1694
      %1696 = vrot.lane.b32.xlu0 %v1668, 16
      %v1697 = vpop.permute.xlu0 %1696
      %1698 = vrot.lane.b32.xlu0 %v1669, 16
      %v1699 = vpop.permute.xlu0 %1698
      %1700 = vrot.lane.b32.xlu0 %v1670, 16
      %v1701 = vpop.permute.xlu0 %1700
      %1702 = vrot.lane.b32.xlu0 %v1671, 16
      %v1703 = vpop.permute.xlu0 %1702
      %1704 = vrot.lane.b32.xlu0 %v1672, 16
      %v1705 = vpop.permute.xlu0 %1704
      %1706 = vrot.lane.b32.xlu0 %v1673, 16
      %v1707 = vpop.permute.xlu0 %1706
      %1708 = vrot.lane.b32.xlu0 %v1674, 16
      %v1709 = vpop.permute.xlu0 %1708
      %1710 = vrot.lane.b32.xlu0 %v1675, 16
      %v1711 = vpop.permute.xlu0 %1710
      %v1712 = vsel %vm576, %v1689, %v1691
      %v1713 = vsel %vm576, %v1691, %v1693
      %v1714 = vsel %vm576, %v1695, %v1697
      %v1715 = vsel %vm576, %v1697, %v1699
      %v1716 = vsel %vm576, %v1701, %v1703
      %v1717 = vsel %vm576, %v1703, %v1705
      %v1718 = vsel %vm576, %v1707, %v1709
      %v1719 = vsel %vm576, %v1709, %v1711
      %1728 = vst [vmem:[#allocation3 + $0x40] sm:$0xff] %v1712
      %1729 = vst [vmem:[#allocation3 + $0x48] sm:$0xff] %v1713
      %1730 = vst [vmem:[#allocation3 + $0x50] sm:$0xff] %v1714
      %1731 = vst [vmem:[#allocation3 + $0x58] sm:$0xff] %v1715
      %1732 = vst [vmem:[#allocation3 + $0x60] sm:$0xff] %v1716
      %1733 = vst [vmem:[#allocation3 + $0x68] sm:$0xff] %v1717
      %1734 = vst [vmem:[#allocation3 + $0x70] sm:$0xff] %v1718
      %1735 = vst [vmem:[#allocation3 + $0x78] sm:$0xff] %v1719
      %v1736 = vld [vmem:[#allocation2] sm:$0xff]
      %v1737 = vld [vmem:[#allocation2 + $0x8] sm:$0xff]
      %v1738 = vld [vmem:[#allocation2 + $0x10] sm:$0xff]
      %v1739 = vld [vmem:[#allocation2 + $0x20] sm:$0xff]
      %v1740 = vld [vmem:[#allocation2 + $0x28] sm:$0xff]
      %v1741 = vld [vmem:[#allocation2 + $0x30] sm:$0xff]
      %v1742 = vld [vmem:[#allocation2 + $0x40] sm:$0xff]
      %v1743 = vld [vmem:[#allocation2 + $0x48] sm:$0xff]
      %v1744 = vld [vmem:[#allocation2 + $0x50] sm:$0xff]
      %v1745 = vld [vmem:[#allocation2 + $0x60] sm:$0xff]
      %v1746 = vld [vmem:[#allocation2 + $0x68] sm:$0xff]
      %v1747 = vld [vmem:[#allocation2 + $0x70] sm:$0xff]
      %v1748 = vmul.bf16 %v1736, %v589
      %v1749 = vmul.bf16 %v1737, %v593
      %v1750 = vmul.bf16 %v1738, %v591
      %v1751 = vmul.bf16 %v1739, %v589
      %v1752 = vmul.bf16 %v1740, %v593
      %v1753 = vmul.bf16 %v1741, %v591
      %v1754 = vmul.bf16 %v1742, %v589
      %v1755 = vmul.bf16 %v1743, %v593
      %v1756 = vmul.bf16 %v1744, %v591
      %v1757 = vmul.bf16 %v1745, %v589
      %v1758 = vmul.bf16 %v1746, %v593
      %v1759 = vmul.bf16 %v1747, %v591
      %1772 = vrot.lane.b32.xlu0 %v1748, 15
      %v1773 = vpop.permute.xlu0 %1772
      %1774 = vrot.lane.b32.xlu0 %v1749, 15
      %v1775 = vpop.permute.xlu0 %1774
      %1776 = vrot.lane.b32.xlu0 %v1750, 15
      %v1777 = vpop.permute.xlu0 %1776
      %1778 = vrot.lane.b32.xlu0 %v1751, 15
      %v1779 = vpop.permute.xlu0 %1778
      %1780 = vrot.lane.b32.xlu0 %v1752, 15
      %v1781 = vpop.permute.xlu0 %1780
      %1782 = vrot.lane.b32.xlu0 %v1753, 15
      %v1783 = vpop.permute.xlu0 %1782
      %1784 = vrot.lane.b32.xlu0 %v1754, 15
      %v1785 = vpop.permute.xlu0 %1784
      %1786 = vrot.lane.b32.xlu0 %v1755, 15
      %v1787 = vpop.permute.xlu0 %1786
      %1788 = vrot.lane.b32.xlu0 %v1756, 15
      %v1789 = vpop.permute.xlu0 %1788
      %1790 = vrot.lane.b32.xlu0 %v1757, 15
      %v1791 = vpop.permute.xlu0 %1790
      %1792 = vrot.lane.b32.xlu0 %v1758, 15
      %v1793 = vpop.permute.xlu0 %1792
      %1794 = vrot.lane.b32.xlu0 %v1759, 15
      %v1795 = vpop.permute.xlu0 %1794
      %v1796 = vsel %vm609, %v1773, %v1775
      %v1797 = vsel %vm609, %v1775, %v1777
      %v1798 = vsel %vm609, %v1779, %v1781
      %v1799 = vsel %vm609, %v1781, %v1783
      %v1800 = vsel %vm609, %v1785, %v1787
      %v1801 = vsel %vm609, %v1787, %v1789
      %v1802 = vsel %vm609, %v1791, %v1793
      %v1803 = vsel %vm609, %v1793, %v1795
      %1812 = vst [vmem:[#allocation3 + $0x80] sm:$0xff] %v1796
      %1813 = vst [vmem:[#allocation3 + $0x88] sm:$0xff] %v1797
      %1814 = vst [vmem:[#allocation3 + $0x90] sm:$0xff] %v1798
      %1815 = vst [vmem:[#allocation3 + $0x98] sm:$0xff] %v1799
      %1816 = vst [vmem:[#allocation3 + $0xa0] sm:$0xff] %v1800
      %1817 = vst [vmem:[#allocation3 + $0xa8] sm:$0xff] %v1801
      %1818 = vst [vmem:[#allocation3 + $0xb0] sm:$0xff] %v1802
      %1819 = vst [vmem:[#allocation3 + $0xb8] sm:$0xff] %v1803
      %v1820 = vld [vmem:[#allocation2] sm:$0xff]
      %v1821 = vld [vmem:[#allocation2 + $0x8] sm:$0xff]
      %v1822 = vld [vmem:[#allocation2 + $0x10] sm:$0xff]
      %v1823 = vld [vmem:[#allocation2 + $0x20] sm:$0xff]
      %v1824 = vld [vmem:[#allocation2 + $0x28] sm:$0xff]
      %v1825 = vld [vmem:[#allocation2 + $0x30] sm:$0xff]
      %v1826 = vld [vmem:[#allocation2 + $0x40] sm:$0xff]
      %v1827 = vld [vmem:[#allocation2 + $0x48] sm:$0xff]
      %v1828 = vld [vmem:[#allocation2 + $0x50] sm:$0xff]
      %v1829 = vld [vmem:[#allocation2 + $0x60] sm:$0xff]
      %v1830 = vld [vmem:[#allocation2 + $0x68] sm:$0xff]
      %v1831 = vld [vmem:[#allocation2 + $0x70] sm:$0xff]
      %v1832 = vmul.bf16 %v1820, %v620
      %v1833 = vmul.bf16 %v1821, %v624
      %v1834 = vmul.bf16 %v1822, %v622
      %v1835 = vmul.bf16 %v1823, %v620
      %v1836 = vmul.bf16 %v1824, %v624
      %v1837 = vmul.bf16 %v1825, %v622
      %v1838 = vmul.bf16 %v1826, %v620
      %v1839 = vmul.bf16 %v1827, %v624
      %v1840 = vmul.bf16 %v1828, %v622
      %v1841 = vmul.bf16 %v1829, %v620
      %v1842 = vmul.bf16 %v1830, %v624
      %v1843 = vmul.bf16 %v1831, %v622
      %1856 = vrot.lane.b32.xlu0 %v1832, 1
      %v1857 = vpop.permute.xlu0 %1856
      %1858 = vrot.lane.b32.xlu0 %v1833, 1
      %v1859 = vpop.permute.xlu0 %1858
      %1860 = vrot.lane.b32.xlu0 %v1834, 1
      %v1861 = vpop.permute.xlu0 %1860
      %1862 = vrot.lane.b32.xlu0 %v1835, 1
      %v1863 = vpop.permute.xlu0 %1862
      %1864 = vrot.lane.b32.xlu0 %v1836, 1
      %v1865 = vpop.permute.xlu0 %1864
      %1866 = vrot.lane.b32.xlu0 %v1837, 1
      %v1867 = vpop.permute.xlu0 %1866
      %1868 = vrot.lane.b32.xlu0 %v1838, 1
      %v1869 = vpop.permute.xlu0 %1868
      %1870 = vrot.lane.b32.xlu0 %v1839, 1
      %v1871 = vpop.permute.xlu0 %1870
      %1872 = vrot.lane.b32.xlu0 %v1840, 1
      %v1873 = vpop.permute.xlu0 %1872
      %1874 = vrot.lane.b32.xlu0 %v1841, 1
      %v1875 = vpop.permute.xlu0 %1874
      %1876 = vrot.lane.b32.xlu0 %v1842, 1
      %v1877 = vpop.permute.xlu0 %1876
      %1878 = vrot.lane.b32.xlu0 %v1843, 1
      %v1879 = vpop.permute.xlu0 %1878
      %v1880 = vsel %vm640, %v1857, %v1859
      %v1881 = vsel %vm640, %v1859, %v1861
      %v1882 = vsel %vm640, %v1863, %v1865
      %v1883 = vsel %vm640, %v1865, %v1867
      %v1884 = vsel %vm640, %v1869, %v1871
      %v1885 = vsel %vm640, %v1871, %v1873
      %v1886 = vsel %vm640, %v1875, %v1877
      %v1887 = vsel %vm640, %v1877, %v1879
      %1896 = vst [vmem:[#allocation3 + $0xc0] sm:$0xff] %v1880
      %1897 = vst [vmem:[#allocation3 + $0xc8] sm:$0xff] %v1881
      %1898 = vst [vmem:[#allocation3 + $0xd0] sm:$0xff] %v1882
      %1899 = vst [vmem:[#allocation3 + $0xd8] sm:$0xff] %v1883
      %1900 = vst [vmem:[#allocation3 + $0xe0] sm:$0xff] %v1884
      %1901 = vst [vmem:[#allocation3 + $0xe8] sm:$0xff] %v1885
      %1902 = vst [vmem:[#allocation3 + $0xf0] sm:$0xff] %v1886
      %1903 = vst [vmem:[#allocation3 + $0xf8] sm:$0xff] %v1887
      %v1904 = vld [vmem:[#allocation2 + $0x8] sm:$0xff]
      %v1905 = vld [vmem:[#allocation2 + $0x10] sm:$0xff]
      %v1906 = vld [vmem:[#allocation2 + $0x28] sm:$0xff]
      %v1907 = vld [vmem:[#allocation2 + $0x30] sm:$0xff]
      %v1908 = vld [vmem:[#allocation2 + $0x48] sm:$0xff]
      %v1909 = vld [vmem:[#allocation2 + $0x50] sm:$0xff]
      %v1910 = vld [vmem:[#allocation2 + $0x68] sm:$0xff]
      %v1911 = vld [vmem:[#allocation2 + $0x70] sm:$0xff]
      %1912 = vst [vmem:[#allocation3 + $0x100] sm:$0xff] %v1904
      %1913 = vst [vmem:[#allocation3 + $0x108] sm:$0xff] %v1905
      %1914 = vst [vmem:[#allocation3 + $0x110] sm:$0xff] %v1906
      %1915 = vst [vmem:[#allocation3 + $0x118] sm:$0xff] %v1907
      %1916 = vst [vmem:[#allocation3 + $0x120] sm:$0xff] %v1908
      %1917 = vst [vmem:[#allocation3 + $0x128] sm:$0xff] %v1909
      %1918 = vst [vmem:[#allocation3 + $0x130] sm:$0xff] %v1910
      %1919 = vst [vmem:[#allocation3 + $0x138] sm:$0xff] %v1911
      %v1920 = vld [vmem:[#allocation2 + $0x8] sm:$0xff]
      %v1921 = vld [vmem:[#allocation2 + $0x10] sm:$0xff]
      %v1922 = vld [vmem:[#allocation2 + $0x18] sm:$0xff]
      %v1923 = vld [vmem:[#allocation2 + $0x28] sm:$0xff]
      %v1924 = vld [vmem:[#allocation2 + $0x30] sm:$0xff]
      %v1925 = vld [vmem:[#allocation2 + $0x38] sm:$0xff]
      %v1926 = vld [vmem:[#allocation2 + $0x48] sm:$0xff]
      %v1927 = vld [vmem:[#allocation2 + $0x50] sm:$0xff]
      %v1928 = vld [vmem:[#allocation2 + $0x58] sm:$0xff]
      %v1929 = vld [vmem:[#allocation2 + $0x68] sm:$0xff]
      %v1930 = vld [vmem:[#allocation2 + $0x70] sm:$0xff]
      %v1931 = vld [vmem:[#allocation2 + $0x78] sm:$0xff]
      %v1932 = vmul.bf16 %v1920, %v655
      %v1933 = vmul.bf16 %v1921, %v658
      %v1934 = vmul.bf16 %v1922, %v657
      %v1935 = vmul.bf16 %v1923, %v655
      %v1936 = vmul.bf16 %v1924, %v658
      %v1937 = vmul.bf16 %v1925, %v657
      %v1938 = vmul.bf16 %v1926, %v655
      %v1939 = vmul.bf16 %v1927, %v658
      %v1940 = vmul.bf16 %v1928, %v657
      %v1941 = vmul.bf16 %v1929, %v655
      %v1942 = vmul.bf16 %v1930, %v658
      %v1943 = vmul.bf16 %v1931, %v657
      %1956 = vrot.lane.b32.xlu0 %v1932, 127
      %v1957 = vpop.permute.xlu0 %1956
      %1958 = vrot.lane.b32.xlu0 %v1933, 127
      %v1959 = vpop.permute.xlu0 %1958
      %1960 = vrot.lane.b32.xlu0 %v1934, 127
      %v1961 = vpop.permute.xlu0 %1960
      %1962 = vrot.lane.b32.xlu0 %v1935, 127
      %v1963 = vpop.permute.xlu0 %1962
      %1964 = vrot.lane.b32.xlu0 %v1936, 127
      %v1965 = vpop.permute.xlu0 %1964
      %1966 = vrot.lane.b32.xlu0 %v1937, 127
      %v1967 = vpop.permute.xlu0 %1966
      %1968 = vrot.lane.b32.xlu0 %v1938, 127
      %v1969 = vpop.permute.xlu0 %1968
      %1970 = vrot.lane.b32.xlu0 %v1939, 127
      %v1971 = vpop.permute.xlu0 %1970
      %1972 = vrot.lane.b32.xlu0 %v1940, 127
      %v1973 = vpop.permute.xlu0 %1972
      %1974 = vrot.lane.b32.xlu0 %v1941, 127
      %v1975 = vpop.permute.xlu0 %1974
      %1976 = vrot.lane.b32.xlu0 %v1942, 127
      %v1977 = vpop.permute.xlu0 %1976
      %1978 = vrot.lane.b32.xlu0 %v1943, 127
      %v1979 = vpop.permute.xlu0 %1978
      %v1980 = vsel %vm623, %v1957, %v1959
      %v1981 = vsel %vm623, %v1959, %v1961
      %v1982 = vsel %vm623, %v1963, %v1965
      %v1983 = vsel %vm623, %v1965, %v1967
      %v1984 = vsel %vm623, %v1969, %v1971
      %v1985 = vsel %vm623, %v1971, %v1973
      %v1986 = vsel %vm623, %v1975, %v1977
      %v1987 = vsel %vm623, %v1977, %v1979
      %1996 = vst [vmem:[#allocation3 + $0x140] sm:$0xff] %v1980
      %1997 = vst [vmem:[#allocation3 + $0x148] sm:$0xff] %v1981
      %1998 = vst [vmem:[#allocation3 + $0x150] sm:$0xff] %v1982
      %1999 = vst [vmem:[#allocation3 + $0x158] sm:$0xff] %v1983
      %2000 = vst [vmem:[#allocation3 + $0x160] sm:$0xff] %v1984
      %2001 = vst [vmem:[#allocation3 + $0x168] sm:$0xff] %v1985
      %2002 = vst [vmem:[#allocation3 + $0x170] sm:$0xff] %v1986
      %2003 = vst [vmem:[#allocation3 + $0x178] sm:$0xff] %v1987
      %v2004 = vld [vmem:[#allocation2 + $0x8] sm:$0xff]
      %v2005 = vld [vmem:[#allocation2 + $0x10] sm:$0xff]
      %v2006 = vld [vmem:[#allocation2 + $0x18] sm:$0xff]
      %v2007 = vld [vmem:[#allocation2 + $0x28] sm:$0xff]
      %v2008 = vld [vmem:[#allocation2 + $0x30] sm:$0xff]
      %v2009 = vld [vmem:[#allocation2 + $0x38] sm:$0xff]
      %v2010 = vld [vmem:[#allocation2 + $0x48] sm:$0xff]
      %v2011 = vld [vmem:[#allocation2 + $0x50] sm:$0xff]
      %v2012 = vld [vmem:[#allocation2 + $0x58] sm:$0xff]
      %v2013 = vld [vmem:[#allocation2 + $0x68] sm:$0xff]
      %v2014 = vld [vmem:[#allocation2 + $0x70] sm:$0xff]
      %v2015 = vld [vmem:[#allocation2 + $0x78] sm:$0xff]
      %v2016 = vmul.bf16 %v2004, %v684
      %v2017 = vmul.bf16 %v2005, %v687
      %v2018 = vmul.bf16 %v2006, %v686
      %v2019 = vmul.bf16 %v2007, %v684
      %v2020 = vmul.bf16 %v2008, %v687
      %v2021 = vmul.bf16 %v2009, %v686
      %v2022 = vmul.bf16 %v2010, %v684
      %v2023 = vmul.bf16 %v2011, %v687
      %v2024 = vmul.bf16 %v2012, %v686
      %v2025 = vmul.bf16 %v2013, %v684
      %v2026 = vmul.bf16 %v2014, %v687
      %v2027 = vmul.bf16 %v2015, %v686
      %2040 = vrot.lane.b32.xlu0 %v2016, 113
      %v2041 = vpop.permute.xlu0 %2040
      %2042 = vrot.lane.b32.xlu0 %v2017, 113
      %v2043 = vpop.permute.xlu0 %2042
      %2044 = vrot.lane.b32.xlu0 %v2018, 113
      %v2045 = vpop.permute.xlu0 %2044
      %2046 = vrot.lane.b32.xlu0 %v2019, 113
      %v2047 = vpop.permute.xlu0 %2046
      %2048 = vrot.lane.b32.xlu0 %v2020, 113
      %v2049 = vpop.permute.xlu0 %2048
      %2050 = vrot.lane.b32.xlu0 %v2021, 113
      %v2051 = vpop.permute.xlu0 %2050
      %2052 = vrot.lane.b32.xlu0 %v2022, 113
      %v2053 = vpop.permute.xlu0 %2052
      %2054 = vrot.lane.b32.xlu0 %v2023, 113
      %v2055 = vpop.permute.xlu0 %2054
      %2056 = vrot.lane.b32.xlu0 %v2024, 113
      %v2057 = vpop.permute.xlu0 %2056
      %2058 = vrot.lane.b32.xlu0 %v2025, 113
      %v2059 = vpop.permute.xlu0 %2058
      %2060 = vrot.lane.b32.xlu0 %v2026, 113
      %v2061 = vpop.permute.xlu0 %2060
      %2062 = vrot.lane.b32.xlu0 %v2027, 113
      %v2063 = vpop.permute.xlu0 %2062
      %v2064 = vsel %vm592, %v2041, %v2043
      %v2065 = vsel %vm592, %v2043, %v2045
      %v2066 = vsel %vm592, %v2047, %v2049
      %v2067 = vsel %vm592, %v2049, %v2051
      %v2068 = vsel %vm592, %v2053, %v2055
      %v2069 = vsel %vm592, %v2055, %v2057
      %v2070 = vsel %vm592, %v2059, %v2061
      %v2071 = vsel %vm592, %v2061, %v2063
      %2080 = vst [vmem:[#allocation3 + $0x180] sm:$0xff] %v2064
      %2081 = vst [vmem:[#allocation3 + $0x188] sm:$0xff] %v2065
      %2082 = vst [vmem:[#allocation3 + $0x190] sm:$0xff] %v2066
      %2083 = vst [vmem:[#allocation3 + $0x198] sm:$0xff] %v2067
      %2084 = vst [vmem:[#allocation3 + $0x1a0] sm:$0xff] %v2068
      %2085 = vst [vmem:[#allocation3 + $0x1a8] sm:$0xff] %v2069
      %2086 = vst [vmem:[#allocation3 + $0x1b0] sm:$0xff] %v2070
      %2087 = vst [vmem:[#allocation3 + $0x1b8] sm:$0xff] %v2071
      %v2088 = vld [vmem:[#allocation2 + $0x8] sm:$0xff]
      %v2089 = vld [vmem:[#allocation2 + $0x10] sm:$0xff]
      %v2090 = vld [vmem:[#allocation2 + $0x18] sm:$0xff]
      %v2091 = vld [vmem:[#allocation2 + $0x28] sm:$0xff]
      %v2092 = vld [vmem:[#allocation2 + $0x30] sm:$0xff]
      %v2093 = vld [vmem:[#allocation2 + $0x38] sm:$0xff]
      %v2094 = vld [vmem:[#allocation2 + $0x48] sm:$0xff]
      %v2095 = vld [vmem:[#allocation2 + $0x50] sm:$0xff]
      %v2096 = vld [vmem:[#allocation2 + $0x58] sm:$0xff]
      %v2097 = vld [vmem:[#allocation2 + $0x68] sm:$0xff]
      %v2098 = vld [vmem:[#allocation2 + $0x70] sm:$0xff]
      %v2099 = vld [vmem:[#allocation2 + $0x78] sm:$0xff]
      %2112 = vrot.lane.b32.xlu0 %v2088, 112
      %v2113 = vpop.permute.xlu0 %2112
      %2114 = vrot.lane.b32.xlu0 %v2089, 112
      %v2115 = vpop.permute.xlu0 %2114
      %2116 = vrot.lane.b32.xlu0 %v2090, 112
      %v2117 = vpop.permute.xlu0 %2116
      %2118 = vrot.lane.b32.xlu0 %v2091, 112
      %v2119 = vpop.permute.xlu0 %2118
      %2120 = vrot.lane.b32.xlu0 %v2092, 112
      %v2121 = vpop.permute.xlu0 %2120
      %2122 = vrot.lane.b32.xlu0 %v2093, 112
      %v2123 = vpop.permute.xlu0 %2122
      %2124 = vrot.lane.b32.xlu0 %v2094, 112
      %v2125 = vpop.permute.xlu0 %2124
      %2126 = vrot.lane.b32.xlu0 %v2095, 112
      %v2127 = vpop.permute.xlu0 %2126
      %2128 = vrot.lane.b32.xlu0 %v2096, 112
      %v2129 = vpop.permute.xlu0 %2128
      %2130 = vrot.lane.b32.xlu0 %v2097, 112
      %v2131 = vpop.permute.xlu0 %2130
      %2132 = vrot.lane.b32.xlu0 %v2098, 112
      %v2133 = vpop.permute.xlu0 %2132
      %2134 = vrot.lane.b32.xlu0 %v2099, 112
      %v2135 = vpop.permute.xlu0 %2134
      %v2136 = vsel %vm721, %v2113, %v2115
      %v2137 = vsel %vm721, %v2115, %v2117
      %v2138 = vsel %vm721, %v2119, %v2121
      %v2139 = vsel %vm721, %v2121, %v2123
      %v2140 = vsel %vm721, %v2125, %v2127
      %v2141 = vsel %vm721, %v2127, %v2129
      %v2142 = vsel %vm721, %v2131, %v2133
      %v2143 = vsel %vm721, %v2133, %v2135
      %2152 = vst [vmem:[#allocation3 + $0x1c0] sm:$0xff] %v2136
      %2153 = vst [vmem:[#allocation3 + $0x1c8] sm:$0xff] %v2137
      %2154 = vst [vmem:[#allocation3 + $0x1d0] sm:$0xff] %v2138
      %2155 = vst [vmem:[#allocation3 + $0x1d8] sm:$0xff] %v2139
      %2156 = vst [vmem:[#allocation3 + $0x1e0] sm:$0xff] %v2140
      %2157 = vst [vmem:[#allocation3 + $0x1e8] sm:$0xff] %v2141
      %2158 = vst [vmem:[#allocation3 + $0x1f0] sm:$0xff] %v2142
      %2159 = vst [vmem:[#allocation3 + $0x1f8] sm:$0xff] %v2143
      %v2160 = vld [vmem:[#allocation2 + $0x8] sm:$0xff]
      %v2161 = vld [vmem:[#allocation2 + $0x10] sm:$0xff]
      %v2162 = vld [vmem:[#allocation2 + $0x18] sm:$0xff]
      %v2163 = vld [vmem:[#allocation2 + $0x28] sm:$0xff]
      %v2164 = vld [vmem:[#allocation2 + $0x30] sm:$0xff]
      %v2165 = vld [vmem:[#allocation2 + $0x38] sm:$0xff]
      %v2166 = vld [vmem:[#allocation2 + $0x48] sm:$0xff]
      %v2167 = vld [vmem:[#allocation2 + $0x50] sm:$0xff]
      %v2168 = vld [vmem:[#allocation2 + $0x58] sm:$0xff]
      %v2169 = vld [vmem:[#allocation2 + $0x68] sm:$0xff]
      %v2170 = vld [vmem:[#allocation2 + $0x70] sm:$0xff]
      %v2171 = vld [vmem:[#allocation2 + $0x78] sm:$0xff]
      %v2172 = vmul.bf16 %v2160, %v732
      %v2173 = vmul.bf16 %v2161, %v735
      %v2174 = vmul.bf16 %v2162, %v734
      %v2175 = vmul.bf16 %v2163, %v732
      %v2176 = vmul.bf16 %v2164, %v735
      %v2177 = vmul.bf16 %v2165, %v734
      %v2178 = vmul.bf16 %v2166, %v732
      %v2179 = vmul.bf16 %v2167, %v735
      %v2180 = vmul.bf16 %v2168, %v734
      %v2181 = vmul.bf16 %v2169, %v732
      %v2182 = vmul.bf16 %v2170, %v735
      %v2183 = vmul.bf16 %v2171, %v734
      %2196 = vrot.lane.b32.xlu0 %v2172, 111
      %v2197 = vpop.permute.xlu0 %2196
      %2198 = vrot.lane.b32.xlu0 %v2173, 111
      %v2199 = vpop.permute.xlu0 %2198
      %2200 = vrot.lane.b32.xlu0 %v2174, 111
      %v2201 = vpop.permute.xlu0 %2200
      %2202 = vrot.lane.b32.xlu0 %v2175, 111
      %v2203 = vpop.permute.xlu0 %2202
      %2204 = vrot.lane.b32.xlu0 %v2176, 111
      %v2205 = vpop.permute.xlu0 %2204
      %2206 = vrot.lane.b32.xlu0 %v2177, 111
      %v2207 = vpop.permute.xlu0 %2206
      %2208 = vrot.lane.b32.xlu0 %v2178, 111
      %v2209 = vpop.permute.xlu0 %2208
      %2210 = vrot.lane.b32.xlu0 %v2179, 111
      %v2211 = vpop.permute.xlu0 %2210
      %2212 = vrot.lane.b32.xlu0 %v2180, 111
      %v2213 = vpop.permute.xlu0 %2212
      %2214 = vrot.lane.b32.xlu0 %v2181, 111
      %v2215 = vpop.permute.xlu0 %2214
      %2216 = vrot.lane.b32.xlu0 %v2182, 111
      %v2217 = vpop.permute.xlu0 %2216
      %2218 = vrot.lane.b32.xlu0 %v2183, 111
      %v2219 = vpop.permute.xlu0 %2218
      %v2220 = vsel %vm540, %v2197, %v2199
      %v2221 = vsel %vm540, %v2199, %v2201
      %v2222 = vsel %vm540, %v2203, %v2205
      %v2223 = vsel %vm540, %v2205, %v2207
      %v2224 = vsel %vm540, %v2209, %v2211
      %v2225 = vsel %vm540, %v2211, %v2213
      %v2226 = vsel %vm540, %v2215, %v2217
      %v2227 = vsel %vm540, %v2217, %v2219
      %2236 = vst [vmem:[#allocation3 + $0x200] sm:$0xff] %v2220
      %2237 = vst [vmem:[#allocation3 + $0x208] sm:$0xff] %v2221
      %2238 = vst [vmem:[#allocation3 + $0x210] sm:$0xff] %v2222
      %2239 = vst [vmem:[#allocation3 + $0x218] sm:$0xff] %v2223
      %2240 = vst [vmem:[#allocation3 + $0x220] sm:$0xff] %v2224
      %2241 = vst [vmem:[#allocation3 + $0x228] sm:$0xff] %v2225
      %2242 = vst [vmem:[#allocation3 + $0x230] sm:$0xff] %v2226
      %2243 = vst [vmem:[#allocation3 + $0x238] sm:$0xff] %v2227
      %v2244 = vld [vmem:[%s5] sm:$0xff]
      %v2245 = vld [vmem:[%s5 + $0x8] sm:$0xff]
      %v2246 = vld [vmem:[%s5 + $0x10] sm:$0xf]
      %v2247 = vld [vmem:[%s5 + $0x14] sm:$0xff]
      %v2248 = vld [vmem:[%s5 + $0x1c] sm:$0xff]
      %v2249 = vld [vmem:[%s5 + $0x24] sm:$0xf]
      %v2250 = vld [vmem:[%s5 + $0x28] sm:$0xff]
      %v2251 = vld [vmem:[%s5 + $0x30] sm:$0xff]
      %v2252 = vld [vmem:[%s5 + $0x38] sm:$0xf]
      %v2253 = vld [vmem:[%s5 + $0x3c] sm:$0xff]
      %v2254 = vld [vmem:[%s5 + $0x44] sm:$0xff]
      %v2255 = vld [vmem:[%s5 + $0x4c] sm:$0xf]
      %v2256 = vld [vmem:[%s5 + $0x50] sm:$0xff]
      %v2257 = vld [vmem:[%s5 + $0x58] sm:$0xff]
      %v2258 = vld [vmem:[%s5 + $0x60] sm:$0xf]
      %v2259 = vld [vmem:[%s5 + $0x64] sm:$0xff]
      %v2260 = vld [vmem:[%s5 + $0x6c] sm:$0xff]
      %v2261 = vld [vmem:[%s5 + $0x74] sm:$0xf]
      %v2262 = vld [vmem:[%s5 + $0x78] sm:$0xff]
      %v2263 = vld [vmem:[%s5 + $0x80] sm:$0xff]
      %v2264 = vld [vmem:[%s5 + $0x88] sm:$0xf]
      %v2265 = vld [vmem:[%s5 + $0x8c] sm:$0xff]
      %v2266 = vld [vmem:[%s5 + $0x94] sm:$0xff]
      %v2267 = vld [vmem:[%s5 + $0x9c] sm:$0xf]
      %v2268 = vld [vmem:[%s5 + $0xa0] sm:$0xff]
      %v2269 = vld [vmem:[%s5 + $0xa8] sm:$0xff]
      %v2270 = vld [vmem:[%s5 + $0xb0] sm:$0xf]
      %v2271 = vld [vmem:[%s5 + $0xb4] sm:$0xff]
      %v2272 = vld [vmem:[%s5 + $0xbc] sm:$0xff]
      %v2273 = vld [vmem:[%s5 + $0xc4] sm:$0xf]
      %v2274 = vld [vmem:[%s5 + $0xc8] sm:$0xff]
      %v2275 = vld [vmem:[%s5 + $0xd0] sm:$0xff]
      %v2276 = vld [vmem:[%s5 + $0xd8] sm:$0xf]
      %v2277 = vld [vmem:[%s5 + $0xdc] sm:$0xff]
      %v2278 = vld [vmem:[%s5 + $0xe4] sm:$0xff]
      %v2279 = vld [vmem:[%s5 + $0xec] sm:$0xf]
      %v2280 = vld [vmem:[%s5 + $0xf0] sm:$0xff]
      %v2281 = vld [vmem:[%s5 + $0xf8] sm:$0xff]
      %v2282 = vld [vmem:[%s5 + $0x100] sm:$0xf]
      %v2283 = vld [vmem:[%s5 + $0x104] sm:$0xff]
      %v2284 = vld [vmem:[%s5 + $0x10c] sm:$0xff]
      %v2285 = vld [vmem:[%s5 + $0x114] sm:$0xf]
      %v2286 = vld [vmem:[%s5 + $0x118] sm:$0xff]
      %v2287 = vld [vmem:[%s5 + $0x120] sm:$0xff]
      %v2288 = vld [vmem:[%s5 + $0x128] sm:$0xf]
      %v2289 = vld [vmem:[%s5 + $0x12c] sm:$0xff]
      %v2290 = vld [vmem:[%s5 + $0x134] sm:$0xff]
      %v2291 = vld [vmem:[%s5 + $0x13c] sm:$0xf]
      %v2292 = vld [vmem:[#allocation3] sm:$0xff]
      %v2293 = vld [vmem:[#allocation3 + $0x8] sm:$0xff]
      %v2294 = vld [vmem:[#allocation3 + $0x10] sm:$0xff]
      %v2295 = vld [vmem:[#allocation3 + $0x18] sm:$0xff]
      %v2296 = vld [vmem:[#allocation3 + $0x20] sm:$0xff]
      %v2297 = vld [vmem:[#allocation3 + $0x28] sm:$0xff]
      %v2298 = vld [vmem:[#allocation3 + $0x30] sm:$0xff]
      %v2299 = vld [vmem:[#allocation3 + $0x38] sm:$0xff]
      %v2300 = vld [vmem:[#allocation3 + $0x40] sm:$0xff]
      %v2301 = vld [vmem:[#allocation3 + $0x48] sm:$0xff]
      %v2302 = vld [vmem:[#allocation3 + $0x50] sm:$0xff]
      %v2303 = vld [vmem:[#allocation3 + $0x58] sm:$0xff]
      %v2304 = vld [vmem:[#allocation3 + $0x60] sm:$0xff]
      %v2305 = vld [vmem:[#allocation3 + $0x68] sm:$0xff]
      %v2306 = vld [vmem:[#allocation3 + $0x70] sm:$0xff]
      %v2307 = vld [vmem:[#allocation3 + $0x78] sm:$0xff]
      %v2308 = vld [vmem:[#allocation3 + $0x80] sm:$0xff]
      %v2309 = vld [vmem:[#allocation3 + $0x88] sm:$0xff]
      %v2310 = vld [vmem:[#allocation3 + $0x90] sm:$0xff]
      %v2311 = vld [vmem:[#allocation3 + $0x98] sm:$0xff]
      %v2312 = vld [vmem:[#allocation3 + $0xa0] sm:$0xff]
      %v2313 = vld [vmem:[#allocation3 + $0xa8] sm:$0xff]
      %v2314 = vld [vmem:[#allocation3 + $0xb0] sm:$0xff]
      %v2315 = vld [vmem:[#allocation3 + $0xb8] sm:$0xff]
      %v2316 = vld [vmem:[#allocation3 + $0xc0] sm:$0xff]
      %v2317 = vld [vmem:[#allocation3 + $0xc8] sm:$0xff]
      %v2318 = vld [vmem:[#allocation3 + $0xd0] sm:$0xff]
      %v2319 = vld [vmem:[#allocation3 + $0xd8] sm:$0xff]
      %v2320 = vld [vmem:[#allocation3 + $0xe0] sm:$0xff]
      %v2321 = vld [vmem:[#allocation3 + $0xe8] sm:$0xff]
      %v2322 = vld [vmem:[#allocation3 + $0xf0] sm:$0xff]
      %v2323 = vld [vmem:[#allocation3 + $0xf8] sm:$0xff]
      %v2324 = vld [vmem:[#allocation3 + $0x100] sm:$0xff]
      %v2325 = vld [vmem:[#allocation3 + $0x108] sm:$0xff]
      %v2326 = vld [vmem:[#allocation3 + $0x110] sm:$0xff]
      %v2327 = vld [vmem:[#allocation3 + $0x118] sm:$0xff]
      %v2328 = vld [vmem:[#allocation3 + $0x120] sm:$0xff]
      %v2329 = vld [vmem:[#allocation3 + $0x128] sm:$0xff]
      %v2330 = vld [vmem:[#allocation3 + $0x130] sm:$0xff]
      %v2331 = vld [vmem:[#allocation3 + $0x138] sm:$0xff]
      %v2332 = vld [vmem:[#allocation3 + $0x140] sm:$0xff]
      %v2333 = vld [vmem:[#allocation3 + $0x148] sm:$0xff]
      %v2334 = vld [vmem:[#allocation3 + $0x150] sm:$0xff]
      %v2335 = vld [vmem:[#allocation3 + $0x158] sm:$0xff]
      %v2336 = vld [vmem:[#allocation3 + $0x160] sm:$0xff]
      %v2337 = vld [vmem:[#allocation3 + $0x168] sm:$0xff]
      %v2338 = vld [vmem:[#allocation3 + $0x170] sm:$0xff]
      %v2339 = vld [vmem:[#allocation3 + $0x178] sm:$0xff]
      %v2340 = vld [vmem:[#allocation3 + $0x180] sm:$0xff]
      %v2341 = vld [vmem:[#allocation3 + $0x188] sm:$0xff]
      %v2342 = vld [vmem:[#allocation3 + $0x190] sm:$0xff]
      %v2343 = vld [vmem:[#allocation3 + $0x198] sm:$0xff]
      %v2344 = vld [vmem:[#allocation3 + $0x1a0] sm:$0xff]
      %v2345 = vld [vmem:[#allocation3 + $0x1a8] sm:$0xff]
      %v2346 = vld [vmem:[#allocation3 + $0x1b0] sm:$0xff]
      %v2347 = vld [vmem:[#allocation3 + $0x1b8] sm:$0xff]
      %v2348 = vld [vmem:[#allocation3 + $0x1c0] sm:$0xff]
      %v2349 = vld [vmem:[#allocation3 + $0x1c8] sm:$0xff]
      %v2350 = vld [vmem:[#allocation3 + $0x1d0] sm:$0xff]
      %v2351 = vld [vmem:[#allocation3 + $0x1d8] sm:$0xff]
      %v2352 = vld [vmem:[#allocation3 + $0x1e0] sm:$0xff]
      %v2353 = vld [vmem:[#allocation3 + $0x1e8] sm:$0xff]
      %v2354 = vld [vmem:[#allocation3 + $0x1f0] sm:$0xff]
      %v2355 = vld [vmem:[#allocation3 + $0x1f8] sm:$0xff]
      %v2356 = vld [vmem:[#allocation3 + $0x200] sm:$0xff]
      %v2357 = vld [vmem:[#allocation3 + $0x208] sm:$0xff]
      %v2358 = vld [vmem:[#allocation3 + $0x210] sm:$0xff]
      %v2359 = vld [vmem:[#allocation3 + $0x218] sm:$0xff]
      %v2360 = vld [vmem:[#allocation3 + $0x220] sm:$0xff]
      %v2361 = vld [vmem:[#allocation3 + $0x228] sm:$0xff]
      %v2362 = vld [vmem:[#allocation3 + $0x230] sm:$0xff]
      %v2363 = vld [vmem:[#allocation3 + $0x238] sm:$0xff]
      %v2364 = vld [vmem:[%s6] sm:$0xff]
      %v2365 = vld [vmem:[%s6 + $0x8] sm:$0xff]
      %v2366 = vld [vmem:[%s6 + $0x10] sm:$0xff]
      %v2367 = vld [vmem:[%s6 + $0x18] sm:$0xff]
      %v2368 = vld [vmem:[%s6 + $0x20] sm:$0xff]
      %v2369 = vld [vmem:[%s6 + $0x28] sm:$0xff]
      %v2370 = vld [vmem:[%s6 + $0x30] sm:$0xff]
      %v2371 = vld [vmem:[%s6 + $0x38] sm:$0xff]
      %v2372 = vld [vmem:[%s6 + $0x40] sm:$0xff]
      %v2373 = vld [vmem:[%s6 + $0x48] sm:$0xff]
      %v2374 = vld [vmem:[%s6 + $0x50] sm:$0xff]
      %v2375 = vld [vmem:[%s6 + $0x58] sm:$0xff]
      %v2376 = vld [vmem:[%s6 + $0x60] sm:$0xff]
      %v2377 = vld [vmem:[%s6 + $0x68] sm:$0xff]
      %v2378 = vld [vmem:[%s6 + $0x70] sm:$0xff]
      %v2379 = vld [vmem:[%s6 + $0x78] sm:$0xff]
      %2381 = vset.pattern.permute.xlu0 0
      %2382 = vperm.xlu0 %2381, %v2364
      %v2383 = vpop.permute.xlu0 %2382
      %2386 = vset.pattern.permute.xlu0 0
      %2387 = vperm.xlu0 %2386, %v2365
      %v2388 = vpop.permute.xlu0 %2387
      %2391 = vset.pattern.permute.xlu0 0
      %2392 = vperm.xlu0 %2391, %v2366
      %v2393 = vpop.permute.xlu0 %2392
      %2396 = vset.pattern.permute.xlu0 0
      %2397 = vperm.xlu0 %2396, %v2367
      %v2398 = vpop.permute.xlu0 %2397
      %2401 = vset.pattern.permute.xlu0 0
      %2402 = vperm.xlu0 %2401, %v2368
      %v2403 = vpop.permute.xlu0 %2402
      %2406 = vset.pattern.permute.xlu0 0
      %2407 = vperm.xlu0 %2406, %v2369
      %v2408 = vpop.permute.xlu0 %2407
      %2411 = vset.pattern.permute.xlu0 0
      %2412 = vperm.xlu0 %2411, %v2370
      %v2413 = vpop.permute.xlu0 %2412
      %2416 = vset.pattern.permute.xlu0 0
      %2417 = vperm.xlu0 %2416, %v2371
      %v2418 = vpop.permute.xlu0 %2417
      %2421 = vset.pattern.permute.xlu0 0
      %2422 = vperm.xlu0 %2421, %v2372
      %v2423 = vpop.permute.xlu0 %2422
      %2426 = vset.pattern.permute.xlu0 0
      %2427 = vperm.xlu0 %2426, %v2373
      %v2428 = vpop.permute.xlu0 %2427
      %2431 = vset.pattern.permute.xlu0 0
      %2432 = vperm.xlu0 %2431, %v2374
      %v2433 = vpop.permute.xlu0 %2432
      %2436 = vset.pattern.permute.xlu0 0
      %2437 = vperm.xlu0 %2436, %v2375
      %v2438 = vpop.permute.xlu0 %2437
      %2441 = vset.pattern.permute.xlu0 0
      %2442 = vperm.xlu0 %2441, %v2376
      %v2443 = vpop.permute.xlu0 %2442
      %2446 = vset.pattern.permute.xlu0 0
      %2447 = vperm.xlu0 %2446, %v2377
      %v2448 = vpop.permute.xlu0 %2447
      %2451 = vset.pattern.permute.xlu0 0
      %2452 = vperm.xlu0 %2451, %v2378
      %v2453 = vpop.permute.xlu0 %2452
      %2456 = vset.pattern.permute.xlu0 0
      %2457 = vperm.xlu0 %2456, %v2379
      %v2458 = vpop.permute.xlu0 %2457
      %v2508 = vunpack.c.l.b16 %v2244
      %v2509 = vunpack.c.h.b16 %v2244
      %v2510 = vunpack.c.l.b16 %v2245
      %v2511 = vunpack.c.h.b16 %v2245
      %v2512 = vunpack.c.l.b16 %v2246
      %v2513 = vunpack.c.l.b16 %v2247
      %v2514 = vunpack.c.h.b16 %v2247
      %v2515 = vunpack.c.l.b16 %v2248
      %v2516 = vunpack.c.h.b16 %v2248
      %v2517 = vunpack.c.l.b16 %v2249
      %v2518 = vunpack.c.l.b16 %v2250
      %v2519 = vunpack.c.h.b16 %v2250
      %v2520 = vunpack.c.l.b16 %v2251
      %v2521 = vunpack.c.h.b16 %v2251
      %v2522 = vunpack.c.l.b16 %v2252
      %v2523 = vunpack.c.l.b16 %v2253
      %v2524 = vunpack.c.h.b16 %v2253
      %v2525 = vunpack.c.l.b16 %v2254
      %v2526 = vunpack.c.h.b16 %v2254
      %v2527 = vunpack.c.l.b16 %v2255
      %v2528 = vunpack.c.l.b16 %v2256
      %v2529 = vunpack.c.h.b16 %v2256
      %v2530 = vunpack.c.l.b16 %v2257
      %v2531 = vunpack.c.h.b16 %v2257
      %v2532 = vunpack.c.l.b16 %v2258
      %v2533 = vunpack.c.l.b16 %v2259
      %v2534 = vunpack.c.h.b16 %v2259
      %v2535 = vunpack.c.l.b16 %v2260
      %v2536 = vunpack.c.h.b16 %v2260
      %v2537 = vunpack.c.l.b16 %v2261
      %v2538 = vunpack.c.l.b16 %v2262
      %v2539 = vunpack.c.h.b16 %v2262
      %v2540 = vunpack.c.l.b16 %v2263
      %v2541 = vunpack.c.h.b16 %v2263
      %v2542 = vunpack.c.l.b16 %v2264
      %v2543 = vunpack.c.l.b16 %v2265
      %v2544 = vunpack.c.h.b16 %v2265
      %v2545 = vunpack.c.l.b16 %v2266
      %v2546 = vunpack.c.h.b16 %v2266
      %v2547 = vunpack.c.l.b16 %v2267
      %v2548 = vunpack.c.l.b16 %v2268
      %v2549 = vunpack.c.h.b16 %v2268
      %v2550 = vunpack.c.l.b16 %v2269
      %v2551 = vunpack.c.h.b16 %v2269
      %v2552 = vunpack.c.l.b16 %v2270
      %v2553 = vunpack.c.l.b16 %v2271
      %v2554 = vunpack.c.h.b16 %v2271
      %v2555 = vunpack.c.l.b16 %v2272
      %v2556 = vunpack.c.h.b16 %v2272
      %v2557 = vunpack.c.l.b16 %v2273
      %v2558 = vunpack.c.l.b16 %v2274
      %v2559 = vunpack.c.h.b16 %v2274
      %v2560 = vunpack.c.l.b16 %v2275
      %v2561 = vunpack.c.h.b16 %v2275
      %v2562 = vunpack.c.l.b16 %v2276
      %v2563 = vunpack.c.l.b16 %v2277
      %v2564 = vunpack.c.h.b16 %v2277
      %v2565 = vunpack.c.l.b16 %v2278
      %v2566 = vunpack.c.h.b16 %v2278
      %v2567 = vunpack.c.l.b16 %v2279
      %v2568 = vunpack.c.l.b16 %v2280
      %v2569 = vunpack.c.h.b16 %v2280
      %v2570 = vunpack.c.l.b16 %v2281
      %v2571 = vunpack.c.h.b16 %v2281
      %v2572 = vunpack.c.l.b16 %v2282
      %v2573 = vunpack.c.l.b16 %v2283
      %v2574 = vunpack.c.h.b16 %v2283
      %v2575 = vunpack.c.l.b16 %v2284
      %v2576 = vunpack.c.h.b16 %v2284
      %v2577 = vunpack.c.l.b16 %v2285
      %v2578 = vunpack.c.l.b16 %v2286
      %v2579 = vunpack.c.h.b16 %v2286
      %v2580 = vunpack.c.l.b16 %v2287
      %v2581 = vunpack.c.h.b16 %v2287
      %v2582 = vunpack.c.l.b16 %v2288
      %v2583 = vunpack.c.l.b16 %v2289
      %v2584 = vunpack.c.h.b16 %v2289
      %v2585 = vunpack.c.l.b16 %v2290
      %v2586 = vunpack.c.h.b16 %v2290
      %v2587 = vunpack.c.l.b16 %v2291
      %v2588 = vpack.c.b16 %v2513, %v2508
      %v2589 = vpack.c.b16 %v2514, %v2509
      %v2590 = vpack.c.b16 %v2515, %v2510
      %v2591 = vpack.c.b16 %v2516, %v2511
      %v2592 = vpack.c.b16 %v2517, %v2512
      %v2593 = vpack.c.b16 %v2523, %v2518
      %v2594 = vpack.c.b16 %v2524, %v2519
      %v2595 = vpack.c.b16 %v2525, %v2520
      %v2596 = vpack.c.b16 %v2526, %v2521
      %v2597 = vpack.c.b16 %v2527, %v2522
      %v2598 = vpack.c.b16 %v2533, %v2528
      %v2599 = vpack.c.b16 %v2534, %v2529
      %v2600 = vpack.c.b16 %v2535, %v2530
      %v2601 = vpack.c.b16 %v2536, %v2531
      %v2602 = vpack.c.b16 %v2537, %v2532
      %v2603 = vpack.c.b16 %v2543, %v2538
      %v2604 = vpack.c.b16 %v2544, %v2539
      %v2605 = vpack.c.b16 %v2545, %v2540
      %v2606 = vpack.c.b16 %v2546, %v2541
      %v2607 = vpack.c.b16 %v2547, %v2542
      %v2608 = vpack.c.b16 %v2553, %v2548
      %v2609 = vpack.c.b16 %v2554, %v2549
      %v2610 = vpack.c.b16 %v2555, %v2550
      %v2611 = vpack.c.b16 %v2556, %v2551
      %v2612 = vpack.c.b16 %v2557, %v2552
      %v2613 = vpack.c.b16 %v2563, %v2558
      %v2614 = vpack.c.b16 %v2564, %v2559
      %v2615 = vpack.c.b16 %v2565, %v2560
      %v2616 = vpack.c.b16 %v2566, %v2561
      %v2617 = vpack.c.b16 %v2567, %v2562
      %v2618 = vpack.c.b16 %v2573, %v2568
      %v2619 = vpack.c.b16 %v2574, %v2569
      %v2620 = vpack.c.b16 %v2575, %v2570
      %v2621 = vpack.c.b16 %v2576, %v2571
      %v2622 = vpack.c.b16 %v2577, %v2572
      %v2623 = vpack.c.b16 %v2583, %v2578
      %v2624 = vpack.c.b16 %v2584, %v2579
      %v2625 = vpack.c.b16 %v2585, %v2580
      %v2626 = vpack.c.b16 %v2586, %v2581
      %v2627 = vpack.c.b16 %v2587, %v2582
      %vm2660 = vcmask 523264
      %v2662 = vsel %vm2660, %v2592, 0
      %v2665 = vsel %vm2660, %v2597, 0
      %v2668 = vsel %vm2660, %v2602, 0
      %v2671 = vsel %vm2660, %v2607, 0
      %v2674 = vsel %vm2660, %v2612, 0
      %v2677 = vsel %vm2660, %v2617, 0
      %v2680 = vsel %vm2660, %v2622, 0
      %v2683 = vsel %vm2660, %v2627, 0
      %2685 = vmatprep.subr.bf16.mxu0 %v2293
      %2686 = vmatpush1.bf16.msra.mxu0 %v2292
      %2687 = vmatprep.subr.bf16.mxu0 %v2295
      %2688 = vmatpush1.bf16.msra.mxu0 %v2294
      %2689 = vmatprep.subr.bf16.mxu0 %v2297
      %2690 = vmatpush1.bf16.msra.mxu0 %v2296
      %2691 = vmatprep.subr.bf16.mxu0 %v2299
      %2692 = vmatpush1.bf16.msra.mxu0 %v2298
      %2693 = vmatprep.subr.bf16.mxu0 %v2301
      %2694 = vmatpush1.bf16.msra.mxu0 %v2300
      %2695 = vmatprep.subr.bf16.mxu0 %v2303
      %2696 = vmatpush1.bf16.msra.mxu0 %v2302
      %2697 = vmatprep.subr.bf16.mxu0 %v2305
      %2698 = vmatpush1.bf16.msra.mxu0 %v2304
      %2699 = vmatprep.subr.bf16.mxu0 %v2307
      %2700 = vmatpush1.bf16.msra.mxu0 %v2306
      %2701 = vmatprep.subr.bf16.mxu0 %v2309
      %2702 = vmatpush1.bf16.msra.mxu0 %v2308
      %2703 = vmatprep.subr.bf16.mxu0 %v2311
      %2704 = vmatpush1.bf16.msra.mxu0 %v2310
      %2705 = vmatprep.subr.bf16.mxu0 %v2313
      %2706 = vmatpush1.bf16.msra.mxu0 %v2312
      %2707 = vmatprep.subr.bf16.mxu0 %v2315
      %2708 = vmatpush1.bf16.msra.mxu0 %v2314
      %2709 = vmatprep.subr.bf16.mxu0 %v2317
      %2710 = vmatpush1.bf16.msra.mxu0 %v2316
      %2711 = vmatprep.subr.bf16.mxu0 %v2319
      %2712 = vmatpush1.bf16.msra.mxu0 %v2318
      %2713 = vmatprep.subr.bf16.mxu0 %v2321
      %2714 = vmatpush1.bf16.msra.mxu0 %v2320
      %2715 = vmatprep.subr.bf16.mxu0 %v2323
      %2716 = vmatpush1.bf16.msra.mxu0 %v2322
      %2717 = vmatprep.mubr.bf16.mxu0 %v2589
      %2718 = vmatmul.mubr.bf16.gmra.mrb[0].mxu0 %v2588
      %v2719 = vpop.f32.mrb[0].mxu0
      %v2720 = vadd.f32 %v2383, %v2719
      %v2721 = vpop.f32.mrb[0].mxu0
      %v2722 = vadd.f32 %v2383, %v2721
      %v2723 = vpop.f32.mrb[0].mxu0
      %v2724 = vadd.f32 %v2388, %v2723
      %v2725 = vpop.f32.mrb[0].mxu0
      %v2726 = vadd.f32 %v2388, %v2725
      %2727 = vmatprep.mubr.bf16.mxu0 %v2594
      %2728 = vmatmul.mubr.bf16.gmra.mrb[0].mxu0 %v2593
      %v2729 = vpop.f32.mrb[0].mxu0
      %v2730 = vadd.f32 %v2393, %v2729
      %v2731 = vpop.f32.mrb[0].mxu0
      %v2732 = vadd.f32 %v2393, %v2731
      %v2733 = vpop.f32.mrb[0].mxu0
      %v2734 = vadd.f32 %v2398, %v2733
      %v2735 = vpop.f32.mrb[0].mxu0
      %v2736 = vadd.f32 %v2398, %v2735
      %2737 = vmatprep.mubr.bf16.mxu0 %v2599
      %2738 = vmatmul.mubr.bf16.gmra.mrb[0].mxu0 %v2598
      %v2739 = vpop.f32.mrb[0].mxu0
      %v2740 = vadd.f32 %v2403, %v2739
      %v2741 = vpop.f32.mrb[0].mxu0
      %v2742 = vadd.f32 %v2403, %v2741
      %v2743 = vpop.f32.mrb[0].mxu0
      %v2744 = vadd.f32 %v2408, %v2743
      %v2745 = vpop.f32.mrb[0].mxu0
      %v2746 = vadd.f32 %v2408, %v2745
      %2747 = vmatprep.mubr.bf16.mxu0 %v2604
      %2748 = vmatmul.mubr.bf16.gmra.mrb[0].mxu0 %v2603
      %v2749 = vpop.f32.mrb[0].mxu0
      %v2750 = vadd.f32 %v2413, %v2749
      %v2751 = vpop.f32.mrb[0].mxu0
      %v2752 = vadd.f32 %v2413, %v2751
      %v2753 = vpop.f32.mrb[0].mxu0
      %v2754 = vadd.f32 %v2418, %v2753
      %v2755 = vpop.f32.mrb[0].mxu0
      %v2756 = vadd.f32 %v2418, %v2755
      %2757 = vmatprep.mubr.bf16.mxu0 %v2609
      %2758 = vmatmul.mubr.bf16.gmra.mrb[0].mxu0 %v2608
      %v2759 = vpop.f32.mrb[0].mxu0
      %v2760 = vadd.f32 %v2423, %v2759
      %v2761 = vpop.f32.mrb[0].mxu0
      %v2762 = vadd.f32 %v2423, %v2761
      %v2763 = vpop.f32.mrb[0].mxu0
      %v2764 = vadd.f32 %v2428, %v2763
      %v2765 = vpop.f32.mrb[0].mxu0
      %v2766 = vadd.f32 %v2428, %v2765
      %2767 = vmatprep.mubr.bf16.mxu0 %v2614
      %2768 = vmatmul.mubr.bf16.gmra.mrb[0].mxu0 %v2613
      %v2769 = vpop.f32.mrb[0].mxu0
      %v2770 = vadd.f32 %v2433, %v2769
      %v2771 = vpop.f32.mrb[0].mxu0
      %v2772 = vadd.f32 %v2433, %v2771
      %v2773 = vpop.f32.mrb[0].mxu0
      %v2774 = vadd.f32 %v2438, %v2773
      %v2775 = vpop.f32.mrb[0].mxu0
      %v2776 = vadd.f32 %v2438, %v2775
      %2777 = vmatprep.mubr.bf16.mxu0 %v2619
      %2778 = vmatmul.mubr.bf16.gmra.mrb[0].mxu0 %v2618
      %v2779 = vpop.f32.mrb[0].mxu0
      %v2780 = vadd.f32 %v2443, %v2779
      %v2781 = vpop.f32.mrb[0].mxu0
      %v2782 = vadd.f32 %v2443, %v2781
      %v2783 = vpop.f32.mrb[0].mxu0
      %v2784 = vadd.f32 %v2448, %v2783
      %v2785 = vpop.f32.mrb[0].mxu0
      %v2786 = vadd.f32 %v2448, %v2785
      %2787 = vmatprep.mubr.bf16.mxu0 %v2624
      %2788 = vmatmul.mubr.bf16.gmra.mrb[0].mxu0 %v2623
      %v2789 = vpop.f32.mrb[0].mxu0
      %v2790 = vadd.f32 %v2453, %v2789
      %v2791 = vpop.f32.mrb[0].mxu0
      %v2792 = vadd.f32 %v2453, %v2791
      %v2793 = vpop.f32.mrb[0].mxu0
      %v2794 = vadd.f32 %v2458, %v2793
      %v2795 = vpop.f32.mrb[0].mxu0
      %v2796 = vadd.f32 %v2458, %v2795
      %2797 = vdwg.mxu0
      %2798 = vmatprep.subr.bf16.mxu0 %v2325
      %2799 = vmatpush1.bf16.msra.mxu0 %v2324
      %2800 = vmatprep.subr.bf16.mxu0 %v2327
      %2801 = vmatpush1.bf16.msra.mxu0 %v2326
      %2802 = vmatprep.subr.bf16.mxu0 %v2329
      %2803 = vmatpush1.bf16.msra.mxu0 %v2328
      %2804 = vmatprep.subr.bf16.mxu0 %v2331
      %2805 = vmatpush1.bf16.msra.mxu0 %v2330
      %2806 = vmatprep.subr.bf16.mxu0 %v2333
      %2807 = vmatpush1.bf16.msra.mxu0 %v2332
      %2808 = vmatprep.subr.bf16.mxu0 %v2335
      %2809 = vmatpush1.bf16.msra.mxu0 %v2334
      %2810 = vmatprep.subr.bf16.mxu0 %v2337
      %2811 = vmatpush1.bf16.msra.mxu0 %v2336
      %2812 = vmatprep.subr.bf16.mxu0 %v2339
      %2813 = vmatpush1.bf16.msra.mxu0 %v2338
      %2814 = vmatprep.subr.bf16.mxu0 %v2341
      %2815 = vmatpush1.bf16.msra.mxu0 %v2340
      %2816 = vmatprep.subr.bf16.mxu0 %v2343
      %2817 = vmatpush1.bf16.msra.mxu0 %v2342
      %2818 = vmatprep.subr.bf16.mxu0 %v2345
      %2819 = vmatpush1.bf16.msra.mxu0 %v2344
      %2820 = vmatprep.subr.bf16.mxu0 %v2347
      %2821 = vmatpush1.bf16.msra.mxu0 %v2346
      %2822 = vmatprep.subr.bf16.mxu0 %v2349
      %2823 = vmatpush1.bf16.msra.mxu0 %v2348
      %2824 = vmatprep.subr.bf16.mxu0 %v2351
      %2825 = vmatpush1.bf16.msra.mxu0 %v2350
      %2826 = vmatprep.subr.bf16.mxu0 %v2353
      %2827 = vmatpush1.bf16.msra.mxu0 %v2352
      %2828 = vmatprep.subr.bf16.mxu0 %v2355
      %2829 = vmatpush1.bf16.msra.mxu0 %v2354
      %2830 = vmatprep.mubr.bf16.mxu0 %v2591
      %2831 = vmatmul.mubr.bf16.gmra.mrb[0].mxu0 %v2590
      %v2832 = vpop.f32.mrb[0].mxu0
      %v2833 = vadd.f32 %v2720, %v2832
      %v2834 = vpop.f32.mrb[0].mxu0
      %v2835 = vadd.f32 %v2722, %v2834
      %v2836 = vpop.f32.mrb[0].mxu0
      %v2837 = vadd.f32 %v2724, %v2836
      %v2838 = vpop.f32.mrb[0].mxu0
      %v2839 = vadd.f32 %v2726, %v2838
      %2840 = vmatprep.mubr.bf16.mxu0 %v2596
      %2841 = vmatmul.mubr.bf16.gmra.mrb[0].mxu0 %v2595
      %v2842 = vpop.f32.mrb[0].mxu0
      %v2843 = vadd.f32 %v2730, %v2842
      %v2844 = vpop.f32.mrb[0].mxu0
      %v2845 = vadd.f32 %v2732, %v2844
      %v2846 = vpop.f32.mrb[0].mxu0
      %v2847 = vadd.f32 %v2734, %v2846
      %v2848 = vpop.f32.mrb[0].mxu0
      %v2849 = vadd.f32 %v2736, %v2848
      %2850 = vmatprep.mubr.bf16.mxu0 %v2601
      %2851 = vmatmul.mubr.bf16.gmra.mrb[0].mxu0 %v2600
      %v2852 = vpop.f32.mrb[0].mxu0
      %v2853 = vadd.f32 %v2740, %v2852
      %v2854 = vpop.f32.mrb[0].mxu0
      %v2855 = vadd.f32 %v2742, %v2854
      %v2856 = vpop.f32.mrb[0].mxu0
      %v2857 = vadd.f32 %v2744, %v2856
      %v2858 = vpop.f32.mrb[0].mxu0
      %v2859 = vadd.f32 %v2746, %v2858
      %2860 = vmatprep.mubr.bf16.mxu0 %v2606
      %2861 = vmatmul.mubr.bf16.gmra.mrb[0].mxu0 %v2605
      %v2862 = vpop.f32.mrb[0].mxu0
      %v2863 = vadd.f32 %v2750, %v2862
      %v2864 = vpop.f32.mrb[0].mxu0
      %v2865 = vadd.f32 %v2752, %v2864
      %v2866 = vpop.f32.mrb[0].mxu0
      %v2867 = vadd.f32 %v2754, %v2866
      %v2868 = vpop.f32.mrb[0].mxu0
      %v2869 = vadd.f32 %v2756, %v2868
      %2870 = vmatprep.mubr.bf16.mxu0 %v2611
      %2871 = vmatmul.mubr.bf16.gmra.mrb[0].mxu0 %v2610
      %v2872 = vpop.f32.mrb[0].mxu0
      %v2873 = vadd.f32 %v2760, %v2872
      %v2874 = vpop.f32.mrb[0].mxu0
      %v2875 = vadd.f32 %v2762, %v2874
      %v2876 = vpop.f32.mrb[0].mxu0
      %v2877 = vadd.f32 %v2764, %v2876
      %v2878 = vpop.f32.mrb[0].mxu0
      %v2879 = vadd.f32 %v2766, %v2878
      %2880 = vmatprep.mubr.bf16.mxu0 %v2616
      %2881 = vmatmul.mubr.bf16.gmra.mrb[0].mxu0 %v2615
      %v2882 = vpop.f32.mrb[0].mxu0
      %v2883 = vadd.f32 %v2770, %v2882
      %v2884 = vpop.f32.mrb[0].mxu0
      %v2885 = vadd.f32 %v2772, %v2884
      %v2886 = vpop.f32.mrb[0].mxu0
      %v2887 = vadd.f32 %v2774, %v2886
      %v2888 = vpop.f32.mrb[0].mxu0
      %v2889 = vadd.f32 %v2776, %v2888
      %2890 = vmatprep.mubr.bf16.mxu0 %v2621
      %2891 = vmatmul.mubr.bf16.gmra.mrb[0].mxu0 %v2620
      %v2892 = vpop.f32.mrb[0].mxu0
      %v2893 = vadd.f32 %v2780, %v2892
      %v2894 = vpop.f32.mrb[0].mxu0
      %v2895 = vadd.f32 %v2782, %v2894
      %v2896 = vpop.f32.mrb[0].mxu0
      %v2897 = vadd.f32 %v2784, %v2896
      %v2898 = vpop.f32.mrb[0].mxu0
      %v2899 = vadd.f32 %v2786, %v2898
      %2900 = vmatprep.mubr.bf16.mxu0 %v2626
      %2901 = vmatmul.mubr.bf16.gmra.mrb[0].mxu0 %v2625
      %v2902 = vpop.f32.mrb[0].mxu0
      %v2903 = vadd.f32 %v2790, %v2902
      %v2904 = vpop.f32.mrb[0].mxu0
      %v2905 = vadd.f32 %v2792, %v2904
      %v2906 = vpop.f32.mrb[0].mxu0
      %v2907 = vadd.f32 %v2794, %v2906
      %v2908 = vpop.f32.mrb[0].mxu0
      %v2909 = vadd.f32 %v2796, %v2908
      %2910 = vdwg.mxu0
      %2911 = vmatprep.subr.bf16.mxu0 %v2357
      %2912 = vmatpush1.bf16.msra.mxu0 %v2356
      %2913 = vmatprep.subr.bf16.mxu0 %v2359
      %2914 = vmatpush1.bf16.msra.mxu0 %v2358
      %2915 = vmatprep.subr.bf16.mxu0 %v2361
      %2916 = vmatpush1.bf16.msra.mxu0 %v2360
      %2917 = vmatprep.subr.bf16.mxu0 %v2363
      %2918 = vmatpush1.bf16.msra.mxu0 %v2362
      %2919 = vmatprep.subr.bf16.mxu0 0
      %2920 = vmatpush1.bf16.msra.mxu0 0
      %2921 = vmatprep.subr.bf16.mxu0 0
      %2922 = vmatpush1.bf16.msra.mxu0 0
      %2923 = vmatprep.subr.bf16.mxu0 0
      %2924 = vmatpush1.bf16.msra.mxu0 0
      %2925 = vmatprep.subr.bf16.mxu0 0
      %2926 = vmatpush1.bf16.msra.mxu0 0
      %2927 = vmatprep.subr.bf16.mxu0 0
      %2928 = vmatpush1.bf16.msra.mxu0 0
      %2929 = vmatprep.subr.bf16.mxu0 0
      %2930 = vmatpush1.bf16.msra.mxu0 0
      %2931 = vmatprep.subr.bf16.mxu0 0
      %2932 = vmatpush1.bf16.msra.mxu0 0
      %2933 = vmatprep.subr.bf16.mxu0 0
      %2934 = vmatpush1.bf16.msra.mxu0 0
      %2935 = vmatprep.subr.bf16.mxu0 0
      %2936 = vmatpush1.bf16.msra.mxu0 0
      %2937 = vmatprep.subr.bf16.mxu0 0
      %2938 = vmatpush1.bf16.msra.mxu0 0
      %2939 = vmatprep.subr.bf16.mxu0 0
      %2940 = vmatpush1.bf16.msra.mxu0 0
      %2941 = vmatprep.subr.bf16.mxu0 0
      %2942 = vmatpush1.bf16.msra.mxu0 0
      %2943 = vmatprep.mubr.bf16.mxu0 0
      %2944 = vmatmul.mubr.bf16.gmra.mrb[0].mxu0 %v2662
      %v2945 = vpop.f32.mrb[0].mxu0
      %v2946 = vadd.f32 %v2833, %v2945
      %v2947 = vpop.f32.mrb[0].mxu0
      %v2948 = vadd.f32 %v2835, %v2947
      %v2949 = vpop.f32.mrb[0].mxu0
      %v2950 = vadd.f32 %v2837, %v2949
      %v2951 = vpop.f32.mrb[0].mxu0
      %v2952 = vadd.f32 %v2839, %v2951
      %2953 = vmatprep.mubr.bf16.mxu0 0
      %2954 = vmatmul.mubr.bf16.gmra.mrb[0].mxu0 %v2665
      %v2955 = vpop.f32.mrb[0].mxu0
      %v2956 = vadd.f32 %v2843, %v2955
      %v2957 = vpop.f32.mrb[0].mxu0
      %v2958 = vadd.f32 %v2845, %v2957
      %v2959 = vpop.f32.mrb[0].mxu0
      %v2960 = vadd.f32 %v2847, %v2959
      %v2961 = vpop.f32.mrb[0].mxu0
      %v2962 = vadd.f32 %v2849, %v2961
      %2963 = vmatprep.mubr.bf16.mxu0 0
      %2964 = vmatmul.mubr.bf16.gmra.mrb[0].mxu0 %v2668
      %v2965 = vpop.f32.mrb[0].mxu0
      %v2966 = vadd.f32 %v2853, %v2965
      %v2967 = vpop.f32.mrb[0].mxu0
      %v2968 = vadd.f32 %v2855, %v2967
      %v2969 = vpop.f32.mrb[0].mxu0
      %v2970 = vadd.f32 %v2857, %v2969
      %v2971 = vpop.f32.mrb[0].mxu0
      %v2972 = vadd.f32 %v2859, %v2971
      %2973 = vmatprep.mubr.bf16.mxu0 0
      %2974 = vmatmul.mubr.bf16.gmra.mrb[0].mxu0 %v2671
      %v2975 = vpop.f32.mrb[0].mxu0
      %v2976 = vadd.f32 %v2863, %v2975
      %v2977 = vpop.f32.mrb[0].mxu0
      %v2978 = vadd.f32 %v2865, %v2977
      %v2979 = vpop.f32.mrb[0].mxu0
      %v2980 = vadd.f32 %v2867, %v2979
      %v2981 = vpop.f32.mrb[0].mxu0
      %v2982 = vadd.f32 %v2869, %v2981
      %2983 = vmatprep.mubr.bf16.mxu0 0
      %2984 = vmatmul.mubr.bf16.gmra.mrb[0].mxu0 %v2674
      %v2985 = vpop.f32.mrb[0].mxu0
      %v2986 = vadd.f32 %v2873, %v2985
      %v2987 = vpop.f32.mrb[0].mxu0
      %v2988 = vadd.f32 %v2875, %v2987
      %v2989 = vpop.f32.mrb[0].mxu0
      %v2990 = vadd.f32 %v2877, %v2989
      %v2991 = vpop.f32.mrb[0].mxu0
      %v2992 = vadd.f32 %v2879, %v2991
      %2993 = vmatprep.mubr.bf16.mxu0 0
      %2994 = vmatmul.mubr.bf16.gmra.mrb[0].mxu0 %v2677
      %v2995 = vpop.f32.mrb[0].mxu0
      %v2996 = vadd.f32 %v2883, %v2995
      %v2997 = vpop.f32.mrb[0].mxu0
      %v2998 = vadd.f32 %v2885, %v2997
      %v2999 = vpop.f32.mrb[0].mxu0
      %v3000 = vadd.f32 %v2887, %v2999
      %v3001 = vpop.f32.mrb[0].mxu0
      %v3002 = vadd.f32 %v2889, %v3001
      %3003 = vmatprep.mubr.bf16.mxu0 0
      %3004 = vmatmul.mubr.bf16.gmra.mrb[0].mxu0 %v2680
      %v3005 = vpop.f32.mrb[0].mxu0
      %v3006 = vadd.f32 %v2893, %v3005
      %v3007 = vpop.f32.mrb[0].mxu0
      %v3008 = vadd.f32 %v2895, %v3007
      %v3009 = vpop.f32.mrb[0].mxu0
      %v3010 = vadd.f32 %v2897, %v3009
      %v3011 = vpop.f32.mrb[0].mxu0
      %v3012 = vadd.f32 %v2899, %v3011
      %3013 = vmatprep.mubr.bf16.mxu0 0
      %3014 = vmatmul.mubr.bf16.gmra.mrb[0].mxu0 %v2683
      %v3015 = vpop.f32.mrb[0].mxu0
      %v3016 = vadd.f32 %v2903, %v3015
      %v3017 = vpop.f32.mrb[0].mxu0
      %v3018 = vadd.f32 %v2905, %v3017
      %v3019 = vpop.f32.mrb[0].mxu0
      %v3020 = vadd.f32 %v2907, %v3019
      %v3021 = vpop.f32.mrb[0].mxu0
      %v3022 = vadd.f32 %v2909, %v3021
      %3023 = vdwg.mxu0
      %v3024 = vmax.f32 %v2946, 0.0
      %v3025 = vmax.f32 %v2948, 0.0
      %v3026 = vmax.f32 %v2950, 0.0
      %v3027 = vmax.f32 %v2952, 0.0
      %v3028 = vmax.f32 %v2956, 0.0
      %v3029 = vmax.f32 %v2958, 0.0
      %v3030 = vmax.f32 %v2960, 0.0
      %v3031 = vmax.f32 %v2962, 0.0
      %v3032 = vmax.f32 %v2966, 0.0
      %v3033 = vmax.f32 %v2968, 0.0
      %v3034 = vmax.f32 %v2970, 0.0
      %v3035 = vmax.f32 %v2972, 0.0
      %v3036 = vmax.f32 %v2976, 0.0
      %v3037 = vmax.f32 %v2978, 0.0
      %v3038 = vmax.f32 %v2980, 0.0
      %v3039 = vmax.f32 %v2982, 0.0
      %v3040 = vmax.f32 %v2986, 0.0
      %v3041 = vmax.f32 %v2988, 0.0
      %v3042 = vmax.f32 %v2990, 0.0
      %v3043 = vmax.f32 %v2992, 0.0
      %v3044 = vmax.f32 %v2996, 0.0
      %v3045 = vmax.f32 %v2998, 0.0
      %v3046 = vmax.f32 %v3000, 0.0
      %v3047 = vmax.f32 %v3002, 0.0
      %v3048 = vmax.f32 %v3006, 0.0
      %v3049 = vmax.f32 %v3008, 0.0
      %v3050 = vmax.f32 %v3010, 0.0
      %v3051 = vmax.f32 %v3012, 0.0
      %v3052 = vmax.f32 %v3016, 0.0
      %v3053 = vmax.f32 %v3018, 0.0
      %v3054 = vmax.f32 %v3020, 0.0
      %v3055 = vmax.f32 %v3022, 0.0
      %v3056 = vpack.c.bf16 %v3026, %v3024
      %v3057 = vpack.c.bf16 %v3027, %v3025
      %v3058 = vpack.c.bf16 %v3030, %v3028
      %v3059 = vpack.c.bf16 %v3031, %v3029
      %v3060 = vpack.c.bf16 %v3034, %v3032
      %v3061 = vpack.c.bf16 %v3035, %v3033
      %v3062 = vpack.c.bf16 %v3038, %v3036
      %v3063 = vpack.c.bf16 %v3039, %v3037
      %v3064 = vpack.c.bf16 %v3042, %v3040
      %v3065 = vpack.c.bf16 %v3043, %v3041
      %v3066 = vpack.c.bf16 %v3046, %v3044
      %v3067 = vpack.c.bf16 %v3047, %v3045
      %v3068 = vpack.c.bf16 %v3050, %v3048
      %v3069 = vpack.c.bf16 %v3051, %v3049
      %v3070 = vpack.c.bf16 %v3054, %v3052
      %v3071 = vpack.c.bf16 %v3055, %v3053
      %3072 = vst [vmem:[#allocation2 + $0x8] sm:$0xff] %v3056
      %3073 = vst [vmem:[#allocation2 + $0x10] sm:$0xff] %v3057
      %3074 = vst [vmem:[#allocation2 + $0x28] sm:$0xff] %v3058
      %3075 = vst [vmem:[#allocation2 + $0x30] sm:$0xff] %v3059
      %3076 = vst [vmem:[#allocation2 + $0x48] sm:$0xff] %v3060
      %3077 = vst [vmem:[#allocation2 + $0x50] sm:$0xff] %v3061
      %3078 = vst [vmem:[#allocation2 + $0x68] sm:$0xff] %v3062
      %3079 = vst [vmem:[#allocation2 + $0x70] sm:$0xff] %v3063
      %3080 = vst [vmem:[#allocation2 + $0x88] sm:$0xff] %v3064
      %3081 = vst [vmem:[#allocation2 + $0x90] sm:$0xff] %v3065
      %3082 = vst [vmem:[#allocation2 + $0xa8] sm:$0xff] %v3066
      %3083 = vst [vmem:[#allocation2 + $0xb0] sm:$0xff] %v3067
      %3084 = vst [vmem:[#allocation2 + $0xc8] sm:$0xff] %v3068
      %3085 = vst [vmem:[#allocation2 + $0xd0] sm:$0xff] %v3069
      %3086 = vst [vmem:[#allocation2 + $0xe8] sm:$0xff] %v3070
      %3087 = vst [vmem:[#allocation2 + $0xf0] sm:$0xff] %v3071
      %v3088 = vld [vmem:[#allocation2] sm:$0xff]
      %v3089 = vld [vmem:[#allocation2 + $0x8] sm:$0xff]
      %v3090 = vld [vmem:[#allocation2 + $0x10] sm:$0xff]
      %v3091 = vld [vmem:[#allocation2 + $0x20] sm:$0xff]
      %v3092 = vld [vmem:[#allocation2 + $0x28] sm:$0xff]
      %v3093 = vld [vmem:[#allocation2 + $0x30] sm:$0xff]
      %v3094 = vld [vmem:[#allocation2 + $0x40] sm:$0xff]
      %v3095 = vld [vmem:[#allocation2 + $0x48] sm:$0xff]
      %v3096 = vld [vmem:[#allocation2 + $0x50] sm:$0xff]
      %v3097 = vld [vmem:[#allocation2 + $0x60] sm:$0xff]
      %v3098 = vld [vmem:[#allocation2 + $0x68] sm:$0xff]
      %v3099 = vld [vmem:[#allocation2 + $0x70] sm:$0xff]
      %v3100 = vld [vmem:[#allocation2 + $0x80] sm:$0xff]
      %v3101 = vld [vmem:[#allocation2 + $0x88] sm:$0xff]
      %v3102 = vld [vmem:[#allocation2 + $0x90] sm:$0xff]
      %v3103 = vld [vmem:[#allocation2 + $0xa0] sm:$0xff]
      %v3104 = vld [vmem:[#allocation2 + $0xa8] sm:$0xff]
      %v3105 = vld [vmem:[#allocation2 + $0xb0] sm:$0xff]
      %v3106 = vld [vmem:[#allocation2 + $0xc0] sm:$0xff]
      %v3107 = vld [vmem:[#allocation2 + $0xc8] sm:$0xff]
      %v3108 = vld [vmem:[#allocation2 + $0xd0] sm:$0xff]
      %v3109 = vld [vmem:[#allocation2 + $0xe0] sm:$0xff]
      %v3110 = vld [vmem:[#allocation2 + $0xe8] sm:$0xff]
      %v3111 = vld [vmem:[#allocation2 + $0xf0] sm:$0xff]
      %v3112 = vmul.bf16 %v3088, %v537
      %v3113 = vmul.bf16 %v3089, %v541
      %v3114 = vmul.bf16 %v3090, %v539
      %v3115 = vmul.bf16 %v3091, %v537
      %v3116 = vmul.bf16 %v3092, %v541
      %v3117 = vmul.bf16 %v3093, %v539
      %v3118 = vmul.bf16 %v3094, %v537
      %v3119 = vmul.bf16 %v3095, %v541
      %v3120 = vmul.bf16 %v3096, %v539
      %v3121 = vmul.bf16 %v3097, %v537
      %v3122 = vmul.bf16 %v3098, %v541
      %v3123 = vmul.bf16 %v3099, %v539
      %v3124 = vmul.bf16 %v3100, %v537
      %v3125 = vmul.bf16 %v3101, %v541
      %v3126 = vmul.bf16 %v3102, %v539
      %v3127 = vmul.bf16 %v3103, %v537
      %v3128 = vmul.bf16 %v3104, %v541
      %v3129 = vmul.bf16 %v3105, %v539
      %v3130 = vmul.bf16 %v3106, %v537
      %v3131 = vmul.bf16 %v3107, %v541
      %v3132 = vmul.bf16 %v3108, %v539
      %v3133 = vmul.bf16 %v3109, %v537
      %v3134 = vmul.bf16 %v3110, %v541
      %v3135 = vmul.bf16 %v3111, %v539
      %3160 = vrot.lane.b32.xlu0 %v3112, 17
      %v3161 = vpop.permute.xlu0 %3160
      %3162 = vrot.lane.b32.xlu0 %v3113, 17
      %v3163 = vpop.permute.xlu0 %3162
      %3164 = vrot.lane.b32.xlu0 %v3114, 17
      %v3165 = vpop.permute.xlu0 %3164
      %3166 = vrot.lane.b32.xlu0 %v3115, 17
      %v3167 = vpop.permute.xlu0 %3166
      %3168 = vrot.lane.b32.xlu0 %v3116, 17
      %v3169 = vpop.permute.xlu0 %3168
      %3170 = vrot.lane.b32.xlu0 %v3117, 17
      %v3171 = vpop.permute.xlu0 %3170
      %3172 = vrot.lane.b32.xlu0 %v3118, 17
      %v3173 = vpop.permute.xlu0 %3172
      %3174 = vrot.lane.b32.xlu0 %v3119, 17
      %v3175 = vpop.permute.xlu0 %3174
      %3176 = vrot.lane.b32.xlu0 %v3120, 17
      %v3177 = vpop.permute.xlu0 %3176
      %3178 = vrot.lane.b32.xlu0 %v3121, 17
      %v3179 = vpop.permute.xlu0 %3178
      %3180 = vrot.lane.b32.xlu0 %v3122, 17
      %v3181 = vpop.permute.xlu0 %3180
      %3182 = vrot.lane.b32.xlu0 %v3123, 17
      %v3183 = vpop.permute.xlu0 %3182
      %3184 = vrot.lane.b32.xlu0 %v3124, 17
      %v3185 = vpop.permute.xlu0 %3184
      %3186 = vrot.lane.b32.xlu0 %v3125, 17
      %v3187 = vpop.permute.xlu0 %3186
      %3188 = vrot.lane.b32.xlu0 %v3126, 17
      %v3189 = vpop.permute.xlu0 %3188
      %3190 = vrot.lane.b32.xlu0 %v3127, 17
      %v3191 = vpop.permute.xlu0 %3190
      %3192 = vrot.lane.b32.xlu0 %v3128, 17
      %v3193 = vpop.permute.xlu0 %3192
      %3194 = vrot.lane.b32.xlu0 %v3129, 17
      %v3195 = vpop.permute.xlu0 %3194
      %3196 = vrot.lane.b32.xlu0 %v3130, 17
      %v3197 = vpop.permute.xlu0 %3196
      %3198 = vrot.lane.b32.xlu0 %v3131, 17
      %v3199 = vpop.permute.xlu0 %3198
      %3200 = vrot.lane.b32.xlu0 %v3132, 17
      %v3201 = vpop.permute.xlu0 %3200
      %3202 = vrot.lane.b32.xlu0 %v3133, 17
      %v3203 = vpop.permute.xlu0 %3202
      %3204 = vrot.lane.b32.xlu0 %v3134, 17
      %v3205 = vpop.permute.xlu0 %3204
      %3206 = vrot.lane.b32.xlu0 %v3135, 17
      %v3207 = vpop.permute.xlu0 %3206
      %v3208 = vsel %vm557, %v3161, %v3163
      %v3209 = vsel %vm557, %v3163, %v3165
      %v3210 = vsel %vm557, %v3167, %v3169
      %v3211 = vsel %vm557, %v3169, %v3171
      %v3212 = vsel %vm557, %v3173, %v3175
      %v3213 = vsel %vm557, %v3175, %v3177
      %v3214 = vsel %vm557, %v3179, %v3181
      %v3215 = vsel %vm557, %v3181, %v3183
      %v3216 = vsel %vm557, %v3185, %v3187
      %v3217 = vsel %vm557, %v3187, %v3189
      %v3218 = vsel %vm557, %v3191, %v3193
      %v3219 = vsel %vm557, %v3193, %v3195
      %v3220 = vsel %vm557, %v3197, %v3199
      %v3221 = vsel %vm557, %v3199, %v3201
      %v3222 = vsel %vm557, %v3203, %v3205
      %v3223 = vsel %vm557, %v3205, %v3207
      %3240 = vst [vmem:[#allocation3] sm:$0xff] %v3208
      %3241 = vst [vmem:[#allocation3 + $0x8] sm:$0xff] %v3209
      %3242 = vst [vmem:[#allocation3 + $0x10] sm:$0xff] %v3210
      %3243 = vst [vmem:[#allocation3 + $0x18] sm:$0xff] %v3211
      %3244 = vst [vmem:[#allocation3 + $0x20] sm:$0xff] %v3212
      %3245 = vst [vmem:[#allocation3 + $0x28] sm:$0xff] %v3213
      %3246 = vst [vmem:[#allocation3 + $0x30] sm:$0xff] %v3214
      %3247 = vst [vmem:[#allocation3 + $0x38] sm:$0xff] %v3215
      %3248 = vst [vmem:[#allocation3 + $0x40] sm:$0xff] %v3216
      %3249 = vst [vmem:[#allocation3 + $0x48] sm:$0xff] %v3217
      %3250 = vst [vmem:[#allocation3 + $0x50] sm:$0xff] %v3218
      %3251 = vst [vmem:[#allocation3 + $0x58] sm:$0xff] %v3219
      %3252 = vst [vmem:[#allocation3 + $0x60] sm:$0xff] %v3220
      %3253 = vst [vmem:[#allocation3 + $0x68] sm:$0xff] %v3221
      %3254 = vst [vmem:[#allocation3 + $0x70] sm:$0xff] %v3222
      %3255 = vst [vmem:[#allocation3 + $0x78] sm:$0xff] %v3223
      %v3256 = vld [vmem:[#allocation2] sm:$0xff]
      %v3257 = vld [vmem:[#allocation2 + $0x8] sm:$0xff]
      %v3258 = vld [vmem:[#allocation2 + $0x10] sm:$0xff]
      %v3259 = vld [vmem:[#allocation2 + $0x20] sm:$0xff]
      %v3260 = vld [vmem:[#allocation2 + $0x28] sm:$0xff]
      %v3261 = vld [vmem:[#allocation2 + $0x30] sm:$0xff]
      %v3262 = vld [vmem:[#allocation2 + $0x40] sm:$0xff]
      %v3263 = vld [vmem:[#allocation2 + $0x48] sm:$0xff]
      %v3264 = vld [vmem:[#allocation2 + $0x50] sm:$0xff]
      %v3265 = vld [vmem:[#allocation2 + $0x60] sm:$0xff]
      %v3266 = vld [vmem:[#allocation2 + $0x68] sm:$0xff]
      %v3267 = vld [vmem:[#allocation2 + $0x70] sm:$0xff]
      %v3268 = vld [vmem:[#allocation2 + $0x80] sm:$0xff]
      %v3269 = vld [vmem:[#allocation2 + $0x88] sm:$0xff]
      %v3270 = vld [vmem:[#allocation2 + $0x90] sm:$0xff]
      %v3271 = vld [vmem:[#allocation2 + $0xa0] sm:$0xff]
      %v3272 = vld [vmem:[#allocation2 + $0xa8] sm:$0xff]
      %v3273 = vld [vmem:[#allocation2 + $0xb0] sm:$0xff]
      %v3274 = vld [vmem:[#allocation2 + $0xc0] sm:$0xff]
      %v3275 = vld [vmem:[#allocation2 + $0xc8] sm:$0xff]
      %v3276 = vld [vmem:[#allocation2 + $0xd0] sm:$0xff]
      %v3277 = vld [vmem:[#allocation2 + $0xe0] sm:$0xff]
      %v3278 = vld [vmem:[#allocation2 + $0xe8] sm:$0xff]
      %v3279 = vld [vmem:[#allocation2 + $0xf0] sm:$0xff]
      %3304 = vrot.lane.b32.xlu0 %v3256, 16
      %v3305 = vpop.permute.xlu0 %3304
      %3306 = vrot.lane.b32.xlu0 %v3257, 16
      %v3307 = vpop.permute.xlu0 %3306
      %3308 = vrot.lane.b32.xlu0 %v3258, 16
      %v3309 = vpop.permute.xlu0 %3308
      %3310 = vrot.lane.b32.xlu0 %v3259, 16
      %v3311 = vpop.permute.xlu0 %3310
      %3312 = vrot.lane.b32.xlu0 %v3260, 16
      %v3313 = vpop.permute.xlu0 %3312
      %3314 = vrot.lane.b32.xlu0 %v3261, 16
      %v3315 = vpop.permute.xlu0 %3314
      %3316 = vrot.lane.b32.xlu0 %v3262, 16
      %v3317 = vpop.permute.xlu0 %3316
      %3318 = vrot.lane.b32.xlu0 %v3263, 16
      %v3319 = vpop.permute.xlu0 %3318
      %3320 = vrot.lane.b32.xlu0 %v3264, 16
      %v3321 = vpop.permute.xlu0 %3320
      %3322 = vrot.lane.b32.xlu0 %v3265, 16
      %v3323 = vpop.permute.xlu0 %3322
      %3324 = vrot.lane.b32.xlu0 %v3266, 16
      %v3325 = vpop.permute.xlu0 %3324
      %3326 = vrot.lane.b32.xlu0 %v3267, 16
      %v3327 = vpop.permute.xlu0 %3326
      %3328 = vrot.lane.b32.xlu0 %v3268, 16
      %v3329 = vpop.permute.xlu0 %3328
      %3330 = vrot.lane.b32.xlu0 %v3269, 16
      %v3331 = vpop.permute.xlu0 %3330
      %3332 = vrot.lane.b32.xlu0 %v3270, 16
      %v3333 = vpop.permute.xlu0 %3332
      %3334 = vrot.lane.b32.xlu0 %v3271, 16
      %v3335 = vpop.permute.xlu0 %3334
      %3336 = vrot.lane.b32.xlu0 %v3272, 16
      %v3337 = vpop.permute.xlu0 %3336
      %3338 = vrot.lane.b32.xlu0 %v3273, 16
      %v3339 = vpop.permute.xlu0 %3338
      %3340 = vrot.lane.b32.xlu0 %v3274, 16
      %v3341 = vpop.permute.xlu0 %3340
      %3342 = vrot.lane.b32.xlu0 %v3275, 16
      %v3343 = vpop.permute.xlu0 %3342
      %3344 = vrot.lane.b32.xlu0 %v3276, 16
      %v3345 = vpop.permute.xlu0 %3344
      %3346 = vrot.lane.b32.xlu0 %v3277, 16
      %v3347 = vpop.permute.xlu0 %3346
      %3348 = vrot.lane.b32.xlu0 %v3278, 16
      %v3349 = vpop.permute.xlu0 %3348
      %3350 = vrot.lane.b32.xlu0 %v3279, 16
      %v3351 = vpop.permute.xlu0 %3350
      %v3352 = vsel %vm576, %v3305, %v3307
      %v3353 = vsel %vm576, %v3307, %v3309
      %v3354 = vsel %vm576, %v3311, %v3313
      %v3355 = vsel %vm576, %v3313, %v3315
      %v3356 = vsel %vm576, %v3317, %v3319
      %v3357 = vsel %vm576, %v3319, %v3321
      %v3358 = vsel %vm576, %v3323, %v3325
      %v3359 = vsel %vm576, %v3325, %v3327
      %v3360 = vsel %vm576, %v3329, %v3331
      %v3361 = vsel %vm576, %v3331, %v3333
      %v3362 = vsel %vm576, %v3335, %v3337
      %v3363 = vsel %vm576, %v3337, %v3339
      %v3364 = vsel %vm576, %v3341, %v3343
      %v3365 = vsel %vm576, %v3343, %v3345
      %v3366 = vsel %vm576, %v3347, %v3349
      %v3367 = vsel %vm576, %v3349, %v3351
      %3384 = vst [vmem:[#allocation3 + $0x80] sm:$0xff] %v3352
      %3385 = vst [vmem:[#allocation3 + $0x88] sm:$0xff] %v3353
      %3386 = vst [vmem:[#allocation3 + $0x90] sm:$0xff] %v3354
      %3387 = vst [vmem:[#allocation3 + $0x98] sm:$0xff] %v3355
      %3388 = vst [vmem:[#allocation3 + $0xa0] sm:$0xff] %v3356
      %3389 = vst [vmem:[#allocation3 + $0xa8] sm:$0xff] %v3357
      %3390 = vst [vmem:[#allocation3 + $0xb0] sm:$0xff] %v3358
      %3391 = vst [vmem:[#allocation3 + $0xb8] sm:$0xff] %v3359
      %3392 = vst [vmem:[#allocation3 + $0xc0] sm:$0xff] %v3360
      %3393 = vst [vmem:[#allocation3 + $0xc8] sm:$0xff] %v3361
      %3394 = vst [vmem:[#allocation3 + $0xd0] sm:$0xff] %v3362
      %3395 = vst [vmem:[#allocation3 + $0xd8] sm:$0xff] %v3363
      %3396 = vst [vmem:[#allocation3 + $0xe0] sm:$0xff] %v3364
      %3397 = vst [vmem:[#allocation3 + $0xe8] sm:$0xff] %v3365
      %3398 = vst [vmem:[#allocation3 + $0xf0] sm:$0xff] %v3366
      %3399 = vst [vmem:[#allocation3 + $0xf8] sm:$0xff] %v3367
      %v3400 = vld [vmem:[#allocation2] sm:$0xff]
      %v3401 = vld [vmem:[#allocation2 + $0x8] sm:$0xff]
      %v3402 = vld [vmem:[#allocation2 + $0x10] sm:$0xff]
      %v3403 = vld [vmem:[#allocation2 + $0x20] sm:$0xff]
      %v3404 = vld [vmem:[#allocation2 + $0x28] sm:$0xff]
      %v3405 = vld [vmem:[#allocation2 + $0x30] sm:$0xff]
      %v3406 = vld [vmem:[#allocation2 + $0x40] sm:$0xff]
      %v3407 = vld [vmem:[#allocation2 + $0x48] sm:$0xff]
      %v3408 = vld [vmem:[#allocation2 + $0x50] sm:$0xff]
      %v3409 = vld [vmem:[#allocation2 + $0x60] sm:$0xff]
      %v3410 = vld [vmem:[#allocation2 + $0x68] sm:$0xff]
      %v3411 = vld [vmem:[#allocation2 + $0x70] sm:$0xff]
      %v3412 = vld [vmem:[#allocation2 + $0x80] sm:$0xff]
      %v3413 = vld [vmem:[#allocation2 + $0x88] sm:$0xff]
      %v3414 = vld [vmem:[#allocation2 + $0x90] sm:$0xff]
      %v3415 = vld [vmem:[#allocation2 + $0xa0] sm:$0xff]
      %v3416 = vld [vmem:[#allocation2 + $0xa8] sm:$0xff]
      %v3417 = vld [vmem:[#allocation2 + $0xb0] sm:$0xff]
      %v3418 = vld [vmem:[#allocation2 + $0xc0] sm:$0xff]
      %v3419 = vld [vmem:[#allocation2 + $0xc8] sm:$0xff]
      %v3420 = vld [vmem:[#allocation2 + $0xd0] sm:$0xff]
      %v3421 = vld [vmem:[#allocation2 + $0xe0] sm:$0xff]
      %v3422 = vld [vmem:[#allocation2 + $0xe8] sm:$0xff]
      %v3423 = vld [vmem:[#allocation2 + $0xf0] sm:$0xff]
      %v3424 = vmul.bf16 %v3400, %v589
      %v3425 = vmul.bf16 %v3401, %v593
      %v3426 = vmul.bf16 %v3402, %v591
      %v3427 = vmul.bf16 %v3403, %v589
      %v3428 = vmul.bf16 %v3404, %v593
      %v3429 = vmul.bf16 %v3405, %v591
      %v3430 = vmul.bf16 %v3406, %v589
      %v3431 = vmul.bf16 %v3407, %v593
      %v3432 = vmul.bf16 %v3408, %v591
      %v3433 = vmul.bf16 %v3409, %v589
      %v3434 = vmul.bf16 %v3410, %v593
      %v3435 = vmul.bf16 %v3411, %v591
      %v3436 = vmul.bf16 %v3412, %v589
      %v3437 = vmul.bf16 %v3413, %v593
      %v3438 = vmul.bf16 %v3414, %v591
      %v3439 = vmul.bf16 %v3415, %v589
      %v3440 = vmul.bf16 %v3416, %v593
      %v3441 = vmul.bf16 %v3417, %v591
      %v3442 = vmul.bf16 %v3418, %v589
      %v3443 = vmul.bf16 %v3419, %v593
      %v3444 = vmul.bf16 %v3420, %v591
      %v3445 = vmul.bf16 %v3421, %v589
      %v3446 = vmul.bf16 %v3422, %v593
      %v3447 = vmul.bf16 %v3423, %v591
      %3472 = vrot.lane.b32.xlu0 %v3424, 15
      %v3473 = vpop.permute.xlu0 %3472
      %3474 = vrot.lane.b32.xlu0 %v3425, 15
      %v3475 = vpop.permute.xlu0 %3474
      %3476 = vrot.lane.b32.xlu0 %v3426, 15
      %v3477 = vpop.permute.xlu0 %3476
      %3478 = vrot.lane.b32.xlu0 %v3427, 15
      %v3479 = vpop.permute.xlu0 %3478
      %3480 = vrot.lane.b32.xlu0 %v3428, 15
      %v3481 = vpop.permute.xlu0 %3480
      %3482 = vrot.lane.b32.xlu0 %v3429, 15
      %v3483 = vpop.permute.xlu0 %3482
      %3484 = vrot.lane.b32.xlu0 %v3430, 15
      %v3485 = vpop.permute.xlu0 %3484
      %3486 = vrot.lane.b32.xlu0 %v3431, 15
      %v3487 = vpop.permute.xlu0 %3486
      %3488 = vrot.lane.b32.xlu0 %v3432, 15
      %v3489 = vpop.permute.xlu0 %3488
      %3490 = vrot.lane.b32.xlu0 %v3433, 15
      %v3491 = vpop.permute.xlu0 %3490
      %3492 = vrot.lane.b32.xlu0 %v3434, 15
      %v3493 = vpop.permute.xlu0 %3492
      %3494 = vrot.lane.b32.xlu0 %v3435, 15
      %v3495 = vpop.permute.xlu0 %3494
      %3496 = vrot.lane.b32.xlu0 %v3436, 15
      %v3497 = vpop.permute.xlu0 %3496
      %3498 = vrot.lane.b32.xlu0 %v3437, 15
      %v3499 = vpop.permute.xlu0 %3498
      %3500 = vrot.lane.b32.xlu0 %v3438, 15
      %v3501 = vpop.permute.xlu0 %3500
      %3502 = vrot.lane.b32.xlu0 %v3439, 15
      %v3503 = vpop.permute.xlu0 %3502
      %3504 = vrot.lane.b32.xlu0 %v3440, 15
      %v3505 = vpop.permute.xlu0 %3504
      %3506 = vrot.lane.b32.xlu0 %v3441, 15
      %v3507 = vpop.permute.xlu0 %3506
      %3508 = vrot.lane.b32.xlu0 %v3442, 15
      %v3509 = vpop.permute.xlu0 %3508
      %3510 = vrot.lane.b32.xlu0 %v3443, 15
      %v3511 = vpop.permute.xlu0 %3510
      %3512 = vrot.lane.b32.xlu0 %v3444, 15
      %v3513 = vpop.permute.xlu0 %3512
      %3514 = vrot.lane.b32.xlu0 %v3445, 15
      %v3515 = vpop.permute.xlu0 %3514
      %3516 = vrot.lane.b32.xlu0 %v3446, 15
      %v3517 = vpop.permute.xlu0 %3516
      %3518 = vrot.lane.b32.xlu0 %v3447, 15
      %v3519 = vpop.permute.xlu0 %3518
      %v3520 = vsel %vm609, %v3473, %v3475
      %v3521 = vsel %vm609, %v3475, %v3477
      %v3522 = vsel %vm609, %v3479, %v3481
      %v3523 = vsel %vm609, %v3481, %v3483
      %v3524 = vsel %vm609, %v3485, %v3487
      %v3525 = vsel %vm609, %v3487, %v3489
      %v3526 = vsel %vm609, %v3491, %v3493
      %v3527 = vsel %vm609, %v3493, %v3495
      %v3528 = vsel %vm609, %v3497, %v3499
      %v3529 = vsel %vm609, %v3499, %v3501
      %v3530 = vsel %vm609, %v3503, %v3505
      %v3531 = vsel %vm609, %v3505, %v3507
      %v3532 = vsel %vm609, %v3509, %v3511
      %v3533 = vsel %vm609, %v3511, %v3513
      %v3534 = vsel %vm609, %v3515, %v3517
      %v3535 = vsel %vm609, %v3517, %v3519
      %3552 = vst [vmem:[#allocation3 + $0x100] sm:$0xff] %v3520
      %3553 = vst [vmem:[#allocation3 + $0x108] sm:$0xff] %v3521
      %3554 = vst [vmem:[#allocation3 + $0x110] sm:$0xff] %v3522
      %3555 = vst [vmem:[#allocation3 + $0x118] sm:$0xff] %v3523
      %3556 = vst [vmem:[#allocation3 + $0x120] sm:$0xff] %v3524
      %3557 = vst [vmem:[#allocation3 + $0x128] sm:$0xff] %v3525
      %3558 = vst [vmem:[#allocation3 + $0x130] sm:$0xff] %v3526
      %3559 = vst [vmem:[#allocation3 + $0x138] sm:$0xff] %v3527
      %3560 = vst [vmem:[#allocation3 + $0x140] sm:$0xff] %v3528
      %3561 = vst [vmem:[#allocation3 + $0x148] sm:$0xff] %v3529
      %3562 = vst [vmem:[#allocation3 + $0x150] sm:$0xff] %v3530
      %3563 = vst [vmem:[#allocation3 + $0x158] sm:$0xff] %v3531
      %3564 = vst [vmem:[#allocation3 + $0x160] sm:$0xff] %v3532
      %3565 = vst [vmem:[#allocation3 + $0x168] sm:$0xff] %v3533
      %3566 = vst [vmem:[#allocation3 + $0x170] sm:$0xff] %v3534
      %3567 = vst [vmem:[#allocation3 + $0x178] sm:$0xff] %v3535
      %v3568 = vld [vmem:[#allocation2] sm:$0xff]
      %v3569 = vld [vmem:[#allocation2 + $0x8] sm:$0xff]
      %v3570 = vld [vmem:[#allocation2 + $0x10] sm:$0xff]
      %v3571 = vld [vmem:[#allocation2 + $0x20] sm:$0xff]
      %v3572 = vld [vmem:[#allocation2 + $0x28] sm:$0xff]
      %v3573 = vld [vmem:[#allocation2 + $0x30] sm:$0xff]
      %v3574 = vld [vmem:[#allocation2 + $0x40] sm:$0xff]
      %v3575 = vld [vmem:[#allocation2 + $0x48] sm:$0xff]
      %v3576 = vld [vmem:[#allocation2 + $0x50] sm:$0xff]
      %v3577 = vld [vmem:[#allocation2 + $0x60] sm:$0xff]
      %v3578 = vld [vmem:[#allocation2 + $0x68] sm:$0xff]
      %v3579 = vld [vmem:[#allocation2 + $0x70] sm:$0xff]
      %v3580 = vld [vmem:[#allocation2 + $0x80] sm:$0xff]
      %v3581 = vld [vmem:[#allocation2 + $0x88] sm:$0xff]
      %v3582 = vld [vmem:[#allocation2 + $0x90] sm:$0xff]
      %v3583 = vld [vmem:[#allocation2 + $0xa0] sm:$0xff]
      %v3584 = vld [vmem:[#allocation2 + $0xa8] sm:$0xff]
      %v3585 = vld [vmem:[#allocation2 + $0xb0] sm:$0xff]
      %v3586 = vld [vmem:[#allocation2 + $0xc0] sm:$0xff]
      %v3587 = vld [vmem:[#allocation2 + $0xc8] sm:$0xff]
      %v3588 = vld [vmem:[#allocation2 + $0xd0] sm:$0xff]
      %v3589 = vld [vmem:[#allocation2 + $0xe0] sm:$0xff]
      %v3590 = vld [vmem:[#allocation2 + $0xe8] sm:$0xff]
      %v3591 = vld [vmem:[#allocation2 + $0xf0] sm:$0xff]
      %v3592 = vmul.bf16 %v3568, %v620
      %v3593 = vmul.bf16 %v3569, %v624
      %v3594 = vmul.bf16 %v3570, %v622
      %v3595 = vmul.bf16 %v3571, %v620
      %v3596 = vmul.bf16 %v3572, %v624
      %v3597 = vmul.bf16 %v3573, %v622
      %v3598 = vmul.bf16 %v3574, %v620
      %v3599 = vmul.bf16 %v3575, %v624
      %v3600 = vmul.bf16 %v3576, %v622
      %v3601 = vmul.bf16 %v3577, %v620
      %v3602 = vmul.bf16 %v3578, %v624
      %v3603 = vmul.bf16 %v3579, %v622
      %v3604 = vmul.bf16 %v3580, %v620
      %v3605 = vmul.bf16 %v3581, %v624
      %v3606 = vmul.bf16 %v3582, %v622
      %v3607 = vmul.bf16 %v3583, %v620
      %v3608 = vmul.bf16 %v3584, %v624
      %v3609 = vmul.bf16 %v3585, %v622
      %v3610 = vmul.bf16 %v3586, %v620
      %v3611 = vmul.bf16 %v3587, %v624
      %v3612 = vmul.bf16 %v3588, %v622
      %v3613 = vmul.bf16 %v3589, %v620
      %v3614 = vmul.bf16 %v3590, %v624
      %v3615 = vmul.bf16 %v3591, %v622
      %3640 = vrot.lane.b32.xlu0 %v3592, 1
      %v3641 = vpop.permute.xlu0 %3640
      %3642 = vrot.lane.b32.xlu0 %v3593, 1
      %v3643 = vpop.permute.xlu0 %3642
      %3644 = vrot.lane.b32.xlu0 %v3594, 1
      %v3645 = vpop.permute.xlu0 %3644
      %3646 = vrot.lane.b32.xlu0 %v3595, 1
      %v3647 = vpop.permute.xlu0 %3646
      %3648 = vrot.lane.b32.xlu0 %v3596, 1
      %v3649 = vpop.permute.xlu0 %3648
      %3650 = vrot.lane.b32.xlu0 %v3597, 1
      %v3651 = vpop.permute.xlu0 %3650
      %3652 = vrot.lane.b32.xlu0 %v3598, 1
      %v3653 = vpop.permute.xlu0 %3652
      %3654 = vrot.lane.b32.xlu0 %v3599, 1
      %v3655 = vpop.permute.xlu0 %3654
      %3656 = vrot.lane.b32.xlu0 %v3600, 1
      %v3657 = vpop.permute.xlu0 %3656
      %3658 = vrot.lane.b32.xlu0 %v3601, 1
      %v3659 = vpop.permute.xlu0 %3658
      %3660 = vrot.lane.b32.xlu0 %v3602, 1
      %v3661 = vpop.permute.xlu0 %3660
      %3662 = vrot.lane.b32.xlu0 %v3603, 1
      %v3663 = vpop.permute.xlu0 %3662
      %3664 = vrot.lane.b32.xlu0 %v3604, 1
      %v3665 = vpop.permute.xlu0 %3664
      %3666 = vrot.lane.b32.xlu0 %v3605, 1
      %v3667 = vpop.permute.xlu0 %3666
      %3668 = vrot.lane.b32.xlu0 %v3606, 1
      %v3669 = vpop.permute.xlu0 %3668
      %3670 = vrot.lane.b32.xlu0 %v3607, 1
      %v3671 = vpop.permute.xlu0 %3670
      %3672 = vrot.lane.b32.xlu0 %v3608, 1
      %v3673 = vpop.permute.xlu0 %3672
      %3674 = vrot.lane.b32.xlu0 %v3609, 1
      %v3675 = vpop.permute.xlu0 %3674
      %3676 = vrot.lane.b32.xlu0 %v3610, 1
      %v3677 = vpop.permute.xlu0 %3676
      %3678 = vrot.lane.b32.xlu0 %v3611, 1
      %v3679 = vpop.permute.xlu0 %3678
      %3680 = vrot.lane.b32.xlu0 %v3612, 1
      %v3681 = vpop.permute.xlu0 %3680
      %3682 = vrot.lane.b32.xlu0 %v3613, 1
      %v3683 = vpop.permute.xlu0 %3682
      %3684 = vrot.lane.b32.xlu0 %v3614, 1
      %v3685 = vpop.permute.xlu0 %3684
      %3686 = vrot.lane.b32.xlu0 %v3615, 1
      %v3687 = vpop.permute.xlu0 %3686
      %v3688 = vsel %vm640, %v3641, %v3643
      %v3689 = vsel %vm640, %v3643, %v3645
      %v3690 = vsel %vm640, %v3647, %v3649
      %v3691 = vsel %vm640, %v3649, %v3651
      %v3692 = vsel %vm640, %v3653, %v3655
      %v3693 = vsel %vm640, %v3655, %v3657
      %v3694 = vsel %vm640, %v3659, %v3661
      %v3695 = vsel %vm640, %v3661, %v3663
      %v3696 = vsel %vm640, %v3665, %v3667
      %v3697 = vsel %vm640, %v3667, %v3669
      %v3698 = vsel %vm640, %v3671, %v3673
      %v3699 = vsel %vm640, %v3673, %v3675
      %v3700 = vsel %vm640, %v3677, %v3679
      %v3701 = vsel %vm640, %v3679, %v3681
      %v3702 = vsel %vm640, %v3683, %v3685
      %v3703 = vsel %vm640, %v3685, %v3687
      %3720 = vst [vmem:[#allocation3 + $0x180] sm:$0xff] %v3688
      %3721 = vst [vmem:[#allocation3 + $0x188] sm:$0xff] %v3689
      %3722 = vst [vmem:[#allocation3 + $0x190] sm:$0xff] %v3690
      %3723 = vst [vmem:[#allocation3 + $0x198] sm:$0xff] %v3691
      %3724 = vst [vmem:[#allocation3 + $0x1a0] sm:$0xff] %v3692
      %3725 = vst [vmem:[#allocation3 + $0x1a8] sm:$0xff] %v3693
      %3726 = vst [vmem:[#allocation3 + $0x1b0] sm:$0xff] %v3694
      %3727 = vst [vmem:[#allocation3 + $0x1b8] sm:$0xff] %v3695
      %3728 = vst [vmem:[#allocation3 + $0x1c0] sm:$0xff] %v3696
      %3729 = vst [vmem:[#allocation3 + $0x1c8] sm:$0xff] %v3697
      %3730 = vst [vmem:[#allocation3 + $0x1d0] sm:$0xff] %v3698
      %3731 = vst [vmem:[#allocation3 + $0x1d8] sm:$0xff] %v3699
      %3732 = vst [vmem:[#allocation3 + $0x1e0] sm:$0xff] %v3700
      %3733 = vst [vmem:[#allocation3 + $0x1e8] sm:$0xff] %v3701
      %3734 = vst [vmem:[#allocation3 + $0x1f0] sm:$0xff] %v3702
      %3735 = vst [vmem:[#allocation3 + $0x1f8] sm:$0xff] %v3703
      %v3736 = vld [vmem:[#allocation2 + $0x8] sm:$0xff]
      %v3737 = vld [vmem:[#allocation2 + $0x10] sm:$0xff]
      %v3738 = vld [vmem:[#allocation2 + $0x28] sm:$0xff]
      %v3739 = vld [vmem:[#allocation2 + $0x30] sm:$0xff]
      %v3740 = vld [vmem:[#allocation2 + $0x48] sm:$0xff]
      %v3741 = vld [vmem:[#allocation2 + $0x50] sm:$0xff]
      %v3742 = vld [vmem:[#allocation2 + $0x68] sm:$0xff]
      %v3743 = vld [vmem:[#allocation2 + $0x70] sm:$0xff]
      %v3744 = vld [vmem:[#allocation2 + $0x88] sm:$0xff]
      %v3745 = vld [vmem:[#allocation2 + $0x90] sm:$0xff]
      %v3746 = vld [vmem:[#allocation2 + $0xa8] sm:$0xff]
      %v3747 = vld [vmem:[#allocation2 + $0xb0] sm:$0xff]
      %v3748 = vld [vmem:[#allocation2 + $0xc8] sm:$0xff]
      %v3749 = vld [vmem:[#allocation2 + $0xd0] sm:$0xff]
      %v3750 = vld [vmem:[#allocation2 + $0xe8] sm:$0xff]
      %v3751 = vld [vmem:[#allocation2 + $0xf0] sm:$0xff]
      %3752 = vst [vmem:[#allocation3 + $0x200] sm:$0xff] %v3736
      %3753 = vst [vmem:[#allocation3 + $0x208] sm:$0xff] %v3737
      %3754 = vst [vmem:[#allocation3 + $0x210] sm:$0xff] %v3738
      %3755 = vst [vmem:[#allocation3 + $0x218] sm:$0xff] %v3739
      %3756 = vst [vmem:[#allocation3 + $0x220] sm:$0xff] %v3740
      %3757 = vst [vmem:[#allocation3 + $0x228] sm:$0xff] %v3741
      %3758 = vst [vmem:[#allocation3 + $0x230] sm:$0xff] %v3742
      %3759 = vst [vmem:[#allocation3 + $0x238] sm:$0xff] %v3743
      %3760 = vst [vmem:[#allocation3 + $0x240] sm:$0xff] %v3744
      %3761 = vst [vmem:[#allocation3 + $0x248] sm:$0xff] %v3745
      %3762 = vst [vmem:[#allocation3 + $0x250] sm:$0xff] %v3746
      %3763 = vst [vmem:[#allocation3 + $0x258] sm:$0xff] %v3747
      %3764 = vst [vmem:[#allocation3 + $0x260] sm:$0xff] %v3748
      %3765 = vst [vmem:[#allocation3 + $0x268] sm:$0xff] %v3749
      %3766 = vst [vmem:[#allocation3 + $0x270] sm:$0xff] %v3750
      %3767 = vst [vmem:[#allocation3 + $0x278] sm:$0xff] %v3751
      %v3768 = vld [vmem:[#allocation2 + $0x8] sm:$0xff]
      %v3769 = vld [vmem:[#allocation2 + $0x10] sm:$0xff]
      %v3770 = vld [vmem:[#allocation2 + $0x18] sm:$0xff]
      %v3771 = vld [vmem:[#allocation2 + $0x28] sm:$0xff]
      %v3772 = vld [vmem:[#allocation2 + $0x30] sm:$0xff]
      %v3773 = vld [vmem:[#allocation2 + $0x38] sm:$0xff]
      %v3774 = vld [vmem:[#allocation2 + $0x48] sm:$0xff]
      %v3775 = vld [vmem:[#allocation2 + $0x50] sm:$0xff]
      %v3776 = vld [vmem:[#allocation2 + $0x58] sm:$0xff]
      %v3777 = vld [vmem:[#allocation2 + $0x68] sm:$0xff]
      %v3778 = vld [vmem:[#allocation2 + $0x70] sm:$0xff]
      %v3779 = vld [vmem:[#allocation2 + $0x78] sm:$0xff]
      %v3780 = vld [vmem:[#allocation2 + $0x88] sm:$0xff]
      %v3781 = vld [vmem:[#allocation2 + $0x90] sm:$0xff]
      %v3782 = vld [vmem:[#allocation2 + $0x98] sm:$0xff]
      %v3783 = vld [vmem:[#allocation2 + $0xa8] sm:$0xff]
      %v3784 = vld [vmem:[#allocation2 + $0xb0] sm:$0xff]
      %v3785 = vld [vmem:[#allocation2 + $0xb8] sm:$0xff]
      %v3786 = vld [vmem:[#allocation2 + $0xc8] sm:$0xff]
      %v3787 = vld [vmem:[#allocation2 + $0xd0] sm:$0xff]
      %v3788 = vld [vmem:[#allocation2 + $0xd8] sm:$0xff]
      %v3789 = vld [vmem:[#allocation2 + $0xe8] sm:$0xff]
      %v3790 = vld [vmem:[#allocation2 + $0xf0] sm:$0xff]
      %v3791 = vld [vmem:[#allocation2 + $0xf8] sm:$0xff]
      %v3792 = vmul.bf16 %v3768, %v655
      %v3793 = vmul.bf16 %v3769, %v658
      %v3794 = vmul.bf16 %v3770, %v657
      %v3795 = vmul.bf16 %v3771, %v655
      %v3796 = vmul.bf16 %v3772, %v658
      %v3797 = vmul.bf16 %v3773, %v657
      %v3798 = vmul.bf16 %v3774, %v655
      %v3799 = vmul.bf16 %v3775, %v658
      %v3800 = vmul.bf16 %v3776, %v657
      %v3801 = vmul.bf16 %v3777, %v655
      %v3802 = vmul.bf16 %v3778, %v658
      %v3803 = vmul.bf16 %v3779, %v657
      %v3804 = vmul.bf16 %v3780, %v655
      %v3805 = vmul.bf16 %v3781, %v658
      %v3806 = vmul.bf16 %v3782, %v657
      %v3807 = vmul.bf16 %v3783, %v655
      %v3808 = vmul.bf16 %v3784, %v658
      %v3809 = vmul.bf16 %v3785, %v657
      %v3810 = vmul.bf16 %v3786, %v655
      %v3811 = vmul.bf16 %v3787, %v658
      %v3812 = vmul.bf16 %v3788, %v657
      %v3813 = vmul.bf16 %v3789, %v655
      %v3814 = vmul.bf16 %v3790, %v658
      %v3815 = vmul.bf16 %v3791, %v657
      %3840 = vrot.lane.b32.xlu0 %v3792, 127
      %v3841 = vpop.permute.xlu0 %3840
      %3842 = vrot.lane.b32.xlu0 %v3793, 127
      %v3843 = vpop.permute.xlu0 %3842
      %3844 = vrot.lane.b32.xlu0 %v3794, 127
      %v3845 = vpop.permute.xlu0 %3844
      %3846 = vrot.lane.b32.xlu0 %v3795, 127
      %v3847 = vpop.permute.xlu0 %3846
      %3848 = vrot.lane.b32.xlu0 %v3796, 127
      %v3849 = vpop.permute.xlu0 %3848
      %3850 = vrot.lane.b32.xlu0 %v3797, 127
      %v3851 = vpop.permute.xlu0 %3850
      %3852 = vrot.lane.b32.xlu0 %v3798, 127
      %v3853 = vpop.permute.xlu0 %3852
      %3854 = vrot.lane.b32.xlu0 %v3799, 127
      %v3855 = vpop.permute.xlu0 %3854
      %3856 = vrot.lane.b32.xlu0 %v3800, 127
      %v3857 = vpop.permute.xlu0 %3856
      %3858 = vrot.lane.b32.xlu0 %v3801, 127
      %v3859 = vpop.permute.xlu0 %3858
      %3860 = vrot.lane.b32.xlu0 %v3802, 127
      %v3861 = vpop.permute.xlu0 %3860
      %3862 = vrot.lane.b32.xlu0 %v3803, 127
      %v3863 = vpop.permute.xlu0 %3862
      %3864 = vrot.lane.b32.xlu0 %v3804, 127
      %v3865 = vpop.permute.xlu0 %3864
      %3866 = vrot.lane.b32.xlu0 %v3805, 127
      %v3867 = vpop.permute.xlu0 %3866
      %3868 = vrot.lane.b32.xlu0 %v3806, 127
      %v3869 = vpop.permute.xlu0 %3868
      %3870 = vrot.lane.b32.xlu0 %v3807, 127
      %v3871 = vpop.permute.xlu0 %3870
      %3872 = vrot.lane.b32.xlu0 %v3808, 127
      %v3873 = vpop.permute.xlu0 %3872
      %3874 = vrot.lane.b32.xlu0 %v3809, 127
      %v3875 = vpop.permute.xlu0 %3874
      %3876 = vrot.lane.b32.xlu0 %v3810, 127
      %v3877 = vpop.permute.xlu0 %3876
      %3878 = vrot.lane.b32.xlu0 %v3811, 127
      %v3879 = vpop.permute.xlu0 %3878
      %3880 = vrot.lane.b32.xlu0 %v3812, 127
      %v3881 = vpop.permute.xlu0 %3880
      %3882 = vrot.lane.b32.xlu0 %v3813, 127
      %v3883 = vpop.permute.xlu0 %3882
      %3884 = vrot.lane.b32.xlu0 %v3814, 127
      %v3885 = vpop.permute.xlu0 %3884
      %3886 = vrot.lane.b32.xlu0 %v3815, 127
      %v3887 = vpop.permute.xlu0 %3886
      %v3888 = vsel %vm623, %v3841, %v3843
      %v3889 = vsel %vm623, %v3843, %v3845
      %v3890 = vsel %vm623, %v3847, %v3849
      %v3891 = vsel %vm623, %v3849, %v3851
      %v3892 = vsel %vm623, %v3853, %v3855
      %v3893 = vsel %vm623, %v3855, %v3857
      %v3894 = vsel %vm623, %v3859, %v3861
      %v3895 = vsel %vm623, %v3861, %v3863
      %v3896 = vsel %vm623, %v3865, %v3867
      %v3897 = vsel %vm623, %v3867, %v3869
      %v3898 = vsel %vm623, %v3871, %v3873
      %v3899 = vsel %vm623, %v3873, %v3875
      %v3900 = vsel %vm623, %v3877, %v3879
      %v3901 = vsel %vm623, %v3879, %v3881
      %v3902 = vsel %vm623, %v3883, %v3885
      %v3903 = vsel %vm623, %v3885, %v3887
      %3920 = vst [vmem:[#allocation3 + $0x280] sm:$0xff] %v3888
      %3921 = vst [vmem:[#allocation3 + $0x288] sm:$0xff] %v3889
      %3922 = vst [vmem:[#allocation3 + $0x290] sm:$0xff] %v3890
      %3923 = vst [vmem:[#allocation3 + $0x298] sm:$0xff] %v3891
      %3924 = vst [vmem:[#allocation3 + $0x2a0] sm:$0xff] %v3892
      %3925 = vst [vmem:[#allocation3 + $0x2a8] sm:$0xff] %v3893
      %3926 = vst [vmem:[#allocation3 + $0x2b0] sm:$0xff] %v3894
      %3927 = vst [vmem:[#allocation3 + $0x2b8] sm:$0xff] %v3895
      %3928 = vst [vmem:[#allocation3 + $0x2c0] sm:$0xff] %v3896
      %3929 = vst [vmem:[#allocation3 + $0x2c8] sm:$0xff] %v3897
      %3930 = vst [vmem:[#allocation3 + $0x2d0] sm:$0xff] %v3898
      %3931 = vst [vmem:[#allocation3 + $0x2d8] sm:$0xff] %v3899
      %3932 = vst [vmem:[#allocation3 + $0x2e0] sm:$0xff] %v3900
      %3933 = vst [vmem:[#allocation3 + $0x2e8] sm:$0xff] %v3901
      %3934 = vst [vmem:[#allocation3 + $0x2f0] sm:$0xff] %v3902
      %3935 = vst [vmem:[#allocation3 + $0x2f8] sm:$0xff] %v3903
      %v3936 = vld [vmem:[#allocation2 + $0x8] sm:$0xff]
      %v3937 = vld [vmem:[#allocation2 + $0x10] sm:$0xff]
      %v3938 = vld [vmem:[#allocation2 + $0x18] sm:$0xff]
      %v3939 = vld [vmem:[#allocation2 + $0x28] sm:$0xff]
      %v3940 = vld [vmem:[#allocation2 + $0x30] sm:$0xff]
      %v3941 = vld [vmem:[#allocation2 + $0x38] sm:$0xff]
      %v3942 = vld [vmem:[#allocation2 + $0x48] sm:$0xff]
      %v3943 = vld [vmem:[#allocation2 + $0x50] sm:$0xff]
      %v3944 = vld [vmem:[#allocation2 + $0x58] sm:$0xff]
      %v3945 = vld [vmem:[#allocation2 + $0x68] sm:$0xff]
      %v3946 = vld [vmem:[#allocation2 + $0x70] sm:$0xff]
      %v3947 = vld [vmem:[#allocation2 + $0x78] sm:$0xff]
      %v3948 = vld [vmem:[#allocation2 + $0x88] sm:$0xff]
      %v3949 = vld [vmem:[#allocation2 + $0x90] sm:$0xff]
      %v3950 = vld [vmem:[#allocation2 + $0x98] sm:$0xff]
      %v3951 = vld [vmem:[#allocation2 + $0xa8] sm:$0xff]
      %v3952 = vld [vmem:[#allocation2 + $0xb0] sm:$0xff]
      %v3953 = vld [vmem:[#allocation2 + $0xb8] sm:$0xff]
      %v3954 = vld [vmem:[#allocation2 + $0xc8] sm:$0xff]
      %v3955 = vld [vmem:[#allocation2 + $0xd0] sm:$0xff]
      %v3956 = vld [vmem:[#allocation2 + $0xd8] sm:$0xff]
      %v3957 = vld [vmem:[#allocation2 + $0xe8] sm:$0xff]
      %v3958 = vld [vmem:[#allocation2 + $0xf0] sm:$0xff]
      %v3959 = vld [vmem:[#allocation2 + $0xf8] sm:$0xff]
      %v3960 = vmul.bf16 %v3936, %v684
      %v3961 = vmul.bf16 %v3937, %v687
      %v3962 = vmul.bf16 %v3938, %v686
      %v3963 = vmul.bf16 %v3939, %v684
      %v3964 = vmul.bf16 %v3940, %v687
      %v3965 = vmul.bf16 %v3941, %v686
      %v3966 = vmul.bf16 %v3942, %v684
      %v3967 = vmul.bf16 %v3943, %v687
      %v3968 = vmul.bf16 %v3944, %v686
      %v3969 = vmul.bf16 %v3945, %v684
      %v3970 = vmul.bf16 %v3946, %v687
      %v3971 = vmul.bf16 %v3947, %v686
      %v3972 = vmul.bf16 %v3948, %v684
      %v3973 = vmul.bf16 %v3949, %v687
      %v3974 = vmul.bf16 %v3950, %v686
      %v3975 = vmul.bf16 %v3951, %v684
      %v3976 = vmul.bf16 %v3952, %v687
      %v3977 = vmul.bf16 %v3953, %v686
      %v3978 = vmul.bf16 %v3954, %v684
      %v3979 = vmul.bf16 %v3955, %v687
      %v3980 = vmul.bf16 %v3956, %v686
      %v3981 = vmul.bf16 %v3957, %v684
      %v3982 = vmul.bf16 %v3958, %v687
      %v3983 = vmul.bf16 %v3959, %v686
      %4008 = vrot.lane.b32.xlu0 %v3960, 113
      %v4009 = vpop.permute.xlu0 %4008
      %4010 = vrot.lane.b32.xlu0 %v3961, 113
      %v4011 = vpop.permute.xlu0 %4010
      %4012 = vrot.lane.b32.xlu0 %v3962, 113
      %v4013 = vpop.permute.xlu0 %4012
      %4014 = vrot.lane.b32.xlu0 %v3963, 113
      %v4015 = vpop.permute.xlu0 %4014
      %4016 = vrot.lane.b32.xlu0 %v3964, 113
      %v4017 = vpop.permute.xlu0 %4016
      %4018 = vrot.lane.b32.xlu0 %v3965, 113
      %v4019 = vpop.permute.xlu0 %4018
      %4020 = vrot.lane.b32.xlu0 %v3966, 113
      %v4021 = vpop.permute.xlu0 %4020
      %4022 = vrot.lane.b32.xlu0 %v3967, 113
      %v4023 = vpop.permute.xlu0 %4022
      %4024 = vrot.lane.b32.xlu0 %v3968, 113
      %v4025 = vpop.permute.xlu0 %4024
      %4026 = vrot.lane.b32.xlu0 %v3969, 113
      %v4027 = vpop.permute.xlu0 %4026
      %4028 = vrot.lane.b32.xlu0 %v3970, 113
      %v4029 = vpop.permute.xlu0 %4028
      %4030 = vrot.lane.b32.xlu0 %v3971, 113
      %v4031 = vpop.permute.xlu0 %4030
      %4032 = vrot.lane.b32.xlu0 %v3972, 113
      %v4033 = vpop.permute.xlu0 %4032
      %4034 = vrot.lane.b32.xlu0 %v3973, 113
      %v4035 = vpop.permute.xlu0 %4034
      %4036 = vrot.lane.b32.xlu0 %v3974, 113
      %v4037 = vpop.permute.xlu0 %4036
      %4038 = vrot.lane.b32.xlu0 %v3975, 113
      %v4039 = vpop.permute.xlu0 %4038
      %4040 = vrot.lane.b32.xlu0 %v3976, 113
      %v4041 = vpop.permute.xlu0 %4040
      %4042 = vrot.lane.b32.xlu0 %v3977, 113
      %v4043 = vpop.permute.xlu0 %4042
      %4044 = vrot.lane.b32.xlu0 %v3978, 113
      %v4045 = vpop.permute.xlu0 %4044
      %4046 = vrot.lane.b32.xlu0 %v3979, 113
      %v4047 = vpop.permute.xlu0 %4046
      %4048 = vrot.lane.b32.xlu0 %v3980, 113
      %v4049 = vpop.permute.xlu0 %4048
      %4050 = vrot.lane.b32.xlu0 %v3981, 113
      %v4051 = vpop.permute.xlu0 %4050
      %4052 = vrot.lane.b32.xlu0 %v3982, 113
      %v4053 = vpop.permute.xlu0 %4052
      %4054 = vrot.lane.b32.xlu0 %v3983, 113
      %v4055 = vpop.permute.xlu0 %4054
      %v4056 = vsel %vm592, %v4009, %v4011
      %v4057 = vsel %vm592, %v4011, %v4013
      %v4058 = vsel %vm592, %v4015, %v4017
      %v4059 = vsel %vm592, %v4017, %v4019
      %v4060 = vsel %vm592, %v4021, %v4023
      %v4061 = vsel %vm592, %v4023, %v4025
      %v4062 = vsel %vm592, %v4027, %v4029
      %v4063 = vsel %vm592, %v4029, %v4031
      %v4064 = vsel %vm592, %v4033, %v4035
      %v4065 = vsel %vm592, %v4035, %v4037
      %v4066 = vsel %vm592, %v4039, %v4041
      %v4067 = vsel %vm592, %v4041, %v4043
      %v4068 = vsel %vm592, %v4045, %v4047
      %v4069 = vsel %vm592, %v4047, %v4049
      %v4070 = vsel %vm592, %v4051, %v4053
      %v4071 = vsel %vm592, %v4053, %v4055
      %4088 = vst [vmem:[#allocation3 + $0x300] sm:$0xff] %v4056
      %4089 = vst [vmem:[#allocation3 + $0x308] sm:$0xff] %v4057
      %4090 = vst [vmem:[#allocation3 + $0x310] sm:$0xff] %v4058
      %4091 = vst [vmem:[#allocation3 + $0x318] sm:$0xff] %v4059
      %4092 = vst [vmem:[#allocation3 + $0x320] sm:$0xff] %v4060
      %4093 = vst [vmem:[#allocation3 + $0x328] sm:$0xff] %v4061
      %4094 = vst [vmem:[#allocation3 + $0x330] sm:$0xff] %v4062
      %4095 = vst [vmem:[#allocation3 + $0x338] sm:$0xff] %v4063
      %4096 = vst [vmem:[#allocation3 + $0x340] sm:$0xff] %v4064
      %4097 = vst [vmem:[#allocation3 + $0x348] sm:$0xff] %v4065
      %4098 = vst [vmem:[#allocation3 + $0x350] sm:$0xff] %v4066
      %4099 = vst [vmem:[#allocation3 + $0x358] sm:$0xff] %v4067
      %4100 = vst [vmem:[#allocation3 + $0x360] sm:$0xff] %v4068
      %4101 = vst [vmem:[#allocation3 + $0x368] sm:$0xff] %v4069
      %4102 = vst [vmem:[#allocation3 + $0x370] sm:$0xff] %v4070
      %4103 = vst [vmem:[#allocation3 + $0x378] sm:$0xff] %v4071
      %v4104 = vld [vmem:[#allocation2 + $0x8] sm:$0xff]
      %v4105 = vld [vmem:[#allocation2 + $0x10] sm:$0xff]
      %v4106 = vld [vmem:[#allocation2 + $0x18] sm:$0xff]
      %v4107 = vld [vmem:[#allocation2 + $0x28] sm:$0xff]
      %v4108 = vld [vmem:[#allocation2 + $0x30] sm:$0xff]
      %v4109 = vld [vmem:[#allocation2 + $0x38] sm:$0xff]
      %v4110 = vld [vmem:[#allocation2 + $0x48] sm:$0xff]
      %v4111 = vld [vmem:[#allocation2 + $0x50] sm:$0xff]
      %v4112 = vld [vmem:[#allocation2 + $0x58] sm:$0xff]
      %v4113 = vld [vmem:[#allocation2 + $0x68] sm:$0xff]
      %v4114 = vld [vmem:[#allocation2 + $0x70] sm:$0xff]
      %v4115 = vld [vmem:[#allocation2 + $0x78] sm:$0xff]
      %v4116 = vld [vmem:[#allocation2 + $0x88] sm:$0xff]
      %v4117 = vld [vmem:[#allocation2 + $0x90] sm:$0xff]
      %v4118 = vld [vmem:[#allocation2 + $0x98] sm:$0xff]
      %v4119 = vld [vmem:[#allocation2 + $0xa8] sm:$0xff]
      %v4120 = vld [vmem:[#allocation2 + $0xb0] sm:$0xff]
      %v4121 = vld [vmem:[#allocation2 + $0xb8] sm:$0xff]
      %v4122 = vld [vmem:[#allocation2 + $0xc8] sm:$0xff]
      %v4123 = vld [vmem:[#allocation2 + $0xd0] sm:$0xff]
      %v4124 = vld [vmem:[#allocation2 + $0xd8] sm:$0xff]
      %v4125 = vld [vmem:[#allocation2 + $0xe8] sm:$0xff]
      %v4126 = vld [vmem:[#allocation2 + $0xf0] sm:$0xff]
      %v4127 = vld [vmem:[#allocation2 + $0xf8] sm:$0xff]
      %4152 = vrot.lane.b32.xlu0 %v4104, 112
      %v4153 = vpop.permute.xlu0 %4152
      %4154 = vrot.lane.b32.xlu0 %v4105, 112
      %v4155 = vpop.permute.xlu0 %4154
      %4156 = vrot.lane.b32.xlu0 %v4106, 112
      %v4157 = vpop.permute.xlu0 %4156
      %4158 = vrot.lane.b32.xlu0 %v4107, 112
      %v4159 = vpop.permute.xlu0 %4158
      %4160 = vrot.lane.b32.xlu0 %v4108, 112
      %v4161 = vpop.permute.xlu0 %4160
      %4162 = vrot.lane.b32.xlu0 %v4109, 112
      %v4163 = vpop.permute.xlu0 %4162
      %4164 = vrot.lane.b32.xlu0 %v4110, 112
      %v4165 = vpop.permute.xlu0 %4164
      %4166 = vrot.lane.b32.xlu0 %v4111, 112
      %v4167 = vpop.permute.xlu0 %4166
      %4168 = vrot.lane.b32.xlu0 %v4112, 112
      %v4169 = vpop.permute.xlu0 %4168
      %4170 = vrot.lane.b32.xlu0 %v4113, 112
      %v4171 = vpop.permute.xlu0 %4170
      %4172 = vrot.lane.b32.xlu0 %v4114, 112
      %v4173 = vpop.permute.xlu0 %4172
      %4174 = vrot.lane.b32.xlu0 %v4115, 112
      %v4175 = vpop.permute.xlu0 %4174
      %4176 = vrot.lane.b32.xlu0 %v4116, 112
      %v4177 = vpop.permute.xlu0 %4176
      %4178 = vrot.lane.b32.xlu0 %v4117, 112
      %v4179 = vpop.permute.xlu0 %4178
      %4180 = vrot.lane.b32.xlu0 %v4118, 112
      %v4181 = vpop.permute.xlu0 %4180
      %4182 = vrot.lane.b32.xlu0 %v4119, 112
      %v4183 = vpop.permute.xlu0 %4182
      %4184 = vrot.lane.b32.xlu0 %v4120, 112
      %v4185 = vpop.permute.xlu0 %4184
      %4186 = vrot.lane.b32.xlu0 %v4121, 112
      %v4187 = vpop.permute.xlu0 %4186
      %4188 = vrot.lane.b32.xlu0 %v4122, 112
      %v4189 = vpop.permute.xlu0 %4188
      %4190 = vrot.lane.b32.xlu0 %v4123, 112
      %v4191 = vpop.permute.xlu0 %4190
      %4192 = vrot.lane.b32.xlu0 %v4124, 112
      %v4193 = vpop.permute.xlu0 %4192
      %4194 = vrot.lane.b32.xlu0 %v4125, 112
      %v4195 = vpop.permute.xlu0 %4194
      %4196 = vrot.lane.b32.xlu0 %v4126, 112
      %v4197 = vpop.permute.xlu0 %4196
      %4198 = vrot.lane.b32.xlu0 %v4127, 112
      %v4199 = vpop.permute.xlu0 %4198
      %v4200 = vsel %vm721, %v4153, %v4155
      %v4201 = vsel %vm721, %v4155, %v4157
      %v4202 = vsel %vm721, %v4159, %v4161
      %v4203 = vsel %vm721, %v4161, %v4163
      %v4204 = vsel %vm721, %v4165, %v4167
      %v4205 = vsel %vm721, %v4167, %v4169
      %v4206 = vsel %vm721, %v4171, %v4173
      %v4207 = vsel %vm721, %v4173, %v4175
      %v4208 = vsel %vm721, %v4177, %v4179
      %v4209 = vsel %vm721, %v4179, %v4181
      %v4210 = vsel %vm721, %v4183, %v4185
      %v4211 = vsel %vm721, %v4185, %v4187
      %v4212 = vsel %vm721, %v4189, %v4191
      %v4213 = vsel %vm721, %v4191, %v4193
      %v4214 = vsel %vm721, %v4195, %v4197
      %v4215 = vsel %vm721, %v4197, %v4199
      %4232 = vst [vmem:[#allocation3 + $0x380] sm:$0xff] %v4200
      %4233 = vst [vmem:[#allocation3 + $0x388] sm:$0xff] %v4201
      %4234 = vst [vmem:[#allocation3 + $0x390] sm:$0xff] %v4202
      %4235 = vst [vmem:[#allocation3 + $0x398] sm:$0xff] %v4203
      %4236 = vst [vmem:[#allocation3 + $0x3a0] sm:$0xff] %v4204
      %4237 = vst [vmem:[#allocation3 + $0x3a8] sm:$0xff] %v4205
      %4238 = vst [vmem:[#allocation3 + $0x3b0] sm:$0xff] %v4206
      %4239 = vst [vmem:[#allocation3 + $0x3b8] sm:$0xff] %v4207
      %4240 = vst [vmem:[#allocation3 + $0x3c0] sm:$0xff] %v4208
      %4241 = vst [vmem:[#allocation3 + $0x3c8] sm:$0xff] %v4209
      %4242 = vst [vmem:[#allocation3 + $0x3d0] sm:$0xff] %v4210
      %4243 = vst [vmem:[#allocation3 + $0x3d8] sm:$0xff] %v4211
      %4244 = vst [vmem:[#allocation3 + $0x3e0] sm:$0xff] %v4212
      %4245 = vst [vmem:[#allocation3 + $0x3e8] sm:$0xff] %v4213
      %4246 = vst [vmem:[#allocation3 + $0x3f0] sm:$0xff] %v4214
      %4247 = vst [vmem:[#allocation3 + $0x3f8] sm:$0xff] %v4215
      %v4248 = vld [vmem:[#allocation2 + $0x8] sm:$0xff]
      %v4249 = vld [vmem:[#allocation2 + $0x10] sm:$0xff]
      %v4250 = vld [vmem:[#allocation2 + $0x18] sm:$0xff]
      %v4251 = vld [vmem:[#allocation2 + $0x28] sm:$0xff]
      %v4252 = vld [vmem:[#allocation2 + $0x30] sm:$0xff]
      %v4253 = vld [vmem:[#allocation2 + $0x38] sm:$0xff]
      %v4254 = vld [vmem:[#allocation2 + $0x48] sm:$0xff]
      %v4255 = vld [vmem:[#allocation2 + $0x50] sm:$0xff]
      %v4256 = vld [vmem:[#allocation2 + $0x58] sm:$0xff]
      %v4257 = vld [vmem:[#allocation2 + $0x68] sm:$0xff]
      %v4258 = vld [vmem:[#allocation2 + $0x70] sm:$0xff]
      %v4259 = vld [vmem:[#allocation2 + $0x78] sm:$0xff]
      %v4260 = vld [vmem:[#allocation2 + $0x88] sm:$0xff]
      %v4261 = vld [vmem:[#allocation2 + $0x90] sm:$0xff]
      %v4262 = vld [vmem:[#allocation2 + $0x98] sm:$0xff]
      %v4263 = vld [vmem:[#allocation2 + $0xa8] sm:$0xff]
      %v4264 = vld [vmem:[#allocation2 + $0xb0] sm:$0xff]
      %v4265 = vld [vmem:[#allocation2 + $0xb8] sm:$0xff]
      %v4266 = vld [vmem:[#allocation2 + $0xc8] sm:$0xff]
      %v4267 = vld [vmem:[#allocation2 + $0xd0] sm:$0xff]
      %v4268 = vld [vmem:[#allocation2 + $0xd8] sm:$0xff]
      %v4269 = vld [vmem:[#allocation2 + $0xe8] sm:$0xff]
      %v4270 = vld [vmem:[#allocation2 + $0xf0] sm:$0xff]
      %v4271 = vld [vmem:[#allocation2 + $0xf8] sm:$0xff]
      %v4272 = vmul.bf16 %v4248, %v732
      %v4273 = vmul.bf16 %v4249, %v735
      %v4274 = vmul.bf16 %v4250, %v734
      %v4275 = vmul.bf16 %v4251, %v732
      %v4276 = vmul.bf16 %v4252, %v735
      %v4277 = vmul.bf16 %v4253, %v734
      %v4278 = vmul.bf16 %v4254, %v732
      %v4279 = vmul.bf16 %v4255, %v735
      %v4280 = vmul.bf16 %v4256, %v734
      %v4281 = vmul.bf16 %v4257, %v732
      %v4282 = vmul.bf16 %v4258, %v735
      %v4283 = vmul.bf16 %v4259, %v734
      %v4284 = vmul.bf16 %v4260, %v732
      %v4285 = vmul.bf16 %v4261, %v735
      %v4286 = vmul.bf16 %v4262, %v734
      %v4287 = vmul.bf16 %v4263, %v732
      %v4288 = vmul.bf16 %v4264, %v735
      %v4289 = vmul.bf16 %v4265, %v734
      %v4290 = vmul.bf16 %v4266, %v732
      %v4291 = vmul.bf16 %v4267, %v735
      %v4292 = vmul.bf16 %v4268, %v734
      %v4293 = vmul.bf16 %v4269, %v732
      %v4294 = vmul.bf16 %v4270, %v735
      %v4295 = vmul.bf16 %v4271, %v734
      %4320 = vrot.lane.b32.xlu0 %v4272, 111
      %v4321 = vpop.permute.xlu0 %4320
      %4322 = vrot.lane.b32.xlu0 %v4273, 111
      %v4323 = vpop.permute.xlu0 %4322
      %4324 = vrot.lane.b32.xlu0 %v4274, 111
      %v4325 = vpop.permute.xlu0 %4324
      %4326 = vrot.lane.b32.xlu0 %v4275, 111
      %v4327 = vpop.permute.xlu0 %4326
      %4328 = vrot.lane.b32.xlu0 %v4276, 111
      %v4329 = vpop.permute.xlu0 %4328
      %4330 = vrot.lane.b32.xlu0 %v4277, 111
      %v4331 = vpop.permute.xlu0 %4330
      %4332 = vrot.lane.b32.xlu0 %v4278, 111
      %v4333 = vpop.permute.xlu0 %4332
      %4334 = vrot.lane.b32.xlu0 %v4279, 111
      %v4335 = vpop.permute.xlu0 %4334
      %4336 = vrot.lane.b32.xlu0 %v4280, 111
      %v4337 = vpop.permute.xlu0 %4336
      %4338 = vrot.lane.b32.xlu0 %v4281, 111
      %v4339 = vpop.permute.xlu0 %4338
      %4340 = vrot.lane.b32.xlu0 %v4282, 111
      %v4341 = vpop.permute.xlu0 %4340
      %4342 = vrot.lane.b32.xlu0 %v4283, 111
      %v4343 = vpop.permute.xlu0 %4342
      %4344 = vrot.lane.b32.xlu0 %v4284, 111
      %v4345 = vpop.permute.xlu0 %4344
      %4346 = vrot.lane.b32.xlu0 %v4285, 111
      %v4347 = vpop.permute.xlu0 %4346
      %4348 = vrot.lane.b32.xlu0 %v4286, 111
      %v4349 = vpop.permute.xlu0 %4348
      %4350 = vrot.lane.b32.xlu0 %v4287, 111
      %v4351 = vpop.permute.xlu0 %4350
      %4352 = vrot.lane.b32.xlu0 %v4288, 111
      %v4353 = vpop.permute.xlu0 %4352
      %4354 = vrot.lane.b32.xlu0 %v4289, 111
      %v4355 = vpop.permute.xlu0 %4354
      %4356 = vrot.lane.b32.xlu0 %v4290, 111
      %v4357 = vpop.permute.xlu0 %4356
      %4358 = vrot.lane.b32.xlu0 %v4291, 111
      %v4359 = vpop.permute.xlu0 %4358
      %4360 = vrot.lane.b32.xlu0 %v4292, 111
      %v4361 = vpop.permute.xlu0 %4360
      %4362 = vrot.lane.b32.xlu0 %v4293, 111
      %v4363 = vpop.permute.xlu0 %4362
      %4364 = vrot.lane.b32.xlu0 %v4294, 111
      %v4365 = vpop.permute.xlu0 %4364
      %4366 = vrot.lane.b32.xlu0 %v4295, 111
      %v4367 = vpop.permute.xlu0 %4366
      %v4368 = vsel %vm540, %v4321, %v4323
      %v4369 = vsel %vm540, %v4323, %v4325
      %v4370 = vsel %vm540, %v4327, %v4329
      %v4371 = vsel %vm540, %v4329, %v4331
      %v4372 = vsel %vm540, %v4333, %v4335
      %v4373 = vsel %vm540, %v4335, %v4337
      %v4374 = vsel %vm540, %v4339, %v4341
      %v4375 = vsel %vm540, %v4341, %v4343
      %v4376 = vsel %vm540, %v4345, %v4347
      %v4377 = vsel %vm540, %v4347, %v4349
      %v4378 = vsel %vm540, %v4351, %v4353
      %v4379 = vsel %vm540, %v4353, %v4355
      %v4380 = vsel %vm540, %v4357, %v4359
      %v4381 = vsel %vm540, %v4359, %v4361
      %v4382 = vsel %vm540, %v4363, %v4365
      %v4383 = vsel %vm540, %v4365, %v4367
      %4400 = vst [vmem:[#allocation3 + $0x400] sm:$0xff] %v4368
      %4401 = vst [vmem:[#allocation3 + $0x408] sm:$0xff] %v4369
      %4402 = vst [vmem:[#allocation3 + $0x410] sm:$0xff] %v4370
      %4403 = vst [vmem:[#allocation3 + $0x418] sm:$0xff] %v4371
      %4404 = vst [vmem:[#allocation3 + $0x420] sm:$0xff] %v4372
      %4405 = vst [vmem:[#allocation3 + $0x428] sm:$0xff] %v4373
      %4406 = vst [vmem:[#allocation3 + $0x430] sm:$0xff] %v4374
      %4407 = vst [vmem:[#allocation3 + $0x438] sm:$0xff] %v4375
      %4408 = vst [vmem:[#allocation3 + $0x440] sm:$0xff] %v4376
      %4409 = vst [vmem:[#allocation3 + $0x448] sm:$0xff] %v4377
      %4410 = vst [vmem:[#allocation3 + $0x450] sm:$0xff] %v4378
      %4411 = vst [vmem:[#allocation3 + $0x458] sm:$0xff] %v4379
      %4412 = vst [vmem:[#allocation3 + $0x460] sm:$0xff] %v4380
      %4413 = vst [vmem:[#allocation3 + $0x468] sm:$0xff] %v4381
      %4414 = vst [vmem:[#allocation3 + $0x470] sm:$0xff] %v4382
      %4415 = vst [vmem:[#allocation3 + $0x478] sm:$0xff] %v4383
      %v4416 = vld [vmem:[%s7] sm:$0xff]
      %v4417 = vld [vmem:[%s7 + $0x8] sm:$0xff]
      %v4418 = vld [vmem:[%s7 + $0x10] sm:$0xff]
      %v4419 = vld [vmem:[%s7 + $0x18] sm:$0xff]
      %v4420 = vld [vmem:[%s7 + $0x20] sm:$0xf]
      %v4421 = vld [vmem:[%s7 + $0x24] sm:$0xff]
      %v4422 = vld [vmem:[%s7 + $0x2c] sm:$0xff]
      %v4423 = vld [vmem:[%s7 + $0x34] sm:$0xff]
      %v4424 = vld [vmem:[%s7 + $0x3c] sm:$0xff]
      %v4425 = vld [vmem:[%s7 + $0x44] sm:$0xf]
      %v4426 = vld [vmem:[%s7 + $0x48] sm:$0xff]
      %v4427 = vld [vmem:[%s7 + $0x50] sm:$0xff]
      %v4428 = vld [vmem:[%s7 + $0x58] sm:$0xff]
      %v4429 = vld [vmem:[%s7 + $0x60] sm:$0xff]
      %v4430 = vld [vmem:[%s7 + $0x68] sm:$0xf]
      %v4431 = vld [vmem:[%s7 + $0x6c] sm:$0xff]
      %v4432 = vld [vmem:[%s7 + $0x74] sm:$0xff]
      %v4433 = vld [vmem:[%s7 + $0x7c] sm:$0xff]
      %v4434 = vld [vmem:[%s7 + $0x84] sm:$0xff]
      %v4435 = vld [vmem:[%s7 + $0x8c] sm:$0xf]
      %v4436 = vld [vmem:[%s7 + $0x90] sm:$0xff]
      %v4437 = vld [vmem:[%s7 + $0x98] sm:$0xff]
      %v4438 = vld [vmem:[%s7 + $0xa0] sm:$0xff]
      %v4439 = vld [vmem:[%s7 + $0xa8] sm:$0xff]
      %v4440 = vld [vmem:[%s7 + $0xb0] sm:$0xf]
      %v4441 = vld [vmem:[%s7 + $0xb4] sm:$0xff]
      %v4442 = vld [vmem:[%s7 + $0xbc] sm:$0xff]
      %v4443 = vld [vmem:[%s7 + $0xc4] sm:$0xff]
      %v4444 = vld [vmem:[%s7 + $0xcc] sm:$0xff]
      %v4445 = vld [vmem:[%s7 + $0xd4] sm:$0xf]
      %v4446 = vld [vmem:[%s7 + $0xd8] sm:$0xff]
      %v4447 = vld [vmem:[%s7 + $0xe0] sm:$0xff]
      %v4448 = vld [vmem:[%s7 + $0xe8] sm:$0xff]
      %v4449 = vld [vmem:[%s7 + $0xf0] sm:$0xff]
      %v4450 = vld [vmem:[%s7 + $0xf8] sm:$0xf]
      %v4451 = vld [vmem:[%s7 + $0xfc] sm:$0xff]
      %v4452 = vld [vmem:[%s7 + $0x104] sm:$0xff]
      %v4453 = vld [vmem:[%s7 + $0x10c] sm:$0xff]
      %v4454 = vld [vmem:[%s7 + $0x114] sm:$0xff]
      %v4455 = vld [vmem:[%s7 + $0x11c] sm:$0xf]
      %v4456 = vld [vmem:[#allocation3] sm:$0xff]
      %v4457 = vld [vmem:[#allocation3 + $0x8] sm:$0xff]
      %v4458 = vld [vmem:[#allocation3 + $0x10] sm:$0xff]
      %v4459 = vld [vmem:[#allocation3 + $0x18] sm:$0xff]
      %v4460 = vld [vmem:[#allocation3 + $0x20] sm:$0xff]
      %v4461 = vld [vmem:[#allocation3 + $0x28] sm:$0xff]
      %v4462 = vld [vmem:[#allocation3 + $0x30] sm:$0xff]
      %v4463 = vld [vmem:[#allocation3 + $0x38] sm:$0xff]
      %v4464 = vld [vmem:[#allocation3 + $0x40] sm:$0xff]
      %v4465 = vld [vmem:[#allocation3 + $0x48] sm:$0xff]
      %v4466 = vld [vmem:[#allocation3 + $0x50] sm:$0xff]
      %v4467 = vld [vmem:[#allocation3 + $0x58] sm:$0xff]
      %v4468 = vld [vmem:[#allocation3 + $0x60] sm:$0xff]
      %v4469 = vld [vmem:[#allocation3 + $0x68] sm:$0xff]
      %v4470 = vld [vmem:[#allocation3 + $0x70] sm:$0xff]
      %v4471 = vld [vmem:[#allocation3 + $0x78] sm:$0xff]
      %v4472 = vld [vmem:[#allocation3 + $0x80] sm:$0xff]
      %v4473 = vld [vmem:[#allocation3 + $0x88] sm:$0xff]
      %v4474 = vld [vmem:[#allocation3 + $0x90] sm:$0xff]
      %v4475 = vld [vmem:[#allocation3 + $0x98] sm:$0xff]
      %v4476 = vld [vmem:[#allocation3 + $0xa0] sm:$0xff]
      %v4477 = vld [vmem:[#allocation3 + $0xa8] sm:$0xff]
      %v4478 = vld [vmem:[#allocation3 + $0xb0] sm:$0xff]
      %v4479 = vld [vmem:[#allocation3 + $0xb8] sm:$0xff]
      %v4480 = vld [vmem:[#allocation3 + $0xc0] sm:$0xff]
      %v4481 = vld [vmem:[#allocation3 + $0xc8] sm:$0xff]
      %v4482 = vld [vmem:[#allocation3 + $0xd0] sm:$0xff]
      %v4483 = vld [vmem:[#allocation3 + $0xd8] sm:$0xff]
      %v4484 = vld [vmem:[#allocation3 + $0xe0] sm:$0xff]
      %v4485 = vld [vmem:[#allocation3 + $0xe8] sm:$0xff]
      %v4486 = vld [vmem:[#allocation3 + $0xf0] sm:$0xff]
      %v4487 = vld [vmem:[#allocation3 + $0xf8] sm:$0xff]
      %v4488 = vld [vmem:[#allocation3 + $0x100] sm:$0xff]
      %v4489 = vld [vmem:[#allocation3 + $0x108] sm:$0xff]
      %v4490 = vld [vmem:[#allocation3 + $0x110] sm:$0xff]
      %v4491 = vld [vmem:[#allocation3 + $0x118] sm:$0xff]
      %v4492 = vld [vmem:[#allocation3 + $0x120] sm:$0xff]
      %v4493 = vld [vmem:[#allocation3 + $0x128] sm:$0xff]
      %v4494 = vld [vmem:[#allocation3 + $0x130] sm:$0xff]
      %v4495 = vld [vmem:[#allocation3 + $0x138] sm:$0xff]
      %v4496 = vld [vmem:[#allocation3 + $0x140] sm:$0xff]
      %v4497 = vld [vmem:[#allocation3 + $0x148] sm:$0xff]
      %v4498 = vld [vmem:[#allocation3 + $0x150] sm:$0xff]
      %v4499 = vld [vmem:[#allocation3 + $0x158] sm:$0xff]
      %v4500 = vld [vmem:[#allocation3 + $0x160] sm:$0xff]
      %v4501 = vld [vmem:[#allocation3 + $0x168] sm:$0xff]
      %v4502 = vld [vmem:[#allocation3 + $0x170] sm:$0xff]
      %v4503 = vld [vmem:[#allocation3 + $0x178] sm:$0xff]
      %v4504 = vld [vmem:[#allocation3 + $0x180] sm:$0xff]
      %v4505 = vld [vmem:[#allocation3 + $0x188] sm:$0xff]
      %v4506 = vld [vmem:[#allocation3 + $0x190] sm:$0xff]
      %v4507 = vld [vmem:[#allocation3 + $0x198] sm:$0xff]
      %v4508 = vld [vmem:[#allocation3 + $0x1a0] sm:$0xff]
      %v4509 = vld [vmem:[#allocation3 + $0x1a8] sm:$0xff]
      %v4510 = vld [vmem:[#allocation3 + $0x1b0] sm:$0xff]
      %v4511 = vld [vmem:[#allocation3 + $0x1b8] sm:$0xff]
      %v4512 = vld [vmem:[#allocation3 + $0x1c0] sm:$0xff]
      %v4513 = vld [vmem:[#allocation3 + $0x1c8] sm:$0xff]
      %v4514 = vld [vmem:[#allocation3 + $0x1d0] sm:$0xff]
      %v4515 = vld [vmem:[#allocation3 + $0x1d8] sm:$0xff]
      %v4516 = vld [vmem:[#allocation3 + $0x1e0] sm:$0xff]
      %v4517 = vld [vmem:[#allocation3 + $0x1e8] sm:$0xff]
      %v4518 = vld [vmem:[#allocation3 + $0x1f0] sm:$0xff]
      %v4519 = vld [vmem:[#allocation3 + $0x1f8] sm:$0xff]
      %v4520 = vld [vmem:[#allocation3 + $0x200] sm:$0xff]
      %v4521 = vld [vmem:[#allocation3 + $0x208] sm:$0xff]
      %v4522 = vld [vmem:[#allocation3 + $0x210] sm:$0xff]
      %v4523 = vld [vmem:[#allocation3 + $0x218] sm:$0xff]
      %v4524 = vld [vmem:[#allocation3 + $0x220] sm:$0xff]
      %v4525 = vld [vmem:[#allocation3 + $0x228] sm:$0xff]
      %v4526 = vld [vmem:[#allocation3 + $0x230] sm:$0xff]
      %v4527 = vld [vmem:[#allocation3 + $0x238] sm:$0xff]
      %v4528 = vld [vmem:[#allocation3 + $0x240] sm:$0xff]
      %v4529 = vld [vmem:[#allocation3 + $0x248] sm:$0xff]
      %v4530 = vld [vmem:[#allocation3 + $0x250] sm:$0xff]
      %v4531 = vld [vmem:[#allocation3 + $0x258] sm:$0xff]
      %v4532 = vld [vmem:[#allocation3 + $0x260] sm:$0xff]
      %v4533 = vld [vmem:[#allocation3 + $0x268] sm:$0xff]
      %v4534 = vld [vmem:[#allocation3 + $0x270] sm:$0xff]
      %v4535 = vld [vmem:[#allocation3 + $0x278] sm:$0xff]
      %v4536 = vld [vmem:[#allocation3 + $0x280] sm:$0xff]
      %v4537 = vld [vmem:[#allocation3 + $0x288] sm:$0xff]
      %v4538 = vld [vmem:[#allocation3 + $0x290] sm:$0xff]
      %v4539 = vld [vmem:[#allocation3 + $0x298] sm:$0xff]
      %v4540 = vld [vmem:[#allocation3 + $0x2a0] sm:$0xff]
      %v4541 = vld [vmem:[#allocation3 + $0x2a8] sm:$0xff]
      %v4542 = vld [vmem:[#allocation3 + $0x2b0] sm:$0xff]
      %v4543 = vld [vmem:[#allocation3 + $0x2b8] sm:$0xff]
      %v4544 = vld [vmem:[#allocation3 + $0x2c0] sm:$0xff]
      %v4545 = vld [vmem:[#allocation3 + $0x2c8] sm:$0xff]
      %v4546 = vld [vmem:[#allocation3 + $0x2d0] sm:$0xff]
      %v4547 = vld [vmem:[#allocation3 + $0x2d8] sm:$0xff]
      %v4548 = vld [vmem:[#allocation3 + $0x2e0] sm:$0xff]
      %v4549 = vld [vmem:[#allocation3 + $0x2e8] sm:$0xff]
      %v4550 = vld [vmem:[#allocation3 + $0x2f0] sm:$0xff]
      %v4551 = vld [vmem:[#allocation3 + $0x2f8] sm:$0xff]
      %v4552 = vld [vmem:[#allocation3 + $0x300] sm:$0xff]
      %v4553 = vld [vmem:[#allocation3 + $0x308] sm:$0xff]
      %v4554 = vld [vmem:[#allocation3 + $0x310] sm:$0xff]
      %v4555 = vld [vmem:[#allocation3 + $0x318] sm:$0xff]
      %v4556 = vld [vmem:[#allocation3 + $0x320] sm:$0xff]
      %v4557 = vld [vmem:[#allocation3 + $0x328] sm:$0xff]
      %v4558 = vld [vmem:[#allocation3 + $0x330] sm:$0xff]
      %v4559 = vld [vmem:[#allocation3 + $0x338] sm:$0xff]
      %v4560 = vld [vmem:[#allocation3 + $0x340] sm:$0xff]
      %v4561 = vld [vmem:[#allocation3 + $0x348] sm:$0xff]
      %v4562 = vld [vmem:[#allocation3 + $0x350] sm:$0xff]
      %v4563 = vld [vmem:[#allocation3 + $0x358] sm:$0xff]
      %v4564 = vld [vmem:[#allocation3 + $0x360] sm:$0xff]
      %v4565 = vld [vmem:[#allocation3 + $0x368] sm:$0xff]
      %v4566 = vld [vmem:[#allocation3 + $0x370] sm:$0xff]
      %v4567 = vld [vmem:[#allocation3 + $0x378] sm:$0xff]
      %v4568 = vld [vmem:[#allocation3 + $0x380] sm:$0xff]
      %v4569 = vld [vmem:[#allocation3 + $0x388] sm:$0xff]
      %v4570 = vld [vmem:[#allocation3 + $0x390] sm:$0xff]
      %v4571 = vld [vmem:[#allocation3 + $0x398] sm:$0xff]
      %v4572 = vld [vmem:[#allocation3 + $0x3a0] sm:$0xff]
      %v4573 = vld [vmem:[#allocation3 + $0x3a8] sm:$0xff]
      %v4574 = vld [vmem:[#allocation3 + $0x3b0] sm:$0xff]
      %v4575 = vld [vmem:[#allocation3 + $0x3b8] sm:$0xff]
      %v4576 = vld [vmem:[#allocation3 + $0x3c0] sm:$0xff]
      %v4577 = vld [vmem:[#allocation3 + $0x3c8] sm:$0xff]
      %v4578 = vld [vmem:[#allocation3 + $0x3d0] sm:$0xff]
      %v4579 = vld [vmem:[#allocation3 + $0x3d8] sm:$0xff]
      %v4580 = vld [vmem:[#allocation3 + $0x3e0] sm:$0xff]
      %v4581 = vld [vmem:[#allocation3 + $0x3e8] sm:$0xff]
      %v4582 = vld [vmem:[#allocation3 + $0x3f0] sm:$0xff]
      %v4583 = vld [vmem:[#allocation3 + $0x3f8] sm:$0xff]
      %v4584 = vld [vmem:[#allocation3 + $0x400] sm:$0xff]
      %v4585 = vld [vmem:[#allocation3 + $0x408] sm:$0xff]
      %v4586 = vld [vmem:[#allocation3 + $0x410] sm:$0xff]
      %v4587 = vld [vmem:[#allocation3 + $0x418] sm:$0xff]
      %v4588 = vld [vmem:[#allocation3 + $0x420] sm:$0xff]
      %v4589 = vld [vmem:[#allocation3 + $0x428] sm:$0xff]
      %v4590 = vld [vmem:[#allocation3 + $0x430] sm:$0xff]
      %v4591 = vld [vmem:[#allocation3 + $0x438] sm:$0xff]
      %v4592 = vld [vmem:[#allocation3 + $0x440] sm:$0xff]
      %v4593 = vld [vmem:[#allocation3 + $0x448] sm:$0xff]
      %v4594 = vld [vmem:[#allocation3 + $0x450] sm:$0xff]
      %v4595 = vld [vmem:[#allocation3 + $0x458] sm:$0xff]
      %v4596 = vld [vmem:[#allocation3 + $0x460] sm:$0xff]
      %v4597 = vld [vmem:[#allocation3 + $0x468] sm:$0xff]
      %v4598 = vld [vmem:[#allocation3 + $0x470] sm:$0xff]
      %v4599 = vld [vmem:[#allocation3 + $0x478] sm:$0xff]
      %v4600 = vld [vmem:[%s8] sm:$0xff]
      %v4601 = vld [vmem:[%s8 + $0x8] sm:$0xff]
      %v4602 = vld [vmem:[%s8 + $0x10] sm:$0xff]
      %v4603 = vld [vmem:[%s8 + $0x18] sm:$0xff]
      %v4604 = vld [vmem:[%s8 + $0x20] sm:$0xff]
      %v4605 = vld [vmem:[%s8 + $0x28] sm:$0xff]
      %v4606 = vld [vmem:[%s8 + $0x30] sm:$0xff]
      %v4607 = vld [vmem:[%s8 + $0x38] sm:$0xff]
      %4609 = vset.pattern.permute.xlu0 0
      %4610 = vperm.xlu0 %4609, %v4600
      %v4611 = vpop.permute.xlu0 %4610
      %4614 = vset.pattern.permute.xlu0 0
      %4615 = vperm.xlu0 %4614, %v4601
      %v4616 = vpop.permute.xlu0 %4615
      %4619 = vset.pattern.permute.xlu0 0
      %4620 = vperm.xlu0 %4619, %v4602
      %v4621 = vpop.permute.xlu0 %4620
      %4624 = vset.pattern.permute.xlu0 0
      %4625 = vperm.xlu0 %4624, %v4603
      %v4626 = vpop.permute.xlu0 %4625
      %4629 = vset.pattern.permute.xlu0 0
      %4630 = vperm.xlu0 %4629, %v4604
      %v4631 = vpop.permute.xlu0 %4630
      %4634 = vset.pattern.permute.xlu0 0
      %4635 = vperm.xlu0 %4634, %v4605
      %v4636 = vpop.permute.xlu0 %4635
      %4639 = vset.pattern.permute.xlu0 0
      %4640 = vperm.xlu0 %4639, %v4606
      %v4641 = vpop.permute.xlu0 %4640
      %4644 = vset.pattern.permute.xlu0 0
      %4645 = vperm.xlu0 %4644, %v4607
      %v4646 = vpop.permute.xlu0 %4645
      %v4688 = vunpack.c.l.b16 %v4416
      %v4689 = vunpack.c.h.b16 %v4416
      %v4690 = vunpack.c.l.b16 %v4417
      %v4691 = vunpack.c.h.b16 %v4417
      %v4692 = vunpack.c.l.b16 %v4418
      %v4693 = vunpack.c.h.b16 %v4418
      %v4694 = vunpack.c.l.b16 %v4419
      %v4695 = vunpack.c.h.b16 %v4419
      %v4696 = vunpack.c.l.b16 %v4420
      %v4697 = vunpack.c.l.b16 %v4421
      %v4698 = vunpack.c.h.b16 %v4421
      %v4699 = vunpack.c.l.b16 %v4422
      %v4700 = vunpack.c.h.b16 %v4422
      %v4701 = vunpack.c.l.b16 %v4423
      %v4702 = vunpack.c.h.b16 %v4423
      %v4703 = vunpack.c.l.b16 %v4424
      %v4704 = vunpack.c.h.b16 %v4424
      %v4705 = vunpack.c.l.b16 %v4425
      %v4706 = vunpack.c.l.b16 %v4426
      %v4707 = vunpack.c.h.b16 %v4426
      %v4708 = vunpack.c.l.b16 %v4427
      %v4709 = vunpack.c.h.b16 %v4427
      %v4710 = vunpack.c.l.b16 %v4428
      %v4711 = vunpack.c.h.b16 %v4428
      %v4712 = vunpack.c.l.b16 %v4429
      %v4713 = vunpack.c.h.b16 %v4429
      %v4714 = vunpack.c.l.b16 %v4430
      %v4715 = vunpack.c.l.b16 %v4431
      %v4716 = vunpack.c.h.b16 %v4431
      %v4717 = vunpack.c.l.b16 %v4432
      %v4718 = vunpack.c.h.b16 %v4432
      %v4719 = vunpack.c.l.b16 %v4433
      %v4720 = vunpack.c.h.b16 %v4433
      %v4721 = vunpack.c.l.b16 %v4434
      %v4722 = vunpack.c.h.b16 %v4434
      %v4723 = vunpack.c.l.b16 %v4435
      %v4724 = vunpack.c.l.b16 %v4436
      %v4725 = vunpack.c.h.b16 %v4436
      %v4726 = vunpack.c.l.b16 %v4437
      %v4727 = vunpack.c.h.b16 %v4437
      %v4728 = vunpack.c.l.b16 %v4438
      %v4729 = vunpack.c.h.b16 %v4438
      %v4730 = vunpack.c.l.b16 %v4439
      %v4731 = vunpack.c.h.b16 %v4439
      %v4732 = vunpack.c.l.b16 %v4440
      %v4733 = vunpack.c.l.b16 %v4441
      %v4734 = vunpack.c.h.b16 %v4441
      %v4735 = vunpack.c.l.b16 %v4442
      %v4736 = vunpack.c.h.b16 %v4442
      %v4737 = vunpack.c.l.b16 %v4443
      %v4738 = vunpack.c.h.b16 %v4443
      %v4739 = vunpack.c.l.b16 %v4444
      %v4740 = vunpack.c.h.b16 %v4444
      %v4741 = vunpack.c.l.b16 %v4445
      %v4742 = vunpack.c.l.b16 %v4446
      %v4743 = vunpack.c.h.b16 %v4446
      %v4744 = vunpack.c.l.b16 %v4447
      %v4745 = vunpack.c.h.b16 %v4447
      %v4746 = vunpack.c.l.b16 %v4448
      %v4747 = vunpack.c.h.b16 %v4448
      %v4748 = vunpack.c.l.b16 %v4449
      %v4749 = vunpack.c.h.b16 %v4449
      %v4750 = vunpack.c.l.b16 %v4450
      %v4751 = vunpack.c.l.b16 %v4451
      %v4752 = vunpack.c.h.b16 %v4451
      %v4753 = vunpack.c.l.b16 %v4452
      %v4754 = vunpack.c.h.b16 %v4452
      %v4755 = vunpack.c.l.b16 %v4453
      %v4756 = vunpack.c.h.b16 %v4453
      %v4757 = vunpack.c.l.b16 %v4454
      %v4758 = vunpack.c.h.b16 %v4454
      %v4759 = vunpack.c.l.b16 %v4455
      %v4760 = vpack.c.b16 %v4697, %v4688
      %v4761 = vpack.c.b16 %v4698, %v4689
      %v4762 = vpack.c.b16 %v4699, %v4690
      %v4763 = vpack.c.b16 %v4700, %v4691
      %v4764 = vpack.c.b16 %v4701, %v4692
      %v4765 = vpack.c.b16 %v4702, %v4693
      %v4766 = vpack.c.b16 %v4703, %v4694
      %v4767 = vpack.c.b16 %v4704, %v4695
      %v4768 = vpack.c.b16 %v4705, %v4696
      %v4769 = vpack.c.b16 %v4715, %v4706
      %v4770 = vpack.c.b16 %v4716, %v4707
      %v4771 = vpack.c.b16 %v4717, %v4708
      %v4772 = vpack.c.b16 %v4718, %v4709
      %v4773 = vpack.c.b16 %v4719, %v4710
      %v4774 = vpack.c.b16 %v4720, %v4711
      %v4775 = vpack.c.b16 %v4721, %v4712
      %v4776 = vpack.c.b16 %v4722, %v4713
      %v4777 = vpack.c.b16 %v4723, %v4714
      %v4778 = vpack.c.b16 %v4733, %v4724
      %v4779 = vpack.c.b16 %v4734, %v4725
      %v4780 = vpack.c.b16 %v4735, %v4726
      %v4781 = vpack.c.b16 %v4736, %v4727
      %v4782 = vpack.c.b16 %v4737, %v4728
      %v4783 = vpack.c.b16 %v4738, %v4729
      %v4784 = vpack.c.b16 %v4739, %v4730
      %v4785 = vpack.c.b16 %v4740, %v4731
      %v4786 = vpack.c.b16 %v4741, %v4732
      %v4787 = vpack.c.b16 %v4751, %v4742
      %v4788 = vpack.c.b16 %v4752, %v4743
      %v4789 = vpack.c.b16 %v4753, %v4744
      %v4790 = vpack.c.b16 %v4754, %v4745
      %v4791 = vpack.c.b16 %v4755, %v4746
      %v4792 = vpack.c.b16 %v4756, %v4747
      %v4793 = vpack.c.b16 %v4757, %v4748
      %v4794 = vpack.c.b16 %v4758, %v4749
      %v4795 = vpack.c.b16 %v4759, %v4750
      %4832 = vmatprep.subr.bf16.mxu0 %v4457
      %4833 = vmatpush1.bf16.msra.mxu0 %v4456
      %4834 = vmatprep.subr.bf16.mxu0 %v4459
      %4835 = vmatpush1.bf16.msra.mxu0 %v4458
      %4836 = vmatprep.subr.bf16.mxu0 %v4461
      %4837 = vmatpush1.bf16.msra.mxu0 %v4460
      %4838 = vmatprep.subr.bf16.mxu0 %v4463
      %4839 = vmatpush1.bf16.msra.mxu0 %v4462
      %4840 = vmatprep.subr.bf16.mxu0 %v4465
      %4841 = vmatpush1.bf16.msra.mxu0 %v4464
      %4842 = vmatprep.subr.bf16.mxu0 %v4467
      %4843 = vmatpush1.bf16.msra.mxu0 %v4466
      %4844 = vmatprep.subr.bf16.mxu0 %v4469
      %4845 = vmatpush1.bf16.msra.mxu0 %v4468
      %4846 = vmatprep.subr.bf16.mxu0 %v4471
      %4847 = vmatpush1.bf16.msra.mxu0 %v4470
      %4848 = vmatprep.subr.bf16.mxu0 %v4473
      %4849 = vmatpush1.bf16.msra.mxu0 %v4472
      %4850 = vmatprep.subr.bf16.mxu0 %v4475
      %4851 = vmatpush1.bf16.msra.mxu0 %v4474
      %4852 = vmatprep.subr.bf16.mxu0 %v4477
      %4853 = vmatpush1.bf16.msra.mxu0 %v4476
      %4854 = vmatprep.subr.bf16.mxu0 %v4479
      %4855 = vmatpush1.bf16.msra.mxu0 %v4478
      %4856 = vmatprep.subr.bf16.mxu0 %v4481
      %4857 = vmatpush1.bf16.msra.mxu0 %v4480
      %4858 = vmatprep.subr.bf16.mxu0 %v4483
      %4859 = vmatpush1.bf16.msra.mxu0 %v4482
      %4860 = vmatprep.subr.bf16.mxu0 %v4485
      %4861 = vmatpush1.bf16.msra.mxu0 %v4484
      %4862 = vmatprep.subr.bf16.mxu0 %v4487
      %4863 = vmatpush1.bf16.msra.mxu0 %v4486
      %4864 = vmatprep.mubr.bf16.mxu0 %v4761
      %4865 = vmatmul.mubr.bf16.gmra.mrb[0].mxu0 %v4760
      %v4866 = vpop.f32.mrb[0].mxu0
      %v4867 = vadd.f32 %v4611, %v4866
      %v4868 = vpop.f32.mrb[0].mxu0
      %v4869 = vadd.f32 %v4611, %v4868
      %v4870 = vpop.f32.mrb[0].mxu0
      %v4871 = vadd.f32 %v4616, %v4870
      %v4872 = vpop.f32.mrb[0].mxu0
      %v4873 = vadd.f32 %v4616, %v4872
      %4874 = vmatprep.mubr.bf16.mxu0 %v4770
      %4875 = vmatmul.mubr.bf16.gmra.mrb[0].mxu0 %v4769
      %v4876 = vpop.f32.mrb[0].mxu0
      %v4877 = vadd.f32 %v4621, %v4876
      %v4878 = vpop.f32.mrb[0].mxu0
      %v4879 = vadd.f32 %v4621, %v4878
      %v4880 = vpop.f32.mrb[0].mxu0
      %v4881 = vadd.f32 %v4626, %v4880
      %v4882 = vpop.f32.mrb[0].mxu0
      %v4883 = vadd.f32 %v4626, %v4882
      %4884 = vmatprep.mubr.bf16.mxu0 %v4779
      %4885 = vmatmul.mubr.bf16.gmra.mrb[0].mxu0 %v4778
      %v4886 = vpop.f32.mrb[0].mxu0
      %v4887 = vadd.f32 %v4631, %v4886
      %v4888 = vpop.f32.mrb[0].mxu0
      %v4889 = vadd.f32 %v4631, %v4888
      %v4890 = vpop.f32.mrb[0].mxu0
      %v4891 = vadd.f32 %v4636, %v4890
      %v4892 = vpop.f32.mrb[0].mxu0
      %v4893 = vadd.f32 %v4636, %v4892
      %4894 = vmatprep.mubr.bf16.mxu0 %v4788
      %4895 = vmatmul.mubr.bf16.gmra.mrb[0].mxu0 %v4787
      %v4896 = vpop.f32.mrb[0].mxu0
      %v4897 = vadd.f32 %v4641, %v4896
      %v4898 = vpop.f32.mrb[0].mxu0
      %v4899 = vadd.f32 %v4641, %v4898
      %v4900 = vpop.f32.mrb[0].mxu0
      %v4901 = vadd.f32 %v4646, %v4900
      %v4902 = vpop.f32.mrb[0].mxu0
      %v4903 = vadd.f32 %v4646, %v4902
      %4904 = vdwg.mxu0
      %4905 = vmatprep.subr.bf16.mxu0 %v4489
      %4906 = vmatpush1.bf16.msra.mxu0 %v4488
      %4907 = vmatprep.subr.bf16.mxu0 %v4491
      %4908 = vmatpush1.bf16.msra.mxu0 %v4490
      %4909 = vmatprep.subr.bf16.mxu0 %v4493
      %4910 = vmatpush1.bf16.msra.mxu0 %v4492
      %4911 = vmatprep.subr.bf16.mxu0 %v4495
      %4912 = vmatpush1.bf16.msra.mxu0 %v4494
      %4913 = vmatprep.subr.bf16.mxu0 %v4497
      %4914 = vmatpush1.bf16.msra.mxu0 %v4496
      %4915 = vmatprep.subr.bf16.mxu0 %v4499
      %4916 = vmatpush1.bf16.msra.mxu0 %v4498
      %4917 = vmatprep.subr.bf16.mxu0 %v4501
      %4918 = vmatpush1.bf16.msra.mxu0 %v4500
      %4919 = vmatprep.subr.bf16.mxu0 %v4503
      %4920 = vmatpush1.bf16.msra.mxu0 %v4502
      %4921 = vmatprep.subr.bf16.mxu0 %v4505
      %4922 = vmatpush1.bf16.msra.mxu0 %v4504
      %4923 = vmatprep.subr.bf16.mxu0 %v4507
      %4924 = vmatpush1.bf16.msra.mxu0 %v4506
      %4925 = vmatprep.subr.bf16.mxu0 %v4509
      %4926 = vmatpush1.bf16.msra.mxu0 %v4508
      %4927 = vmatprep.subr.bf16.mxu0 %v4511
      %4928 = vmatpush1.bf16.msra.mxu0 %v4510
      %4929 = vmatprep.subr.bf16.mxu0 %v4513
      %4930 = vmatpush1.bf16.msra.mxu0 %v4512
      %4931 = vmatprep.subr.bf16.mxu0 %v4515
      %4932 = vmatpush1.bf16.msra.mxu0 %v4514
      %4933 = vmatprep.subr.bf16.mxu0 %v4517
      %4934 = vmatpush1.bf16.msra.mxu0 %v4516
      %4935 = vmatprep.subr.bf16.mxu0 %v4519
      %4936 = vmatpush1.bf16.msra.mxu0 %v4518
      %4937 = vmatprep.mubr.bf16.mxu0 %v4763
      %4938 = vmatmul.mubr.bf16.gmra.mrb[0].mxu0 %v4762
      %v4939 = vpop.f32.mrb[0].mxu0
      %v4940 = vadd.f32 %v4867, %v4939
      %v4941 = vpop.f32.mrb[0].mxu0
      %v4942 = vadd.f32 %v4869, %v4941
      %v4943 = vpop.f32.mrb[0].mxu0
      %v4944 = vadd.f32 %v4871, %v4943
      %v4945 = vpop.f32.mrb[0].mxu0
      %v4946 = vadd.f32 %v4873, %v4945
      %4947 = vmatprep.mubr.bf16.mxu0 %v4772
      %4948 = vmatmul.mubr.bf16.gmra.mrb[0].mxu0 %v4771
      %v4949 = vpop.f32.mrb[0].mxu0
      %v4950 = vadd.f32 %v4877, %v4949
      %v4951 = vpop.f32.mrb[0].mxu0
      %v4952 = vadd.f32 %v4879, %v4951
      %v4953 = vpop.f32.mrb[0].mxu0
      %v4954 = vadd.f32 %v4881, %v4953
      %v4955 = vpop.f32.mrb[0].mxu0
      %v4956 = vadd.f32 %v4883, %v4955
      %4957 = vmatprep.mubr.bf16.mxu0 %v4781
      %4958 = vmatmul.mubr.bf16.gmra.mrb[0].mxu0 %v4780
      %v4959 = vpop.f32.mrb[0].mxu0
      %v4960 = vadd.f32 %v4887, %v4959
      %v4961 = vpop.f32.mrb[0].mxu0
      %v4962 = vadd.f32 %v4889, %v4961
      %v4963 = vpop.f32.mrb[0].mxu0
      %v4964 = vadd.f32 %v4891, %v4963
      %v4965 = vpop.f32.mrb[0].mxu0
      %v4966 = vadd.f32 %v4893, %v4965
      %4967 = vmatprep.mubr.bf16.mxu0 %v4790
      %4968 = vmatmul.mubr.bf16.gmra.mrb[0].mxu0 %v4789
      %v4969 = vpop.f32.mrb[0].mxu0
      %v4970 = vadd.f32 %v4897, %v4969
      %v4971 = vpop.f32.mrb[0].mxu0
      %v4972 = vadd.f32 %v4899, %v4971
      %v4973 = vpop.f32.mrb[0].mxu0
      %v4974 = vadd.f32 %v4901, %v4973
      %v4975 = vpop.f32.mrb[0].mxu0
      %v4976 = vadd.f32 %v4903, %v4975
      %4977 = vdwg.mxu0
      %4978 = vmatprep.subr.bf16.mxu0 %v4521
      %4979 = vmatpush1.bf16.msra.mxu0 %v4520
      %4980 = vmatprep.subr.bf16.mxu0 %v4523
      %4981 = vmatpush1.bf16.msra.mxu0 %v4522
      %4982 = vmatprep.subr.bf16.mxu0 %v4525
      %4983 = vmatpush1.bf16.msra.mxu0 %v4524
      %4984 = vmatprep.subr.bf16.mxu0 %v4527
      %4985 = vmatpush1.bf16.msra.mxu0 %v4526
      %4986 = vmatprep.subr.bf16.mxu0 %v4529
      %4987 = vmatpush1.bf16.msra.mxu0 %v4528
      %4988 = vmatprep.subr.bf16.mxu0 %v4531
      %4989 = vmatpush1.bf16.msra.mxu0 %v4530
      %4990 = vmatprep.subr.bf16.mxu0 %v4533
      %4991 = vmatpush1.bf16.msra.mxu0 %v4532
      %4992 = vmatprep.subr.bf16.mxu0 %v4535
      %4993 = vmatpush1.bf16.msra.mxu0 %v4534
      %4994 = vmatprep.subr.bf16.mxu0 %v4537
      %4995 = vmatpush1.bf16.msra.mxu0 %v4536
      %4996 = vmatprep.subr.bf16.mxu0 %v4539
      %4997 = vmatpush1.bf16.msra.mxu0 %v4538
      %4998 = vmatprep.subr.bf16.mxu0 %v4541
      %4999 = vmatpush1.bf16.msra.mxu0 %v4540
      %5000 = vmatprep.subr.bf16.mxu0 %v4543
      %5001 = vmatpush1.bf16.msra.mxu0 %v4542
      %5002 = vmatprep.subr.bf16.mxu0 %v4545
      %5003 = vmatpush1.bf16.msra.mxu0 %v4544
      %5004 = vmatprep.subr.bf16.mxu0 %v4547
      %5005 = vmatpush1.bf16.msra.mxu0 %v4546
      %5006 = vmatprep.subr.bf16.mxu0 %v4549
      %5007 = vmatpush1.bf16.msra.mxu0 %v4548
      %5008 = vmatprep.subr.bf16.mxu0 %v4551
      %5009 = vmatpush1.bf16.msra.mxu0 %v4550
      %5010 = vmatprep.mubr.bf16.mxu0 %v4765
      %5011 = vmatmul.mubr.bf16.gmra.mrb[0].mxu0 %v4764
      %v5012 = vpop.f32.mrb[0].mxu0
      %v5013 = vadd.f32 %v4940, %v5012
      %v5014 = vpop.f32.mrb[0].mxu0
      %v5015 = vadd.f32 %v4942, %v5014
      %v5016 = vpop.f32.mrb[0].mxu0
      %v5017 = vadd.f32 %v4944, %v5016
      %v5018 = vpop.f32.mrb[0].mxu0
      %v5019 = vadd.f32 %v4946, %v5018
      %5020 = vmatprep.mubr.bf16.mxu0 %v4774
      %5021 = vmatmul.mubr.bf16.gmra.mrb[0].mxu0 %v4773
      %v5022 = vpop.f32.mrb[0].mxu0
      %v5023 = vadd.f32 %v4950, %v5022
      %v5024 = vpop.f32.mrb[0].mxu0
      %v5025 = vadd.f32 %v4952, %v5024
      %v5026 = vpop.f32.mrb[0].mxu0
      %v5027 = vadd.f32 %v4954, %v5026
      %v5028 = vpop.f32.mrb[0].mxu0
      %v5029 = vadd.f32 %v4956, %v5028
      %5030 = vmatprep.mubr.bf16.mxu0 %v4783
      %5031 = vmatmul.mubr.bf16.gmra.mrb[0].mxu0 %v4782
      %v5032 = vpop.f32.mrb[0].mxu0
      %v5033 = vadd.f32 %v4960, %v5032
      %v5034 = vpop.f32.mrb[0].mxu0
      %v5035 = vadd.f32 %v4962, %v5034
      %v5036 = vpop.f32.mrb[0].mxu0
      %v5037 = vadd.f32 %v4964, %v5036
      %v5038 = vpop.f32.mrb[0].mxu0
      %v5039 = vadd.f32 %v4966, %v5038
      %5040 = vmatprep.mubr.bf16.mxu0 %v4792
      %5041 = vmatmul.mubr.bf16.gmra.mrb[0].mxu0 %v4791
      %v5042 = vpop.f32.mrb[0].mxu0
      %v5043 = vadd.f32 %v4970, %v5042
      %v5044 = vpop.f32.mrb[0].mxu0
      %v5045 = vadd.f32 %v4972, %v5044
      %v5046 = vpop.f32.mrb[0].mxu0
      %v5047 = vadd.f32 %v4974, %v5046
      %v5048 = vpop.f32.mrb[0].mxu0
      %v5049 = vadd.f32 %v4976, %v5048
      %5050 = vdwg.mxu0
      %5051 = vmatprep.subr.bf16.mxu0 %v4553
      %5052 = vmatpush1.bf16.msra.mxu0 %v4552
      %5053 = vmatprep.subr.bf16.mxu0 %v4555
      %5054 = vmatpush1.bf16.msra.mxu0 %v4554
      %5055 = vmatprep.subr.bf16.mxu0 %v4557
      %5056 = vmatpush1.bf16.msra.mxu0 %v4556
      %5057 = vmatprep.subr.bf16.mxu0 %v4559
      %5058 = vmatpush1.bf16.msra.mxu0 %v4558
      %5059 = vmatprep.subr.bf16.mxu0 %v4561
      %5060 = vmatpush1.bf16.msra.mxu0 %v4560
      %5061 = vmatprep.subr.bf16.mxu0 %v4563
      %5062 = vmatpush1.bf16.msra.mxu0 %v4562
      %5063 = vmatprep.subr.bf16.mxu0 %v4565
      %5064 = vmatpush1.bf16.msra.mxu0 %v4564
      %5065 = vmatprep.subr.bf16.mxu0 %v4567
      %5066 = vmatpush1.bf16.msra.mxu0 %v4566
      %5067 = vmatprep.subr.bf16.mxu0 %v4569
      %5068 = vmatpush1.bf16.msra.mxu0 %v4568
      %5069 = vmatprep.subr.bf16.mxu0 %v4571
      %5070 = vmatpush1.bf16.msra.mxu0 %v4570
      %5071 = vmatprep.subr.bf16.mxu0 %v4573
      %5072 = vmatpush1.bf16.msra.mxu0 %v4572
      %5073 = vmatprep.subr.bf16.mxu0 %v4575
      %5074 = vmatpush1.bf16.msra.mxu0 %v4574
      %5075 = vmatprep.subr.bf16.mxu0 %v4577
      %5076 = vmatpush1.bf16.msra.mxu0 %v4576
      %5077 = vmatprep.subr.bf16.mxu0 %v4579
      %5078 = vmatpush1.bf16.msra.mxu0 %v4578
      %5079 = vmatprep.subr.bf16.mxu0 %v4581
      %5080 = vmatpush1.bf16.msra.mxu0 %v4580
      %5081 = vmatprep.subr.bf16.mxu0 %v4583
      %5082 = vmatpush1.bf16.msra.mxu0 %v4582
      %5083 = vmatprep.mubr.bf16.mxu0 %v4767
      %5084 = vmatmul.mubr.bf16.gmra.mrb[0].mxu0 %v4766
      %v5085 = vpop.f32.mrb[0].mxu0
      %v5086 = vadd.f32 %v5013, %v5085
      %v5087 = vpop.f32.mrb[0].mxu0
      %v5088 = vadd.f32 %v5015, %v5087
      %v5089 = vpop.f32.mrb[0].mxu0
      %v5090 = vadd.f32 %v5017, %v5089
      %v5091 = vpop.f32.mrb[0].mxu0
      %v5092 = vadd.f32 %v5019, %v5091
      %5093 = vmatprep.mubr.bf16.mxu0 %v4776
      %5094 = vmatmul.mubr.bf16.gmra.mrb[0].mxu0 %v4775
      %v5095 = vpop.f32.mrb[0].mxu0
      %v5096 = vadd.f32 %v5023, %v5095
      %v5097 = vpop.f32.mrb[0].mxu0
      %v5098 = vadd.f32 %v5025, %v5097
      %v5099 = vpop.f32.mrb[0].mxu0
      %v5100 = vadd.f32 %v5027, %v5099
      %v5101 = vpop.f32.mrb[0].mxu0
      %v5102 = vadd.f32 %v5029, %v5101
      %5103 = vmatprep.mubr.bf16.mxu0 %v4785
      %5104 = vmatmul.mubr.bf16.gmra.mrb[0].mxu0 %v4784
      %v5105 = vpop.f32.mrb[0].mxu0
      %v5106 = vadd.f32 %v5033, %v5105
      %v5107 = vpop.f32.mrb[0].mxu0
      %v5108 = vadd.f32 %v5035, %v5107
      %v5109 = vpop.f32.mrb[0].mxu0
      %v5110 = vadd.f32 %v5037, %v5109
      %v5111 = vpop.f32.mrb[0].mxu0
      %v5112 = vadd.f32 %v5039, %v5111
      %5113 = vmatprep.mubr.bf16.mxu0 %v4794
      %5114 = vmatmul.mubr.bf16.gmra.mrb[0].mxu0 %v4793
      %v5115 = vpop.f32.mrb[0].mxu0
      %v5116 = vadd.f32 %v5043, %v5115
      %v5117 = vpop.f32.mrb[0].mxu0
      %v5118 = vadd.f32 %v5045, %v5117
      %v5119 = vpop.f32.mrb[0].mxu0
      %v5120 = vadd.f32 %v5047, %v5119
      %v5121 = vpop.f32.mrb[0].mxu0
      %v5122 = vadd.f32 %v5049, %v5121
      %5123 = vdwg.mxu0
      %5124 = vmatprep.subr.bf16.mxu0 %v4585
      %5125 = vmatpush1.bf16.msra.mxu0 %v4584
      %5126 = vmatprep.subr.bf16.mxu0 %v4587
      %5127 = vmatpush1.bf16.msra.mxu0 %v4586
      %5128 = vmatprep.subr.bf16.mxu0 %v4589
      %5129 = vmatpush1.bf16.msra.mxu0 %v4588
      %5130 = vmatprep.subr.bf16.mxu0 %v4591
      %5131 = vmatpush1.bf16.msra.mxu0 %v4590
      %5132 = vmatprep.subr.bf16.mxu0 %v4593
      %5133 = vmatpush1.bf16.msra.mxu0 %v4592
      %5134 = vmatprep.subr.bf16.mxu0 %v4595
      %5135 = vmatpush1.bf16.msra.mxu0 %v4594
      %5136 = vmatprep.subr.bf16.mxu0 %v4597
      %5137 = vmatpush1.bf16.msra.mxu0 %v4596
      %5138 = vmatprep.subr.bf16.mxu0 %v4599
      %5139 = vmatpush1.bf16.msra.mxu0 %v4598
      %5140 = vmatprep.subr.bf16.mxu0 0
      %5141 = vmatpush1.bf16.msra.mxu0 0
      %5142 = vmatprep.subr.bf16.mxu0 0
      %5143 = vmatpush1.bf16.msra.mxu0 0
      %5144 = vmatprep.subr.bf16.mxu0 0
      %5145 = vmatpush1.bf16.msra.mxu0 0
      %5146 = vmatprep.subr.bf16.mxu0 0
      %5147 = vmatpush1.bf16.msra.mxu0 0
      %5148 = vmatprep.subr.bf16.mxu0 0
      %5149 = vmatpush1.bf16.msra.mxu0 0
      %5150 = vmatprep.subr.bf16.mxu0 0
      %5151 = vmatpush1.bf16.msra.mxu0 0
      %5152 = vmatprep.subr.bf16.mxu0 0
      %5153 = vmatpush1.bf16.msra.mxu0 0
      %5154 = vmatprep.subr.bf16.mxu0 0
      %5155 = vmatpush1.bf16.msra.mxu0 0
      %5156 = vmatprep.mubr.bf16.mxu0 0
      %5157 = vmatmul.mubr.bf16.gmra.mrb[0].mxu0 %v4768
      %v5158 = vpop.f32.mrb[0].mxu0
      %v5159 = vadd.f32 %v5086, %v5158
      %v5160 = vpop.f32.mrb[0].mxu0
      %v5161 = vadd.f32 %v5088, %v5160
      %v5162 = vpop.f32.mrb[0].mxu0
      %v5163 = vadd.f32 %v5090, %v5162
      %v5164 = vpop.f32.mrb[0].mxu0
      %v5165 = vadd.f32 %v5092, %v5164
      %5166 = vmatprep.mubr.bf16.mxu0 0
      %5167 = vmatmul.mubr.bf16.gmra.mrb[0].mxu0 %v4777
      %v5168 = vpop.f32.mrb[0].mxu0
      %v5169 = vadd.f32 %v5096, %v5168
      %v5170 = vpop.f32.mrb[0].mxu0
      %v5171 = vadd.f32 %v5098, %v5170
      %v5172 = vpop.f32.mrb[0].mxu0
      %v5173 = vadd.f32 %v5100, %v5172
      %v5174 = vpop.f32.mrb[0].mxu0
      %v5175 = vadd.f32 %v5102, %v5174
      %5176 = vmatprep.mubr.bf16.mxu0 0
      %5177 = vmatmul.mubr.bf16.gmra.mrb[0].mxu0 %v4786
      %v5178 = vpop.f32.mrb[0].mxu0
      %v5179 = vadd.f32 %v5106, %v5178
      %v5180 = vpop.f32.mrb[0].mxu0
      %v5181 = vadd.f32 %v5108, %v5180
      %v5182 = vpop.f32.mrb[0].mxu0
      %v5183 = vadd.f32 %v5110, %v5182
      %v5184 = vpop.f32.mrb[0].mxu0
      %v5185 = vadd.f32 %v5112, %v5184
      %5186 = vmatprep.mubr.bf16.mxu0 0
      %5187 = vmatmul.mubr.bf16.gmra.mrb[0].mxu0 %v4795
      %v5188 = vpop.f32.mrb[0].mxu0
      %v5189 = vadd.f32 %v5116, %v5188
      %v5190 = vpop.f32.mrb[0].mxu0
      %v5191 = vadd.f32 %v5118, %v5190
      %v5192 = vpop.f32.mrb[0].mxu0
      %v5193 = vadd.f32 %v5120, %v5192
      %v5194 = vpop.f32.mrb[0].mxu0
      %v5195 = vadd.f32 %v5122, %v5194
      %5196 = vdwg.mxu0
      %v5197 = vmax.f32 %v5159, 0.0
      %v5198 = vmax.f32 %v5161, 0.0
      %v5199 = vmax.f32 %v5163, 0.0
      %v5200 = vmax.f32 %v5165, 0.0
      %v5201 = vmax.f32 %v5169, 0.0
      %v5202 = vmax.f32 %v5171, 0.0
      %v5203 = vmax.f32 %v5173, 0.0
      %v5204 = vmax.f32 %v5175, 0.0
      %v5205 = vmax.f32 %v5179, 0.0
      %v5206 = vmax.f32 %v5181, 0.0
      %v5207 = vmax.f32 %v5183, 0.0
      %v5208 = vmax.f32 %v5185, 0.0
      %v5209 = vmax.f32 %v5189, 0.0
      %v5210 = vmax.f32 %v5191, 0.0
      %v5211 = vmax.f32 %v5193, 0.0
      %v5212 = vmax.f32 %v5195, 0.0
      %v5213 = vpack.c.bf16 %v5199, %v5197
      %v5214 = vpack.c.bf16 %v5200, %v5198
      %v5215 = vpack.c.bf16 %v5203, %v5201
      %v5216 = vpack.c.bf16 %v5204, %v5202
      %v5217 = vpack.c.bf16 %v5207, %v5205
      %v5218 = vpack.c.bf16 %v5208, %v5206
      %v5219 = vpack.c.bf16 %v5211, %v5209
      %v5220 = vpack.c.bf16 %v5212, %v5210
      %5221 = vst [vmem:[#allocation2 + $0x8] sm:$0xff] %v5213
      %5222 = vst [vmem:[#allocation2 + $0x10] sm:$0xff] %v5214
      %5223 = vst [vmem:[#allocation2 + $0x28] sm:$0xff] %v5215
      %5224 = vst [vmem:[#allocation2 + $0x30] sm:$0xff] %v5216
      %5225 = vst [vmem:[#allocation2 + $0x48] sm:$0xff] %v5217
      %5226 = vst [vmem:[#allocation2 + $0x50] sm:$0xff] %v5218
      %5227 = vst [vmem:[#allocation2 + $0x68] sm:$0xff] %v5219
      %5228 = vst [vmem:[#allocation2 + $0x70] sm:$0xff] %v5220
      %v5229 = vld [vmem:[#allocation2] sm:$0xff]
      %v5230 = vld [vmem:[#allocation2 + $0x8] sm:$0xff]
      %v5231 = vld [vmem:[#allocation2 + $0x10] sm:$0xff]
      %v5232 = vld [vmem:[#allocation2 + $0x20] sm:$0xff]
      %v5233 = vld [vmem:[#allocation2 + $0x28] sm:$0xff]
      %v5234 = vld [vmem:[#allocation2 + $0x30] sm:$0xff]
      %v5235 = vld [vmem:[#allocation2 + $0x40] sm:$0xff]
      %v5236 = vld [vmem:[#allocation2 + $0x48] sm:$0xff]
      %v5237 = vld [vmem:[#allocation2 + $0x50] sm:$0xff]
      %v5238 = vld [vmem:[#allocation2 + $0x60] sm:$0xff]
      %v5239 = vld [vmem:[#allocation2 + $0x68] sm:$0xff]
      %v5240 = vld [vmem:[#allocation2 + $0x70] sm:$0xff]
      %v5241 = vmul.bf16 %v5229, %v537
      %v5242 = vmul.bf16 %v5230, %v541
      %v5243 = vmul.bf16 %v5231, %v539
      %v5244 = vmul.bf16 %v5232, %v537
      %v5245 = vmul.bf16 %v5233, %v541
      %v5246 = vmul.bf16 %v5234, %v539
      %v5247 = vmul.bf16 %v5235, %v537
      %v5248 = vmul.bf16 %v5236, %v541
      %v5249 = vmul.bf16 %v5237, %v539
      %v5250 = vmul.bf16 %v5238, %v537
      %v5251 = vmul.bf16 %v5239, %v541
      %v5252 = vmul.bf16 %v5240, %v539
      %5265 = vrot.lane.b32.xlu0 %v5241, 17
      %v5266 = vpop.permute.xlu0 %5265
      %5267 = vrot.lane.b32.xlu0 %v5242, 17
      %v5268 = vpop.permute.xlu0 %5267
      %5269 = vrot.lane.b32.xlu0 %v5243, 17
      %v5270 = vpop.permute.xlu0 %5269
      %5271 = vrot.lane.b32.xlu0 %v5244, 17
      %v5272 = vpop.permute.xlu0 %5271
      %5273 = vrot.lane.b32.xlu0 %v5245, 17
      %v5274 = vpop.permute.xlu0 %5273
      %5275 = vrot.lane.b32.xlu0 %v5246, 17
      %v5276 = vpop.permute.xlu0 %5275
      %5277 = vrot.lane.b32.xlu0 %v5247, 17
      %v5278 = vpop.permute.xlu0 %5277
      %5279 = vrot.lane.b32.xlu0 %v5248, 17
      %v5280 = vpop.permute.xlu0 %5279
      %5281 = vrot.lane.b32.xlu0 %v5249, 17
      %v5282 = vpop.permute.xlu0 %5281
      %5283 = vrot.lane.b32.xlu0 %v5250, 17
      %v5284 = vpop.permute.xlu0 %5283
      %5285 = vrot.lane.b32.xlu0 %v5251, 17
      %v5286 = vpop.permute.xlu0 %5285
      %5287 = vrot.lane.b32.xlu0 %v5252, 17
      %v5288 = vpop.permute.xlu0 %5287
      %v5289 = vsel %vm557, %v5266, %v5268
      %v5290 = vsel %vm557, %v5268, %v5270
      %v5291 = vsel %vm557, %v5272, %v5274
      %v5292 = vsel %vm557, %v5274, %v5276
      %v5293 = vsel %vm557, %v5278, %v5280
      %v5294 = vsel %vm557, %v5280, %v5282
      %v5295 = vsel %vm557, %v5284, %v5286
      %v5296 = vsel %vm557, %v5286, %v5288
      %5305 = vst [vmem:[#allocation3] sm:$0xff] %v5289
      %5306 = vst [vmem:[#allocation3 + $0x8] sm:$0xff] %v5290
      %5307 = vst [vmem:[#allocation3 + $0x10] sm:$0xff] %v5291
      %5308 = vst [vmem:[#allocation3 + $0x18] sm:$0xff] %v5292
      %5309 = vst [vmem:[#allocation3 + $0x20] sm:$0xff] %v5293
      %5310 = vst [vmem:[#allocation3 + $0x28] sm:$0xff] %v5294
      %5311 = vst [vmem:[#allocation3 + $0x30] sm:$0xff] %v5295
      %5312 = vst [vmem:[#allocation3 + $0x38] sm:$0xff] %v5296
      %v5313 = vld [vmem:[#allocation2] sm:$0xff]
      %v5314 = vld [vmem:[#allocation2 + $0x8] sm:$0xff]
      %v5315 = vld [vmem:[#allocation2 + $0x10] sm:$0xff]
      %v5316 = vld [vmem:[#allocation2 + $0x20] sm:$0xff]
      %v5317 = vld [vmem:[#allocation2 + $0x28] sm:$0xff]
      %v5318 = vld [vmem:[#allocation2 + $0x30] sm:$0xff]
      %v5319 = vld [vmem:[#allocation2 + $0x40] sm:$0xff]
      %v5320 = vld [vmem:[#allocation2 + $0x48] sm:$0xff]
      %v5321 = vld [vmem:[#allocation2 + $0x50] sm:$0xff]
      %v5322 = vld [vmem:[#allocation2 + $0x60] sm:$0xff]
      %v5323 = vld [vmem:[#allocation2 + $0x68] sm:$0xff]
      %v5324 = vld [vmem:[#allocation2 + $0x70] sm:$0xff]
      %5337 = vrot.lane.b32.xlu0 %v5313, 16
      %v5338 = vpop.permute.xlu0 %5337
      %5339 = vrot.lane.b32.xlu0 %v5314, 16
      %v5340 = vpop.permute.xlu0 %5339
      %5341 = vrot.lane.b32.xlu0 %v5315, 16
      %v5342 = vpop.permute.xlu0 %5341
      %5343 = vrot.lane.b32.xlu0 %v5316, 16
      %v5344 = vpop.permute.xlu0 %5343
      %5345 = vrot.lane.b32.xlu0 %v5317, 16
      %v5346 = vpop.permute.xlu0 %5345
      %5347 = vrot.lane.b32.xlu0 %v5318, 16
      %v5348 = vpop.permute.xlu0 %5347
      %5349 = vrot.lane.b32.xlu0 %v5319, 16
      %v5350 = vpop.permute.xlu0 %5349
      %5351 = vrot.lane.b32.xlu0 %v5320, 16
      %v5352 = vpop.permute.xlu0 %5351
      %5353 = vrot.lane.b32.xlu0 %v5321, 16
      %v5354 = vpop.permute.xlu0 %5353
      %5355 = vrot.lane.b32.xlu0 %v5322, 16
      %v5356 = vpop.permute.xlu0 %5355
      %5357 = vrot.lane.b32.xlu0 %v5323, 16
      %v5358 = vpop.permute.xlu0 %5357
      %5359 = vrot.lane.b32.xlu0 %v5324, 16
      %v5360 = vpop.permute.xlu0 %5359
      %v5361 = vsel %vm576, %v5338, %v5340
      %v5362 = vsel %vm576, %v5340, %v5342
      %v5363 = vsel %vm576, %v5344, %v5346
      %v5364 = vsel %vm576, %v5346, %v5348
      %v5365 = vsel %vm576, %v5350, %v5352
      %v5366 = vsel %vm576, %v5352, %v5354
      %v5367 = vsel %vm576, %v5356, %v5358
      %v5368 = vsel %vm576, %v5358, %v5360
      %5377 = vst [vmem:[#allocation3 + $0x40] sm:$0xff] %v5361
      %5378 = vst [vmem:[#allocation3 + $0x48] sm:$0xff] %v5362
      %5379 = vst [vmem:[#allocation3 + $0x50] sm:$0xff] %v5363
      %5380 = vst [vmem:[#allocation3 + $0x58] sm:$0xff] %v5364
      %5381 = vst [vmem:[#allocation3 + $0x60] sm:$0xff] %v5365
      %5382 = vst [vmem:[#allocation3 + $0x68] sm:$0xff] %v5366
      %5383 = vst [vmem:[#allocation3 + $0x70] sm:$0xff] %v5367
      %5384 = vst [vmem:[#allocation3 + $0x78] sm:$0xff] %v5368
      %v5385 = vld [vmem:[#allocation2] sm:$0xff]
      %v5386 = vld [vmem:[#allocation2 + $0x8] sm:$0xff]
      %v5387 = vld [vmem:[#allocation2 + $0x10] sm:$0xff]
      %v5388 = vld [vmem:[#allocation2 + $0x20] sm:$0xff]
      %v5389 = vld [vmem:[#allocation2 + $0x28] sm:$0xff]
      %v5390 = vld [vmem:[#allocation2 + $0x30] sm:$0xff]
      %v5391 = vld [vmem:[#allocation2 + $0x40] sm:$0xff]
      %v5392 = vld [vmem:[#allocation2 + $0x48] sm:$0xff]
      %v5393 = vld [vmem:[#allocation2 + $0x50] sm:$0xff]
      %v5394 = vld [vmem:[#allocation2 + $0x60] sm:$0xff]
      %v5395 = vld [vmem:[#allocation2 + $0x68] sm:$0xff]
      %v5396 = vld [vmem:[#allocation2 + $0x70] sm:$0xff]
      %v5397 = vmul.bf16 %v5385, %v589
      %v5398 = vmul.bf16 %v5386, %v593
      %v5399 = vmul.bf16 %v5387, %v591
      %v5400 = vmul.bf16 %v5388, %v589
      %v5401 = vmul.bf16 %v5389, %v593
      %v5402 = vmul.bf16 %v5390, %v591
      %v5403 = vmul.bf16 %v5391, %v589
      %v5404 = vmul.bf16 %v5392, %v593
      %v5405 = vmul.bf16 %v5393, %v591
      %v5406 = vmul.bf16 %v5394, %v589
      %v5407 = vmul.bf16 %v5395, %v593
      %v5408 = vmul.bf16 %v5396, %v591
      %5421 = vrot.lane.b32.xlu0 %v5397, 15
      %v5422 = vpop.permute.xlu0 %5421
      %5423 = vrot.lane.b32.xlu0 %v5398, 15
      %v5424 = vpop.permute.xlu0 %5423
      %5425 = vrot.lane.b32.xlu0 %v5399, 15
      %v5426 = vpop.permute.xlu0 %5425
      %5427 = vrot.lane.b32.xlu0 %v5400, 15
      %v5428 = vpop.permute.xlu0 %5427
      %5429 = vrot.lane.b32.xlu0 %v5401, 15
      %v5430 = vpop.permute.xlu0 %5429
      %5431 = vrot.lane.b32.xlu0 %v5402, 15
      %v5432 = vpop.permute.xlu0 %5431
      %5433 = vrot.lane.b32.xlu0 %v5403, 15
      %v5434 = vpop.permute.xlu0 %5433
      %5435 = vrot.lane.b32.xlu0 %v5404, 15
      %v5436 = vpop.permute.xlu0 %5435
      %5437 = vrot.lane.b32.xlu0 %v5405, 15
      %v5438 = vpop.permute.xlu0 %5437
      %5439 = vrot.lane.b32.xlu0 %v5406, 15
      %v5440 = vpop.permute.xlu0 %5439
      %5441 = vrot.lane.b32.xlu0 %v5407, 15
      %v5442 = vpop.permute.xlu0 %5441
      %5443 = vrot.lane.b32.xlu0 %v5408, 15
      %v5444 = vpop.permute.xlu0 %5443
      %v5445 = vsel %vm609, %v5422, %v5424
      %v5446 = vsel %vm609, %v5424, %v5426
      %v5447 = vsel %vm609, %v5428, %v5430
      %v5448 = vsel %vm609, %v5430, %v5432
      %v5449 = vsel %vm609, %v5434, %v5436
      %v5450 = vsel %vm609, %v5436, %v5438
      %v5451 = vsel %vm609, %v5440, %v5442
      %v5452 = vsel %vm609, %v5442, %v5444
      %5461 = vst [vmem:[#allocation3 + $0x80] sm:$0xff] %v5445
      %5462 = vst [vmem:[#allocation3 + $0x88] sm:$0xff] %v5446
      %5463 = vst [vmem:[#allocation3 + $0x90] sm:$0xff] %v5447
      %5464 = vst [vmem:[#allocation3 + $0x98] sm:$0xff] %v5448
      %5465 = vst [vmem:[#allocation3 + $0xa0] sm:$0xff] %v5449
      %5466 = vst [vmem:[#allocation3 + $0xa8] sm:$0xff] %v5450
      %5467 = vst [vmem:[#allocation3 + $0xb0] sm:$0xff] %v5451
      %5468 = vst [vmem:[#allocation3 + $0xb8] sm:$0xff] %v5452
      %v5469 = vld [vmem:[#allocation2] sm:$0xff]
      %v5470 = vld [vmem:[#allocation2 + $0x8] sm:$0xff]
      %v5471 = vld [vmem:[#allocation2 + $0x10] sm:$0xff]
      %v5472 = vld [vmem:[#allocation2 + $0x20] sm:$0xff]
      %v5473 = vld [vmem:[#allocation2 + $0x28] sm:$0xff]
      %v5474 = vld [vmem:[#allocation2 + $0x30] sm:$0xff]
      %v5475 = vld [vmem:[#allocation2 + $0x40] sm:$0xff]
      %v5476 = vld [vmem:[#allocation2 + $0x48] sm:$0xff]
      %v5477 = vld [vmem:[#allocation2 + $0x50] sm:$0xff]
      %v5478 = vld [vmem:[#allocation2 + $0x60] sm:$0xff]
      %v5479 = vld [vmem:[#allocation2 + $0x68] sm:$0xff]
      %v5480 = vld [vmem:[#allocation2 + $0x70] sm:$0xff]
      %v5481 = vmul.bf16 %v5469, %v620
      %v5482 = vmul.bf16 %v5470, %v624
      %v5483 = vmul.bf16 %v5471, %v622
      %v5484 = vmul.bf16 %v5472, %v620
      %v5485 = vmul.bf16 %v5473, %v624
      %v5486 = vmul.bf16 %v5474, %v622
      %v5487 = vmul.bf16 %v5475, %v620
      %v5488 = vmul.bf16 %v5476, %v624
      %v5489 = vmul.bf16 %v5477, %v622
      %v5490 = vmul.bf16 %v5478, %v620
      %v5491 = vmul.bf16 %v5479, %v624
      %v5492 = vmul.bf16 %v5480, %v622
      %5505 = vrot.lane.b32.xlu0 %v5481, 1
      %v5506 = vpop.permute.xlu0 %5505
      %5507 = vrot.lane.b32.xlu0 %v5482, 1
      %v5508 = vpop.permute.xlu0 %5507
      %5509 = vrot.lane.b32.xlu0 %v5483, 1
      %v5510 = vpop.permute.xlu0 %5509
      %5511 = vrot.lane.b32.xlu0 %v5484, 1
      %v5512 = vpop.permute.xlu0 %5511
      %5513 = vrot.lane.b32.xlu0 %v5485, 1
      %v5514 = vpop.permute.xlu0 %5513
      %5515 = vrot.lane.b32.xlu0 %v5486, 1
      %v5516 = vpop.permute.xlu0 %5515
      %5517 = vrot.lane.b32.xlu0 %v5487, 1
      %v5518 = vpop.permute.xlu0 %5517
      %5519 = vrot.lane.b32.xlu0 %v5488, 1
      %v5520 = vpop.permute.xlu0 %5519
      %5521 = vrot.lane.b32.xlu0 %v5489, 1
      %v5522 = vpop.permute.xlu0 %5521
      %5523 = vrot.lane.b32.xlu0 %v5490, 1
      %v5524 = vpop.permute.xlu0 %5523
      %5525 = vrot.lane.b32.xlu0 %v5491, 1
      %v5526 = vpop.permute.xlu0 %5525
      %5527 = vrot.lane.b32.xlu0 %v5492, 1
      %v5528 = vpop.permute.xlu0 %5527
      %v5529 = vsel %vm640, %v5506, %v5508
      %v5530 = vsel %vm640, %v5508, %v5510
      %v5531 = vsel %vm640, %v5512, %v5514
      %v5532 = vsel %vm640, %v5514, %v5516
      %v5533 = vsel %vm640, %v5518, %v5520
      %v5534 = vsel %vm640, %v5520, %v5522
      %v5535 = vsel %vm640, %v5524, %v5526
      %v5536 = vsel %vm640, %v5526, %v5528
      %5545 = vst [vmem:[#allocation3 + $0xc0] sm:$0xff] %v5529
      %5546 = vst [vmem:[#allocation3 + $0xc8] sm:$0xff] %v5530
      %5547 = vst [vmem:[#allocation3 + $0xd0] sm:$0xff] %v5531
      %5548 = vst [vmem:[#allocation3 + $0xd8] sm:$0xff] %v5532
      %5549 = vst [vmem:[#allocation3 + $0xe0] sm:$0xff] %v5533
      %5550 = vst [vmem:[#allocation3 + $0xe8] sm:$0xff] %v5534
      %5551 = vst [vmem:[#allocation3 + $0xf0] sm:$0xff] %v5535
      %5552 = vst [vmem:[#allocation3 + $0xf8] sm:$0xff] %v5536
      %v5553 = vld [vmem:[#allocation2 + $0x8] sm:$0xff]
      %v5554 = vld [vmem:[#allocation2 + $0x10] sm:$0xff]
      %v5555 = vld [vmem:[#allocation2 + $0x28] sm:$0xff]
      %v5556 = vld [vmem:[#allocation2 + $0x30] sm:$0xff]
      %v5557 = vld [vmem:[#allocation2 + $0x48] sm:$0xff]
      %v5558 = vld [vmem:[#allocation2 + $0x50] sm:$0xff]
      %v5559 = vld [vmem:[#allocation2 + $0x68] sm:$0xff]
      %v5560 = vld [vmem:[#allocation2 + $0x70] sm:$0xff]
      %5561 = vst [vmem:[#allocation3 + $0x100] sm:$0xff] %v5553
      %5562 = vst [vmem:[#allocation3 + $0x108] sm:$0xff] %v5554
      %5563 = vst [vmem:[#allocation3 + $0x110] sm:$0xff] %v5555
      %5564 = vst [vmem:[#allocation3 + $0x118] sm:$0xff] %v5556
      %5565 = vst [vmem:[#allocation3 + $0x120] sm:$0xff] %v5557
      %5566 = vst [vmem:[#allocation3 + $0x128] sm:$0xff] %v5558
      %5567 = vst [vmem:[#allocation3 + $0x130] sm:$0xff] %v5559
      %5568 = vst [vmem:[#allocation3 + $0x138] sm:$0xff] %v5560
      %v5569 = vld [vmem:[#allocation2 + $0x8] sm:$0xff]
      %v5570 = vld [vmem:[#allocation2 + $0x10] sm:$0xff]
      %v5571 = vld [vmem:[#allocation2 + $0x18] sm:$0xff]
      %v5572 = vld [vmem:[#allocation2 + $0x28] sm:$0xff]
      %v5573 = vld [vmem:[#allocation2 + $0x30] sm:$0xff]
      %v5574 = vld [vmem:[#allocation2 + $0x38] sm:$0xff]
      %v5575 = vld [vmem:[#allocation2 + $0x48] sm:$0xff]
      %v5576 = vld [vmem:[#allocation2 + $0x50] sm:$0xff]
      %v5577 = vld [vmem:[#allocation2 + $0x58] sm:$0xff]
      %v5578 = vld [vmem:[#allocation2 + $0x68] sm:$0xff]
      %v5579 = vld [vmem:[#allocation2 + $0x70] sm:$0xff]
      %v5580 = vld [vmem:[#allocation2 + $0x78] sm:$0xff]
      %v5581 = vmul.bf16 %v5569, %v655
      %v5582 = vmul.bf16 %v5570, %v658
      %v5583 = vmul.bf16 %v5571, %v657
      %v5584 = vmul.bf16 %v5572, %v655
      %v5585 = vmul.bf16 %v5573, %v658
      %v5586 = vmul.bf16 %v5574, %v657
      %v5587 = vmul.bf16 %v5575, %v655
      %v5588 = vmul.bf16 %v5576, %v658
      %v5589 = vmul.bf16 %v5577, %v657
      %v5590 = vmul.bf16 %v5578, %v655
      %v5591 = vmul.bf16 %v5579, %v658
      %v5592 = vmul.bf16 %v5580, %v657
      %5605 = vrot.lane.b32.xlu0 %v5581, 127
      %v5606 = vpop.permute.xlu0 %5605
      %5607 = vrot.lane.b32.xlu0 %v5582, 127
      %v5608 = vpop.permute.xlu0 %5607
      %5609 = vrot.lane.b32.xlu0 %v5583, 127
      %v5610 = vpop.permute.xlu0 %5609
      %5611 = vrot.lane.b32.xlu0 %v5584, 127
      %v5612 = vpop.permute.xlu0 %5611
      %5613 = vrot.lane.b32.xlu0 %v5585, 127
      %v5614 = vpop.permute.xlu0 %5613
      %5615 = vrot.lane.b32.xlu0 %v5586, 127
      %v5616 = vpop.permute.xlu0 %5615
      %5617 = vrot.lane.b32.xlu0 %v5587, 127
      %v5618 = vpop.permute.xlu0 %5617
      %5619 = vrot.lane.b32.xlu0 %v5588, 127
      %v5620 = vpop.permute.xlu0 %5619
      %5621 = vrot.lane.b32.xlu0 %v5589, 127
      %v5622 = vpop.permute.xlu0 %5621
      %5623 = vrot.lane.b32.xlu0 %v5590, 127
      %v5624 = vpop.permute.xlu0 %5623
      %5625 = vrot.lane.b32.xlu0 %v5591, 127
      %v5626 = vpop.permute.xlu0 %5625
      %5627 = vrot.lane.b32.xlu0 %v5592, 127
      %v5628 = vpop.permute.xlu0 %5627
      %v5629 = vsel %vm623, %v5606, %v5608
      %v5630 = vsel %vm623, %v5608, %v5610
      %v5631 = vsel %vm623, %v5612, %v5614
      %v5632 = vsel %vm623, %v5614, %v5616
      %v5633 = vsel %vm623, %v5618, %v5620
      %v5634 = vsel %vm623, %v5620, %v5622
      %v5635 = vsel %vm623, %v5624, %v5626
      %v5636 = vsel %vm623, %v5626, %v5628
      %5645 = vst [vmem:[#allocation3 + $0x140] sm:$0xff] %v5629
      %5646 = vst [vmem:[#allocation3 + $0x148] sm:$0xff] %v5630
      %5647 = vst [vmem:[#allocation3 + $0x150] sm:$0xff] %v5631
      %5648 = vst [vmem:[#allocation3 + $0x158] sm:$0xff] %v5632
      %5649 = vst [vmem:[#allocation3 + $0x160] sm:$0xff] %v5633
      %5650 = vst [vmem:[#allocation3 + $0x168] sm:$0xff] %v5634
      %5651 = vst [vmem:[#allocation3 + $0x170] sm:$0xff] %v5635
      %5652 = vst [vmem:[#allocation3 + $0x178] sm:$0xff] %v5636
      %v5653 = vld [vmem:[#allocation2 + $0x8] sm:$0xff]
      %v5654 = vld [vmem:[#allocation2 + $0x10] sm:$0xff]
      %v5655 = vld [vmem:[#allocation2 + $0x18] sm:$0xff]
      %v5656 = vld [vmem:[#allocation2 + $0x28] sm:$0xff]
      %v5657 = vld [vmem:[#allocation2 + $0x30] sm:$0xff]
      %v5658 = vld [vmem:[#allocation2 + $0x38] sm:$0xff]
      %v5659 = vld [vmem:[#allocation2 + $0x48] sm:$0xff]
      %v5660 = vld [vmem:[#allocation2 + $0x50] sm:$0xff]
      %v5661 = vld [vmem:[#allocation2 + $0x58] sm:$0xff]
      %v5662 = vld [vmem:[#allocation2 + $0x68] sm:$0xff]
      %v5663 = vld [vmem:[#allocation2 + $0x70] sm:$0xff]
      %v5664 = vld [vmem:[#allocation2 + $0x78] sm:$0xff]
      %v5665 = vmul.bf16 %v5653, %v684
      %v5666 = vmul.bf16 %v5654, %v687
      %v5667 = vmul.bf16 %v5655, %v686
      %v5668 = vmul.bf16 %v5656, %v684
      %v5669 = vmul.bf16 %v5657, %v687
      %v5670 = vmul.bf16 %v5658, %v686
      %v5671 = vmul.bf16 %v5659, %v684
      %v5672 = vmul.bf16 %v5660, %v687
      %v5673 = vmul.bf16 %v5661, %v686
      %v5674 = vmul.bf16 %v5662, %v684
      %v5675 = vmul.bf16 %v5663, %v687
      %v5676 = vmul.bf16 %v5664, %v686
      %5689 = vrot.lane.b32.xlu0 %v5665, 113
      %v5690 = vpop.permute.xlu0 %5689
      %5691 = vrot.lane.b32.xlu0 %v5666, 113
      %v5692 = vpop.permute.xlu0 %5691
      %5693 = vrot.lane.b32.xlu0 %v5667, 113
      %v5694 = vpop.permute.xlu0 %5693
      %5695 = vrot.lane.b32.xlu0 %v5668, 113
      %v5696 = vpop.permute.xlu0 %5695
      %5697 = vrot.lane.b32.xlu0 %v5669, 113
      %v5698 = vpop.permute.xlu0 %5697
      %5699 = vrot.lane.b32.xlu0 %v5670, 113
      %v5700 = vpop.permute.xlu0 %5699
      %5701 = vrot.lane.b32.xlu0 %v5671, 113
      %v5702 = vpop.permute.xlu0 %5701
      %5703 = vrot.lane.b32.xlu0 %v5672, 113
      %v5704 = vpop.permute.xlu0 %5703
      %5705 = vrot.lane.b32.xlu0 %v5673, 113
      %v5706 = vpop.permute.xlu0 %5705
      %5707 = vrot.lane.b32.xlu0 %v5674, 113
      %v5708 = vpop.permute.xlu0 %5707
      %5709 = vrot.lane.b32.xlu0 %v5675, 113
      %v5710 = vpop.permute.xlu0 %5709
      %5711 = vrot.lane.b32.xlu0 %v5676, 113
      %v5712 = vpop.permute.xlu0 %5711
      %v5713 = vsel %vm592, %v5690, %v5692
      %v5714 = vsel %vm592, %v5692, %v5694
      %v5715 = vsel %vm592, %v5696, %v5698
      %v5716 = vsel %vm592, %v5698, %v5700
      %v5717 = vsel %vm592, %v5702, %v5704
      %v5718 = vsel %vm592, %v5704, %v5706
      %v5719 = vsel %vm592, %v5708, %v5710
      %v5720 = vsel %vm592, %v5710, %v5712
      %5729 = vst [vmem:[#allocation3 + $0x180] sm:$0xff] %v5713
      %5730 = vst [vmem:[#allocation3 + $0x188] sm:$0xff] %v5714
      %5731 = vst [vmem:[#allocation3 + $0x190] sm:$0xff] %v5715
      %5732 = vst [vmem:[#allocation3 + $0x198] sm:$0xff] %v5716
      %5733 = vst [vmem:[#allocation3 + $0x1a0] sm:$0xff] %v5717
      %5734 = vst [vmem:[#allocation3 + $0x1a8] sm:$0xff] %v5718
      %5735 = vst [vmem:[#allocation3 + $0x1b0] sm:$0xff] %v5719
      %5736 = vst [vmem:[#allocation3 + $0x1b8] sm:$0xff] %v5720
      %v5737 = vld [vmem:[#allocation2 + $0x8] sm:$0xff]
      %v5738 = vld [vmem:[#allocation2 + $0x10] sm:$0xff]
      %v5739 = vld [vmem:[#allocation2 + $0x18] sm:$0xff]
      %v5740 = vld [vmem:[#allocation2 + $0x28] sm:$0xff]
      %v5741 = vld [vmem:[#allocation2 + $0x30] sm:$0xff]
      %v5742 = vld [vmem:[#allocation2 + $0x38] sm:$0xff]
      %v5743 = vld [vmem:[#allocation2 + $0x48] sm:$0xff]
      %v5744 = vld [vmem:[#allocation2 + $0x50] sm:$0xff]
      %v5745 = vld [vmem:[#allocation2 + $0x58] sm:$0xff]
      %v5746 = vld [vmem:[#allocation2 + $0x68] sm:$0xff]
      %v5747 = vld [vmem:[#allocation2 + $0x70] sm:$0xff]
      %v5748 = vld [vmem:[#allocation2 + $0x78] sm:$0xff]
      %5761 = vrot.lane.b32.xlu0 %v5737, 112
      %v5762 = vpop.permute.xlu0 %5761
      %5763 = vrot.lane.b32.xlu0 %v5738, 112
      %v5764 = vpop.permute.xlu0 %5763
      %5765 = vrot.lane.b32.xlu0 %v5739, 112
      %v5766 = vpop.permute.xlu0 %5765
      %5767 = vrot.lane.b32.xlu0 %v5740, 112
      %v5768 = vpop.permute.xlu0 %5767
      %5769 = vrot.lane.b32.xlu0 %v5741, 112
      %v5770 = vpop.permute.xlu0 %5769
      %5771 = vrot.lane.b32.xlu0 %v5742, 112
      %v5772 = vpop.permute.xlu0 %5771
      %5773 = vrot.lane.b32.xlu0 %v5743, 112
      %v5774 = vpop.permute.xlu0 %5773
      %5775 = vrot.lane.b32.xlu0 %v5744, 112
      %v5776 = vpop.permute.xlu0 %5775
      %5777 = vrot.lane.b32.xlu0 %v5745, 112
      %v5778 = vpop.permute.xlu0 %5777
      %5779 = vrot.lane.b32.xlu0 %v5746, 112
      %v5780 = vpop.permute.xlu0 %5779
      %5781 = vrot.lane.b32.xlu0 %v5747, 112
      %v5782 = vpop.permute.xlu0 %5781
      %5783 = vrot.lane.b32.xlu0 %v5748, 112
      %v5784 = vpop.permute.xlu0 %5783
      %v5785 = vsel %vm721, %v5762, %v5764
      %v5786 = vsel %vm721, %v5764, %v5766
      %v5787 = vsel %vm721, %v5768, %v5770
      %v5788 = vsel %vm721, %v5770, %v5772
      %v5789 = vsel %vm721, %v5774, %v5776
      %v5790 = vsel %vm721, %v5776, %v5778
      %v5791 = vsel %vm721, %v5780, %v5782
      %v5792 = vsel %vm721, %v5782, %v5784
      %5801 = vst [vmem:[#allocation3 + $0x1c0] sm:$0xff] %v5785
      %5802 = vst [vmem:[#allocation3 + $0x1c8] sm:$0xff] %v5786
      %5803 = vst [vmem:[#allocation3 + $0x1d0] sm:$0xff] %v5787
      %5804 = vst [vmem:[#allocation3 + $0x1d8] sm:$0xff] %v5788
      %5805 = vst [vmem:[#allocation3 + $0x1e0] sm:$0xff] %v5789
      %5806 = vst [vmem:[#allocation3 + $0x1e8] sm:$0xff] %v5790
      %5807 = vst [vmem:[#allocation3 + $0x1f0] sm:$0xff] %v5791
      %5808 = vst [vmem:[#allocation3 + $0x1f8] sm:$0xff] %v5792
      %v5809 = vld [vmem:[#allocation2 + $0x8] sm:$0xff]
      %v5810 = vld [vmem:[#allocation2 + $0x10] sm:$0xff]
      %v5811 = vld [vmem:[#allocation2 + $0x18] sm:$0xff]
      %v5812 = vld [vmem:[#allocation2 + $0x28] sm:$0xff]
      %v5813 = vld [vmem:[#allocation2 + $0x30] sm:$0xff]
      %v5814 = vld [vmem:[#allocation2 + $0x38] sm:$0xff]
      %v5815 = vld [vmem:[#allocation2 + $0x48] sm:$0xff]
      %v5816 = vld [vmem:[#allocation2 + $0x50] sm:$0xff]
      %v5817 = vld [vmem:[#allocation2 + $0x58] sm:$0xff]
      %v5818 = vld [vmem:[#allocation2 + $0x68] sm:$0xff]
      %v5819 = vld [vmem:[#allocation2 + $0x70] sm:$0xff]
      %v5820 = vld [vmem:[#allocation2 + $0x78] sm:$0xff]
      %v5821 = vmul.bf16 %v5809, %v732
      %v5822 = vmul.bf16 %v5810, %v735
      %v5823 = vmul.bf16 %v5811, %v734
      %v5824 = vmul.bf16 %v5812, %v732
      %v5825 = vmul.bf16 %v5813, %v735
      %v5826 = vmul.bf16 %v5814, %v734
      %v5827 = vmul.bf16 %v5815, %v732
      %v5828 = vmul.bf16 %v5816, %v735
      %v5829 = vmul.bf16 %v5817, %v734
      %v5830 = vmul.bf16 %v5818, %v732
      %v5831 = vmul.bf16 %v5819, %v735
      %v5832 = vmul.bf16 %v5820, %v734
      %5845 = vrot.lane.b32.xlu0 %v5821, 111
      %v5846 = vpop.permute.xlu0 %5845
      %5847 = vrot.lane.b32.xlu0 %v5822, 111
      %v5848 = vpop.permute.xlu0 %5847
      %5849 = vrot.lane.b32.xlu0 %v5823, 111
      %v5850 = vpop.permute.xlu0 %5849
      %5851 = vrot.lane.b32.xlu0 %v5824, 111
      %v5852 = vpop.permute.xlu0 %5851
      %5853 = vrot.lane.b32.xlu0 %v5825, 111
      %v5854 = vpop.permute.xlu0 %5853
      %5855 = vrot.lane.b32.xlu0 %v5826, 111
      %v5856 = vpop.permute.xlu0 %5855
      %5857 = vrot.lane.b32.xlu0 %v5827, 111
      %v5858 = vpop.permute.xlu0 %5857
      %5859 = vrot.lane.b32.xlu0 %v5828, 111
      %v5860 = vpop.permute.xlu0 %5859
      %5861 = vrot.lane.b32.xlu0 %v5829, 111
      %v5862 = vpop.permute.xlu0 %5861
      %5863 = vrot.lane.b32.xlu0 %v5830, 111
      %v5864 = vpop.permute.xlu0 %5863
      %5865 = vrot.lane.b32.xlu0 %v5831, 111
      %v5866 = vpop.permute.xlu0 %5865
      %5867 = vrot.lane.b32.xlu0 %v5832, 111
      %v5868 = vpop.permute.xlu0 %5867
      %v5869 = vsel %vm540, %v5846, %v5848
      %v5870 = vsel %vm540, %v5848, %v5850
      %v5871 = vsel %vm540, %v5852, %v5854
      %v5872 = vsel %vm540, %v5854, %v5856
      %v5873 = vsel %vm540, %v5858, %v5860
      %v5874 = vsel %vm540, %v5860, %v5862
      %v5875 = vsel %vm540, %v5864, %v5866
      %v5876 = vsel %vm540, %v5866, %v5868
      %5885 = vst [vmem:[#allocation3 + $0x200] sm:$0xff] %v5869
      %5886 = vst [vmem:[#allocation3 + $0x208] sm:$0xff] %v5870
      %5887 = vst [vmem:[#allocation3 + $0x210] sm:$0xff] %v5871
      %5888 = vst [vmem:[#allocation3 + $0x218] sm:$0xff] %v5872
      %5889 = vst [vmem:[#allocation3 + $0x220] sm:$0xff] %v5873
      %5890 = vst [vmem:[#allocation3 + $0x228] sm:$0xff] %v5874
      %5891 = vst [vmem:[#allocation3 + $0x230] sm:$0xff] %v5875
      %5892 = vst [vmem:[#allocation3 + $0x238] sm:$0xff] %v5876
      %v5893 = vld [vmem:[%s9] sm:$0xff]
      %v5894 = vld [vmem:[%s9 + $0x8] sm:$0xff]
      %v5895 = vld [vmem:[%s9 + $0x10] sm:$0xf]
      %v5896 = vld [vmem:[%s9 + $0x14] sm:$0xff]
      %v5897 = vld [vmem:[%s9 + $0x1c] sm:$0xff]
      %v5898 = vld [vmem:[%s9 + $0x24] sm:$0xf]
      %v5899 = vld [vmem:[%s9 + $0x28] sm:$0xff]
      %v5900 = vld [vmem:[%s9 + $0x30] sm:$0xff]
      %v5901 = vld [vmem:[%s9 + $0x38] sm:$0xf]
      %v5902 = vld [vmem:[%s9 + $0x3c] sm:$0xff]
      %v5903 = vld [vmem:[%s9 + $0x44] sm:$0xff]
      %v5904 = vld [vmem:[%s9 + $0x4c] sm:$0xf]
      %v5905 = vld [vmem:[#allocation3] sm:$0xff]
      %v5906 = vld [vmem:[#allocation3 + $0x8] sm:$0xff]
      %v5907 = vld [vmem:[#allocation3 + $0x10] sm:$0xff]
      %v5908 = vld [vmem:[#allocation3 + $0x18] sm:$0xff]
      %v5909 = vld [vmem:[#allocation3 + $0x20] sm:$0xff]
      %v5910 = vld [vmem:[#allocation3 + $0x28] sm:$0xff]
      %v5911 = vld [vmem:[#allocation3 + $0x30] sm:$0xff]
      %v5912 = vld [vmem:[#allocation3 + $0x38] sm:$0xff]
      %v5913 = vld [vmem:[#allocation3 + $0x40] sm:$0xff]
      %v5914 = vld [vmem:[#allocation3 + $0x48] sm:$0xff]
      %v5915 = vld [vmem:[#allocation3 + $0x50] sm:$0xff]
      %v5916 = vld [vmem:[#allocation3 + $0x58] sm:$0xff]
      %v5917 = vld [vmem:[#allocation3 + $0x60] sm:$0xff]
      %v5918 = vld [vmem:[#allocation3 + $0x68] sm:$0xff]
      %v5919 = vld [vmem:[#allocation3 + $0x70] sm:$0xff]
      %v5920 = vld [vmem:[#allocation3 + $0x78] sm:$0xff]
      %v5921 = vld [vmem:[#allocation3 + $0x80] sm:$0xff]
      %v5922 = vld [vmem:[#allocation3 + $0x88] sm:$0xff]
      %v5923 = vld [vmem:[#allocation3 + $0x90] sm:$0xff]
      %v5924 = vld [vmem:[#allocation3 + $0x98] sm:$0xff]
      %v5925 = vld [vmem:[#allocation3 + $0xa0] sm:$0xff]
      %v5926 = vld [vmem:[#allocation3 + $0xa8] sm:$0xff]
      %v5927 = vld [vmem:[#allocation3 + $0xb0] sm:$0xff]
      %v5928 = vld [vmem:[#allocation3 + $0xb8] sm:$0xff]
      %v5929 = vld [vmem:[#allocation3 + $0xc0] sm:$0xff]
      %v5930 = vld [vmem:[#allocation3 + $0xc8] sm:$0xff]
      %v5931 = vld [vmem:[#allocation3 + $0xd0] sm:$0xff]
      %v5932 = vld [vmem:[#allocation3 + $0xd8] sm:$0xff]
      %v5933 = vld [vmem:[#allocation3 + $0xe0] sm:$0xff]
      %v5934 = vld [vmem:[#allocation3 + $0xe8] sm:$0xff]
      %v5935 = vld [vmem:[#allocation3 + $0xf0] sm:$0xff]
      %v5936 = vld [vmem:[#allocation3 + $0xf8] sm:$0xff]
      %v5937 = vld [vmem:[#allocation3 + $0x100] sm:$0xff]
      %v5938 = vld [vmem:[#allocation3 + $0x108] sm:$0xff]
      %v5939 = vld [vmem:[#allocation3 + $0x110] sm:$0xff]
      %v5940 = vld [vmem:[#allocation3 + $0x118] sm:$0xff]
      %v5941 = vld [vmem:[#allocation3 + $0x120] sm:$0xff]
      %v5942 = vld [vmem:[#allocation3 + $0x128] sm:$0xff]
      %v5943 = vld [vmem:[#allocation3 + $0x130] sm:$0xff]
      %v5944 = vld [vmem:[#allocation3 + $0x138] sm:$0xff]
      %v5945 = vld [vmem:[#allocation3 + $0x140] sm:$0xff]
      %v5946 = vld [vmem:[#allocation3 + $0x148] sm:$0xff]
      %v5947 = vld [vmem:[#allocation3 + $0x150] sm:$0xff]
      %v5948 = vld [vmem:[#allocation3 + $0x158] sm:$0xff]
      %v5949 = vld [vmem:[#allocation3 + $0x160] sm:$0xff]
      %v5950 = vld [vmem:[#allocation3 + $0x168] sm:$0xff]
      %v5951 = vld [vmem:[#allocation3 + $0x170] sm:$0xff]
      %v5952 = vld [vmem:[#allocation3 + $0x178] sm:$0xff]
      %v5953 = vld [vmem:[#allocation3 + $0x180] sm:$0xff]
      %v5954 = vld [vmem:[#allocation3 + $0x188] sm:$0xff]
      %v5955 = vld [vmem:[#allocation3 + $0x190] sm:$0xff]
      %v5956 = vld [vmem:[#allocation3 + $0x198] sm:$0xff]
      %v5957 = vld [vmem:[#allocation3 + $0x1a0] sm:$0xff]
      %v5958 = vld [vmem:[#allocation3 + $0x1a8] sm:$0xff]
      %v5959 = vld [vmem:[#allocation3 + $0x1b0] sm:$0xff]
      %v5960 = vld [vmem:[#allocation3 + $0x1b8] sm:$0xff]
      %v5961 = vld [vmem:[#allocation3 + $0x1c0] sm:$0xff]
      %v5962 = vld [vmem:[#allocation3 + $0x1c8] sm:$0xff]
      %v5963 = vld [vmem:[#allocation3 + $0x1d0] sm:$0xff]
      %v5964 = vld [vmem:[#allocation3 + $0x1d8] sm:$0xff]
      %v5965 = vld [vmem:[#allocation3 + $0x1e0] sm:$0xff]
      %v5966 = vld [vmem:[#allocation3 + $0x1e8] sm:$0xff]
      %v5967 = vld [vmem:[#allocation3 + $0x1f0] sm:$0xff]
      %v5968 = vld [vmem:[#allocation3 + $0x1f8] sm:$0xff]
      %v5969 = vld [vmem:[#allocation3 + $0x200] sm:$0xff]
      %v5970 = vld [vmem:[#allocation3 + $0x208] sm:$0xff]
      %v5971 = vld [vmem:[#allocation3 + $0x210] sm:$0xff]
      %v5972 = vld [vmem:[#allocation3 + $0x218] sm:$0xff]
      %v5973 = vld [vmem:[#allocation3 + $0x220] sm:$0xff]
      %v5974 = vld [vmem:[#allocation3 + $0x228] sm:$0xff]
      %v5975 = vld [vmem:[#allocation3 + $0x230] sm:$0xff]
      %v5976 = vld [vmem:[#allocation3 + $0x238] sm:$0xff]
      %v5977 = vld [vmem:[%s10] sm:$0xff]
      %v5978 = vld [vmem:[%s10 + $0x8] sm:$0xff]
      %v5979 = vld [vmem:[%s10 + $0x10] sm:$0xff]
      %v5980 = vld [vmem:[%s10 + $0x18] sm:$0xff]
      %5982 = vset.pattern.permute.xlu0 0
      %5983 = vperm.xlu0 %5982, %v5977
      %v5984 = vpop.permute.xlu0 %5983
      %5987 = vset.pattern.permute.xlu0 0
      %5988 = vperm.xlu0 %5987, %v5978
      %v5989 = vpop.permute.xlu0 %5988
      %5992 = vset.pattern.permute.xlu0 0
      %5993 = vperm.xlu0 %5992, %v5979
      %v5994 = vpop.permute.xlu0 %5993
      %5997 = vset.pattern.permute.xlu0 0
      %5998 = vperm.xlu0 %5997, %v5980
      %v5999 = vpop.permute.xlu0 %5998
      %v6013 = vunpack.c.l.b16 %v5893
      %v6014 = vunpack.c.h.b16 %v5893
      %v6015 = vunpack.c.l.b16 %v5894
      %v6016 = vunpack.c.h.b16 %v5894
      %v6017 = vunpack.c.l.b16 %v5895
      %v6018 = vunpack.c.l.b16 %v5896
      %v6019 = vunpack.c.h.b16 %v5896
      %v6020 = vunpack.c.l.b16 %v5897
      %v6021 = vunpack.c.h.b16 %v5897
      %v6022 = vunpack.c.l.b16 %v5898
      %v6023 = vunpack.c.l.b16 %v5899
      %v6024 = vunpack.c.h.b16 %v5899
      %v6025 = vunpack.c.l.b16 %v5900
      %v6026 = vunpack.c.h.b16 %v5900
      %v6027 = vunpack.c.l.b16 %v5901
      %v6028 = vunpack.c.l.b16 %v5902
      %v6029 = vunpack.c.h.b16 %v5902
      %v6030 = vunpack.c.l.b16 %v5903
      %v6031 = vunpack.c.h.b16 %v5903
      %v6032 = vunpack.c.l.b16 %v5904
      %v6033 = vpack.c.b16 %v6018, %v6013
      %v6034 = vpack.c.b16 %v6019, %v6014
      %v6035 = vpack.c.b16 %v6020, %v6015
      %v6036 = vpack.c.b16 %v6021, %v6016
      %v6037 = vpack.c.b16 %v6022, %v6017
      %v6038 = vpack.c.b16 %v6028, %v6023
      %v6039 = vpack.c.b16 %v6029, %v6024
      %v6040 = vpack.c.b16 %v6030, %v6025
      %v6041 = vpack.c.b16 %v6031, %v6026
      %v6042 = vpack.c.b16 %v6032, %v6027
      %v6052 = vsel %vm2660, %v6037, 0
      %v6055 = vsel %vm2660, %v6042, 0
      %6057 = vmatprep.subr.bf16.mxu0 %v5906
      %6058 = vmatpush1.bf16.msra.mxu0 %v5905
      %6059 = vmatprep.subr.bf16.mxu0 %v5908
      %6060 = vmatpush1.bf16.msra.mxu0 %v5907
      %6061 = vmatprep.subr.bf16.mxu0 %v5910
      %6062 = vmatpush1.bf16.msra.mxu0 %v5909
      %6063 = vmatprep.subr.bf16.mxu0 %v5912
      %6064 = vmatpush1.bf16.msra.mxu0 %v5911
      %6065 = vmatprep.subr.bf16.mxu0 %v5914
      %6066 = vmatpush1.bf16.msra.mxu0 %v5913
      %6067 = vmatprep.subr.bf16.mxu0 %v5916
      %6068 = vmatpush1.bf16.msra.mxu0 %v5915
      %6069 = vmatprep.subr.bf16.mxu0 %v5918
      %6070 = vmatpush1.bf16.msra.mxu0 %v5917
      %6071 = vmatprep.subr.bf16.mxu0 %v5920
      %6072 = vmatpush1.bf16.msra.mxu0 %v5919
      %6073 = vmatprep.subr.bf16.mxu0 %v5922
      %6074 = vmatpush1.bf16.msra.mxu0 %v5921
      %6075 = vmatprep.subr.bf16.mxu0 %v5924
      %6076 = vmatpush1.bf16.msra.mxu0 %v5923
      %6077 = vmatprep.subr.bf16.mxu0 %v5926
      %6078 = vmatpush1.bf16.msra.mxu0 %v5925
      %6079 = vmatprep.subr.bf16.mxu0 %v5928
      %6080 = vmatpush1.bf16.msra.mxu0 %v5927
      %6081 = vmatprep.subr.bf16.mxu0 %v5930
      %6082 = vmatpush1.bf16.msra.mxu0 %v5929
      %6083 = vmatprep.subr.bf16.mxu0 %v5932
      %6084 = vmatpush1.bf16.msra.mxu0 %v5931
      %6085 = vmatprep.subr.bf16.mxu0 %v5934
      %6086 = vmatpush1.bf16.msra.mxu0 %v5933
      %6087 = vmatprep.subr.bf16.mxu0 %v5936
      %6088 = vmatpush1.bf16.msra.mxu0 %v5935
      %6089 = vmatprep.mubr.bf16.mxu0 %v6034
      %6090 = vmatmul.mubr.bf16.gmra.mrb[0].mxu0 %v6033
      %v6091 = vpop.f32.mrb[0].mxu0
      %v6092 = vadd.f32 %v5984, %v6091
      %v6093 = vpop.f32.mrb[0].mxu0
      %v6094 = vadd.f32 %v5984, %v6093
      %v6095 = vpop.f32.mrb[0].mxu0
      %v6096 = vadd.f32 %v5989, %v6095
      %v6097 = vpop.f32.mrb[0].mxu0
      %v6098 = vadd.f32 %v5989, %v6097
      %6099 = vmatprep.mubr.bf16.mxu0 %v6039
      %6100 = vmatmul.mubr.bf16.gmra.mrb[0].mxu0 %v6038
      %v6101 = vpop.f32.mrb[0].mxu0
      %v6102 = vadd.f32 %v5994, %v6101
      %v6103 = vpop.f32.mrb[0].mxu0
      %v6104 = vadd.f32 %v5994, %v6103
      %v6105 = vpop.f32.mrb[0].mxu0
      %v6106 = vadd.f32 %v5999, %v6105
      %v6107 = vpop.f32.mrb[0].mxu0
      %v6108 = vadd.f32 %v5999, %v6107
      %6109 = vdwg.mxu0
      %6110 = vmatprep.subr.bf16.mxu0 %v5938
      %6111 = vmatpush1.bf16.msra.mxu0 %v5937
      %6112 = vmatprep.subr.bf16.mxu0 %v5940
      %6113 = vmatpush1.bf16.msra.mxu0 %v5939
      %6114 = vmatprep.subr.bf16.mxu0 %v5942
      %6115 = vmatpush1.bf16.msra.mxu0 %v5941
      %6116 = vmatprep.subr.bf16.mxu0 %v5944
      %6117 = vmatpush1.bf16.msra.mxu0 %v5943
      %6118 = vmatprep.subr.bf16.mxu0 %v5946
      %6119 = vmatpush1.bf16.msra.mxu0 %v5945
      %6120 = vmatprep.subr.bf16.mxu0 %v5948
      %6121 = vmatpush1.bf16.msra.mxu0 %v5947
      %6122 = vmatprep.subr.bf16.mxu0 %v5950
      %6123 = vmatpush1.bf16.msra.mxu0 %v5949
      %6124 = vmatprep.subr.bf16.mxu0 %v5952
      %6125 = vmatpush1.bf16.msra.mxu0 %v5951
      %6126 = vmatprep.subr.bf16.mxu0 %v5954
      %6127 = vmatpush1.bf16.msra.mxu0 %v5953
      %6128 = vmatprep.subr.bf16.mxu0 %v5956
      %6129 = vmatpush1.bf16.msra.mxu0 %v5955
      %6130 = vmatprep.subr.bf16.mxu0 %v5958
      %6131 = vmatpush1.bf16.msra.mxu0 %v5957
      %6132 = vmatprep.subr.bf16.mxu0 %v5960
      %6133 = vmatpush1.bf16.msra.mxu0 %v5959
      %6134 = vmatprep.subr.bf16.mxu0 %v5962
      %6135 = vmatpush1.bf16.msra.mxu0 %v5961
      %6136 = vmatprep.subr.bf16.mxu0 %v5964
      %6137 = vmatpush1.bf16.msra.mxu0 %v5963
      %6138 = vmatprep.subr.bf16.mxu0 %v5966
      %6139 = vmatpush1.bf16.msra.mxu0 %v5965
      %6140 = vmatprep.subr.bf16.mxu0 %v5968
      %6141 = vmatpush1.bf16.msra.mxu0 %v5967
      %6142 = vmatprep.mubr.bf16.mxu0 %v6036
      %6143 = vmatmul.mubr.bf16.gmra.mrb[0].mxu0 %v6035
      %v6144 = vpop.f32.mrb[0].mxu0
      %v6145 = vadd.f32 %v6092, %v6144
      %v6146 = vpop.f32.mrb[0].mxu0
      %v6147 = vadd.f32 %v6094, %v6146
      %v6148 = vpop.f32.mrb[0].mxu0
      %v6149 = vadd.f32 %v6096, %v6148
      %v6150 = vpop.f32.mrb[0].mxu0
      %v6151 = vadd.f32 %v6098, %v6150
      %6152 = vmatprep.mubr.bf16.mxu0 %v6041
      %6153 = vmatmul.mubr.bf16.gmra.mrb[0].mxu0 %v6040
      %v6154 = vpop.f32.mrb[0].mxu0
      %v6155 = vadd.f32 %v6102, %v6154
      %v6156 = vpop.f32.mrb[0].mxu0
      %v6157 = vadd.f32 %v6104, %v6156
      %v6158 = vpop.f32.mrb[0].mxu0
      %v6159 = vadd.f32 %v6106, %v6158
      %v6160 = vpop.f32.mrb[0].mxu0
      %v6161 = vadd.f32 %v6108, %v6160
      %6162 = vdwg.mxu0
      %6163 = vmatprep.subr.bf16.mxu0 %v5970
      %6164 = vmatpush1.bf16.msra.mxu0 %v5969
      %6165 = vmatprep.subr.bf16.mxu0 %v5972
      %6166 = vmatpush1.bf16.msra.mxu0 %v5971
      %6167 = vmatprep.subr.bf16.mxu0 %v5974
      %6168 = vmatpush1.bf16.msra.mxu0 %v5973
      %6169 = vmatprep.subr.bf16.mxu0 %v5976
      %6170 = vmatpush1.bf16.msra.mxu0 %v5975
      %6171 = vmatprep.subr.bf16.mxu0 0
      %6172 = vmatpush1.bf16.msra.mxu0 0
      %6173 = vmatprep.subr.bf16.mxu0 0
      %6174 = vmatpush1.bf16.msra.mxu0 0
      %6175 = vmatprep.subr.bf16.mxu0 0
      %6176 = vmatpush1.bf16.msra.mxu0 0
      %6177 = vmatprep.subr.bf16.mxu0 0
      %6178 = vmatpush1.bf16.msra.mxu0 0
      %6179 = vmatprep.subr.bf16.mxu0 0
      %6180 = vmatpush1.bf16.msra.mxu0 0
      %6181 = vmatprep.subr.bf16.mxu0 0
      %6182 = vmatpush1.bf16.msra.mxu0 0
      %6183 = vmatprep.subr.bf16.mxu0 0
      %6184 = vmatpush1.bf16.msra.mxu0 0
      %6185 = vmatprep.subr.bf16.mxu0 0
      %6186 = vmatpush1.bf16.msra.mxu0 0
      %6187 = vmatprep.subr.bf16.mxu0 0
      %6188 = vmatpush1.bf16.msra.mxu0 0
      %6189 = vmatprep.subr.bf16.mxu0 0
      %6190 = vmatpush1.bf16.msra.mxu0 0
      %6191 = vmatprep.subr.bf16.mxu0 0
      %6192 = vmatpush1.bf16.msra.mxu0 0
      %6193 = vmatprep.subr.bf16.mxu0 0
      %6194 = vmatpush1.bf16.msra.mxu0 0
      %6195 = vmatprep.mubr.bf16.mxu0 0
      %6196 = vmatmul.mubr.bf16.gmra.mrb[0].mxu0 %v6052
      %v6197 = vpop.f32.mrb[0].mxu0
      %v6198 = vadd.f32 %v6145, %v6197
      %v6199 = vpop.f32.mrb[0].mxu0
      %v6200 = vadd.f32 %v6147, %v6199
      %v6201 = vpop.f32.mrb[0].mxu0
      %v6202 = vadd.f32 %v6149, %v6201
      %v6203 = vpop.f32.mrb[0].mxu0
      %v6204 = vadd.f32 %v6151, %v6203
      %6205 = vmatprep.mubr.bf16.mxu0 0
      %6206 = vmatmul.mubr.bf16.gmra.mrb[0].mxu0 %v6055
      %v6207 = vpop.f32.mrb[0].mxu0
      %v6208 = vadd.f32 %v6155, %v6207
      %v6209 = vpop.f32.mrb[0].mxu0
      %v6210 = vadd.f32 %v6157, %v6209
      %v6211 = vpop.f32.mrb[0].mxu0
      %v6212 = vadd.f32 %v6159, %v6211
      %v6213 = vpop.f32.mrb[0].mxu0
      %v6214 = vadd.f32 %v6161, %v6213
      %6215 = vdwg.mxu0
      %v6216 = vmax.f32 %v6198, 0.0
      %v6217 = vmax.f32 %v6200, 0.0
      %v6218 = vmax.f32 %v6202, 0.0
      %v6219 = vmax.f32 %v6204, 0.0
      %v6220 = vmax.f32 %v6208, 0.0
      %v6221 = vmax.f32 %v6210, 0.0
      %v6222 = vmax.f32 %v6212, 0.0
      %v6223 = vmax.f32 %v6214, 0.0
      %v6224 = vld [vmem:[%s11] sm:$0x1]
      %v6225 = vpack.c.bf16 %v6218, %v6216
      %v6226 = vpack.c.bf16 %v6219, %v6217
      %v6227 = vpack.c.bf16 %v6222, %v6220
      %v6228 = vpack.c.bf16 %v6223, %v6221
      %v6229 = vld [vmem:[%s12] sm:$0x3]
      %6231 = vset.pattern.permute.xlu0 0
      %6232 = vperm.xlu0 %6231, %v6229
      %v6233 = vpop.permute.xlu0 %6232
      %v6236 = vsel %vm1389, %v6224, 0
      %6238 = vmatprep.subr.bf16.mxu0 %v6226
      %6239 = vmatpush1.bf16.msra.mxu0 %v6225
      %6240 = vmatprep.subr.bf16.mxu0 %v6228
      %6241 = vmatpush1.bf16.msra.mxu0 %v6227
      %6242 = vmatprep.subr.bf16.mxu0 0
      %6243 = vmatpush1.bf16.msra.mxu0 0
      %6244 = vmatprep.subr.bf16.mxu0 0
      %6245 = vmatpush1.bf16.msra.mxu0 0
      %6246 = vmatprep.subr.bf16.mxu0 0
      %6247 = vmatpush1.bf16.msra.mxu0 0
      %6248 = vmatprep.subr.bf16.mxu0 0
      %6249 = vmatpush1.bf16.msra.mxu0 0
      %6250 = vmatprep.subr.bf16.mxu0 0
      %6251 = vmatpush1.bf16.msra.mxu0 0
      %6252 = vmatprep.subr.bf16.mxu0 0
      %6253 = vmatpush1.bf16.msra.mxu0 0
      %6254 = vmatprep.subr.bf16.mxu0 0
      %6255 = vmatpush1.bf16.msra.mxu0 0
      %6256 = vmatprep.subr.bf16.mxu0 0
      %6257 = vmatpush1.bf16.msra.mxu0 0
      %6258 = vmatprep.subr.bf16.mxu0 0
      %6259 = vmatpush1.bf16.msra.mxu0 0
      %6260 = vmatprep.subr.bf16.mxu0 0
      %6261 = vmatpush1.bf16.msra.mxu0 0
      %6262 = vmatprep.subr.bf16.mxu0 0
      %6263 = vmatpush1.bf16.msra.mxu0 0
      %6264 = vmatprep.subr.bf16.mxu0 0
      %6265 = vmatpush1.bf16.msra.mxu0 0
      %6266 = vmatprep.subr.bf16.mxu0 0
      %6267 = vmatpush1.bf16.msra.mxu0 0
      %6268 = vmatprep.subr.bf16.mxu0 0
      %6269 = vmatpush1.bf16.msra.mxu0 0
      %6270 = vmatprep.mubr.bf16.mxu0 0
      %6271 = vmatmul.mubr.bf16.gmra.mrb[0].mxu0 %v6236
      %v6272 = vpop.f32.mrb[0].mxu0
      %v6273 = vadd.f32 %v6233, %v6272
      %v6274 = vpop.f32.mrb[0].mxu0
      %v6275 = vadd.f32 %v6233, %v6274
      %v6276 = vpop.f32.mrb[0].mxu0
      %v6277 = vpop.f32.mrb[0].mxu0
      %6278 = vdwg.mxu0
      %v6281 = vcombine.low %v6273, %v6275
      %v6283 = vunpack.c.l.s4 1983009808
      %v6284 = vunpack.c.0.s8 %v6283
      %v6285 = vlaneseq
      %v6286 = vshrl.u32 %v6285, 7
      %v6287 = vsub.s32 %v6284, %v6286
      %v6288 = vrot.slane %v6281, %v6287
      %6290 = vst [vmem:[%s440] sm:$0xf] %v6288
      %p6291 = scmp.lt.s32.totalorder %s24, 1
      %s6292 = scalar_select %p6291, %s24, 1
      %s6293 = smul.addr %s6292, 2
      %s6294 = smul.addr %s6293, 2
      %s6295 = scalar_lea.vmem %s13, %s6294
      // Predicated region
      $region73: #{topology_cnn_forward.1} parent=71 // pred_check
        %p6296 = pneg %p320
      $region74: #{topology_cnn_forward.1} parent=71 // pred_check_branch
        %6298 = sbr.rel (%p6296) target = $region76
      $region75: #{topology_cnn_forward.1} parent=71 // pred_region
        _
      $region76: #{topology_cnn_forward.1} parent=71 // pred_fallthru
        _
    $region72: #{topology_cnn_forward.1} parent=5 // pred_fallthru
      _
    %p6299 = scmp.le.s32.totalorder 2, %s19
    // Predicated region
    $region77: #{topology_cnn_forward.1} parent=5 // pred_check
      %p6300 = pneg %p6299
    $region78: #{topology_cnn_forward.1} parent=5 // pred_check_branch
      %6302 = sbr.rel (%p6300) target = $region80
    $region79: #{topology_cnn_forward.1} parent=5 // pred_region
      %s6303 = ssub.s32 %s19, 2
      // Predicated region
      $region81: #{topology_cnn_forward.1} parent=79 // pred_check
        %p6304 = pneg %p326
      $region82: #{topology_cnn_forward.1} parent=79 // pred_check_branch
        %6306 = sbr.rel (%p6304) target = $region84
      $region83: #{topology_cnn_forward.1} parent=79 // pred_region
        %p6307 = scmp.lt.s32.totalorder %s25, 1
        %s6308 = scalar_select %p6307, %s25, 1
        %s6309 = smul.addr %s6308, 2
        %s6310 = smul.addr %s6309, 2
        %s6311 = scalar_lea.vmem %s13, %s6310
      $region84: #{topology_cnn_forward.1} parent=79 // pred_fallthru
        _
    $region80: #{topology_cnn_forward.1} parent=5 // pred_fallthru
      _
  $region6: #{topology_cnn_forward.1} parent=0 // loop_footer
    %s23 = sadd.s32 1, %s19
  $region7: #{topology_cnn_forward.1} parent=0 // loop_footer_branch
    %18 = sbr.rel target = $region3
  $region8: #{topology_cnn_forward.1} parent=0 // loop_exit
    _

</llo_original>
